<compile_context>
chip_gen: v5e
topology: v5e:2x2
jax: 0.10.0
libtpu: 0.0.40
codegen_flags: <defaults>
</compile_context>

<pallas_src>
import math

import jax
import jax.numpy as jnp
from jax import lax
from jax.experimental import pallas as pl
from jax.experimental.pallas import tpu as pltpu

D_MODEL = 32
N_HEADS = 8
HEAD_DIM = D_MODEL // N_HEADS
FFN_DIM = 4 * D_MODEL
N_LAYERS = 6
PATCH = 4


# ---------------------------------------------------------------------------
# Kernel
# ---------------------------------------------------------------------------
def _layer_norm(x, g, b, eps=1e-5):
    # sum(x) and sum(x*x) are independent lane reductions -> can overlap on the
    # XLU pipes; var = E[x^2] - mu^2 (same math, slightly different rounding).
    mu = jnp.mean(x, axis=-1, keepdims=True)
    ms = jnp.mean(x * x, axis=-1, keepdims=True)
    var = ms - mu * mu
    return (x - mu) * lax.rsqrt(var + eps) * g + b


def fused_encoder_kernel(p_ref, we_ref, be_ref, wqkv_ref, bqkv_ref, wo_ref,
                         w1_ref, b1_ref, w2_ref, vecs_ref, o_ref, cat_ref):
    # p_ref:    (BN, S, P)   patches for BN batch elements
    # we_ref:   (P, E)       patch-embed weight (x @ W orientation)
    # be_ref:   (1, E)       patch-embed bias
    # wqkv_ref: (L, E, 3E)   fused in-projection weight  [q | k | v], Q pre-scaled
    # bqkv_ref: (L, 1, 3E)   fused in-projection bias    (Q slice pre-scaled)
    # wo_ref:   (L, E, E)    output-projection weight (rows = concat'd heads)
    # w1_ref:   (L, E, F)    FFN layer 1 weight
    # b1_ref:   (L, 1, F)    FFN layer 1 bias
    # w2_ref:   (L, F, E)    FFN layer 2 weight
    # vecs_ref: (L, 6, E)    [b_o, b2, gamma1, beta1, gamma2, beta2]
    # o_ref:    (BN, S, E)
    # cat_ref:  (BN*S, E)    VMEM scratch: head-minor concat of attention heads
    BN, S, P = p_ref.shape
    E, H, Dh = D_MODEL, N_HEADS, HEAD_DIM
    M = BN * S

    # patch embed, flattened to (M, E) so every matmul below is row/lane dense
    x = (jnp.dot(p_ref[...].reshape(M, P), we_ref[...],
                 preferred_element_type=jnp.float32) + be_ref[...])      # (M, E)

    dn_qk = (((2,), (2,)), ((0,), (0,)))   # (B,S,Dh) x (B,S,Dh) -> (B,S,S)
    dn_pv = (((2,), (1,)), ((0,), (0,)))   # (B,S,S)  x (B,S,Dh) -> (B,S,Dh)

    def split_heads(qkv, base):            # lane slices -> (H*BN, S, Dh), h-major
        parts = [qkv[:, base + h * Dh: base + (h + 1) * Dh].reshape(BN, S, Dh)
                 for h in range(H)]
        return jnp.concatenate(parts, axis=0)

    for l in range(N_LAYERS):                                   # static unroll
        vecs = vecs_ref[l]                                      # (6, E)
        b_o, b_2 = vecs[0:1, :], vecs[1:2, :]
        g1, be1 = vecs[2:3, :], vecs[3:4, :]
        g2, be2 = vecs[4:5, :], vecs[5:6, :]

        # --- multi-head self-attention ---------------------------------------
        # fused QKV projection: ONE (M,E)x(E,3E) matmul + one lane-dense bias add
        qkv = (jnp.dot(x, wqkv_ref[l], preferred_element_type=jnp.float32)
               + bqkv_ref[l])                                   # (M, 3E)
        q = split_heads(qkv, 0)        # Q already scaled by 1/sqrt(Dh) in weights
        k = split_heads(qkv, E)
        v = split_heads(qkv, 2 * E)

        s = lax.dot_general(q, k, dn_qk,
                            preferred_element_type=jnp.float32)  # (H*BN, S, S)
        s = s - jnp.max(s, axis=-1, keepdims=True)
        p = jnp.exp(s)
        p = p * pl.reciprocal(jnp.sum(p, axis=-1, keepdims=True), approx=True)

        o_h = lax.dot_general(p, v, dn_pv,
                              preferred_element_type=jnp.float32)  # (H*BN, S, Dh)

        # head-minor concat along lanes via scratch stores, then a single
        # (M,E)x(E,E) output projection (identical math to concat(heads) @ Wo)
        for h in range(H):
            cat_ref[:, h * Dh:(h + 1) * Dh] = \
                o_h[h * BN:(h + 1) * BN].reshape(M, Dh)
        att = (jnp.dot(cat_ref[...], wo_ref[l],
                       preferred_element_type=jnp.float32) + b_o)  # (M, E)

        # TODO(synk): dropout (p=0.1) omitted — eval-mode semantics (identity).
        x = _layer_norm(x + att, g1, be1)

        # --- feed-forward -----------------------------------------------------
        h1 = jnp.maximum(
            jnp.dot(x, w1_ref[l], preferred_element_type=jnp.float32) + b1_ref[l],
            0.0)
        ffn = jnp.dot(h1, w2_ref[l], preferred_element_type=jnp.float32) + b_2
        x = _layer_norm(x + ffn, g2, be2)

    o_ref[...] = x.reshape(BN, S, E)


# ---------------------------------------------------------------------------
# pallas_call wrapper
# ---------------------------------------------------------------------------
def _full_spec(a):
    r = a.ndim
    return pl.BlockSpec(a.shape, lambda g, _r=r: (0,) * _r)


def extract_patches(image):
    # glue: NCHW -> (N, S, C*PATCH*PATCH) non-overlapping 4x4 patches
    N, C, H, W = image.shape
    x = image.reshape(N, C, H // PATCH, PATCH, W // PATCH, PATCH)
    x = jnp.transpose(x, (0, 2, 4, 1, 3, 5))
    return x.reshape(N, (H // PATCH) * (W // PATCH), C * PATCH * PATCH)


def _choose_block_batch(N):
    # Up to 8 batch elements per step (fills 8*S = 128 LHS rows when S=16) but
    # keep the grid >= 2 steps when possible so both v7x TensorCores get work.
    cap = min(8, max(1, N // 2))
    for bn in range(cap, 0, -1):
        if N % bn == 0:
            return bn
    return 1


def transformer_encoder_forward(image, params):
    patches = extract_patches(image)                  # (N, S, P)
    N, S, P = patches.shape
    E = D_MODEL
    BN = _choose_block_batch(N)
    G = N // BN

    weight_args = (params["w_embed"], params["b_embed"], params["wqkv"],
                   params["bqkv"], params["wo"], params["w1"], params["b1"],
                   params["w2"], params["vecs"])

    out = pl.pallas_call(
        fused_encoder_kernel,
        out_shape=jax.ShapeDtypeStruct((N, S, E), jnp.float32),
        grid=(G,),
        in_specs=[pl.BlockSpec((BN, S, P), lambda g: (g, 0, 0))]
                 + [_full_spec(w) for w in weight_args],
        out_specs=pl.BlockSpec((BN, S, E), lambda g: (g, 0, 0)),
        scratch_shapes=[pltpu.VMEM((BN * S, E), jnp.float32)],
        compiler_params=pltpu.CompilerParams(dimension_semantics=("parallel",)),
    )(patches, *weight_args)

    return jnp.transpose(out, (1, 0, 2))              # (S, N, E) like PyTorch


# ---------------------------------------------------------------------------
# Parameters (deterministic synthetic init, stacked over layers)
# ---------------------------------------------------------------------------
def init_params(key, in_ch):
    P = in_ch * PATCH * PATCH
    keys = jax.random.split(key, 1 + 6 * N_LAYERS)
    scale_q = 1.0 / math.sqrt(HEAD_DIM)   # folded into Wq (and bq) — same math

    wqkv, bqkv, wo, w1, b1, w2, vecs = [], [], [], [], [], [], []
    for l in range(N_LAYERS):
        kq, kk, kv_, ko, kf1, kf2 = keys[1 + 6 * l: 1 + 6 * (l + 1)]
        wq = 0.05 * jax.random.normal(kq, (D_MODEL, D_MODEL), jnp.float32)
        wk = 0.05 * jax.random.normal(kk, (D_MODEL, D_MODEL), jnp.float32)
        wv = 0.05 * jax.random.normal(kv_, (D_MODEL, D_MODEL), jnp.float32)
        # fused in-projection (E, 3E): columns [q | k | v], heads head-major
        wqkv.append(jnp.concatenate([wq * scale_q, wk, wv], axis=1))
        # fused in-projection bias (zero here); a real PyTorch in_proj_bias must
        # have its Q third multiplied by scale_q as well when loading.
        bqkv.append(jnp.zeros((1, 3 * D_MODEL), jnp.float32))
        wo.append(0.05 * jax.random.normal(ko, (D_MODEL, D_MODEL), jnp.float32))
        w1.append(0.05 * jax.random.normal(kf1, (D_MODEL, FFN_DIM), jnp.float32))
        b1.append(jnp.zeros((1, FFN_DIM), jnp.float32))
        w2.append(0.05 * jax.random.normal(kf2, (FFN_DIM, D_MODEL), jnp.float32))
        vecs.append(jnp.stack([
            jnp.zeros((D_MODEL,), jnp.float32),   # b_o
            jnp.zeros((D_MODEL,), jnp.float32),   # b2
            jnp.ones((D_MODEL,), jnp.float32),    # norm1 gamma
            jnp.zeros((D_MODEL,), jnp.float32),   # norm1 beta
            jnp.ones((D_MODEL,), jnp.float32),    # norm2 gamma
            jnp.zeros((D_MODEL,), jnp.float32),   # norm2 beta
        ]))

    return {
        "w_embed": 0.05 * jax.random.normal(keys[0], (P, D_MODEL), jnp.float32),
        "b_embed": jnp.zeros((1, D_MODEL), jnp.float32),
        "wqkv": jnp.stack(wqkv),    # (L, E, 3E)
        "bqkv": jnp.stack(bqkv),    # (L, 1, 3E)
        "wo": jnp.stack(wo),        # (L, E, E)
        "w1": jnp.stack(w1),        # (L, E, F)
        "b1": jnp.stack(b1),        # (L, 1, F)
        "w2": jnp.stack(w2),        # (L, F, E)
        "vecs": jnp.stack(vecs),    # (L, 6, E)
    }


# ---------------------------------------------------------------------------
if __name__ == "__main__":
    key = jax.random.PRNGKey(0)
    k_img, k_par = jax.random.split(key)

    image = jax.random.normal(k_img, (2, 1, 16, 16), jnp.float32)  # NCHW
    params = init_params(k_par, in_ch=1)

    out = jax.jit(transformer_encoder_forward)(image, params)
    out = jax.block_until_ready(out)

    assert out.shape == (16, 2, D_MODEL)
    assert bool(jnp.all(jnp.isfinite(out)))
    print("KERNEL_OK")
</pallas_src>

<mosaic_0001>
module attributes {stable_mosaic.version = 11 : i64} {
  func.func @fused_encoder_kernel(%arg0: i32, %arg1: memref<1x16x16xf32, #tpu.memory_space<vmem>>, %arg2: memref<16x32xf32, #tpu.memory_space<vmem>>, %arg3: memref<1x32xf32, #tpu.memory_space<vmem>>, %arg4: memref<6x32x96xf32, #tpu.memory_space<vmem>>, %arg5: memref<6x1x96xf32, #tpu.memory_space<vmem>>, %arg6: memref<6x32x32xf32, #tpu.memory_space<vmem>>, %arg7: memref<6x32x128xf32, #tpu.memory_space<vmem>>, %arg8: memref<6x1x128xf32, #tpu.memory_space<vmem>>, %arg9: memref<6x128x32xf32, #tpu.memory_space<vmem>>, %arg10: memref<6x6x32xf32, #tpu.memory_space<vmem>>, %arg11: memref<1x16x32xf32, #tpu.memory_space<vmem>>, %arg12: memref<16x32xf32, #tpu.memory_space<vmem>>) attributes {dimension_semantics = [#tpu.dimension_semantics<parallel>], iteration_bounds = array<i64: 2>, scalar_prefetch = 0 : i64, scratch_operands = 1 : i64, tpu.core_type = #tpu.core_type<tc>, window_params = [{transform_indices = @transform_0, window_bounds = array<i64: 1, 16, 16>}, {pipeline_mode = #tpu.pipeline_mode<synchronous>, transform_indices = @transform_1, window_bounds = array<i64: 16, 32>}, {pipeline_mode = #tpu.pipeline_mode<synchronous>, transform_indices = @transform_2, window_bounds = array<i64: 1, 32>}, {pipeline_mode = #tpu.pipeline_mode<synchronous>, transform_indices = @transform_3, window_bounds = array<i64: 6, 32, 96>}, {pipeline_mode = #tpu.pipeline_mode<synchronous>, transform_indices = @transform_4, window_bounds = array<i64: 6, 1, 96>}, {pipeline_mode = #tpu.pipeline_mode<synchronous>, transform_indices = @transform_5, window_bounds = array<i64: 6, 32, 32>}, {pipeline_mode = #tpu.pipeline_mode<synchronous>, transform_indices = @transform_6, window_bounds = array<i64: 6, 32, 128>}, {pipeline_mode = #tpu.pipeline_mode<synchronous>, transform_indices = @transform_7, window_bounds = array<i64: 6, 1, 128>}, {pipeline_mode = #tpu.pipeline_mode<synchronous>, transform_indices = @transform_8, window_bounds = array<i64: 6, 128, 32>}, {pipeline_mode = #tpu.pipeline_mode<synchronous>, transform_indices = @transform_9, window_bounds = array<i64: 6, 6, 32>}, {transform_indices = @transform_10, window_bounds = array<i64: 1, 16, 32>}]} {
    %c0 = arith.constant 0 : index
    %c0_0 = arith.constant 0 : index
    %c0_1 = arith.constant 0 : index
    %0 = vector.load %arg1[%c0, %c0_0, %c0_1] : memref<1x16x16xf32, #tpu.memory_space<vmem>>, vector<1x16x16xf32>
    %1 = vector.shape_cast %0 : vector<1x16x16xf32> to vector<16x16xf32>
    %c0_2 = arith.constant 0 : index
    %c0_3 = arith.constant 0 : index
    %2 = vector.load %arg2[%c0_2, %c0_3] : memref<16x32xf32, #tpu.memory_space<vmem>>, vector<16x32xf32>
    %cst = arith.constant dense<0.000000e+00> : vector<16x32xf32>
    %3 = tpu.matmul %1, %2, %cst {dimension_numbers = #tpu.dot_dimension_numbers<[1], [0], [0], [1], [0, 0, 1, 1], [], []>} : vector<16x16xf32>, vector<16x32xf32>, vector<16x32xf32> -> vector<16x32xf32>
    %c0_4 = arith.constant 0 : index
    %c0_5 = arith.constant 0 : index
    %4 = vector.load %arg3[%c0_4, %c0_5] : memref<1x32xf32, #tpu.memory_space<vmem>>, vector<1x32xf32>
    %5 = vector.broadcast %4 : vector<1x32xf32> to vector<16x32xf32>
    %6 = arith.addf %3, %5 : vector<16x32xf32>
    %c0_6 = arith.constant 0 : index
    %c0_7 = arith.constant 0 : index
    %c0_8 = arith.constant 0 : index
    %7 = vector.load %arg10[%c0_6, %c0_7, %c0_8] : memref<6x6x32xf32, #tpu.memory_space<vmem>>, vector<1x6x32xf32>
    %8 = vector.shape_cast %7 : vector<1x6x32xf32> to vector<6x32xf32>
    %9 = vector.extract_strided_slice %8 {offsets = [0, 0], sizes = [1, 32], strides = [1, 1]} : vector<6x32xf32> to vector<1x32xf32>
    %10 = vector.extract_strided_slice %8 {offsets = [1, 0], sizes = [1, 32], strides = [1, 1]} : vector<6x32xf32> to vector<1x32xf32>
    %11 = vector.extract_strided_slice %8 {offsets = [2, 0], sizes = [1, 32], strides = [1, 1]} : vector<6x32xf32> to vector<1x32xf32>
    %12 = vector.extract_strided_slice %8 {offsets = [3, 0], sizes = [1, 32], strides = [1, 1]} : vector<6x32xf32> to vector<1x32xf32>
    %13 = vector.extract_strided_slice %8 {offsets = [4, 0], sizes = [1, 32], strides = [1, 1]} : vector<6x32xf32> to vector<1x32xf32>
    %14 = vector.extract_strided_slice %8 {offsets = [5, 0], sizes = [1, 32], strides = [1, 1]} : vector<6x32xf32> to vector<1x32xf32>
    %c0_9 = arith.constant 0 : index
    %c0_10 = arith.constant 0 : index
    %c0_11 = arith.constant 0 : index
    %15 = vector.load %arg4[%c0_9, %c0_10, %c0_11] : memref<6x32x96xf32, #tpu.memory_space<vmem>>, vector<1x32x96xf32>
    %16 = vector.shape_cast %15 : vector<1x32x96xf32> to vector<32x96xf32>
    %cst_12 = arith.constant dense<0.000000e+00> : vector<16x96xf32>
    %17 = tpu.matmul %6, %16, %cst_12 {dimension_numbers = #tpu.dot_dimension_numbers<[1], [0], [0], [1], [0, 0, 1, 1], [], []>} : vector<16x32xf32>, vector<32x96xf32>, vector<16x96xf32> -> vector<16x96xf32>
    %c0_13 = arith.constant 0 : index
    %c0_14 = arith.constant 0 : index
    %c0_15 = arith.constant 0 : index
    %18 = vector.load %arg5[%c0_13, %c0_14, %c0_15] : memref<6x1x96xf32, #tpu.memory_space<vmem>>, vector<1x1x96xf32>
    %19 = vector.shape_cast %18 : vector<1x1x96xf32> to vector<1x96xf32>
    %20 = vector.broadcast %19 : vector<1x96xf32> to vector<16x96xf32>
    %21 = arith.addf %17, %20 : vector<16x96xf32>
    %22 = vector.extract_strided_slice %21 {offsets = [0, 0], sizes = [16, 4], strides = [1, 1]} : vector<16x96xf32> to vector<16x4xf32>
    %23 = vector.shape_cast %22 : vector<16x4xf32> to vector<1x16x4xf32>
    %24 = vector.extract_strided_slice %21 {offsets = [0, 4], sizes = [16, 4], strides = [1, 1]} : vector<16x96xf32> to vector<16x4xf32>
    %25 = vector.shape_cast %24 : vector<16x4xf32> to vector<1x16x4xf32>
    %26 = vector.extract_strided_slice %21 {offsets = [0, 8], sizes = [16, 4], strides = [1, 1]} : vector<16x96xf32> to vector<16x4xf32>
    %27 = vector.shape_cast %26 : vector<16x4xf32> to vector<1x16x4xf32>
    %28 = vector.extract_strided_slice %21 {offsets = [0, 12], sizes = [16, 4], strides = [1, 1]} : vector<16x96xf32> to vector<16x4xf32>
    %29 = vector.shape_cast %28 : vector<16x4xf32> to vector<1x16x4xf32>
    %30 = vector.extract_strided_slice %21 {offsets = [0, 16], sizes = [16, 4], strides = [1, 1]} : vector<16x96xf32> to vector<16x4xf32>
    %31 = vector.shape_cast %30 : vector<16x4xf32> to vector<1x16x4xf32>
    %32 = vector.extract_strided_slice %21 {offsets = [0, 20], sizes = [16, 4], strides = [1, 1]} : vector<16x96xf32> to vector<16x4xf32>
    %33 = vector.shape_cast %32 : vector<16x4xf32> to vector<1x16x4xf32>
    %34 = vector.extract_strided_slice %21 {offsets = [0, 24], sizes = [16, 4], strides = [1, 1]} : vector<16x96xf32> to vector<16x4xf32>
    %35 = vector.shape_cast %34 : vector<16x4xf32> to vector<1x16x4xf32>
    %36 = vector.extract_strided_slice %21 {offsets = [0, 28], sizes = [16, 4], strides = [1, 1]} : vector<16x96xf32> to vector<16x4xf32>
    %37 = vector.shape_cast %36 : vector<16x4xf32> to vector<1x16x4xf32>
    %38 = tpu.concatenate %23, %25, %27, %29, %31, %33, %35, %37 in 0 : vector<1x16x4xf32>, vector<1x16x4xf32>, vector<1x16x4xf32>, vector<1x16x4xf32>, vector<1x16x4xf32>, vector<1x16x4xf32>, vector<1x16x4xf32>, vector<1x16x4xf32> -> vector<8x16x4xf32>
    %39 = vector.extract_strided_slice %21 {offsets = [0, 32], sizes = [16, 4], strides = [1, 1]} : vector<16x96xf32> to vector<16x4xf32>
    %40 = vector.shape_cast %39 : vector<16x4xf32> to vector<1x16x4xf32>
    %41 = vector.extract_strided_slice %21 {offsets = [0, 36], sizes = [16, 4], strides = [1, 1]} : vector<16x96xf32> to vector<16x4xf32>
    %42 = vector.shape_cast %41 : vector<16x4xf32> to vector<1x16x4xf32>
    %43 = vector.extract_strided_slice %21 {offsets = [0, 40], sizes = [16, 4], strides = [1, 1]} : vector<16x96xf32> to vector<16x4xf32>
    %44 = vector.shape_cast %43 : vector<16x4xf32> to vector<1x16x4xf32>
    %45 = vector.extract_strided_slice %21 {offsets = [0, 44], sizes = [16, 4], strides = [1, 1]} : vector<16x96xf32> to vector<16x4xf32>
    %46 = vector.shape_cast %45 : vector<16x4xf32> to vector<1x16x4xf32>
    %47 = vector.extract_strided_slice %21 {offsets = [0, 48], sizes = [16, 4], strides = [1, 1]} : vector<16x96xf32> to vector<16x4xf32>
    %48 = vector.shape_cast %47 : vector<16x4xf32> to vector<1x16x4xf32>
    %49 = vector.extract_strided_slice %21 {offsets = [0, 52], sizes = [16, 4], strides = [1, 1]} : vector<16x96xf32> to vector<16x4xf32>
    %50 = vector.shape_cast %49 : vector<16x4xf32> to vector<1x16x4xf32>
    %51 = vector.extract_strided_slice %21 {offsets = [0, 56], sizes = [16, 4], strides = [1, 1]} : vector<16x96xf32> to vector<16x4xf32>
    %52 = vector.shape_cast %51 : vector<16x4xf32> to vector<1x16x4xf32>
    %53 = vector.extract_strided_slice %21 {offsets = [0, 60], sizes = [16, 4], strides = [1, 1]} : vector<16x96xf32> to vector<16x4xf32>
    %54 = vector.shape_cast %53 : vector<16x4xf32> to vector<1x16x4xf32>
    %55 = tpu.concatenate %40, %42, %44, %46, %48, %50, %52, %54 in 0 : vector<1x16x4xf32>, vector<1x16x4xf32>, vector<1x16x4xf32>, vector<1x16x4xf32>, vector<1x16x4xf32>, vector<1x16x4xf32>, vector<1x16x4xf32>, vector<1x16x4xf32> -> vector<8x16x4xf32>
    %56 = vector.extract_strided_slice %21 {offsets = [0, 64], sizes = [16, 4], strides = [1, 1]} : vector<16x96xf32> to vector<16x4xf32>
    %57 = vector.shape_cast %56 : vector<16x4xf32> to vector<1x16x4xf32>
    %58 = vector.extract_strided_slice %21 {offsets = [0, 68], sizes = [16, 4], strides = [1, 1]} : vector<16x96xf32> to vector<16x4xf32>
    %59 = vector.shape_cast %58 : vector<16x4xf32> to vector<1x16x4xf32>
    %60 = vector.extract_strided_slice %21 {offsets = [0, 72], sizes = [16, 4], strides = [1, 1]} : vector<16x96xf32> to vector<16x4xf32>
    %61 = vector.shape_cast %60 : vector<16x4xf32> to vector<1x16x4xf32>
    %62 = vector.extract_strided_slice %21 {offsets = [0, 76], sizes = [16, 4], strides = [1, 1]} : vector<16x96xf32> to vector<16x4xf32>
    %63 = vector.shape_cast %62 : vector<16x4xf32> to vector<1x16x4xf32>
    %64 = vector.extract_strided_slice %21 {offsets = [0, 80], sizes = [16, 4], strides = [1, 1]} : vector<16x96xf32> to vector<16x4xf32>
    %65 = vector.shape_cast %64 : vector<16x4xf32> to vector<1x16x4xf32>
    %66 = vector.extract_strided_slice %21 {offsets = [0, 84], sizes = [16, 4], strides = [1, 1]} : vector<16x96xf32> to vector<16x4xf32>
    %67 = vector.shape_cast %66 : vector<16x4xf32> to vector<1x16x4xf32>
    %68 = vector.extract_strided_slice %21 {offsets = [0, 88], sizes = [16, 4], strides = [1, 1]} : vector<16x96xf32> to vector<16x4xf32>
    %69 = vector.shape_cast %68 : vector<16x4xf32> to vector<1x16x4xf32>
    %70 = vector.extract_strided_slice %21 {offsets = [0, 92], sizes = [16, 4], strides = [1, 1]} : vector<16x96xf32> to vector<16x4xf32>
    %71 = vector.shape_cast %70 : vector<16x4xf32> to vector<1x16x4xf32>
    %72 = tpu.concatenate %57, %59, %61, %63, %65, %67, %69, %71 in 0 : vector<1x16x4xf32>, vector<1x16x4xf32>, vector<1x16x4xf32>, vector<1x16x4xf32>, vector<1x16x4xf32>, vector<1x16x4xf32>, vector<1x16x4xf32>, vector<1x16x4xf32> -> vector<8x16x4xf32>
    %cst_16 = arith.constant dense<0.000000e+00> : vector<8x16x16xf32>
    %73 = tpu.matmul %38, %55, %cst_16 {dimension_numbers = #tpu.dot_dimension_numbers<[2], [2], [1], [1], [0, 0, 0, 1, 1, 1], [0], [0]>} : vector<8x16x4xf32>, vector<8x16x4xf32>, vector<8x16x16xf32> -> vector<8x16x16xf32>
    %cst_17 = arith.constant dense<0xFF800000> : vector<8x16xf32>
    %74 = vector.multi_reduction <maximumf>, %73, %cst_17 [2] : vector<8x16x16xf32> to vector<8x16xf32>
    %75 = vector.shape_cast %74 : vector<8x16xf32> to vector<8x16x1xf32>
    %76 = vector.broadcast %75 : vector<8x16x1xf32> to vector<8x16x16xf32>
    %77 = arith.subf %73, %76 : vector<8x16x16xf32>
    %78 = math.exp %77 : vector<8x16x16xf32>
    %cst_18 = arith.constant dense<0.000000e+00> : vector<8x16xf32>
    %79 = vector.multi_reduction <add>, %78, %cst_18 [2] : vector<8x16x16xf32> to vector<8x16xf32>
    %80 = vector.shape_cast %79 : vector<8x16xf32> to vector<8x16x1xf32>
    %81 = tpu.reciprocal %80 {approx = true} : vector<8x16x1xf32> -> vector<8x16x1xf32>
    %82 = vector.broadcast %81 : vector<8x16x1xf32> to vector<8x16x16xf32>
    %83 = arith.mulf %78, %82 : vector<8x16x16xf32>
    %cst_19 = arith.constant dense<0.000000e+00> : vector<8x16x4xf32>
    %84 = tpu.matmul %83, %72, %cst_19 {dimension_numbers = #tpu.dot_dimension_numbers<[2], [1], [1], [2], [0, 0, 0, 1, 1, 2], [0], [0]>} : vector<8x16x16xf32>, vector<8x16x4xf32>, vector<8x16x4xf32> -> vector<8x16x4xf32>
    %85 = vector.extract_strided_slice %84 {offsets = [0, 0, 0], sizes = [1, 16, 4], strides = [1, 1, 1]} : vector<8x16x4xf32> to vector<1x16x4xf32>
    %86 = vector.shape_cast %85 : vector<1x16x4xf32> to vector<16x4xf32>
    %c0_20 = arith.constant 0 : index
    %c0_21 = arith.constant 0 : index
    %87 = vector.load %arg12[%c0_20, %c0_21] : memref<16x32xf32, #tpu.memory_space<vmem>>, vector<16x4xf32>
    tpu.vector_store %arg12[%c0_20, %c0_21], %86 {strides = array<i32>} : memref<16x32xf32, #tpu.memory_space<vmem>>, vector<16x4xf32>,
    %88 = vector.extract_strided_slice %84 {offsets = [1, 0, 0], sizes = [1, 16, 4], strides = [1, 1, 1]} : vector<8x16x4xf32> to vector<1x16x4xf32>
    %89 = vector.shape_cast %88 : vector<1x16x4xf32> to vector<16x4xf32>
    %c0_22 = arith.constant 0 : index
    %c4 = arith.constant 4 : index
    %90 = vector.load %arg12[%c0_22, %c4] : memref<16x32xf32, #tpu.memory_space<vmem>>, vector<16x4xf32>
    tpu.vector_store %arg12[%c0_22, %c4], %89 {strides = array<i32>} : memref<16x32xf32, #tpu.memory_space<vmem>>, vector<16x4xf32>,
    %91 = vector.extract_strided_slice %84 {offsets = [2, 0, 0], sizes = [1, 16, 4], strides = [1, 1, 1]} : vector<8x16x4xf32> to vector<1x16x4xf32>
    %92 = vector.shape_cast %91 : vector<1x16x4xf32> to vector<16x4xf32>
    %c0_23 = arith.constant 0 : index
    %c8 = arith.constant 8 : index
    %93 = vector.load %arg12[%c0_23, %c8] : memref<16x32xf32, #tpu.memory_space<vmem>>, vector<16x4xf32>
    tpu.vector_store %arg12[%c0_23, %c8], %92 {strides = array<i32>} : memref<16x32xf32, #tpu.memory_space<vmem>>, vector<16x4xf32>,
    %94 = vector.extract_strided_slice %84 {offsets = [3, 0, 0], sizes = [1, 16, 4], strides = [1, 1, 1]} : vector<8x16x4xf32> to vector<1x16x4xf32>
    %95 = vector.shape_cast %94 : vector<1x16x4xf32> to vector<16x4xf32>
    %c0_24 = arith.constant 0 : index
    %c12 = arith.constant 12 : index
    %96 = vector.load %arg12[%c0_24, %c12] : memref<16x32xf32, #tpu.memory_space<vmem>>, vector<16x4xf32>
    tpu.vector_store %arg12[%c0_24, %c12], %95 {strides = array<i32>} : memref<16x32xf32, #tpu.memory_space<vmem>>, vector<16x4xf32>,
    %97 = vector.extract_strided_slice %84 {offsets = [4, 0, 0], sizes = [1, 16, 4], strides = [1, 1, 1]} : vector<8x16x4xf32> to vector<1x16x4xf32>
    %98 = vector.shape_cast %97 : vector<1x16x4xf32> to vector<16x4xf32>
    %c0_25 = arith.constant 0 : index
    %c16 = arith.constant 16 : index
    %99 = vector.load %arg12[%c0_25, %c16] : memref<16x32xf32, #tpu.memory_space<vmem>>, vector<16x4xf32>
    tpu.vector_store %arg12[%c0_25, %c16], %98 {strides = array<i32>} : memref<16x32xf32, #tpu.memory_space<vmem>>, vector<16x4xf32>,
    %100 = vector.extract_strided_slice %84 {offsets = [5, 0, 0], sizes = [1, 16, 4], strides = [1, 1, 1]} : vector<8x16x4xf32> to vector<1x16x4xf32>
    %101 = vector.shape_cast %100 : vector<1x16x4xf32> to vector<16x4xf32>
    %c0_26 = arith.constant 0 : index
    %c20 = arith.constant 20 : index
    %102 = vector.load %arg12[%c0_26, %c20] : memref<16x32xf32, #tpu.memory_space<vmem>>, vector<16x4xf32>
    tpu.vector_store %arg12[%c0_26, %c20], %101 {strides = array<i32>} : memref<16x32xf32, #tpu.memory_space<vmem>>, vector<16x4xf32>,
    %103 = vector.extract_strided_slice %84 {offsets = [6, 0, 0], sizes = [1, 16, 4], strides = [1, 1, 1]} : vector<8x16x4xf32> to vector<1x16x4xf32>
    %104 = vector.shape_cast %103 : vector<1x16x4xf32> to vector<16x4xf32>
    %c0_27 = arith.constant 0 : index
    %c24 = arith.constant 24 : index
    %105 = vector.load %arg12[%c0_27, %c24] : memref<16x32xf32, #tpu.memory_space<vmem>>, vector<16x4xf32>
    tpu.vector_store %arg12[%c0_27, %c24], %104 {strides = array<i32>} : memref<16x32xf32, #tpu.memory_space<vmem>>, vector<16x4xf32>,
    %106 = vector.extract_strided_slice %84 {offsets = [7, 0, 0], sizes = [1, 16, 4], strides = [1, 1, 1]} : vector<8x16x4xf32> to vector<1x16x4xf32>
    %107 = vector.shape_cast %106 : vector<1x16x4xf32> to vector<16x4xf32>
    %c0_28 = arith.constant 0 : index
    %c28 = arith.constant 28 : index
    %108 = vector.load %arg12[%c0_28, %c28] : memref<16x32xf32, #tpu.memory_space<vmem>>, vector<16x4xf32>
    tpu.vector_store %arg12[%c0_28, %c28], %107 {strides = array<i32>} : memref<16x32xf32, #tpu.memory_space<vmem>>, vector<16x4xf32>,
    %c0_29 = arith.constant 0 : index
    %c0_30 = arith.constant 0 : index
    %109 = vector.load %arg12[%c0_29, %c0_30] : memref<16x32xf32, #tpu.memory_space<vmem>>, vector<16x32xf32>
    %c0_31 = arith.constant 0 : index
    %c0_32 = arith.constant 0 : index
    %c0_33 = arith.constant 0 : index
    %110 = vector.load %arg6[%c0_31, %c0_32, %c0_33] : memref<6x32x32xf32, #tpu.memory_space<vmem>>, vector<1x32x32xf32>
    %111 = vector.shape_cast %110 : vector<1x32x32xf32> to vector<32x32xf32>
    %cst_34 = arith.constant dense<0.000000e+00> : vector<16x32xf32>
    %112 = tpu.matmul %109, %111, %cst_34 {dimension_numbers = #tpu.dot_dimension_numbers<[1], [0], [0], [1], [0, 0, 1, 1], [], []>} : vector<16x32xf32>, vector<32x32xf32>, vector<16x32xf32> -> vector<16x32xf32>
    %113 = vector.broadcast %9 : vector<1x32xf32> to vector<16x32xf32>
    %114 = arith.addf %112, %113 : vector<16x32xf32>
    %115 = arith.addf %6, %114 : vector<16x32xf32>
    %cst_35 = arith.constant dense<0.000000e+00> : vector<16xf32>
    %116 = vector.multi_reduction <add>, %115, %cst_35 [1] : vector<16x32xf32> to vector<16xf32>
    %117 = vector.shape_cast %116 : vector<16xf32> to vector<16x1xf32>
    %cst_36 = arith.constant 3.200000e+01 : f32
    %118 = vector.broadcast %cst_36 : f32 to vector<16x1xf32>
    %119 = arith.divf %117, %118 : vector<16x1xf32>
    %120 = arith.mulf %115, %115 : vector<16x32xf32>
    %cst_37 = arith.constant dense<0.000000e+00> : vector<16xf32>
    %121 = vector.multi_reduction <add>, %120, %cst_37 [1] : vector<16x32xf32> to vector<16xf32>
    %122 = vector.shape_cast %121 : vector<16xf32> to vector<16x1xf32>
    %cst_38 = arith.constant 3.200000e+01 : f32
    %123 = vector.broadcast %cst_38 : f32 to vector<16x1xf32>
    %124 = arith.divf %122, %123 : vector<16x1xf32>
    %125 = arith.mulf %119, %119 : vector<16x1xf32>
    %126 = arith.subf %124, %125 : vector<16x1xf32>
    %127 = vector.broadcast %119 : vector<16x1xf32> to vector<16x32xf32>
    %128 = arith.subf %115, %127 : vector<16x32xf32>
    %cst_39 = arith.constant 9.99999974E-6 : f32
    %129 = vector.broadcast %cst_39 : f32 to vector<16x1xf32>
    %130 = arith.addf %126, %129 : vector<16x1xf32>
    %131 = math.rsqrt %130 : vector<16x1xf32>
    %132 = vector.broadcast %131 : vector<16x1xf32> to vector<16x32xf32>
    %133 = arith.mulf %128, %132 : vector<16x32xf32>
    %134 = vector.broadcast %11 : vector<1x32xf32> to vector<16x32xf32>
    %135 = arith.mulf %133, %134 : vector<16x32xf32>
    %136 = vector.broadcast %12 : vector<1x32xf32> to vector<16x32xf32>
    %137 = arith.addf %135, %136 : vector<16x32xf32>
    %c0_40 = arith.constant 0 : index
    %c0_41 = arith.constant 0 : index
    %c0_42 = arith.constant 0 : index
    %138 = vector.load %arg7[%c0_40, %c0_41, %c0_42] : memref<6x32x128xf32, #tpu.memory_space<vmem>>, vector<1x32x128xf32>
    %139 = vector.shape_cast %138 : vector<1x32x128xf32> to vector<32x128xf32>
    %cst_43 = arith.constant dense<0.000000e+00> : vector<16x128xf32>
    %140 = tpu.matmul %137, %139, %cst_43 {dimension_numbers = #tpu.dot_dimension_numbers<[1], [0], [0], [1], [0, 0, 1, 1], [], []>} : vector<16x32xf32>, vector<32x128xf32>, vector<16x128xf32> -> vector<16x128xf32>
    %c0_44 = arith.constant 0 : index
    %c0_45 = arith.constant 0 : index
    %c0_46 = arith.constant 0 : index
    %141 = vector.load %arg8[%c0_44, %c0_45, %c0_46] : memref<6x1x128xf32, #tpu.memory_space<vmem>>, vector<1x1x128xf32>
    %142 = vector.shape_cast %141 : vector<1x1x128xf32> to vector<1x128xf32>
    %143 = vector.broadcast %142 : vector<1x128xf32> to vector<16x128xf32>
    %144 = arith.addf %140, %143 : vector<16x128xf32>
    %cst_47 = arith.constant 0.000000e+00 : f32
    %145 = vector.broadcast %cst_47 : f32 to vector<16x128xf32>
    %146 = arith.maximumf %144, %145 : vector<16x128xf32>
    %c0_48 = arith.constant 0 : index
    %c0_49 = arith.constant 0 : index
    %c0_50 = arith.constant 0 : index
    %147 = vector.load %arg9[%c0_48, %c0_49, %c0_50] : memref<6x128x32xf32, #tpu.memory_space<vmem>>, vector<1x128x32xf32>
    %148 = vector.shape_cast %147 : vector<1x128x32xf32> to vector<128x32xf32>
    %cst_51 = arith.constant dense<0.000000e+00> : vector<16x32xf32>
    %149 = tpu.matmul %146, %148, %cst_51 {dimension_numbers = #tpu.dot_dimension_numbers<[1], [0], [0], [1], [0, 0, 1, 1], [], []>} : vector<16x128xf32>, vector<128x32xf32>, vector<16x32xf32> -> vector<16x32xf32>
    %150 = vector.broadcast %10 : vector<1x32xf32> to vector<16x32xf32>
    %151 = arith.addf %149, %150 : vector<16x32xf32>
    %152 = arith.addf %137, %151 : vector<16x32xf32>
    %cst_52 = arith.constant dense<0.000000e+00> : vector<16xf32>
    %153 = vector.multi_reduction <add>, %152, %cst_52 [1] : vector<16x32xf32> to vector<16xf32>
    %154 = vector.shape_cast %153 : vector<16xf32> to vector<16x1xf32>
    %cst_53 = arith.constant 3.200000e+01 : f32
    %155 = vector.broadcast %cst_53 : f32 to vector<16x1xf32>
    %156 = arith.divf %154, %155 : vector<16x1xf32>
    %157 = arith.mulf %152, %152 : vector<16x32xf32>
    %cst_54 = arith.constant dense<0.000000e+00> : vector<16xf32>
    %158 = vector.multi_reduction <add>, %157, %cst_54 [1] : vector<16x32xf32> to vector<16xf32>
    %159 = vector.shape_cast %158 : vector<16xf32> to vector<16x1xf32>
    %cst_55 = arith.constant 3.200000e+01 : f32
    %160 = vector.broadcast %cst_55 : f32 to vector<16x1xf32>
    %161 = arith.divf %159, %160 : vector<16x1xf32>
    %162 = arith.mulf %156, %156 : vector<16x1xf32>
    %163 = arith.subf %161, %162 : vector<16x1xf32>
    %164 = vector.broadcast %156 : vector<16x1xf32> to vector<16x32xf32>
    %165 = arith.subf %152, %164 : vector<16x32xf32>
    %cst_56 = arith.constant 9.99999974E-6 : f32
    %166 = vector.broadcast %cst_56 : f32 to vector<16x1xf32>
    %167 = arith.addf %163, %166 : vector<16x1xf32>
    %168 = math.rsqrt %167 : vector<16x1xf32>
    %169 = vector.broadcast %168 : vector<16x1xf32> to vector<16x32xf32>
    %170 = arith.mulf %165, %169 : vector<16x32xf32>
    %171 = vector.broadcast %13 : vector<1x32xf32> to vector<16x32xf32>
    %172 = arith.mulf %170, %171 : vector<16x32xf32>
    %173 = vector.broadcast %14 : vector<1x32xf32> to vector<16x32xf32>
    %174 = arith.addf %172, %173 : vector<16x32xf32>
    %c1 = arith.constant 1 : index
    %c0_57 = arith.constant 0 : index
    %c0_58 = arith.constant 0 : index
    %175 = vector.load %arg10[%c1, %c0_57, %c0_58] : memref<6x6x32xf32, #tpu.memory_space<vmem>>, vector<1x6x32xf32>
    %176 = vector.shape_cast %175 : vector<1x6x32xf32> to vector<6x32xf32>
    %177 = vector.extract_strided_slice %176 {offsets = [0, 0], sizes = [1, 32], strides = [1, 1]} : vector<6x32xf32> to vector<1x32xf32>
    %178 = vector.extract_strided_slice %176 {offsets = [1, 0], sizes = [1, 32], strides = [1, 1]} : vector<6x32xf32> to vector<1x32xf32>
    %179 = vector.extract_strided_slice %176 {offsets = [2, 0], sizes = [1, 32], strides = [1, 1]} : vector<6x32xf32> to vector<1x32xf32>
    %180 = vector.extract_strided_slice %176 {offsets = [3, 0], sizes = [1, 32], strides = [1, 1]} : vector<6x32xf32> to vector<1x32xf32>
    %181 = vector.extract_strided_slice %176 {offsets = [4, 0], sizes = [1, 32], strides = [1, 1]} : vector<6x32xf32> to vector<1x32xf32>
    %182 = vector.extract_strided_slice %176 {offsets = [5, 0], sizes = [1, 32], strides = [1, 1]} : vector<6x32xf32> to vector<1x32xf32>
    %c1_59 = arith.constant 1 : index
    %c0_60 = arith.constant 0 : index
    %c0_61 = arith.constant 0 : index
    %183 = vector.load %arg4[%c1_59, %c0_60, %c0_61] : memref<6x32x96xf32, #tpu.memory_space<vmem>>, vector<1x32x96xf32>
    %184 = vector.shape_cast %183 : vector<1x32x96xf32> to vector<32x96xf32>
    %cst_62 = arith.constant dense<0.000000e+00> : vector<16x96xf32>
    %185 = tpu.matmul %174, %184, %cst_62 {dimension_numbers = #tpu.dot_dimension_numbers<[1], [0], [0], [1], [0, 0, 1, 1], [], []>} : vector<16x32xf32>, vector<32x96xf32>, vector<16x96xf32> -> vector<16x96xf32>
    %c1_63 = arith.constant 1 : index
    %c0_64 = arith.constant 0 : index
    %c0_65 = arith.constant 0 : index
    %186 = vector.load %arg5[%c1_63, %c0_64, %c0_65] : memref<6x1x96xf32, #tpu.memory_space<vmem>>, vector<1x1x96xf32>
    %187 = vector.shape_cast %186 : vector<1x1x96xf32> to vector<1x96xf32>
    %188 = vector.broadcast %187 : vector<1x96xf32> to vector<16x96xf32>
    %189 = arith.addf %185, %188 : vector<16x96xf32>
    %190 = vector.extract_strided_slice %189 {offsets = [0, 0], sizes = [16, 4], strides = [1, 1]} : vector<16x96xf32> to vector<16x4xf32>
    %191 = vector.shape_cast %190 : vector<16x4xf32> to vector<1x16x4xf32>
    %192 = vector.extract_strided_slice %189 {offsets = [0, 4], sizes = [16, 4], strides = [1, 1]} : vector<16x96xf32> to vector<16x4xf32>
    %193 = vector.shape_cast %192 : vector<16x4xf32> to vector<1x16x4xf32>
    %194 = vector.extract_strided_slice %189 {offsets = [0, 8], sizes = [16, 4], strides = [1, 1]} : vector<16x96xf32> to vector<16x4xf32>
    %195 = vector.shape_cast %194 : vector<16x4xf32> to vector<1x16x4xf32>
    %196 = vector.extract_strided_slice %189 {offsets = [0, 12], sizes = [16, 4], strides = [1, 1]} : vector<16x96xf32> to vector<16x4xf32>
    %197 = vector.shape_cast %196 : vector<16x4xf32> to vector<1x16x4xf32>
    %198 = vector.extract_strided_slice %189 {offsets = [0, 16], sizes = [16, 4], strides = [1, 1]} : vector<16x96xf32> to vector<16x4xf32>
    %199 = vector.shape_cast %198 : vector<16x4xf32> to vector<1x16x4xf32>
    %200 = vector.extract_strided_slice %189 {offsets = [0, 20], sizes = [16, 4], strides = [1, 1]} : vector<16x96xf32> to vector<16x4xf32>
    %201 = vector.shape_cast %200 : vector<16x4xf32> to vector<1x16x4xf32>
    %202 = vector.extract_strided_slice %189 {offsets = [0, 24], sizes = [16, 4], strides = [1, 1]} : vector<16x96xf32> to vector<16x4xf32>
    %203 = vector.shape_cast %202 : vector<16x4xf32> to vector<1x16x4xf32>
    %204 = vector.extract_strided_slice %189 {offsets = [0, 28], sizes = [16, 4], strides = [1, 1]} : vector<16x96xf32> to vector<16x4xf32>
    %205 = vector.shape_cast %204 : vector<16x4xf32> to vector<1x16x4xf32>
    %206 = tpu.concatenate %191, %193, %195, %197, %199, %201, %203, %205 in 0 : vector<1x16x4xf32>, vector<1x16x4xf32>, vector<1x16x4xf32>, vector<1x16x4xf32>, vector<1x16x4xf32>, vector<1x16x4xf32>, vector<1x16x4xf32>, vector<1x16x4xf32> -> vector<8x16x4xf32>
    %207 = vector.extract_strided_slice %189 {offsets = [0, 32], sizes = [16, 4], strides = [1, 1]} : vector<16x96xf32> to vector<16x4xf32>
    %208 = vector.shape_cast %207 : vector<16x4xf32> to vector<1x16x4xf32>
    %209 = vector.extract_strided_slice %189 {offsets = [0, 36], sizes = [16, 4], strides = [1, 1]} : vector<16x96xf32> to vector<16x4xf32>
    %210 = vector.shape_cast %209 : vector<16x4xf32> to vector<1x16x4xf32>
    %211 = vector.extract_strided_slice %189 {offsets = [0, 40], sizes = [16, 4], strides = [1, 1]} : vector<16x96xf32> to vector<16x4xf32>
    %212 = vector.shape_cast %211 : vector<16x4xf32> to vector<1x16x4xf32>
    %213 = vector.extract_strided_slice %189 {offsets = [0, 44], sizes = [16, 4], strides = [1, 1]} : vector<16x96xf32> to vector<16x4xf32>
    %214 = vector.shape_cast %213 : vector<16x4xf32> to vector<1x16x4xf32>
    %215 = vector.extract_strided_slice %189 {offsets = [0, 48], sizes = [16, 4], strides = [1, 1]} : vector<16x96xf32> to vector<16x4xf32>
    %216 = vector.shape_cast %215 : vector<16x4xf32> to vector<1x16x4xf32>
    %217 = vector.extract_strided_slice %189 {offsets = [0, 52], sizes = [16, 4], strides = [1, 1]} : vector<16x96xf32> to vector<16x4xf32>
    %218 = vector.shape_cast %217 : vector<16x4xf32> to vector<1x16x4xf32>
    %219 = vector.extract_strided_slice %189 {offsets = [0, 56], sizes = [16, 4], strides = [1, 1]} : vector<16x96xf32> to vector<16x4xf32>
    %220 = vector.shape_cast %219 : vector<16x4xf32> to vector<1x16x4xf32>
    %221 = vector.extract_strided_slice %189 {offsets = [0, 60], sizes = [16, 4], strides = [1, 1]} : vector<16x96xf32> to vector<16x4xf32>
    %222 = vector.shape_cast %221 : vector<16x4xf32> to vector<1x16x4xf32>
    %223 = tpu.concatenate %208, %210, %212, %214, %216, %218, %220, %222 in 0 : vector<1x16x4xf32>, vector<1x16x4xf32>, vector<1x16x4xf32>, vector<1x16x4xf32>, vector<1x16x4xf32>, vector<1x16x4xf32>, vector<1x16x4xf32>, vector<1x16x4xf32> -> vector<8x16x4xf32>
    %224 = vector.extract_strided_slice %189 {offsets = [0, 64], sizes = [16, 4], strides = [1, 1]} : vector<16x96xf32> to vector<16x4xf32>
    %225 = vector.shape_cast %224 : vector<16x4xf32> to vector<1x16x4xf32>
    %226 = vector.extract_strided_slice %189 {offsets = [0, 68], sizes = [16, 4], strides = [1, 1]} : vector<16x96xf32> to vector<16x4xf32>
    %227 = vector.shape_cast %226 : vector<16x4xf32> to vector<1x16x4xf32>
    %228 = vector.extract_strided_slice %189 {offsets = [0, 72], sizes = [16, 4], strides = [1, 1]} : vector<16x96xf32> to vector<16x4xf32>
    %229 = vector.shape_cast %228 : vector<16x4xf32> to vector<1x16x4xf32>
    %230 = vector.extract_strided_slice %189 {offsets = [0, 76], sizes = [16, 4], strides = [1, 1]} : vector<16x96xf32> to vector<16x4xf32>
    %231 = vector.shape_cast %230 : vector<16x4xf32> to vector<1x16x4xf32>
    %232 = vector.extract_strided_slice %189 {offsets = [0, 80], sizes = [16, 4], strides = [1, 1]} : vector<16x96xf32> to vector<16x4xf32>
    %233 = vector.shape_cast %232 : vector<16x4xf32> to vector<1x16x4xf32>
    %234 = vector.extract_strided_slice %189 {offsets = [0, 84], sizes = [16, 4], strides = [1, 1]} : vector<16x96xf32> to vector<16x4xf32>
    %235 = vector.shape_cast %234 : vector<16x4xf32> to vector<1x16x4xf32>
    %236 = vector.extract_strided_slice %189 {offsets = [0, 88], sizes = [16, 4], strides = [1, 1]} : vector<16x96xf32> to vector<16x4xf32>
    %237 = vector.shape_cast %236 : vector<16x4xf32> to vector<1x16x4xf32>
    %238 = vector.extract_strided_slice %189 {offsets = [0, 92], sizes = [16, 4], strides = [1, 1]} : vector<16x96xf32> to vector<16x4xf32>
    %239 = vector.shape_cast %238 : vector<16x4xf32> to vector<1x16x4xf32>
    %240 = tpu.concatenate %225, %227, %229, %231, %233, %235, %237, %239 in 0 : vector<1x16x4xf32>, vector<1x16x4xf32>, vector<1x16x4xf32>, vector<1x16x4xf32>, vector<1x16x4xf32>, vector<1x16x4xf32>, vector<1x16x4xf32>, vector<1x16x4xf32> -> vector<8x16x4xf32>
    %cst_66 = arith.constant dense<0.000000e+00> : vector<8x16x16xf32>
    %241 = tpu.matmul %206, %223, %cst_66 {dimension_numbers = #tpu.dot_dimension_numbers<[2], [2], [1], [1], [0, 0, 0, 1, 1, 1], [0], [0]>} : vector<8x16x4xf32>, vector<8x16x4xf32>, vector<8x16x16xf32> -> vector<8x16x16xf32>
    %cst_67 = arith.constant dense<0xFF800000> : vector<8x16xf32>
    %242 = vector.multi_reduction <maximumf>, %241, %cst_67 [2] : vector<8x16x16xf32> to vector<8x16xf32>
    %243 = vector.shape_cast %242 : vector<8x16xf32> to vector<8x16x1xf32>
    %244 = vector.broadcast %243 : vector<8x16x1xf32> to vector<8x16x16xf32>
    %245 = arith.subf %241, %244 : vector<8x16x16xf32>
    %246 = math.exp %245 : vector<8x16x16xf32>
    %cst_68 = arith.constant dense<0.000000e+00> : vector<8x16xf32>
    %247 = vector.multi_reduction <add>, %246, %cst_68 [2] : vector<8x16x16xf32> to vector<8x16xf32>
    %248 = vector.shape_cast %247 : vector<8x16xf32> to vector<8x16x1xf32>
    %249 = tpu.reciprocal %248 {approx = true} : vector<8x16x1xf32> -> vector<8x16x1xf32>
    %250 = vector.broadcast %249 : vector<8x16x1xf32> to vector<8x16x16xf32>
    %251 = arith.mulf %246, %250 : vector<8x16x16xf32>
    %cst_69 = arith.constant dense<0.000000e+00> : vector<8x16x4xf32>
    %252 = tpu.matmul %251, %240, %cst_69 {dimension_numbers = #tpu.dot_dimension_numbers<[2], [1], [1], [2], [0, 0, 0, 1, 1, 2], [0], [0]>} : vector<8x16x16xf32>, vector<8x16x4xf32>, vector<8x16x4xf32> -> vector<8x16x4xf32>
    %253 = vector.extract_strided_slice %252 {offsets = [0, 0, 0], sizes = [1, 16, 4], strides = [1, 1, 1]} : vector<8x16x4xf32> to vector<1x16x4xf32>
    %254 = vector.shape_cast %253 : vector<1x16x4xf32> to vector<16x4xf32>
    %c0_70 = arith.constant 0 : index
    %c0_71 = arith.constant 0 : index
    %255 = vector.load %arg12[%c0_70, %c0_71] : memref<16x32xf32, #tpu.memory_space<vmem>>, vector<16x4xf32>
    tpu.vector_store %arg12[%c0_70, %c0_71], %254 {strides = array<i32>} : memref<16x32xf32, #tpu.memory_space<vmem>>, vector<16x4xf32>,
    %256 = vector.extract_strided_slice %252 {offsets = [1, 0, 0], sizes = [1, 16, 4], strides = [1, 1, 1]} : vector<8x16x4xf32> to vector<1x16x4xf32>
    %257 = vector.shape_cast %256 : vector<1x16x4xf32> to vector<16x4xf32>
    %c0_72 = arith.constant 0 : index
    %c4_73 = arith.constant 4 : index
    %258 = vector.load %arg12[%c0_72, %c4_73] : memref<16x32xf32, #tpu.memory_space<vmem>>, vector<16x4xf32>
    tpu.vector_store %arg12[%c0_72, %c4_73], %257 {strides = array<i32>} : memref<16x32xf32, #tpu.memory_space<vmem>>, vector<16x4xf32>,
    %259 = vector.extract_strided_slice %252 {offsets = [2, 0, 0], sizes = [1, 16, 4], strides = [1, 1, 1]} : vector<8x16x4xf32> to vector<1x16x4xf32>
    %260 = vector.shape_cast %259 : vector<1x16x4xf32> to vector<16x4xf32>
    %c0_74 = arith.constant 0 : index
    %c8_75 = arith.constant 8 : index
    %261 = vector.load %arg12[%c0_74, %c8_75] : memref<16x32xf32, #tpu.memory_space<vmem>>, vector<16x4xf32>
    tpu.vector_store %arg12[%c0_74, %c8_75], %260 {strides = array<i32>} : memref<16x32xf32, #tpu.memory_space<vmem>>, vector<16x4xf32>,
    %262 = vector.extract_strided_slice %252 {offsets = [3, 0, 0], sizes = [1, 16, 4], strides = [1, 1, 1]} : vector<8x16x4xf32> to vector<1x16x4xf32>
    %263 = vector.shape_cast %262 : vector<1x16x4xf32> to vector<16x4xf32>
    %c0_76 = arith.constant 0 : index
    %c12_77 = arith.constant 12 : index
    %264 = vector.load %arg12[%c0_76, %c12_77] : memref<16x32xf32, #tpu.memory_space<vmem>>, vector<16x4xf32>
    tpu.vector_store %arg12[%c0_76, %c12_77], %263 {strides = array<i32>} : memref<16x32xf32, #tpu.memory_space<vmem>>, vector<16x4xf32>,
    %265 = vector.extract_strided_slice %252 {offsets = [4, 0, 0], sizes = [1, 16, 4], strides = [1, 1, 1]} : vector<8x16x4xf32> to vector<1x16x4xf32>
    %266 = vector.shape_cast %265 : vector<1x16x4xf32> to vector<16x4xf32>
    %c0_78 = arith.constant 0 : index
    %c16_79 = arith.constant 16 : index
    %267 = vector.load %arg12[%c0_78, %c16_79] : memref<16x32xf32, #tpu.memory_space<vmem>>, vector<16x4xf32>
    tpu.vector_store %arg12[%c0_78, %c16_79], %266 {strides = array<i32>} : memref<16x32xf32, #tpu.memory_space<vmem>>, vector<16x4xf32>,
    %268 = vector.extract_strided_slice %252 {offsets = [5, 0, 0], sizes = [1, 16, 4], strides = [1, 1, 1]} : vector<8x16x4xf32> to vector<1x16x4xf32>
    %269 = vector.shape_cast %268 : vector<1x16x4xf32> to vector<16x4xf32>
    %c0_80 = arith.constant 0 : index
    %c20_81 = arith.constant 20 : index
    %270 = vector.load %arg12[%c0_80, %c20_81] : memref<16x32xf32, #tpu.memory_space<vmem>>, vector<16x4xf32>
    tpu.vector_store %arg12[%c0_80, %c20_81], %269 {strides = array<i32>} : memref<16x32xf32, #tpu.memory_space<vmem>>, vector<16x4xf32>,
    %271 = vector.extract_strided_slice %252 {offsets = [6, 0, 0], sizes = [1, 16, 4], strides = [1, 1, 1]} : vector<8x16x4xf32> to vector<1x16x4xf32>
    %272 = vector.shape_cast %271 : vector<1x16x4xf32> to vector<16x4xf32>
    %c0_82 = arith.constant 0 : index
    %c24_83 = arith.constant 24 : index
    %273 = vector.load %arg12[%c0_82, %c24_83] : memref<16x32xf32, #tpu.memory_space<vmem>>, vector<16x4xf32>
    tpu.vector_store %arg12[%c0_82, %c24_83], %272 {strides = array<i32>} : memref<16x32xf32, #tpu.memory_space<vmem>>, vector<16x4xf32>,
    %274 = vector.extract_strided_slice %252 {offsets = [7, 0, 0], sizes = [1, 16, 4], strides = [1, 1, 1]} : vector<8x16x4xf32> to vector<1x16x4xf32>
    %275 = vector.shape_cast %274 : vector<1x16x4xf32> to vector<16x4xf32>
    %c0_84 = arith.constant 0 : index
    %c28_85 = arith.constant 28 : index
    %276 = vector.load %arg12[%c0_84, %c28_85] : memref<16x32xf32, #tpu.memory_space<vmem>>, vector<16x4xf32>
    tpu.vector_store %arg12[%c0_84, %c28_85], %275 {strides = array<i32>} : memref<16x32xf32, #tpu.memory_space<vmem>>, vector<16x4xf32>,
    %c0_86 = arith.constant 0 : index
    %c0_87 = arith.constant 0 : index
    %277 = vector.load %arg12[%c0_86, %c0_87] : memref<16x32xf32, #tpu.memory_space<vmem>>, vector<16x32xf32>
    %c1_88 = arith.constant 1 : index
    %c0_89 = arith.constant 0 : index
    %c0_90 = arith.constant 0 : index
    %278 = vector.load %arg6[%c1_88, %c0_89, %c0_90] : memref<6x32x32xf32, #tpu.memory_space<vmem>>, vector<1x32x32xf32>
    %279 = vector.shape_cast %278 : vector<1x32x32xf32> to vector<32x32xf32>
    %cst_91 = arith.constant dense<0.000000e+00> : vector<16x32xf32>
    %280 = tpu.matmul %277, %279, %cst_91 {dimension_numbers = #tpu.dot_dimension_numbers<[1], [0], [0], [1], [0, 0, 1, 1], [], []>} : vector<16x32xf32>, vector<32x32xf32>, vector<16x32xf32> -> vector<16x32xf32>
    %281 = vector.broadcast %177 : vector<1x32xf32> to vector<16x32xf32>
    %282 = arith.addf %280, %281 : vector<16x32xf32>
    %283 = arith.addf %174, %282 : vector<16x32xf32>
    %cst_92 = arith.constant dense<0.000000e+00> : vector<16xf32>
    %284 = vector.multi_reduction <add>, %283, %cst_92 [1] : vector<16x32xf32> to vector<16xf32>
    %285 = vector.shape_cast %284 : vector<16xf32> to vector<16x1xf32>
    %cst_93 = arith.constant 3.200000e+01 : f32
    %286 = vector.broadcast %cst_93 : f32 to vector<16x1xf32>
    %287 = arith.divf %285, %286 : vector<16x1xf32>
    %288 = arith.mulf %283, %283 : vector<16x32xf32>
    %cst_94 = arith.constant dense<0.000000e+00> : vector<16xf32>
    %289 = vector.multi_reduction <add>, %288, %cst_94 [1] : vector<16x32xf32> to vector<16xf32>
    %290 = vector.shape_cast %289 : vector<16xf32> to vector<16x1xf32>
    %cst_95 = arith.constant 3.200000e+01 : f32
    %291 = vector.broadcast %cst_95 : f32 to vector<16x1xf32>
    %292 = arith.divf %290, %291 : vector<16x1xf32>
    %293 = arith.mulf %287, %287 : vector<16x1xf32>
    %294 = arith.subf %292, %293 : vector<16x1xf32>
    %295 = vector.broadcast %287 : vector<16x1xf32> to vector<16x32xf32>
    %296 = arith.subf %283, %295 : vector<16x32xf32>
    %cst_96 = arith.constant 9.99999974E-6 : f32
    %297 = vector.broadcast %cst_96 : f32 to vector<16x1xf32>
    %298 = arith.addf %294, %297 : vector<16x1xf32>
    %299 = math.rsqrt %298 : vector<16x1xf32>
    %300 = vector.broadcast %299 : vector<16x1xf32> to vector<16x32xf32>
    %301 = arith.mulf %296, %300 : vector<16x32xf32>
    %302 = vector.broadcast %179 : vector<1x32xf32> to vector<16x32xf32>
    %303 = arith.mulf %301, %302 : vector<16x32xf32>
    %304 = vector.broadcast %180 : vector<1x32xf32> to vector<16x32xf32>
    %305 = arith.addf %303, %304 : vector<16x32xf32>
    %c1_97 = arith.constant 1 : index
    %c0_98 = arith.constant 0 : index
    %c0_99 = arith.constant 0 : index
    %306 = vector.load %arg7[%c1_97, %c0_98, %c0_99] : memref<6x32x128xf32, #tpu.memory_space<vmem>>, vector<1x32x128xf32>
    %307 = vector.shape_cast %306 : vector<1x32x128xf32> to vector<32x128xf32>
    %cst_100 = arith.constant dense<0.000000e+00> : vector<16x128xf32>
    %308 = tpu.matmul %305, %307, %cst_100 {dimension_numbers = #tpu.dot_dimension_numbers<[1], [0], [0], [1], [0, 0, 1, 1], [], []>} : vector<16x32xf32>, vector<32x128xf32>, vector<16x128xf32> -> vector<16x128xf32>
    %c1_101 = arith.constant 1 : index
    %c0_102 = arith.constant 0 : index
    %c0_103 = arith.constant 0 : index
    %309 = vector.load %arg8[%c1_101, %c0_102, %c0_103] : memref<6x1x128xf32, #tpu.memory_space<vmem>>, vector<1x1x128xf32>
    %310 = vector.shape_cast %309 : vector<1x1x128xf32> to vector<1x128xf32>
    %311 = vector.broadcast %310 : vector<1x128xf32> to vector<16x128xf32>
    %312 = arith.addf %308, %311 : vector<16x128xf32>
    %cst_104 = arith.constant 0.000000e+00 : f32
    %313 = vector.broadcast %cst_104 : f32 to vector<16x128xf32>
    %314 = arith.maximumf %312, %313 : vector<16x128xf32>
    %c1_105 = arith.constant 1 : index
    %c0_106 = arith.constant 0 : index
    %c0_107 = arith.constant 0 : index
    %315 = vector.load %arg9[%c1_105, %c0_106, %c0_107] : memref<6x128x32xf32, #tpu.memory_space<vmem>>, vector<1x128x32xf32>
    %316 = vector.shape_cast %315 : vector<1x128x32xf32> to vector<128x32xf32>
    %cst_108 = arith.constant dense<0.000000e+00> : vector<16x32xf32>
    %317 = tpu.matmul %314, %316, %cst_108 {dimension_numbers = #tpu.dot_dimension_numbers<[1], [0], [0], [1], [0, 0, 1, 1], [], []>} : vector<16x128xf32>, vector<128x32xf32>, vector<16x32xf32> -> vector<16x32xf32>
    %318 = vector.broadcast %178 : vector<1x32xf32> to vector<16x32xf32>
    %319 = arith.addf %317, %318 : vector<16x32xf32>
    %320 = arith.addf %305, %319 : vector<16x32xf32>
    %cst_109 = arith.constant dense<0.000000e+00> : vector<16xf32>
    %321 = vector.multi_reduction <add>, %320, %cst_109 [1] : vector<16x32xf32> to vector<16xf32>
    %322 = vector.shape_cast %321 : vector<16xf32> to vector<16x1xf32>
    %cst_110 = arith.constant 3.200000e+01 : f32
    %323 = vector.broadcast %cst_110 : f32 to vector<16x1xf32>
    %324 = arith.divf %322, %323 : vector<16x1xf32>
    %325 = arith.mulf %320, %320 : vector<16x32xf32>
    %cst_111 = arith.constant dense<0.000000e+00> : vector<16xf32>
    %326 = vector.multi_reduction <add>, %325, %cst_111 [1] : vector<16x32xf32> to vector<16xf32>
    %327 = vector.shape_cast %326 : vector<16xf32> to vector<16x1xf32>
    %cst_112 = arith.constant 3.200000e+01 : f32
    %328 = vector.broadcast %cst_112 : f32 to vector<16x1xf32>
    %329 = arith.divf %327, %328 : vector<16x1xf32>
    %330 = arith.mulf %324, %324 : vector<16x1xf32>
    %331 = arith.subf %329, %330 : vector<16x1xf32>
    %332 = vector.broadcast %324 : vector<16x1xf32> to vector<16x32xf32>
    %333 = arith.subf %320, %332 : vector<16x32xf32>
    %cst_113 = arith.constant 9.99999974E-6 : f32
    %334 = vector.broadcast %cst_113 : f32 to vector<16x1xf32>
    %335 = arith.addf %331, %334 : vector<16x1xf32>
    %336 = math.rsqrt %335 : vector<16x1xf32>
    %337 = vector.broadcast %336 : vector<16x1xf32> to vector<16x32xf32>
    %338 = arith.mulf %333, %337 : vector<16x32xf32>
    %339 = vector.broadcast %181 : vector<1x32xf32> to vector<16x32xf32>
    %340 = arith.mulf %338, %339 : vector<16x32xf32>
    %341 = vector.broadcast %182 : vector<1x32xf32> to vector<16x32xf32>
    %342 = arith.addf %340, %341 : vector<16x32xf32>
    %c2 = arith.constant 2 : index
    %c0_114 = arith.constant 0 : index
    %c0_115 = arith.constant 0 : index
    %343 = vector.load %arg10[%c2, %c0_114, %c0_115] : memref<6x6x32xf32, #tpu.memory_space<vmem>>, vector<1x6x32xf32>
    %344 = vector.shape_cast %343 : vector<1x6x32xf32> to vector<6x32xf32>
    %345 = vector.extract_strided_slice %344 {offsets = [0, 0], sizes = [1, 32], strides = [1, 1]} : vector<6x32xf32> to vector<1x32xf32>
    %346 = vector.extract_strided_slice %344 {offsets = [1, 0], sizes = [1, 32], strides = [1, 1]} : vector<6x32xf32> to vector<1x32xf32>
    %347 = vector.extract_strided_slice %344 {offsets = [2, 0], sizes = [1, 32], strides = [1, 1]} : vector<6x32xf32> to vector<1x32xf32>
    %348 = vector.extract_strided_slice %344 {offsets = [3, 0], sizes = [1, 32], strides = [1, 1]} : vector<6x32xf32> to vector<1x32xf32>
    %349 = vector.extract_strided_slice %344 {offsets = [4, 0], sizes = [1, 32], strides = [1, 1]} : vector<6x32xf32> to vector<1x32xf32>
    %350 = vector.extract_strided_slice %344 {offsets = [5, 0], sizes = [1, 32], strides = [1, 1]} : vector<6x32xf32> to vector<1x32xf32>
    %c2_116 = arith.constant 2 : index
    %c0_117 = arith.constant 0 : index
    %c0_118 = arith.constant 0 : index
    %351 = vector.load %arg4[%c2_116, %c0_117, %c0_118] : memref<6x32x96xf32, #tpu.memory_space<vmem>>, vector<1x32x96xf32>
    %352 = vector.shape_cast %351 : vector<1x32x96xf32> to vector<32x96xf32>
    %cst_119 = arith.constant dense<0.000000e+00> : vector<16x96xf32>
    %353 = tpu.matmul %342, %352, %cst_119 {dimension_numbers = #tpu.dot_dimension_numbers<[1], [0], [0], [1], [0, 0, 1, 1], [], []>} : vector<16x32xf32>, vector<32x96xf32>, vector<16x96xf32> -> vector<16x96xf32>
    %c2_120 = arith.constant 2 : index
    %c0_121 = arith.constant 0 : index
    %c0_122 = arith.constant 0 : index
    %354 = vector.load %arg5[%c2_120, %c0_121, %c0_122] : memref<6x1x96xf32, #tpu.memory_space<vmem>>, vector<1x1x96xf32>
    %355 = vector.shape_cast %354 : vector<1x1x96xf32> to vector<1x96xf32>
    %356 = vector.broadcast %355 : vector<1x96xf32> to vector<16x96xf32>
    %357 = arith.addf %353, %356 : vector<16x96xf32>
    %358 = vector.extract_strided_slice %357 {offsets = [0, 0], sizes = [16, 4], strides = [1, 1]} : vector<16x96xf32> to vector<16x4xf32>
    %359 = vector.shape_cast %358 : vector<16x4xf32> to vector<1x16x4xf32>
    %360 = vector.extract_strided_slice %357 {offsets = [0, 4], sizes = [16, 4], strides = [1, 1]} : vector<16x96xf32> to vector<16x4xf32>
    %361 = vector.shape_cast %360 : vector<16x4xf32> to vector<1x16x4xf32>
    %362 = vector.extract_strided_slice %357 {offsets = [0, 8], sizes = [16, 4], strides = [1, 1]} : vector<16x96xf32> to vector<16x4xf32>
    %363 = vector.shape_cast %362 : vector<16x4xf32> to vector<1x16x4xf32>
    %364 = vector.extract_strided_slice %357 {offsets = [0, 12], sizes = [16, 4], strides = [1, 1]} : vector<16x96xf32> to vector<16x4xf32>
    %365 = vector.shape_cast %364 : vector<16x4xf32> to vector<1x16x4xf32>
    %366 = vector.extract_strided_slice %357 {offsets = [0, 16], sizes = [16, 4], strides = [1, 1]} : vector<16x96xf32> to vector<16x4xf32>
    %367 = vector.shape_cast %366 : vector<16x4xf32> to vector<1x16x4xf32>
    %368 = vector.extract_strided_slice %357 {offsets = [0, 20], sizes = [16, 4], strides = [1, 1]} : vector<16x96xf32> to vector<16x4xf32>
    %369 = vector.shape_cast %368 : vector<16x4xf32> to vector<1x16x4xf32>
    %370 = vector.extract_strided_slice %357 {offsets = [0, 24], sizes = [16, 4], strides = [1, 1]} : vector<16x96xf32> to vector<16x4xf32>
    %371 = vector.shape_cast %370 : vector<16x4xf32> to vector<1x16x4xf32>
    %372 = vector.extract_strided_slice %357 {offsets = [0, 28], sizes = [16, 4], strides = [1, 1]} : vector<16x96xf32> to vector<16x4xf32>
    %373 = vector.shape_cast %372 : vector<16x4xf32> to vector<1x16x4xf32>
    %374 = tpu.concatenate %359, %361, %363, %365, %367, %369, %371, %373 in 0 : vector<1x16x4xf32>, vector<1x16x4xf32>, vector<1x16x4xf32>, vector<1x16x4xf32>, vector<1x16x4xf32>, vector<1x16x4xf32>, vector<1x16x4xf32>, vector<1x16x4xf32> -> vector<8x16x4xf32>
    %375 = vector.extract_strided_slice %357 {offsets = [0, 32], sizes = [16, 4], strides = [1, 1]} : vector<16x96xf32> to vector<16x4xf32>
    %376 = vector.shape_cast %375 : vector<16x4xf32> to vector<1x16x4xf32>
    %377 = vector.extract_strided_slice %357 {offsets = [0, 36], sizes = [16, 4], strides = [1, 1]} : vector<16x96xf32> to vector<16x4xf32>
    %378 = vector.shape_cast %377 : vector<16x4xf32> to vector<1x16x4xf32>
    %379 = vector.extract_strided_slice %357 {offsets = [0, 40], sizes = [16, 4], strides = [1, 1]} : vector<16x96xf32> to vector<16x4xf32>
    %380 = vector.shape_cast %379 : vector<16x4xf32> to vector<1x16x4xf32>
    %381 = vector.extract_strided_slice %357 {offsets = [0, 44], sizes = [16, 4], strides = [1, 1]} : vector<16x96xf32> to vector<16x4xf32>
    %382 = vector.shape_cast %381 : vector<16x4xf32> to vector<1x16x4xf32>
    %383 = vector.extract_strided_slice %357 {offsets = [0, 48], sizes = [16, 4], strides = [1, 1]} : vector<16x96xf32> to vector<16x4xf32>
    %384 = vector.shape_cast %383 : vector<16x4xf32> to vector<1x16x4xf32>
    %385 = vector.extract_strided_slice %357 {offsets = [0, 52], sizes = [16, 4], strides = [1, 1]} : vector<16x96xf32> to vector<16x4xf32>
    %386 = vector.shape_cast %385 : vector<16x4xf32> to vector<1x16x4xf32>
    %387 = vector.extract_strided_slice %357 {offsets = [0, 56], sizes = [16, 4], strides = [1, 1]} : vector<16x96xf32> to vector<16x4xf32>
    %388 = vector.shape_cast %387 : vector<16x4xf32> to vector<1x16x4xf32>
    %389 = vector.extract_strided_slice %357 {offsets = [0, 60], sizes = [16, 4], strides = [1, 1]} : vector<16x96xf32> to vector<16x4xf32>
    %390 = vector.shape_cast %389 : vector<16x4xf32> to vector<1x16x4xf32>
    %391 = tpu.concatenate %376, %378, %380, %382, %384, %386, %388, %390 in 0 : vector<1x16x4xf32>, vector<1x16x4xf32>, vector<1x16x4xf32>, vector<1x16x4xf32>, vector<1x16x4xf32>, vector<1x16x4xf32>, vector<1x16x4xf32>, vector<1x16x4xf32> -> vector<8x16x4xf32>
    %392 = vector.extract_strided_slice %357 {offsets = [0, 64], sizes = [16, 4], strides = [1, 1]} : vector<16x96xf32> to vector<16x4xf32>
    %393 = vector.shape_cast %392 : vector<16x4xf32> to vector<1x16x4xf32>
    %394 = vector.extract_strided_slice %357 {offsets = [0, 68], sizes = [16, 4], strides = [1, 1]} : vector<16x96xf32> to vector<16x4xf32>
    %395 = vector.shape_cast %394 : vector<16x4xf32> to vector<1x16x4xf32>
    %396 = vector.extract_strided_slice %357 {offsets = [0, 72], sizes = [16, 4], strides = [1, 1]} : vector<16x96xf32> to vector<16x4xf32>
    %397 = vector.shape_cast %396 : vector<16x4xf32> to vector<1x16x4xf32>
    %398 = vector.extract_strided_slice %357 {offsets = [0, 76], sizes = [16, 4], strides = [1, 1]} : vector<16x96xf32> to vector<16x4xf32>
    %399 = vector.shape_cast %398 : vector<16x4xf32> to vector<1x16x4xf32>
    %400 = vector.extract_strided_slice %357 {offsets = [0, 80], sizes = [16, 4], strides = [1, 1]} : vector<16x96xf32> to vector<16x4xf32>
    %401 = vector.shape_cast %400 : vector<16x4xf32> to vector<1x16x4xf32>
    %402 = vector.extract_strided_slice %357 {offsets = [0, 84], sizes = [16, 4], strides = [1, 1]} : vector<16x96xf32> to vector<16x4xf32>
    %403 = vector.shape_cast %402 : vector<16x4xf32> to vector<1x16x4xf32>
    %404 = vector.extract_strided_slice %357 {offsets = [0, 88], sizes = [16, 4], strides = [1, 1]} : vector<16x96xf32> to vector<16x4xf32>
    %405 = vector.shape_cast %404 : vector<16x4xf32> to vector<1x16x4xf32>
    %406 = vector.extract_strided_slice %357 {offsets = [0, 92], sizes = [16, 4], strides = [1, 1]} : vector<16x96xf32> to vector<16x4xf32>
    %407 = vector.shape_cast %406 : vector<16x4xf32> to vector<1x16x4xf32>
    %408 = tpu.concatenate %393, %395, %397, %399, %401, %403, %405, %407 in 0 : vector<1x16x4xf32>, vector<1x16x4xf32>, vector<1x16x4xf32>, vector<1x16x4xf32>, vector<1x16x4xf32>, vector<1x16x4xf32>, vector<1x16x4xf32>, vector<1x16x4xf32> -> vector<8x16x4xf32>
    %cst_123 = arith.constant dense<0.000000e+00> : vector<8x16x16xf32>
    %409 = tpu.matmul %374, %391, %cst_123 {dimension_numbers = #tpu.dot_dimension_numbers<[2], [2], [1], [1], [0, 0, 0, 1, 1, 1], [0], [0]>} : vector<8x16x4xf32>, vector<8x16x4xf32>, vector<8x16x16xf32> -> vector<8x16x16xf32>
    %cst_124 = arith.constant dense<0xFF800000> : vector<8x16xf32>
    %410 = vector.multi_reduction <maximumf>, %409, %cst_124 [2] : vector<8x16x16xf32> to vector<8x16xf32>
    %411 = vector.shape_cast %410 : vector<8x16xf32> to vector<8x16x1xf32>
    %412 = vector.broadcast %411 : vector<8x16x1xf32> to vector<8x16x16xf32>
    %413 = arith.subf %409, %412 : vector<8x16x16xf32>
    %414 = math.exp %413 : vector<8x16x16xf32>
    %cst_125 = arith.constant dense<0.000000e+00> : vector<8x16xf32>
    %415 = vector.multi_reduction <add>, %414, %cst_125 [2] : vector<8x16x16xf32> to vector<8x16xf32>
    %416 = vector.shape_cast %415 : vector<8x16xf32> to vector<8x16x1xf32>
    %417 = tpu.reciprocal %416 {approx = true} : vector<8x16x1xf32> -> vector<8x16x1xf32>
    %418 = vector.broadcast %417 : vector<8x16x1xf32> to vector<8x16x16xf32>
    %419 = arith.mulf %414, %418 : vector<8x16x16xf32>
    %cst_126 = arith.constant dense<0.000000e+00> : vector<8x16x4xf32>
    %420 = tpu.matmul %419, %408, %cst_126 {dimension_numbers = #tpu.dot_dimension_numbers<[2], [1], [1], [2], [0, 0, 0, 1, 1, 2], [0], [0]>} : vector<8x16x16xf32>, vector<8x16x4xf32>, vector<8x16x4xf32> -> vector<8x16x4xf32>
    %421 = vector.extract_strided_slice %420 {offsets = [0, 0, 0], sizes = [1, 16, 4], strides = [1, 1, 1]} : vector<8x16x4xf32> to vector<1x16x4xf32>
    %422 = vector.shape_cast %421 : vector<1x16x4xf32> to vector<16x4xf32>
    %c0_127 = arith.constant 0 : index
    %c0_128 = arith.constant 0 : index
    %423 = vector.load %arg12[%c0_127, %c0_128] : memref<16x32xf32, #tpu.memory_space<vmem>>, vector<16x4xf32>
    tpu.vector_store %arg12[%c0_127, %c0_128], %422 {strides = array<i32>} : memref<16x32xf32, #tpu.memory_space<vmem>>, vector<16x4xf32>,
    %424 = vector.extract_strided_slice %420 {offsets = [1, 0, 0], sizes = [1, 16, 4], strides = [1, 1, 1]} : vector<8x16x4xf32> to vector<1x16x4xf32>
    %425 = vector.shape_cast %424 : vector<1x16x4xf32> to vector<16x4xf32>
    %c0_129 = arith.constant 0 : index
    %c4_130 = arith.constant 4 : index
    %426 = vector.load %arg12[%c0_129, %c4_130] : memref<16x32xf32, #tpu.memory_space<vmem>>, vector<16x4xf32>
    tpu.vector_store %arg12[%c0_129, %c4_130], %425 {strides = array<i32>} : memref<16x32xf32, #tpu.memory_space<vmem>>, vector<16x4xf32>,
    %427 = vector.extract_strided_slice %420 {offsets = [2, 0, 0], sizes = [1, 16, 4], strides = [1, 1, 1]} : vector<8x16x4xf32> to vector<1x16x4xf32>
    %428 = vector.shape_cast %427 : vector<1x16x4xf32> to vector<16x4xf32>
    %c0_131 = arith.constant 0 : index
    %c8_132 = arith.constant 8 : index
    %429 = vector.load %arg12[%c0_131, %c8_132] : memref<16x32xf32, #tpu.memory_space<vmem>>, vector<16x4xf32>
    tpu.vector_store %arg12[%c0_131, %c8_132], %428 {strides = array<i32>} : memref<16x32xf32, #tpu.memory_space<vmem>>, vector<16x4xf32>,
    %430 = vector.extract_strided_slice %420 {offsets = [3, 0, 0], sizes = [1, 16, 4], strides = [1, 1, 1]} : vector<8x16x4xf32> to vector<1x16x4xf32>
    %431 = vector.shape_cast %430 : vector<1x16x4xf32> to vector<16x4xf32>
    %c0_133 = arith.constant 0 : index
    %c12_134 = arith.constant 12 : index
    %432 = vector.load %arg12[%c0_133, %c12_134] : memref<16x32xf32, #tpu.memory_space<vmem>>, vector<16x4xf32>
    tpu.vector_store %arg12[%c0_133, %c12_134], %431 {strides = array<i32>} : memref<16x32xf32, #tpu.memory_space<vmem>>, vector<16x4xf32>,
    %433 = vector.extract_strided_slice %420 {offsets = [4, 0, 0], sizes = [1, 16, 4], strides = [1, 1, 1]} : vector<8x16x4xf32> to vector<1x16x4xf32>
    %434 = vector.shape_cast %433 : vector<1x16x4xf32> to vector<16x4xf32>
    %c0_135 = arith.constant 0 : index
    %c16_136 = arith.constant 16 : index
    %435 = vector.load %arg12[%c0_135, %c16_136] : memref<16x32xf32, #tpu.memory_space<vmem>>, vector<16x4xf32>
    tpu.vector_store %arg12[%c0_135, %c16_136], %434 {strides = array<i32>} : memref<16x32xf32, #tpu.memory_space<vmem>>, vector<16x4xf32>,
    %436 = vector.extract_strided_slice %420 {offsets = [5, 0, 0], sizes = [1, 16, 4], strides = [1, 1, 1]} : vector<8x16x4xf32> to vector<1x16x4xf32>
    %437 = vector.shape_cast %436 : vector<1x16x4xf32> to vector<16x4xf32>
    %c0_137 = arith.constant 0 : index
    %c20_138 = arith.constant 20 : index
    %438 = vector.load %arg12[%c0_137, %c20_138] : memref<16x32xf32, #tpu.memory_space<vmem>>, vector<16x4xf32>
    tpu.vector_store %arg12[%c0_137, %c20_138], %437 {strides = array<i32>} : memref<16x32xf32, #tpu.memory_space<vmem>>, vector<16x4xf32>,
    %439 = vector.extract_strided_slice %420 {offsets = [6, 0, 0], sizes = [1, 16, 4], strides = [1, 1, 1]} : vector<8x16x4xf32> to vector<1x16x4xf32>
    %440 = vector.shape_cast %439 : vector<1x16x4xf32> to vector<16x4xf32>
    %c0_139 = arith.constant 0 : index
    %c24_140 = arith.constant 24 : index
    %441 = vector.load %arg12[%c0_139, %c24_140] : memref<16x32xf32, #tpu.memory_space<vmem>>, vector<16x4xf32>
    tpu.vector_store %arg12[%c0_139, %c24_140], %440 {strides = array<i32>} : memref<16x32xf32, #tpu.memory_space<vmem>>, vector<16x4xf32>,
    %442 = vector.extract_strided_slice %420 {offsets = [7, 0, 0], sizes = [1, 16, 4], strides = [1, 1, 1]} : vector<8x16x4xf32> to vector<1x16x4xf32>
    %443 = vector.shape_cast %442 : vector<1x16x4xf32> to vector<16x4xf32>
    %c0_141 = arith.constant 0 : index
    %c28_142 = arith.constant 28 : index
    %444 = vector.load %arg12[%c0_141, %c28_142] : memref<16x32xf32, #tpu.memory_space<vmem>>, vector<16x4xf32>
    tpu.vector_store %arg12[%c0_141, %c28_142], %443 {strides = array<i32>} : memref<16x32xf32, #tpu.memory_space<vmem>>, vector<16x4xf32>,
    %c0_143 = arith.constant 0 : index
    %c0_144 = arith.constant 0 : index
    %445 = vector.load %arg12[%c0_143, %c0_144] : memref<16x32xf32, #tpu.memory_space<vmem>>, vector<16x32xf32>
    %c2_145 = arith.constant 2 : index
    %c0_146 = arith.constant 0 : index
    %c0_147 = arith.constant 0 : index
    %446 = vector.load %arg6[%c2_145, %c0_146, %c0_147] : memref<6x32x32xf32, #tpu.memory_space<vmem>>, vector<1x32x32xf32>
    %447 = vector.shape_cast %446 : vector<1x32x32xf32> to vector<32x32xf32>
    %cst_148 = arith.constant dense<0.000000e+00> : vector<16x32xf32>
    %448 = tpu.matmul %445, %447, %cst_148 {dimension_numbers = #tpu.dot_dimension_numbers<[1], [0], [0], [1], [0, 0, 1, 1], [], []>} : vector<16x32xf32>, vector<32x32xf32>, vector<16x32xf32> -> vector<16x32xf32>
    %449 = vector.broadcast %345 : vector<1x32xf32> to vector<16x32xf32>
    %450 = arith.addf %448, %449 : vector<16x32xf32>
    %451 = arith.addf %342, %450 : vector<16x32xf32>
    %cst_149 = arith.constant dense<0.000000e+00> : vector<16xf32>
    %452 = vector.multi_reduction <add>, %451, %cst_149 [1] : vector<16x32xf32> to vector<16xf32>
    %453 = vector.shape_cast %452 : vector<16xf32> to vector<16x1xf32>
    %cst_150 = arith.constant 3.200000e+01 : f32
    %454 = vector.broadcast %cst_150 : f32 to vector<16x1xf32>
    %455 = arith.divf %453, %454 : vector<16x1xf32>
    %456 = arith.mulf %451, %451 : vector<16x32xf32>
    %cst_151 = arith.constant dense<0.000000e+00> : vector<16xf32>
    %457 = vector.multi_reduction <add>, %456, %cst_151 [1] : vector<16x32xf32> to vector<16xf32>
    %458 = vector.shape_cast %457 : vector<16xf32> to vector<16x1xf32>
    %cst_152 = arith.constant 3.200000e+01 : f32
    %459 = vector.broadcast %cst_152 : f32 to vector<16x1xf32>
    %460 = arith.divf %458, %459 : vector<16x1xf32>
    %461 = arith.mulf %455, %455 : vector<16x1xf32>
    %462 = arith.subf %460, %461 : vector<16x1xf32>
    %463 = vector.broadcast %455 : vector<16x1xf32> to vector<16x32xf32>
    %464 = arith.subf %451, %463 : vector<16x32xf32>
    %cst_153 = arith.constant 9.99999974E-6 : f32
    %465 = vector.broadcast %cst_153 : f32 to vector<16x1xf32>
    %466 = arith.addf %462, %465 : vector<16x1xf32>
    %467 = math.rsqrt %466 : vector<16x1xf32>
    %468 = vector.broadcast %467 : vector<16x1xf32> to vector<16x32xf32>
    %469 = arith.mulf %464, %468 : vector<16x32xf32>
    %470 = vector.broadcast %347 : vector<1x32xf32> to vector<16x32xf32>
    %471 = arith.mulf %469, %470 : vector<16x32xf32>
    %472 = vector.broadcast %348 : vector<1x32xf32> to vector<16x32xf32>
    %473 = arith.addf %471, %472 : vector<16x32xf32>
    %c2_154 = arith.constant 2 : index
    %c0_155 = arith.constant 0 : index
    %c0_156 = arith.constant 0 : index
    %474 = vector.load %arg7[%c2_154, %c0_155, %c0_156] : memref<6x32x128xf32, #tpu.memory_space<vmem>>, vector<1x32x128xf32>
    %475 = vector.shape_cast %474 : vector<1x32x128xf32> to vector<32x128xf32>
    %cst_157 = arith.constant dense<0.000000e+00> : vector<16x128xf32>
    %476 = tpu.matmul %473, %475, %cst_157 {dimension_numbers = #tpu.dot_dimension_numbers<[1], [0], [0], [1], [0, 0, 1, 1], [], []>} : vector<16x32xf32>, vector<32x128xf32>, vector<16x128xf32> -> vector<16x128xf32>
    %c2_158 = arith.constant 2 : index
    %c0_159 = arith.constant 0 : index
    %c0_160 = arith.constant 0 : index
    %477 = vector.load %arg8[%c2_158, %c0_159, %c0_160] : memref<6x1x128xf32, #tpu.memory_space<vmem>>, vector<1x1x128xf32>
    %478 = vector.shape_cast %477 : vector<1x1x128xf32> to vector<1x128xf32>
    %479 = vector.broadcast %478 : vector<1x128xf32> to vector<16x128xf32>
    %480 = arith.addf %476, %479 : vector<16x128xf32>
    %cst_161 = arith.constant 0.000000e+00 : f32
    %481 = vector.broadcast %cst_161 : f32 to vector<16x128xf32>
    %482 = arith.maximumf %480, %481 : vector<16x128xf32>
    %c2_162 = arith.constant 2 : index
    %c0_163 = arith.constant 0 : index
    %c0_164 = arith.constant 0 : index
    %483 = vector.load %arg9[%c2_162, %c0_163, %c0_164] : memref<6x128x32xf32, #tpu.memory_space<vmem>>, vector<1x128x32xf32>
    %484 = vector.shape_cast %483 : vector<1x128x32xf32> to vector<128x32xf32>
    %cst_165 = arith.constant dense<0.000000e+00> : vector<16x32xf32>
    %485 = tpu.matmul %482, %484, %cst_165 {dimension_numbers = #tpu.dot_dimension_numbers<[1], [0], [0], [1], [0, 0, 1, 1], [], []>} : vector<16x128xf32>, vector<128x32xf32>, vector<16x32xf32> -> vector<16x32xf32>
    %486 = vector.broadcast %346 : vector<1x32xf32> to vector<16x32xf32>
    %487 = arith.addf %485, %486 : vector<16x32xf32>
    %488 = arith.addf %473, %487 : vector<16x32xf32>
    %cst_166 = arith.constant dense<0.000000e+00> : vector<16xf32>
    %489 = vector.multi_reduction <add>, %488, %cst_166 [1] : vector<16x32xf32> to vector<16xf32>
    %490 = vector.shape_cast %489 : vector<16xf32> to vector<16x1xf32>
    %cst_167 = arith.constant 3.200000e+01 : f32
    %491 = vector.broadcast %cst_167 : f32 to vector<16x1xf32>
    %492 = arith.divf %490, %491 : vector<16x1xf32>
    %493 = arith.mulf %488, %488 : vector<16x32xf32>
    %cst_168 = arith.constant dense<0.000000e+00> : vector<16xf32>
    %494 = vector.multi_reduction <add>, %493, %cst_168 [1] : vector<16x32xf32> to vector<16xf32>
    %495 = vector.shape_cast %494 : vector<16xf32> to vector<16x1xf32>
    %cst_169 = arith.constant 3.200000e+01 : f32
    %496 = vector.broadcast %cst_169 : f32 to vector<16x1xf32>
    %497 = arith.divf %495, %496 : vector<16x1xf32>
    %498 = arith.mulf %492, %492 : vector<16x1xf32>
    %499 = arith.subf %497, %498 : vector<16x1xf32>
    %500 = vector.broadcast %492 : vector<16x1xf32> to vector<16x32xf32>
    %501 = arith.subf %488, %500 : vector<16x32xf32>
    %cst_170 = arith.constant 9.99999974E-6 : f32
    %502 = vector.broadcast %cst_170 : f32 to vector<16x1xf32>
    %503 = arith.addf %499, %502 : vector<16x1xf32>
    %504 = math.rsqrt %503 : vector<16x1xf32>
    %505 = vector.broadcast %504 : vector<16x1xf32> to vector<16x32xf32>
    %506 = arith.mulf %501, %505 : vector<16x32xf32>
    %507 = vector.broadcast %349 : vector<1x32xf32> to vector<16x32xf32>
    %508 = arith.mulf %506, %507 : vector<16x32xf32>
    %509 = vector.broadcast %350 : vector<1x32xf32> to vector<16x32xf32>
    %510 = arith.addf %508, %509 : vector<16x32xf32>
    %c3 = arith.constant 3 : index
    %c0_171 = arith.constant 0 : index
    %c0_172 = arith.constant 0 : index
    %511 = vector.load %arg10[%c3, %c0_171, %c0_172] : memref<6x6x32xf32, #tpu.memory_space<vmem>>, vector<1x6x32xf32>
    %512 = vector.shape_cast %511 : vector<1x6x32xf32> to vector<6x32xf32>
    %513 = vector.extract_strided_slice %512 {offsets = [0, 0], sizes = [1, 32], strides = [1, 1]} : vector<6x32xf32> to vector<1x32xf32>
    %514 = vector.extract_strided_slice %512 {offsets = [1, 0], sizes = [1, 32], strides = [1, 1]} : vector<6x32xf32> to vector<1x32xf32>
    %515 = vector.extract_strided_slice %512 {offsets = [2, 0], sizes = [1, 32], strides = [1, 1]} : vector<6x32xf32> to vector<1x32xf32>
    %516 = vector.extract_strided_slice %512 {offsets = [3, 0], sizes = [1, 32], strides = [1, 1]} : vector<6x32xf32> to vector<1x32xf32>
    %517 = vector.extract_strided_slice %512 {offsets = [4, 0], sizes = [1, 32], strides = [1, 1]} : vector<6x32xf32> to vector<1x32xf32>
    %518 = vector.extract_strided_slice %512 {offsets = [5, 0], sizes = [1, 32], strides = [1, 1]} : vector<6x32xf32> to vector<1x32xf32>
    %c3_173 = arith.constant 3 : index
    %c0_174 = arith.constant 0 : index
    %c0_175 = arith.constant 0 : index
    %519 = vector.load %arg4[%c3_173, %c0_174, %c0_175] : memref<6x32x96xf32, #tpu.memory_space<vmem>>, vector<1x32x96xf32>
    %520 = vector.shape_cast %519 : vector<1x32x96xf32> to vector<32x96xf32>
    %cst_176 = arith.constant dense<0.000000e+00> : vector<16x96xf32>
    %521 = tpu.matmul %510, %520, %cst_176 {dimension_numbers = #tpu.dot_dimension_numbers<[1], [0], [0], [1], [0, 0, 1, 1], [], []>} : vector<16x32xf32>, vector<32x96xf32>, vector<16x96xf32> -> vector<16x96xf32>
    %c3_177 = arith.constant 3 : index
    %c0_178 = arith.constant 0 : index
    %c0_179 = arith.constant 0 : index
    %522 = vector.load %arg5[%c3_177, %c0_178, %c0_179] : memref<6x1x96xf32, #tpu.memory_space<vmem>>, vector<1x1x96xf32>
    %523 = vector.shape_cast %522 : vector<1x1x96xf32> to vector<1x96xf32>
    %524 = vector.broadcast %523 : vector<1x96xf32> to vector<16x96xf32>
    %525 = arith.addf %521, %524 : vector<16x96xf32>
    %526 = vector.extract_strided_slice %525 {offsets = [0, 0], sizes = [16, 4], strides = [1, 1]} : vector<16x96xf32> to vector<16x4xf32>
    %527 = vector.shape_cast %526 : vector<16x4xf32> to vector<1x16x4xf32>
    %528 = vector.extract_strided_slice %525 {offsets = [0, 4], sizes = [16, 4], strides = [1, 1]} : vector<16x96xf32> to vector<16x4xf32>
    %529 = vector.shape_cast %528 : vector<16x4xf32> to vector<1x16x4xf32>
    %530 = vector.extract_strided_slice %525 {offsets = [0, 8], sizes = [16, 4], strides = [1, 1]} : vector<16x96xf32> to vector<16x4xf32>
    %531 = vector.shape_cast %530 : vector<16x4xf32> to vector<1x16x4xf32>
    %532 = vector.extract_strided_slice %525 {offsets = [0, 12], sizes = [16, 4], strides = [1, 1]} : vector<16x96xf32> to vector<16x4xf32>
    %533 = vector.shape_cast %532 : vector<16x4xf32> to vector<1x16x4xf32>
    %534 = vector.extract_strided_slice %525 {offsets = [0, 16], sizes = [16, 4], strides = [1, 1]} : vector<16x96xf32> to vector<16x4xf32>
    %535 = vector.shape_cast %534 : vector<16x4xf32> to vector<1x16x4xf32>
    %536 = vector.extract_strided_slice %525 {offsets = [0, 20], sizes = [16, 4], strides = [1, 1]} : vector<16x96xf32> to vector<16x4xf32>
    %537 = vector.shape_cast %536 : vector<16x4xf32> to vector<1x16x4xf32>
    %538 = vector.extract_strided_slice %525 {offsets = [0, 24], sizes = [16, 4], strides = [1, 1]} : vector<16x96xf32> to vector<16x4xf32>
    %539 = vector.shape_cast %538 : vector<16x4xf32> to vector<1x16x4xf32>
    %540 = vector.extract_strided_slice %525 {offsets = [0, 28], sizes = [16, 4], strides = [1, 1]} : vector<16x96xf32> to vector<16x4xf32>
    %541 = vector.shape_cast %540 : vector<16x4xf32> to vector<1x16x4xf32>
    %542 = tpu.concatenate %527, %529, %531, %533, %535, %537, %539, %541 in 0 : vector<1x16x4xf32>, vector<1x16x4xf32>, vector<1x16x4xf32>, vector<1x16x4xf32>, vector<1x16x4xf32>, vector<1x16x4xf32>, vector<1x16x4xf32>, vector<1x16x4xf32> -> vector<8x16x4xf32>
    %543 = vector.extract_strided_slice %525 {offsets = [0, 32], sizes = [16, 4], strides = [1, 1]} : vector<16x96xf32> to vector<16x4xf32>
    %544 = vector.shape_cast %543 : vector<16x4xf32> to vector<1x16x4xf32>
    %545 = vector.extract_strided_slice %525 {offsets = [0, 36], sizes = [16, 4], strides = [1, 1]} : vector<16x96xf32> to vector<16x4xf32>
    %546 = vector.shape_cast %545 : vector<16x4xf32> to vector<1x16x4xf32>
    %547 = vector.extract_strided_slice %525 {offsets = [0, 40], sizes = [16, 4], strides = [1, 1]} : vector<16x96xf32> to vector<16x4xf32>
    %548 = vector.shape_cast %547 : vector<16x4xf32> to vector<1x16x4xf32>
    %549 = vector.extract_strided_slice %525 {offsets = [0, 44], sizes = [16, 4], strides = [1, 1]} : vector<16x96xf32> to vector<16x4xf32>
    %550 = vector.shape_cast %549 : vector<16x4xf32> to vector<1x16x4xf32>
    %551 = vector.extract_strided_slice %525 {offsets = [0, 48], sizes = [16, 4], strides = [1, 1]} : vector<16x96xf32> to vector<16x4xf32>
    %552 = vector.shape_cast %551 : vector<16x4xf32> to vector<1x16x4xf32>
    %553 = vector.extract_strided_slice %525 {offsets = [0, 52], sizes = [16, 4], strides = [1, 1]} : vector<16x96xf32> to vector<16x4xf32>
    %554 = vector.shape_cast %553 : vector<16x4xf32> to vector<1x16x4xf32>
    %555 = vector.extract_strided_slice %525 {offsets = [0, 56], sizes = [16, 4], strides = [1, 1]} : vector<16x96xf32> to vector<16x4xf32>
    %556 = vector.shape_cast %555 : vector<16x4xf32> to vector<1x16x4xf32>
    %557 = vector.extract_strided_slice %525 {offsets = [0, 60], sizes = [16, 4], strides = [1, 1]} : vector<16x96xf32> to vector<16x4xf32>
    %558 = vector.shape_cast %557 : vector<16x4xf32> to vector<1x16x4xf32>
    %559 = tpu.concatenate %544, %546, %548, %550, %552, %554, %556, %558 in 0 : vector<1x16x4xf32>, vector<1x16x4xf32>, vector<1x16x4xf32>, vector<1x16x4xf32>, vector<1x16x4xf32>, vector<1x16x4xf32>, vector<1x16x4xf32>, vector<1x16x4xf32> -> vector<8x16x4xf32>
    %560 = vector.extract_strided_slice %525 {offsets = [0, 64], sizes = [16, 4], strides = [1, 1]} : vector<16x96xf32> to vector<16x4xf32>
    %561 = vector.shape_cast %560 : vector<16x4xf32> to vector<1x16x4xf32>
    %562 = vector.extract_strided_slice %525 {offsets = [0, 68], sizes = [16, 4], strides = [1, 1]} : vector<16x96xf32> to vector<16x4xf32>
    %563 = vector.shape_cast %562 : vector<16x4xf32> to vector<1x16x4xf32>
    %564 = vector.extract_strided_slice %525 {offsets = [0, 72], sizes = [16, 4], strides = [1, 1]} : vector<16x96xf32> to vector<16x4xf32>
    %565 = vector.shape_cast %564 : vector<16x4xf32> to vector<1x16x4xf32>
    %566 = vector.extract_strided_slice %525 {offsets = [0, 76], sizes = [16, 4], strides = [1, 1]} : vector<16x96xf32> to vector<16x4xf32>
    %567 = vector.shape_cast %566 : vector<16x4xf32> to vector<1x16x4xf32>
    %568 = vector.extract_strided_slice %525 {offsets = [0, 80], sizes = [16, 4], strides = [1, 1]} : vector<16x96xf32> to vector<16x4xf32>
    %569 = vector.shape_cast %568 : vector<16x4xf32> to vector<1x16x4xf32>
    %570 = vector.extract_strided_slice %525 {offsets = [0, 84], sizes = [16, 4], strides = [1, 1]} : vector<16x96xf32> to vector<16x4xf32>
    %571 = vector.shape_cast %570 : vector<16x4xf32> to vector<1x16x4xf32>
    %572 = vector.extract_strided_slice %525 {offsets = [0, 88], sizes = [16, 4], strides = [1, 1]} : vector<16x96xf32> to vector<16x4xf32>
    %573 = vector.shape_cast %572 : vector<16x4xf32> to vector<1x16x4xf32>
    %574 = vector.extract_strided_slice %525 {offsets = [0, 92], sizes = [16, 4], strides = [1, 1]} : vector<16x96xf32> to vector<16x4xf32>
    %575 = vector.shape_cast %574 : vector<16x4xf32> to vector<1x16x4xf32>
    %576 = tpu.concatenate %561, %563, %565, %567, %569, %571, %573, %575 in 0 : vector<1x16x4xf32>, vector<1x16x4xf32>, vector<1x16x4xf32>, vector<1x16x4xf32>, vector<1x16x4xf32>, vector<1x16x4xf32>, vector<1x16x4xf32>, vector<1x16x4xf32> -> vector<8x16x4xf32>
    %cst_180 = arith.constant dense<0.000000e+00> : vector<8x16x16xf32>
    %577 = tpu.matmul %542, %559, %cst_180 {dimension_numbers = #tpu.dot_dimension_numbers<[2], [2], [1], [1], [0, 0, 0, 1, 1, 1], [0], [0]>} : vector<8x16x4xf32>, vector<8x16x4xf32>, vector<8x16x16xf32> -> vector<8x16x16xf32>
    %cst_181 = arith.constant dense<0xFF800000> : vector<8x16xf32>
    %578 = vector.multi_reduction <maximumf>, %577, %cst_181 [2] : vector<8x16x16xf32> to vector<8x16xf32>
    %579 = vector.shape_cast %578 : vector<8x16xf32> to vector<8x16x1xf32>
    %580 = vector.broadcast %579 : vector<8x16x1xf32> to vector<8x16x16xf32>
    %581 = arith.subf %577, %580 : vector<8x16x16xf32>
    %582 = math.exp %581 : vector<8x16x16xf32>
    %cst_182 = arith.constant dense<0.000000e+00> : vector<8x16xf32>
    %583 = vector.multi_reduction <add>, %582, %cst_182 [2] : vector<8x16x16xf32> to vector<8x16xf32>
    %584 = vector.shape_cast %583 : vector<8x16xf32> to vector<8x16x1xf32>
    %585 = tpu.reciprocal %584 {approx = true} : vector<8x16x1xf32> -> vector<8x16x1xf32>
    %586 = vector.broadcast %585 : vector<8x16x1xf32> to vector<8x16x16xf32>
    %587 = arith.mulf %582, %586 : vector<8x16x16xf32>
    %cst_183 = arith.constant dense<0.000000e+00> : vector<8x16x4xf32>
    %588 = tpu.matmul %587, %576, %cst_183 {dimension_numbers = #tpu.dot_dimension_numbers<[2], [1], [1], [2], [0, 0, 0, 1, 1, 2], [0], [0]>} : vector<8x16x16xf32>, vector<8x16x4xf32>, vector<8x16x4xf32> -> vector<8x16x4xf32>
    %589 = vector.extract_strided_slice %588 {offsets = [0, 0, 0], sizes = [1, 16, 4], strides = [1, 1, 1]} : vector<8x16x4xf32> to vector<1x16x4xf32>
    %590 = vector.shape_cast %589 : vector<1x16x4xf32> to vector<16x4xf32>
    %c0_184 = arith.constant 0 : index
    %c0_185 = arith.constant 0 : index
    %591 = vector.load %arg12[%c0_184, %c0_185] : memref<16x32xf32, #tpu.memory_space<vmem>>, vector<16x4xf32>
    tpu.vector_store %arg12[%c0_184, %c0_185], %590 {strides = array<i32>} : memref<16x32xf32, #tpu.memory_space<vmem>>, vector<16x4xf32>,
    %592 = vector.extract_strided_slice %588 {offsets = [1, 0, 0], sizes = [1, 16, 4], strides = [1, 1, 1]} : vector<8x16x4xf32> to vector<1x16x4xf32>
    %593 = vector.shape_cast %592 : vector<1x16x4xf32> to vector<16x4xf32>
    %c0_186 = arith.constant 0 : index
    %c4_187 = arith.constant 4 : index
    %594 = vector.load %arg12[%c0_186, %c4_187] : memref<16x32xf32, #tpu.memory_space<vmem>>, vector<16x4xf32>
    tpu.vector_store %arg12[%c0_186, %c4_187], %593 {strides = array<i32>} : memref<16x32xf32, #tpu.memory_space<vmem>>, vector<16x4xf32>,
    %595 = vector.extract_strided_slice %588 {offsets = [2, 0, 0], sizes = [1, 16, 4], strides = [1, 1, 1]} : vector<8x16x4xf32> to vector<1x16x4xf32>
    %596 = vector.shape_cast %595 : vector<1x16x4xf32> to vector<16x4xf32>
    %c0_188 = arith.constant 0 : index
    %c8_189 = arith.constant 8 : index
    %597 = vector.load %arg12[%c0_188, %c8_189] : memref<16x32xf32, #tpu.memory_space<vmem>>, vector<16x4xf32>
    tpu.vector_store %arg12[%c0_188, %c8_189], %596 {strides = array<i32>} : memref<16x32xf32, #tpu.memory_space<vmem>>, vector<16x4xf32>,
    %598 = vector.extract_strided_slice %588 {offsets = [3, 0, 0], sizes = [1, 16, 4], strides = [1, 1, 1]} : vector<8x16x4xf32> to vector<1x16x4xf32>
    %599 = vector.shape_cast %598 : vector<1x16x4xf32> to vector<16x4xf32>
    %c0_190 = arith.constant 0 : index
    %c12_191 = arith.constant 12 : index
    %600 = vector.load %arg12[%c0_190, %c12_191] : memref<16x32xf32, #tpu.memory_space<vmem>>, vector<16x4xf32>
    tpu.vector_store %arg12[%c0_190, %c12_191], %599 {strides = array<i32>} : memref<16x32xf32, #tpu.memory_space<vmem>>, vector<16x4xf32>,
    %601 = vector.extract_strided_slice %588 {offsets = [4, 0, 0], sizes = [1, 16, 4], strides = [1, 1, 1]} : vector<8x16x4xf32> to vector<1x16x4xf32>
    %602 = vector.shape_cast %601 : vector<1x16x4xf32> to vector<16x4xf32>
    %c0_192 = arith.constant 0 : index
    %c16_193 = arith.constant 16 : index
    %603 = vector.load %arg12[%c0_192, %c16_193] : memref<16x32xf32, #tpu.memory_space<vmem>>, vector<16x4xf32>
    tpu.vector_store %arg12[%c0_192, %c16_193], %602 {strides = array<i32>} : memref<16x32xf32, #tpu.memory_space<vmem>>, vector<16x4xf32>,
    %604 = vector.extract_strided_slice %588 {offsets = [5, 0, 0], sizes = [1, 16, 4], strides = [1, 1, 1]} : vector<8x16x4xf32> to vector<1x16x4xf32>
    %605 = vector.shape_cast %604 : vector<1x16x4xf32> to vector<16x4xf32>
    %c0_194 = arith.constant 0 : index
    %c20_195 = arith.constant 20 : index
    %606 = vector.load %arg12[%c0_194, %c20_195] : memref<16x32xf32, #tpu.memory_space<vmem>>, vector<16x4xf32>
    tpu.vector_store %arg12[%c0_194, %c20_195], %605 {strides = array<i32>} : memref<16x32xf32, #tpu.memory_space<vmem>>, vector<16x4xf32>,
    %607 = vector.extract_strided_slice %588 {offsets = [6, 0, 0], sizes = [1, 16, 4], strides = [1, 1, 1]} : vector<8x16x4xf32> to vector<1x16x4xf32>
    %608 = vector.shape_cast %607 : vector<1x16x4xf32> to vector<16x4xf32>
    %c0_196 = arith.constant 0 : index
    %c24_197 = arith.constant 24 : index
    %609 = vector.load %arg12[%c0_196, %c24_197] : memref<16x32xf32, #tpu.memory_space<vmem>>, vector<16x4xf32>
    tpu.vector_store %arg12[%c0_196, %c24_197], %608 {strides = array<i32>} : memref<16x32xf32, #tpu.memory_space<vmem>>, vector<16x4xf32>,
    %610 = vector.extract_strided_slice %588 {offsets = [7, 0, 0], sizes = [1, 16, 4], strides = [1, 1, 1]} : vector<8x16x4xf32> to vector<1x16x4xf32>
    %611 = vector.shape_cast %610 : vector<1x16x4xf32> to vector<16x4xf32>
    %c0_198 = arith.constant 0 : index
    %c28_199 = arith.constant 28 : index
    %612 = vector.load %arg12[%c0_198, %c28_199] : memref<16x32xf32, #tpu.memory_space<vmem>>, vector<16x4xf32>
    tpu.vector_store %arg12[%c0_198, %c28_199], %611 {strides = array<i32>} : memref<16x32xf32, #tpu.memory_space<vmem>>, vector<16x4xf32>,
    %c0_200 = arith.constant 0 : index
    %c0_201 = arith.constant 0 : index
    %613 = vector.load %arg12[%c0_200, %c0_201] : memref<16x32xf32, #tpu.memory_space<vmem>>, vector<16x32xf32>
    %c3_202 = arith.constant 3 : index
    %c0_203 = arith.constant 0 : index
    %c0_204 = arith.constant 0 : index
    %614 = vector.load %arg6[%c3_202, %c0_203, %c0_204] : memref<6x32x32xf32, #tpu.memory_space<vmem>>, vector<1x32x32xf32>
    %615 = vector.shape_cast %614 : vector<1x32x32xf32> to vector<32x32xf32>
    %cst_205 = arith.constant dense<0.000000e+00> : vector<16x32xf32>
    %616 = tpu.matmul %613, %615, %cst_205 {dimension_numbers = #tpu.dot_dimension_numbers<[1], [0], [0], [1], [0, 0, 1, 1], [], []>} : vector<16x32xf32>, vector<32x32xf32>, vector<16x32xf32> -> vector<16x32xf32>
    %617 = vector.broadcast %513 : vector<1x32xf32> to vector<16x32xf32>
    %618 = arith.addf %616, %617 : vector<16x32xf32>
    %619 = arith.addf %510, %618 : vector<16x32xf32>
    %cst_206 = arith.constant dense<0.000000e+00> : vector<16xf32>
    %620 = vector.multi_reduction <add>, %619, %cst_206 [1] : vector<16x32xf32> to vector<16xf32>
    %621 = vector.shape_cast %620 : vector<16xf32> to vector<16x1xf32>
    %cst_207 = arith.constant 3.200000e+01 : f32
    %622 = vector.broadcast %cst_207 : f32 to vector<16x1xf32>
    %623 = arith.divf %621, %622 : vector<16x1xf32>
    %624 = arith.mulf %619, %619 : vector<16x32xf32>
    %cst_208 = arith.constant dense<0.000000e+00> : vector<16xf32>
    %625 = vector.multi_reduction <add>, %624, %cst_208 [1] : vector<16x32xf32> to vector<16xf32>
    %626 = vector.shape_cast %625 : vector<16xf32> to vector<16x1xf32>
    %cst_209 = arith.constant 3.200000e+01 : f32
    %627 = vector.broadcast %cst_209 : f32 to vector<16x1xf32>
    %628 = arith.divf %626, %627 : vector<16x1xf32>
    %629 = arith.mulf %623, %623 : vector<16x1xf32>
    %630 = arith.subf %628, %629 : vector<16x1xf32>
    %631 = vector.broadcast %623 : vector<16x1xf32> to vector<16x32xf32>
    %632 = arith.subf %619, %631 : vector<16x32xf32>
    %cst_210 = arith.constant 9.99999974E-6 : f32
    %633 = vector.broadcast %cst_210 : f32 to vector<16x1xf32>
    %634 = arith.addf %630, %633 : vector<16x1xf32>
    %635 = math.rsqrt %634 : vector<16x1xf32>
    %636 = vector.broadcast %635 : vector<16x1xf32> to vector<16x32xf32>
    %637 = arith.mulf %632, %636 : vector<16x32xf32>
    %638 = vector.broadcast %515 : vector<1x32xf32> to vector<16x32xf32>
    %639 = arith.mulf %637, %638 : vector<16x32xf32>
    %640 = vector.broadcast %516 : vector<1x32xf32> to vector<16x32xf32>
    %641 = arith.addf %639, %640 : vector<16x32xf32>
    %c3_211 = arith.constant 3 : index
    %c0_212 = arith.constant 0 : index
    %c0_213 = arith.constant 0 : index
    %642 = vector.load %arg7[%c3_211, %c0_212, %c0_213] : memref<6x32x128xf32, #tpu.memory_space<vmem>>, vector<1x32x128xf32>
    %643 = vector.shape_cast %642 : vector<1x32x128xf32> to vector<32x128xf32>
    %cst_214 = arith.constant dense<0.000000e+00> : vector<16x128xf32>
    %644 = tpu.matmul %641, %643, %cst_214 {dimension_numbers = #tpu.dot_dimension_numbers<[1], [0], [0], [1], [0, 0, 1, 1], [], []>} : vector<16x32xf32>, vector<32x128xf32>, vector<16x128xf32> -> vector<16x128xf32>
    %c3_215 = arith.constant 3 : index
    %c0_216 = arith.constant 0 : index
    %c0_217 = arith.constant 0 : index
    %645 = vector.load %arg8[%c3_215, %c0_216, %c0_217] : memref<6x1x128xf32, #tpu.memory_space<vmem>>, vector<1x1x128xf32>
    %646 = vector.shape_cast %645 : vector<1x1x128xf32> to vector<1x128xf32>
    %647 = vector.broadcast %646 : vector<1x128xf32> to vector<16x128xf32>
    %648 = arith.addf %644, %647 : vector<16x128xf32>
    %cst_218 = arith.constant 0.000000e+00 : f32
    %649 = vector.broadcast %cst_218 : f32 to vector<16x128xf32>
    %650 = arith.maximumf %648, %649 : vector<16x128xf32>
    %c3_219 = arith.constant 3 : index
    %c0_220 = arith.constant 0 : index
    %c0_221 = arith.constant 0 : index
    %651 = vector.load %arg9[%c3_219, %c0_220, %c0_221] : memref<6x128x32xf32, #tpu.memory_space<vmem>>, vector<1x128x32xf32>
    %652 = vector.shape_cast %651 : vector<1x128x32xf32> to vector<128x32xf32>
    %cst_222 = arith.constant dense<0.000000e+00> : vector<16x32xf32>
    %653 = tpu.matmul %650, %652, %cst_222 {dimension_numbers = #tpu.dot_dimension_numbers<[1], [0], [0], [1], [0, 0, 1, 1], [], []>} : vector<16x128xf32>, vector<128x32xf32>, vector<16x32xf32> -> vector<16x32xf32>
    %654 = vector.broadcast %514 : vector<1x32xf32> to vector<16x32xf32>
    %655 = arith.addf %653, %654 : vector<16x32xf32>
    %656 = arith.addf %641, %655 : vector<16x32xf32>
    %cst_223 = arith.constant dense<0.000000e+00> : vector<16xf32>
    %657 = vector.multi_reduction <add>, %656, %cst_223 [1] : vector<16x32xf32> to vector<16xf32>
    %658 = vector.shape_cast %657 : vector<16xf32> to vector<16x1xf32>
    %cst_224 = arith.constant 3.200000e+01 : f32
    %659 = vector.broadcast %cst_224 : f32 to vector<16x1xf32>
    %660 = arith.divf %658, %659 : vector<16x1xf32>
    %661 = arith.mulf %656, %656 : vector<16x32xf32>
    %cst_225 = arith.constant dense<0.000000e+00> : vector<16xf32>
    %662 = vector.multi_reduction <add>, %661, %cst_225 [1] : vector<16x32xf32> to vector<16xf32>
    %663 = vector.shape_cast %662 : vector<16xf32> to vector<16x1xf32>
    %cst_226 = arith.constant 3.200000e+01 : f32
    %664 = vector.broadcast %cst_226 : f32 to vector<16x1xf32>
    %665 = arith.divf %663, %664 : vector<16x1xf32>
    %666 = arith.mulf %660, %660 : vector<16x1xf32>
    %667 = arith.subf %665, %666 : vector<16x1xf32>
    %668 = vector.broadcast %660 : vector<16x1xf32> to vector<16x32xf32>
    %669 = arith.subf %656, %668 : vector<16x32xf32>
    %cst_227 = arith.constant 9.99999974E-6 : f32
    %670 = vector.broadcast %cst_227 : f32 to vector<16x1xf32>
    %671 = arith.addf %667, %670 : vector<16x1xf32>
    %672 = math.rsqrt %671 : vector<16x1xf32>
    %673 = vector.broadcast %672 : vector<16x1xf32> to vector<16x32xf32>
    %674 = arith.mulf %669, %673 : vector<16x32xf32>
    %675 = vector.broadcast %517 : vector<1x32xf32> to vector<16x32xf32>
    %676 = arith.mulf %674, %675 : vector<16x32xf32>
    %677 = vector.broadcast %518 : vector<1x32xf32> to vector<16x32xf32>
    %678 = arith.addf %676, %677 : vector<16x32xf32>
    %c4_228 = arith.constant 4 : index
    %c0_229 = arith.constant 0 : index
    %c0_230 = arith.constant 0 : index
    %679 = vector.load %arg10[%c4_228, %c0_229, %c0_230] : memref<6x6x32xf32, #tpu.memory_space<vmem>>, vector<1x6x32xf32>
    %680 = vector.shape_cast %679 : vector<1x6x32xf32> to vector<6x32xf32>
    %681 = vector.extract_strided_slice %680 {offsets = [0, 0], sizes = [1, 32], strides = [1, 1]} : vector<6x32xf32> to vector<1x32xf32>
    %682 = vector.extract_strided_slice %680 {offsets = [1, 0], sizes = [1, 32], strides = [1, 1]} : vector<6x32xf32> to vector<1x32xf32>
    %683 = vector.extract_strided_slice %680 {offsets = [2, 0], sizes = [1, 32], strides = [1, 1]} : vector<6x32xf32> to vector<1x32xf32>
    %684 = vector.extract_strided_slice %680 {offsets = [3, 0], sizes = [1, 32], strides = [1, 1]} : vector<6x32xf32> to vector<1x32xf32>
    %685 = vector.extract_strided_slice %680 {offsets = [4, 0], sizes = [1, 32], strides = [1, 1]} : vector<6x32xf32> to vector<1x32xf32>
    %686 = vector.extract_strided_slice %680 {offsets = [5, 0], sizes = [1, 32], strides = [1, 1]} : vector<6x32xf32> to vector<1x32xf32>
    %c4_231 = arith.constant 4 : index
    %c0_232 = arith.constant 0 : index
    %c0_233 = arith.constant 0 : index
    %687 = vector.load %arg4[%c4_231, %c0_232, %c0_233] : memref<6x32x96xf32, #tpu.memory_space<vmem>>, vector<1x32x96xf32>
    %688 = vector.shape_cast %687 : vector<1x32x96xf32> to vector<32x96xf32>
    %cst_234 = arith.constant dense<0.000000e+00> : vector<16x96xf32>
    %689 = tpu.matmul %678, %688, %cst_234 {dimension_numbers = #tpu.dot_dimension_numbers<[1], [0], [0], [1], [0, 0, 1, 1], [], []>} : vector<16x32xf32>, vector<32x96xf32>, vector<16x96xf32> -> vector<16x96xf32>
    %c4_235 = arith.constant 4 : index
    %c0_236 = arith.constant 0 : index
    %c0_237 = arith.constant 0 : index
    %690 = vector.load %arg5[%c4_235, %c0_236, %c0_237] : memref<6x1x96xf32, #tpu.memory_space<vmem>>, vector<1x1x96xf32>
    %691 = vector.shape_cast %690 : vector<1x1x96xf32> to vector<1x96xf32>
    %692 = vector.broadcast %691 : vector<1x96xf32> to vector<16x96xf32>
    %693 = arith.addf %689, %692 : vector<16x96xf32>
    %694 = vector.extract_strided_slice %693 {offsets = [0, 0], sizes = [16, 4], strides = [1, 1]} : vector<16x96xf32> to vector<16x4xf32>
    %695 = vector.shape_cast %694 : vector<16x4xf32> to vector<1x16x4xf32>
    %696 = vector.extract_strided_slice %693 {offsets = [0, 4], sizes = [16, 4], strides = [1, 1]} : vector<16x96xf32> to vector<16x4xf32>
    %697 = vector.shape_cast %696 : vector<16x4xf32> to vector<1x16x4xf32>
    %698 = vector.extract_strided_slice %693 {offsets = [0, 8], sizes = [16, 4], strides = [1, 1]} : vector<16x96xf32> to vector<16x4xf32>
    %699 = vector.shape_cast %698 : vector<16x4xf32> to vector<1x16x4xf32>
    %700 = vector.extract_strided_slice %693 {offsets = [0, 12], sizes = [16, 4], strides = [1, 1]} : vector<16x96xf32> to vector<16x4xf32>
    %701 = vector.shape_cast %700 : vector<16x4xf32> to vector<1x16x4xf32>
    %702 = vector.extract_strided_slice %693 {offsets = [0, 16], sizes = [16, 4], strides = [1, 1]} : vector<16x96xf32> to vector<16x4xf32>
    %703 = vector.shape_cast %702 : vector<16x4xf32> to vector<1x16x4xf32>
    %704 = vector.extract_strided_slice %693 {offsets = [0, 20], sizes = [16, 4], strides = [1, 1]} : vector<16x96xf32> to vector<16x4xf32>
    %705 = vector.shape_cast %704 : vector<16x4xf32> to vector<1x16x4xf32>
    %706 = vector.extract_strided_slice %693 {offsets = [0, 24], sizes = [16, 4], strides = [1, 1]} : vector<16x96xf32> to vector<16x4xf32>
    %707 = vector.shape_cast %706 : vector<16x4xf32> to vector<1x16x4xf32>
    %708 = vector.extract_strided_slice %693 {offsets = [0, 28], sizes = [16, 4], strides = [1, 1]} : vector<16x96xf32> to vector<16x4xf32>
    %709 = vector.shape_cast %708 : vector<16x4xf32> to vector<1x16x4xf32>
    %710 = tpu.concatenate %695, %697, %699, %701, %703, %705, %707, %709 in 0 : vector<1x16x4xf32>, vector<1x16x4xf32>, vector<1x16x4xf32>, vector<1x16x4xf32>, vector<1x16x4xf32>, vector<1x16x4xf32>, vector<1x16x4xf32>, vector<1x16x4xf32> -> vector<8x16x4xf32>
    %711 = vector.extract_strided_slice %693 {offsets = [0, 32], sizes = [16, 4], strides = [1, 1]} : vector<16x96xf32> to vector<16x4xf32>
    %712 = vector.shape_cast %711 : vector<16x4xf32> to vector<1x16x4xf32>
    %713 = vector.extract_strided_slice %693 {offsets = [0, 36], sizes = [16, 4], strides = [1, 1]} : vector<16x96xf32> to vector<16x4xf32>
    %714 = vector.shape_cast %713 : vector<16x4xf32> to vector<1x16x4xf32>
    %715 = vector.extract_strided_slice %693 {offsets = [0, 40], sizes = [16, 4], strides = [1, 1]} : vector<16x96xf32> to vector<16x4xf32>
    %716 = vector.shape_cast %715 : vector<16x4xf32> to vector<1x16x4xf32>
    %717 = vector.extract_strided_slice %693 {offsets = [0, 44], sizes = [16, 4], strides = [1, 1]} : vector<16x96xf32> to vector<16x4xf32>
    %718 = vector.shape_cast %717 : vector<16x4xf32> to vector<1x16x4xf32>
    %719 = vector.extract_strided_slice %693 {offsets = [0, 48], sizes = [16, 4], strides = [1, 1]} : vector<16x96xf32> to vector<16x4xf32>
    %720 = vector.shape_cast %719 : vector<16x4xf32> to vector<1x16x4xf32>
    %721 = vector.extract_strided_slice %693 {offsets = [0, 52], sizes = [16, 4], strides = [1, 1]} : vector<16x96xf32> to vector<16x4xf32>
    %722 = vector.shape_cast %721 : vector<16x4xf32> to vector<1x16x4xf32>
    %723 = vector.extract_strided_slice %693 {offsets = [0, 56], sizes = [16, 4], strides = [1, 1]} : vector<16x96xf32> to vector<16x4xf32>
    %724 = vector.shape_cast %723 : vector<16x4xf32> to vector<1x16x4xf32>
    %725 = vector.extract_strided_slice %693 {offsets = [0, 60], sizes = [16, 4], strides = [1, 1]} : vector<16x96xf32> to vector<16x4xf32>
    %726 = vector.shape_cast %725 : vector<16x4xf32> to vector<1x16x4xf32>
    %727 = tpu.concatenate %712, %714, %716, %718, %720, %722, %724, %726 in 0 : vector<1x16x4xf32>, vector<1x16x4xf32>, vector<1x16x4xf32>, vector<1x16x4xf32>, vector<1x16x4xf32>, vector<1x16x4xf32>, vector<1x16x4xf32>, vector<1x16x4xf32> -> vector<8x16x4xf32>
    %728 = vector.extract_strided_slice %693 {offsets = [0, 64], sizes = [16, 4], strides = [1, 1]} : vector<16x96xf32> to vector<16x4xf32>
    %729 = vector.shape_cast %728 : vector<16x4xf32> to vector<1x16x4xf32>
    %730 = vector.extract_strided_slice %693 {offsets = [0, 68], sizes = [16, 4], strides = [1, 1]} : vector<16x96xf32> to vector<16x4xf32>
    %731 = vector.shape_cast %730 : vector<16x4xf32> to vector<1x16x4xf32>
    %732 = vector.extract_strided_slice %693 {offsets = [0, 72], sizes = [16, 4], strides = [1, 1]} : vector<16x96xf32> to vector<16x4xf32>
    %733 = vector.shape_cast %732 : vector<16x4xf32> to vector<1x16x4xf32>
    %734 = vector.extract_strided_slice %693 {offsets = [0, 76], sizes = [16, 4], strides = [1, 1]} : vector<16x96xf32> to vector<16x4xf32>
    %735 = vector.shape_cast %734 : vector<16x4xf32> to vector<1x16x4xf32>
    %736 = vector.extract_strided_slice %693 {offsets = [0, 80], sizes = [16, 4], strides = [1, 1]} : vector<16x96xf32> to vector<16x4xf32>
    %737 = vector.shape_cast %736 : vector<16x4xf32> to vector<1x16x4xf32>
    %738 = vector.extract_strided_slice %693 {offsets = [0, 84], sizes = [16, 4], strides = [1, 1]} : vector<16x96xf32> to vector<16x4xf32>
    %739 = vector.shape_cast %738 : vector<16x4xf32> to vector<1x16x4xf32>
    %740 = vector.extract_strided_slice %693 {offsets = [0, 88], sizes = [16, 4], strides = [1, 1]} : vector<16x96xf32> to vector<16x4xf32>
    %741 = vector.shape_cast %740 : vector<16x4xf32> to vector<1x16x4xf32>
    %742 = vector.extract_strided_slice %693 {offsets = [0, 92], sizes = [16, 4], strides = [1, 1]} : vector<16x96xf32> to vector<16x4xf32>
    %743 = vector.shape_cast %742 : vector<16x4xf32> to vector<1x16x4xf32>
    %744 = tpu.concatenate %729, %731, %733, %735, %737, %739, %741, %743 in 0 : vector<1x16x4xf32>, vector<1x16x4xf32>, vector<1x16x4xf32>, vector<1x16x4xf32>, vector<1x16x4xf32>, vector<1x16x4xf32>, vector<1x16x4xf32>, vector<1x16x4xf32> -> vector<8x16x4xf32>
    %cst_238 = arith.constant dense<0.000000e+00> : vector<8x16x16xf32>
    %745 = tpu.matmul %710, %727, %cst_238 {dimension_numbers = #tpu.dot_dimension_numbers<[2], [2], [1], [1], [0, 0, 0, 1, 1, 1], [0], [0]>} : vector<8x16x4xf32>, vector<8x16x4xf32>, vector<8x16x16xf32> -> vector<8x16x16xf32>
    %cst_239 = arith.constant dense<0xFF800000> : vector<8x16xf32>
    %746 = vector.multi_reduction <maximumf>, %745, %cst_239 [2] : vector<8x16x16xf32> to vector<8x16xf32>
    %747 = vector.shape_cast %746 : vector<8x16xf32> to vector<8x16x1xf32>
    %748 = vector.broadcast %747 : vector<8x16x1xf32> to vector<8x16x16xf32>
    %749 = arith.subf %745, %748 : vector<8x16x16xf32>
    %750 = math.exp %749 : vector<8x16x16xf32>
    %cst_240 = arith.constant dense<0.000000e+00> : vector<8x16xf32>
    %751 = vector.multi_reduction <add>, %750, %cst_240 [2] : vector<8x16x16xf32> to vector<8x16xf32>
    %752 = vector.shape_cast %751 : vector<8x16xf32> to vector<8x16x1xf32>
    %753 = tpu.reciprocal %752 {approx = true} : vector<8x16x1xf32> -> vector<8x16x1xf32>
    %754 = vector.broadcast %753 : vector<8x16x1xf32> to vector<8x16x16xf32>
    %755 = arith.mulf %750, %754 : vector<8x16x16xf32>
    %cst_241 = arith.constant dense<0.000000e+00> : vector<8x16x4xf32>
    %756 = tpu.matmul %755, %744, %cst_241 {dimension_numbers = #tpu.dot_dimension_numbers<[2], [1], [1], [2], [0, 0, 0, 1, 1, 2], [0], [0]>} : vector<8x16x16xf32>, vector<8x16x4xf32>, vector<8x16x4xf32> -> vector<8x16x4xf32>
    %757 = vector.extract_strided_slice %756 {offsets = [0, 0, 0], sizes = [1, 16, 4], strides = [1, 1, 1]} : vector<8x16x4xf32> to vector<1x16x4xf32>
    %758 = vector.shape_cast %757 : vector<1x16x4xf32> to vector<16x4xf32>
    %c0_242 = arith.constant 0 : index
    %c0_243 = arith.constant 0 : index
    %759 = vector.load %arg12[%c0_242, %c0_243] : memref<16x32xf32, #tpu.memory_space<vmem>>, vector<16x4xf32>
    tpu.vector_store %arg12[%c0_242, %c0_243], %758 {strides = array<i32>} : memref<16x32xf32, #tpu.memory_space<vmem>>, vector<16x4xf32>,
    %760 = vector.extract_strided_slice %756 {offsets = [1, 0, 0], sizes = [1, 16, 4], strides = [1, 1, 1]} : vector<8x16x4xf32> to vector<1x16x4xf32>
    %761 = vector.shape_cast %760 : vector<1x16x4xf32> to vector<16x4xf32>
    %c0_244 = arith.constant 0 : index
    %c4_245 = arith.constant 4 : index
    %762 = vector.load %arg12[%c0_244, %c4_245] : memref<16x32xf32, #tpu.memory_space<vmem>>, vector<16x4xf32>
    tpu.vector_store %arg12[%c0_244, %c4_245], %761 {strides = array<i32>} : memref<16x32xf32, #tpu.memory_space<vmem>>, vector<16x4xf32>,
    %763 = vector.extract_strided_slice %756 {offsets = [2, 0, 0], sizes = [1, 16, 4], strides = [1, 1, 1]} : vector<8x16x4xf32> to vector<1x16x4xf32>
    %764 = vector.shape_cast %763 : vector<1x16x4xf32> to vector<16x4xf32>
    %c0_246 = arith.constant 0 : index
    %c8_247 = arith.constant 8 : index
    %765 = vector.load %arg12[%c0_246, %c8_247] : memref<16x32xf32, #tpu.memory_space<vmem>>, vector<16x4xf32>
    tpu.vector_store %arg12[%c0_246, %c8_247], %764 {strides = array<i32>} : memref<16x32xf32, #tpu.memory_space<vmem>>, vector<16x4xf32>,
    %766 = vector.extract_strided_slice %756 {offsets = [3, 0, 0], sizes = [1, 16, 4], strides = [1, 1, 1]} : vector<8x16x4xf32> to vector<1x16x4xf32>
    %767 = vector.shape_cast %766 : vector<1x16x4xf32> to vector<16x4xf32>
    %c0_248 = arith.constant 0 : index
    %c12_249 = arith.constant 12 : index
    %768 = vector.load %arg12[%c0_248, %c12_249] : memref<16x32xf32, #tpu.memory_space<vmem>>, vector<16x4xf32>
    tpu.vector_store %arg12[%c0_248, %c12_249], %767 {strides = array<i32>} : memref<16x32xf32, #tpu.memory_space<vmem>>, vector<16x4xf32>,
    %769 = vector.extract_strided_slice %756 {offsets = [4, 0, 0], sizes = [1, 16, 4], strides = [1, 1, 1]} : vector<8x16x4xf32> to vector<1x16x4xf32>
    %770 = vector.shape_cast %769 : vector<1x16x4xf32> to vector<16x4xf32>
    %c0_250 = arith.constant 0 : index
    %c16_251 = arith.constant 16 : index
    %771 = vector.load %arg12[%c0_250, %c16_251] : memref<16x32xf32, #tpu.memory_space<vmem>>, vector<16x4xf32>
    tpu.vector_store %arg12[%c0_250, %c16_251], %770 {strides = array<i32>} : memref<16x32xf32, #tpu.memory_space<vmem>>, vector<16x4xf32>,
    %772 = vector.extract_strided_slice %756 {offsets = [5, 0, 0], sizes = [1, 16, 4], strides = [1, 1, 1]} : vector<8x16x4xf32> to vector<1x16x4xf32>
    %773 = vector.shape_cast %772 : vector<1x16x4xf32> to vector<16x4xf32>
    %c0_252 = arith.constant 0 : index
    %c20_253 = arith.constant 20 : index
    %774 = vector.load %arg12[%c0_252, %c20_253] : memref<16x32xf32, #tpu.memory_space<vmem>>, vector<16x4xf32>
    tpu.vector_store %arg12[%c0_252, %c20_253], %773 {strides = array<i32>} : memref<16x32xf32, #tpu.memory_space<vmem>>, vector<16x4xf32>,
    %775 = vector.extract_strided_slice %756 {offsets = [6, 0, 0], sizes = [1, 16, 4], strides = [1, 1, 1]} : vector<8x16x4xf32> to vector<1x16x4xf32>
    %776 = vector.shape_cast %775 : vector<1x16x4xf32> to vector<16x4xf32>
    %c0_254 = arith.constant 0 : index
    %c24_255 = arith.constant 24 : index
    %777 = vector.load %arg12[%c0_254, %c24_255] : memref<16x32xf32, #tpu.memory_space<vmem>>, vector<16x4xf32>
    tpu.vector_store %arg12[%c0_254, %c24_255], %776 {strides = array<i32>} : memref<16x32xf32, #tpu.memory_space<vmem>>, vector<16x4xf32>,
    %778 = vector.extract_strided_slice %756 {offsets = [7, 0, 0], sizes = [1, 16, 4], strides = [1, 1, 1]} : vector<8x16x4xf32> to vector<1x16x4xf32>
    %779 = vector.shape_cast %778 : vector<1x16x4xf32> to vector<16x4xf32>
    %c0_256 = arith.constant 0 : index
    %c28_257 = arith.constant 28 : index
    %780 = vector.load %arg12[%c0_256, %c28_257] : memref<16x32xf32, #tpu.memory_space<vmem>>, vector<16x4xf32>
    tpu.vector_store %arg12[%c0_256, %c28_257], %779 {strides = array<i32>} : memref<16x32xf32, #tpu.memory_space<vmem>>, vector<16x4xf32>,
    %c0_258 = arith.constant 0 : index
    %c0_259 = arith.constant 0 : index
    %781 = vector.load %arg12[%c0_258, %c0_259] : memref<16x32xf32, #tpu.memory_space<vmem>>, vector<16x32xf32>
    %c4_260 = arith.constant 4 : index
    %c0_261 = arith.constant 0 : index
    %c0_262 = arith.constant 0 : index
    %782 = vector.load %arg6[%c4_260, %c0_261, %c0_262] : memref<6x32x32xf32, #tpu.memory_space<vmem>>, vector<1x32x32xf32>
    %783 = vector.shape_cast %782 : vector<1x32x32xf32> to vector<32x32xf32>
    %cst_263 = arith.constant dense<0.000000e+00> : vector<16x32xf32>
    %784 = tpu.matmul %781, %783, %cst_263 {dimension_numbers = #tpu.dot_dimension_numbers<[1], [0], [0], [1], [0, 0, 1, 1], [], []>} : vector<16x32xf32>, vector<32x32xf32>, vector<16x32xf32> -> vector<16x32xf32>
    %785 = vector.broadcast %681 : vector<1x32xf32> to vector<16x32xf32>
    %786 = arith.addf %784, %785 : vector<16x32xf32>
    %787 = arith.addf %678, %786 : vector<16x32xf32>
    %cst_264 = arith.constant dense<0.000000e+00> : vector<16xf32>
    %788 = vector.multi_reduction <add>, %787, %cst_264 [1] : vector<16x32xf32> to vector<16xf32>
    %789 = vector.shape_cast %788 : vector<16xf32> to vector<16x1xf32>
    %cst_265 = arith.constant 3.200000e+01 : f32
    %790 = vector.broadcast %cst_265 : f32 to vector<16x1xf32>
    %791 = arith.divf %789, %790 : vector<16x1xf32>
    %792 = arith.mulf %787, %787 : vector<16x32xf32>
    %cst_266 = arith.constant dense<0.000000e+00> : vector<16xf32>
    %793 = vector.multi_reduction <add>, %792, %cst_266 [1] : vector<16x32xf32> to vector<16xf32>
    %794 = vector.shape_cast %793 : vector<16xf32> to vector<16x1xf32>
    %cst_267 = arith.constant 3.200000e+01 : f32
    %795 = vector.broadcast %cst_267 : f32 to vector<16x1xf32>
    %796 = arith.divf %794, %795 : vector<16x1xf32>
    %797 = arith.mulf %791, %791 : vector<16x1xf32>
    %798 = arith.subf %796, %797 : vector<16x1xf32>
    %799 = vector.broadcast %791 : vector<16x1xf32> to vector<16x32xf32>
    %800 = arith.subf %787, %799 : vector<16x32xf32>
    %cst_268 = arith.constant 9.99999974E-6 : f32
    %801 = vector.broadcast %cst_268 : f32 to vector<16x1xf32>
    %802 = arith.addf %798, %801 : vector<16x1xf32>
    %803 = math.rsqrt %802 : vector<16x1xf32>
    %804 = vector.broadcast %803 : vector<16x1xf32> to vector<16x32xf32>
    %805 = arith.mulf %800, %804 : vector<16x32xf32>
    %806 = vector.broadcast %683 : vector<1x32xf32> to vector<16x32xf32>
    %807 = arith.mulf %805, %806 : vector<16x32xf32>
    %808 = vector.broadcast %684 : vector<1x32xf32> to vector<16x32xf32>
    %809 = arith.addf %807, %808 : vector<16x32xf32>
    %c4_269 = arith.constant 4 : index
    %c0_270 = arith.constant 0 : index
    %c0_271 = arith.constant 0 : index
    %810 = vector.load %arg7[%c4_269, %c0_270, %c0_271] : memref<6x32x128xf32, #tpu.memory_space<vmem>>, vector<1x32x128xf32>
    %811 = vector.shape_cast %810 : vector<1x32x128xf32> to vector<32x128xf32>
    %cst_272 = arith.constant dense<0.000000e+00> : vector<16x128xf32>
    %812 = tpu.matmul %809, %811, %cst_272 {dimension_numbers = #tpu.dot_dimension_numbers<[1], [0], [0], [1], [0, 0, 1, 1], [], []>} : vector<16x32xf32>, vector<32x128xf32>, vector<16x128xf32> -> vector<16x128xf32>
    %c4_273 = arith.constant 4 : index
    %c0_274 = arith.constant 0 : index
    %c0_275 = arith.constant 0 : index
    %813 = vector.load %arg8[%c4_273, %c0_274, %c0_275] : memref<6x1x128xf32, #tpu.memory_space<vmem>>, vector<1x1x128xf32>
    %814 = vector.shape_cast %813 : vector<1x1x128xf32> to vector<1x128xf32>
    %815 = vector.broadcast %814 : vector<1x128xf32> to vector<16x128xf32>
    %816 = arith.addf %812, %815 : vector<16x128xf32>
    %cst_276 = arith.constant 0.000000e+00 : f32
    %817 = vector.broadcast %cst_276 : f32 to vector<16x128xf32>
    %818 = arith.maximumf %816, %817 : vector<16x128xf32>
    %c4_277 = arith.constant 4 : index
    %c0_278 = arith.constant 0 : index
    %c0_279 = arith.constant 0 : index
    %819 = vector.load %arg9[%c4_277, %c0_278, %c0_279] : memref<6x128x32xf32, #tpu.memory_space<vmem>>, vector<1x128x32xf32>
    %820 = vector.shape_cast %819 : vector<1x128x32xf32> to vector<128x32xf32>
    %cst_280 = arith.constant dense<0.000000e+00> : vector<16x32xf32>
    %821 = tpu.matmul %818, %820, %cst_280 {dimension_numbers = #tpu.dot_dimension_numbers<[1], [0], [0], [1], [0, 0, 1, 1], [], []>} : vector<16x128xf32>, vector<128x32xf32>, vector<16x32xf32> -> vector<16x32xf32>
    %822 = vector.broadcast %682 : vector<1x32xf32> to vector<16x32xf32>
    %823 = arith.addf %821, %822 : vector<16x32xf32>
    %824 = arith.addf %809, %823 : vector<16x32xf32>
    %cst_281 = arith.constant dense<0.000000e+00> : vector<16xf32>
    %825 = vector.multi_reduction <add>, %824, %cst_281 [1] : vector<16x32xf32> to vector<16xf32>
    %826 = vector.shape_cast %825 : vector<16xf32> to vector<16x1xf32>
    %cst_282 = arith.constant 3.200000e+01 : f32
    %827 = vector.broadcast %cst_282 : f32 to vector<16x1xf32>
    %828 = arith.divf %826, %827 : vector<16x1xf32>
    %829 = arith.mulf %824, %824 : vector<16x32xf32>
    %cst_283 = arith.constant dense<0.000000e+00> : vector<16xf32>
    %830 = vector.multi_reduction <add>, %829, %cst_283 [1] : vector<16x32xf32> to vector<16xf32>
    %831 = vector.shape_cast %830 : vector<16xf32> to vector<16x1xf32>
    %cst_284 = arith.constant 3.200000e+01 : f32
    %832 = vector.broadcast %cst_284 : f32 to vector<16x1xf32>
    %833 = arith.divf %831, %832 : vector<16x1xf32>
    %834 = arith.mulf %828, %828 : vector<16x1xf32>
    %835 = arith.subf %833, %834 : vector<16x1xf32>
    %836 = vector.broadcast %828 : vector<16x1xf32> to vector<16x32xf32>
    %837 = arith.subf %824, %836 : vector<16x32xf32>
    %cst_285 = arith.constant 9.99999974E-6 : f32
    %838 = vector.broadcast %cst_285 : f32 to vector<16x1xf32>
    %839 = arith.addf %835, %838 : vector<16x1xf32>
    %840 = math.rsqrt %839 : vector<16x1xf32>
    %841 = vector.broadcast %840 : vector<16x1xf32> to vector<16x32xf32>
    %842 = arith.mulf %837, %841 : vector<16x32xf32>
    %843 = vector.broadcast %685 : vector<1x32xf32> to vector<16x32xf32>
    %844 = arith.mulf %842, %843 : vector<16x32xf32>
    %845 = vector.broadcast %686 : vector<1x32xf32> to vector<16x32xf32>
    %846 = arith.addf %844, %845 : vector<16x32xf32>
    %c5 = arith.constant 5 : index
    %c0_286 = arith.constant 0 : index
    %c0_287 = arith.constant 0 : index
    %847 = vector.load %arg10[%c5, %c0_286, %c0_287] : memref<6x6x32xf32, #tpu.memory_space<vmem>>, vector<1x6x32xf32>
    %848 = vector.shape_cast %847 : vector<1x6x32xf32> to vector<6x32xf32>
    %849 = vector.extract_strided_slice %848 {offsets = [0, 0], sizes = [1, 32], strides = [1, 1]} : vector<6x32xf32> to vector<1x32xf32>
    %850 = vector.extract_strided_slice %848 {offsets = [1, 0], sizes = [1, 32], strides = [1, 1]} : vector<6x32xf32> to vector<1x32xf32>
    %851 = vector.extract_strided_slice %848 {offsets = [2, 0], sizes = [1, 32], strides = [1, 1]} : vector<6x32xf32> to vector<1x32xf32>
    %852 = vector.extract_strided_slice %848 {offsets = [3, 0], sizes = [1, 32], strides = [1, 1]} : vector<6x32xf32> to vector<1x32xf32>
    %853 = vector.extract_strided_slice %848 {offsets = [4, 0], sizes = [1, 32], strides = [1, 1]} : vector<6x32xf32> to vector<1x32xf32>
    %854 = vector.extract_strided_slice %848 {offsets = [5, 0], sizes = [1, 32], strides = [1, 1]} : vector<6x32xf32> to vector<1x32xf32>
    %c5_288 = arith.constant 5 : index
    %c0_289 = arith.constant 0 : index
    %c0_290 = arith.constant 0 : index
    %855 = vector.load %arg4[%c5_288, %c0_289, %c0_290] : memref<6x32x96xf32, #tpu.memory_space<vmem>>, vector<1x32x96xf32>
    %856 = vector.shape_cast %855 : vector<1x32x96xf32> to vector<32x96xf32>
    %cst_291 = arith.constant dense<0.000000e+00> : vector<16x96xf32>
    %857 = tpu.matmul %846, %856, %cst_291 {dimension_numbers = #tpu.dot_dimension_numbers<[1], [0], [0], [1], [0, 0, 1, 1], [], []>} : vector<16x32xf32>, vector<32x96xf32>, vector<16x96xf32> -> vector<16x96xf32>
    %c5_292 = arith.constant 5 : index
    %c0_293 = arith.constant 0 : index
    %c0_294 = arith.constant 0 : index
    %858 = vector.load %arg5[%c5_292, %c0_293, %c0_294] : memref<6x1x96xf32, #tpu.memory_space<vmem>>, vector<1x1x96xf32>
    %859 = vector.shape_cast %858 : vector<1x1x96xf32> to vector<1x96xf32>
    %860 = vector.broadcast %859 : vector<1x96xf32> to vector<16x96xf32>
    %861 = arith.addf %857, %860 : vector<16x96xf32>
    %862 = vector.extract_strided_slice %861 {offsets = [0, 0], sizes = [16, 4], strides = [1, 1]} : vector<16x96xf32> to vector<16x4xf32>
    %863 = vector.shape_cast %862 : vector<16x4xf32> to vector<1x16x4xf32>
    %864 = vector.extract_strided_slice %861 {offsets = [0, 4], sizes = [16, 4], strides = [1, 1]} : vector<16x96xf32> to vector<16x4xf32>
    %865 = vector.shape_cast %864 : vector<16x4xf32> to vector<1x16x4xf32>
    %866 = vector.extract_strided_slice %861 {offsets = [0, 8], sizes = [16, 4], strides = [1, 1]} : vector<16x96xf32> to vector<16x4xf32>
    %867 = vector.shape_cast %866 : vector<16x4xf32> to vector<1x16x4xf32>
    %868 = vector.extract_strided_slice %861 {offsets = [0, 12], sizes = [16, 4], strides = [1, 1]} : vector<16x96xf32> to vector<16x4xf32>
    %869 = vector.shape_cast %868 : vector<16x4xf32> to vector<1x16x4xf32>
    %870 = vector.extract_strided_slice %861 {offsets = [0, 16], sizes = [16, 4], strides = [1, 1]} : vector<16x96xf32> to vector<16x4xf32>
    %871 = vector.shape_cast %870 : vector<16x4xf32> to vector<1x16x4xf32>
    %872 = vector.extract_strided_slice %861 {offsets = [0, 20], sizes = [16, 4], strides = [1, 1]} : vector<16x96xf32> to vector<16x4xf32>
    %873 = vector.shape_cast %872 : vector<16x4xf32> to vector<1x16x4xf32>
    %874 = vector.extract_strided_slice %861 {offsets = [0, 24], sizes = [16, 4], strides = [1, 1]} : vector<16x96xf32> to vector<16x4xf32>
    %875 = vector.shape_cast %874 : vector<16x4xf32> to vector<1x16x4xf32>
    %876 = vector.extract_strided_slice %861 {offsets = [0, 28], sizes = [16, 4], strides = [1, 1]} : vector<16x96xf32> to vector<16x4xf32>
    %877 = vector.shape_cast %876 : vector<16x4xf32> to vector<1x16x4xf32>
    %878 = tpu.concatenate %863, %865, %867, %869, %871, %873, %875, %877 in 0 : vector<1x16x4xf32>, vector<1x16x4xf32>, vector<1x16x4xf32>, vector<1x16x4xf32>, vector<1x16x4xf32>, vector<1x16x4xf32>, vector<1x16x4xf32>, vector<1x16x4xf32> -> vector<8x16x4xf32>
    %879 = vector.extract_strided_slice %861 {offsets = [0, 32], sizes = [16, 4], strides = [1, 1]} : vector<16x96xf32> to vector<16x4xf32>
    %880 = vector.shape_cast %879 : vector<16x4xf32> to vector<1x16x4xf32>
    %881 = vector.extract_strided_slice %861 {offsets = [0, 36], sizes = [16, 4], strides = [1, 1]} : vector<16x96xf32> to vector<16x4xf32>
    %882 = vector.shape_cast %881 : vector<16x4xf32> to vector<1x16x4xf32>
    %883 = vector.extract_strided_slice %861 {offsets = [0, 40], sizes = [16, 4], strides = [1, 1]} : vector<16x96xf32> to vector<16x4xf32>
    %884 = vector.shape_cast %883 : vector<16x4xf32> to vector<1x16x4xf32>
    %885 = vector.extract_strided_slice %861 {offsets = [0, 44], sizes = [16, 4], strides = [1, 1]} : vector<16x96xf32> to vector<16x4xf32>
    %886 = vector.shape_cast %885 : vector<16x4xf32> to vector<1x16x4xf32>
    %887 = vector.extract_strided_slice %861 {offsets = [0, 48], sizes = [16, 4], strides = [1, 1]} : vector<16x96xf32> to vector<16x4xf32>
    %888 = vector.shape_cast %887 : vector<16x4xf32> to vector<1x16x4xf32>
    %889 = vector.extract_strided_slice %861 {offsets = [0, 52], sizes = [16, 4], strides = [1, 1]} : vector<16x96xf32> to vector<16x4xf32>
    %890 = vector.shape_cast %889 : vector<16x4xf32> to vector<1x16x4xf32>
    %891 = vector.extract_strided_slice %861 {offsets = [0, 56], sizes = [16, 4], strides = [1, 1]} : vector<16x96xf32> to vector<16x4xf32>
    %892 = vector.shape_cast %891 : vector<16x4xf32> to vector<1x16x4xf32>
    %893 = vector.extract_strided_slice %861 {offsets = [0, 60], sizes = [16, 4], strides = [1, 1]} : vector<16x96xf32> to vector<16x4xf32>
    %894 = vector.shape_cast %893 : vector<16x4xf32> to vector<1x16x4xf32>
    %895 = tpu.concatenate %880, %882, %884, %886, %888, %890, %892, %894 in 0 : vector<1x16x4xf32>, vector<1x16x4xf32>, vector<1x16x4xf32>, vector<1x16x4xf32>, vector<1x16x4xf32>, vector<1x16x4xf32>, vector<1x16x4xf32>, vector<1x16x4xf32> -> vector<8x16x4xf32>
    %896 = vector.extract_strided_slice %861 {offsets = [0, 64], sizes = [16, 4], strides = [1, 1]} : vector<16x96xf32> to vector<16x4xf32>
    %897 = vector.shape_cast %896 : vector<16x4xf32> to vector<1x16x4xf32>
    %898 = vector.extract_strided_slice %861 {offsets = [0, 68], sizes = [16, 4], strides = [1, 1]} : vector<16x96xf32> to vector<16x4xf32>
    %899 = vector.shape_cast %898 : vector<16x4xf32> to vector<1x16x4xf32>
    %900 = vector.extract_strided_slice %861 {offsets = [0, 72], sizes = [16, 4], strides = [1, 1]} : vector<16x96xf32> to vector<16x4xf32>
    %901 = vector.shape_cast %900 : vector<16x4xf32> to vector<1x16x4xf32>
    %902 = vector.extract_strided_slice %861 {offsets = [0, 76], sizes = [16, 4], strides = [1, 1]} : vector<16x96xf32> to vector<16x4xf32>
    %903 = vector.shape_cast %902 : vector<16x4xf32> to vector<1x16x4xf32>
    %904 = vector.extract_strided_slice %861 {offsets = [0, 80], sizes = [16, 4], strides = [1, 1]} : vector<16x96xf32> to vector<16x4xf32>
    %905 = vector.shape_cast %904 : vector<16x4xf32> to vector<1x16x4xf32>
    %906 = vector.extract_strided_slice %861 {offsets = [0, 84], sizes = [16, 4], strides = [1, 1]} : vector<16x96xf32> to vector<16x4xf32>
    %907 = vector.shape_cast %906 : vector<16x4xf32> to vector<1x16x4xf32>
    %908 = vector.extract_strided_slice %861 {offsets = [0, 88], sizes = [16, 4], strides = [1, 1]} : vector<16x96xf32> to vector<16x4xf32>
    %909 = vector.shape_cast %908 : vector<16x4xf32> to vector<1x16x4xf32>
    %910 = vector.extract_strided_slice %861 {offsets = [0, 92], sizes = [16, 4], strides = [1, 1]} : vector<16x96xf32> to vector<16x4xf32>
    %911 = vector.shape_cast %910 : vector<16x4xf32> to vector<1x16x4xf32>
    %912 = tpu.concatenate %897, %899, %901, %903, %905, %907, %909, %911 in 0 : vector<1x16x4xf32>, vector<1x16x4xf32>, vector<1x16x4xf32>, vector<1x16x4xf32>, vector<1x16x4xf32>, vector<1x16x4xf32>, vector<1x16x4xf32>, vector<1x16x4xf32> -> vector<8x16x4xf32>
    %cst_295 = arith.constant dense<0.000000e+00> : vector<8x16x16xf32>
    %913 = tpu.matmul %878, %895, %cst_295 {dimension_numbers = #tpu.dot_dimension_numbers<[2], [2], [1], [1], [0, 0, 0, 1, 1, 1], [0], [0]>} : vector<8x16x4xf32>, vector<8x16x4xf32>, vector<8x16x16xf32> -> vector<8x16x16xf32>
    %cst_296 = arith.constant dense<0xFF800000> : vector<8x16xf32>
    %914 = vector.multi_reduction <maximumf>, %913, %cst_296 [2] : vector<8x16x16xf32> to vector<8x16xf32>
    %915 = vector.shape_cast %914 : vector<8x16xf32> to vector<8x16x1xf32>
    %916 = vector.broadcast %915 : vector<8x16x1xf32> to vector<8x16x16xf32>
    %917 = arith.subf %913, %916 : vector<8x16x16xf32>
    %918 = math.exp %917 : vector<8x16x16xf32>
    %cst_297 = arith.constant dense<0.000000e+00> : vector<8x16xf32>
    %919 = vector.multi_reduction <add>, %918, %cst_297 [2] : vector<8x16x16xf32> to vector<8x16xf32>
    %920 = vector.shape_cast %919 : vector<8x16xf32> to vector<8x16x1xf32>
    %921 = tpu.reciprocal %920 {approx = true} : vector<8x16x1xf32> -> vector<8x16x1xf32>
    %922 = vector.broadcast %921 : vector<8x16x1xf32> to vector<8x16x16xf32>
    %923 = arith.mulf %918, %922 : vector<8x16x16xf32>
    %cst_298 = arith.constant dense<0.000000e+00> : vector<8x16x4xf32>
    %924 = tpu.matmul %923, %912, %cst_298 {dimension_numbers = #tpu.dot_dimension_numbers<[2], [1], [1], [2], [0, 0, 0, 1, 1, 2], [0], [0]>} : vector<8x16x16xf32>, vector<8x16x4xf32>, vector<8x16x4xf32> -> vector<8x16x4xf32>
    %925 = vector.extract_strided_slice %924 {offsets = [0, 0, 0], sizes = [1, 16, 4], strides = [1, 1, 1]} : vector<8x16x4xf32> to vector<1x16x4xf32>
    %926 = vector.shape_cast %925 : vector<1x16x4xf32> to vector<16x4xf32>
    %c0_299 = arith.constant 0 : index
    %c0_300 = arith.constant 0 : index
    %927 = vector.load %arg12[%c0_299, %c0_300] : memref<16x32xf32, #tpu.memory_space<vmem>>, vector<16x4xf32>
    tpu.vector_store %arg12[%c0_299, %c0_300], %926 {strides = array<i32>} : memref<16x32xf32, #tpu.memory_space<vmem>>, vector<16x4xf32>,
    %928 = vector.extract_strided_slice %924 {offsets = [1, 0, 0], sizes = [1, 16, 4], strides = [1, 1, 1]} : vector<8x16x4xf32> to vector<1x16x4xf32>
    %929 = vector.shape_cast %928 : vector<1x16x4xf32> to vector<16x4xf32>
    %c0_301 = arith.constant 0 : index
    %c4_302 = arith.constant 4 : index
    %930 = vector.load %arg12[%c0_301, %c4_302] : memref<16x32xf32, #tpu.memory_space<vmem>>, vector<16x4xf32>
    tpu.vector_store %arg12[%c0_301, %c4_302], %929 {strides = array<i32>} : memref<16x32xf32, #tpu.memory_space<vmem>>, vector<16x4xf32>,
    %931 = vector.extract_strided_slice %924 {offsets = [2, 0, 0], sizes = [1, 16, 4], strides = [1, 1, 1]} : vector<8x16x4xf32> to vector<1x16x4xf32>
    %932 = vector.shape_cast %931 : vector<1x16x4xf32> to vector<16x4xf32>
    %c0_303 = arith.constant 0 : index
    %c8_304 = arith.constant 8 : index
    %933 = vector.load %arg12[%c0_303, %c8_304] : memref<16x32xf32, #tpu.memory_space<vmem>>, vector<16x4xf32>
    tpu.vector_store %arg12[%c0_303, %c8_304], %932 {strides = array<i32>} : memref<16x32xf32, #tpu.memory_space<vmem>>, vector<16x4xf32>,
    %934 = vector.extract_strided_slice %924 {offsets = [3, 0, 0], sizes = [1, 16, 4], strides = [1, 1, 1]} : vector<8x16x4xf32> to vector<1x16x4xf32>
    %935 = vector.shape_cast %934 : vector<1x16x4xf32> to vector<16x4xf32>
    %c0_305 = arith.constant 0 : index
    %c12_306 = arith.constant 12 : index
    %936 = vector.load %arg12[%c0_305, %c12_306] : memref<16x32xf32, #tpu.memory_space<vmem>>, vector<16x4xf32>
    tpu.vector_store %arg12[%c0_305, %c12_306], %935 {strides = array<i32>} : memref<16x32xf32, #tpu.memory_space<vmem>>, vector<16x4xf32>,
    %937 = vector.extract_strided_slice %924 {offsets = [4, 0, 0], sizes = [1, 16, 4], strides = [1, 1, 1]} : vector<8x16x4xf32> to vector<1x16x4xf32>
    %938 = vector.shape_cast %937 : vector<1x16x4xf32> to vector<16x4xf32>
    %c0_307 = arith.constant 0 : index
    %c16_308 = arith.constant 16 : index
    %939 = vector.load %arg12[%c0_307, %c16_308] : memref<16x32xf32, #tpu.memory_space<vmem>>, vector<16x4xf32>
    tpu.vector_store %arg12[%c0_307, %c16_308], %938 {strides = array<i32>} : memref<16x32xf32, #tpu.memory_space<vmem>>, vector<16x4xf32>,
    %940 = vector.extract_strided_slice %924 {offsets = [5, 0, 0], sizes = [1, 16, 4], strides = [1, 1, 1]} : vector<8x16x4xf32> to vector<1x16x4xf32>
    %941 = vector.shape_cast %940 : vector<1x16x4xf32> to vector<16x4xf32>
    %c0_309 = arith.constant 0 : index
    %c20_310 = arith.constant 20 : index
    %942 = vector.load %arg12[%c0_309, %c20_310] : memref<16x32xf32, #tpu.memory_space<vmem>>, vector<16x4xf32>
    tpu.vector_store %arg12[%c0_309, %c20_310], %941 {strides = array<i32>} : memref<16x32xf32, #tpu.memory_space<vmem>>, vector<16x4xf32>,
    %943 = vector.extract_strided_slice %924 {offsets = [6, 0, 0], sizes = [1, 16, 4], strides = [1, 1, 1]} : vector<8x16x4xf32> to vector<1x16x4xf32>
    %944 = vector.shape_cast %943 : vector<1x16x4xf32> to vector<16x4xf32>
    %c0_311 = arith.constant 0 : index
    %c24_312 = arith.constant 24 : index
    %945 = vector.load %arg12[%c0_311, %c24_312] : memref<16x32xf32, #tpu.memory_space<vmem>>, vector<16x4xf32>
    tpu.vector_store %arg12[%c0_311, %c24_312], %944 {strides = array<i32>} : memref<16x32xf32, #tpu.memory_space<vmem>>, vector<16x4xf32>,
    %946 = vector.extract_strided_slice %924 {offsets = [7, 0, 0], sizes = [1, 16, 4], strides = [1, 1, 1]} : vector<8x16x4xf32> to vector<1x16x4xf32>
    %947 = vector.shape_cast %946 : vector<1x16x4xf32> to vector<16x4xf32>
    %c0_313 = arith.constant 0 : index
    %c28_314 = arith.constant 28 : index
    %948 = vector.load %arg12[%c0_313, %c28_314] : memref<16x32xf32, #tpu.memory_space<vmem>>, vector<16x4xf32>
    tpu.vector_store %arg12[%c0_313, %c28_314], %947 {strides = array<i32>} : memref<16x32xf32, #tpu.memory_space<vmem>>, vector<16x4xf32>,
    %c0_315 = arith.constant 0 : index
    %c0_316 = arith.constant 0 : index
    %949 = vector.load %arg12[%c0_315, %c0_316] : memref<16x32xf32, #tpu.memory_space<vmem>>, vector<16x32xf32>
    %c5_317 = arith.constant 5 : index
    %c0_318 = arith.constant 0 : index
    %c0_319 = arith.constant 0 : index
    %950 = vector.load %arg6[%c5_317, %c0_318, %c0_319] : memref<6x32x32xf32, #tpu.memory_space<vmem>>, vector<1x32x32xf32>
    %951 = vector.shape_cast %950 : vector<1x32x32xf32> to vector<32x32xf32>
    %cst_320 = arith.constant dense<0.000000e+00> : vector<16x32xf32>
    %952 = tpu.matmul %949, %951, %cst_320 {dimension_numbers = #tpu.dot_dimension_numbers<[1], [0], [0], [1], [0, 0, 1, 1], [], []>} : vector<16x32xf32>, vector<32x32xf32>, vector<16x32xf32> -> vector<16x32xf32>
    %953 = vector.broadcast %849 : vector<1x32xf32> to vector<16x32xf32>
    %954 = arith.addf %952, %953 : vector<16x32xf32>
    %955 = arith.addf %846, %954 : vector<16x32xf32>
    %cst_321 = arith.constant dense<0.000000e+00> : vector<16xf32>
    %956 = vector.multi_reduction <add>, %955, %cst_321 [1] : vector<16x32xf32> to vector<16xf32>
    %957 = vector.shape_cast %956 : vector<16xf32> to vector<16x1xf32>
    %cst_322 = arith.constant 3.200000e+01 : f32
    %958 = vector.broadcast %cst_322 : f32 to vector<16x1xf32>
    %959 = arith.divf %957, %958 : vector<16x1xf32>
    %960 = arith.mulf %955, %955 : vector<16x32xf32>
    %cst_323 = arith.constant dense<0.000000e+00> : vector<16xf32>
    %961 = vector.multi_reduction <add>, %960, %cst_323 [1] : vector<16x32xf32> to vector<16xf32>
    %962 = vector.shape_cast %961 : vector<16xf32> to vector<16x1xf32>
    %cst_324 = arith.constant 3.200000e+01 : f32
    %963 = vector.broadcast %cst_324 : f32 to vector<16x1xf32>
    %964 = arith.divf %962, %963 : vector<16x1xf32>
    %965 = arith.mulf %959, %959 : vector<16x1xf32>
    %966 = arith.subf %964, %965 : vector<16x1xf32>
    %967 = vector.broadcast %959 : vector<16x1xf32> to vector<16x32xf32>
    %968 = arith.subf %955, %967 : vector<16x32xf32>
    %cst_325 = arith.constant 9.99999974E-6 : f32
    %969 = vector.broadcast %cst_325 : f32 to vector<16x1xf32>
    %970 = arith.addf %966, %969 : vector<16x1xf32>
    %971 = math.rsqrt %970 : vector<16x1xf32>
    %972 = vector.broadcast %971 : vector<16x1xf32> to vector<16x32xf32>
    %973 = arith.mulf %968, %972 : vector<16x32xf32>
    %974 = vector.broadcast %851 : vector<1x32xf32> to vector<16x32xf32>
    %975 = arith.mulf %973, %974 : vector<16x32xf32>
    %976 = vector.broadcast %852 : vector<1x32xf32> to vector<16x32xf32>
    %977 = arith.addf %975, %976 : vector<16x32xf32>
    %c5_326 = arith.constant 5 : index
    %c0_327 = arith.constant 0 : index
    %c0_328 = arith.constant 0 : index
    %978 = vector.load %arg7[%c5_326, %c0_327, %c0_328] : memref<6x32x128xf32, #tpu.memory_space<vmem>>, vector<1x32x128xf32>
    %979 = vector.shape_cast %978 : vector<1x32x128xf32> to vector<32x128xf32>
    %cst_329 = arith.constant dense<0.000000e+00> : vector<16x128xf32>
    %980 = tpu.matmul %977, %979, %cst_329 {dimension_numbers = #tpu.dot_dimension_numbers<[1], [0], [0], [1], [0, 0, 1, 1], [], []>} : vector<16x32xf32>, vector<32x128xf32>, vector<16x128xf32> -> vector<16x128xf32>
    %c5_330 = arith.constant 5 : index
    %c0_331 = arith.constant 0 : index
    %c0_332 = arith.constant 0 : index
    %981 = vector.load %arg8[%c5_330, %c0_331, %c0_332] : memref<6x1x128xf32, #tpu.memory_space<vmem>>, vector<1x1x128xf32>
    %982 = vector.shape_cast %981 : vector<1x1x128xf32> to vector<1x128xf32>
    %983 = vector.broadcast %982 : vector<1x128xf32> to vector<16x128xf32>
    %984 = arith.addf %980, %983 : vector<16x128xf32>
    %cst_333 = arith.constant 0.000000e+00 : f32
    %985 = vector.broadcast %cst_333 : f32 to vector<16x128xf32>
    %986 = arith.maximumf %984, %985 : vector<16x128xf32>
    %c5_334 = arith.constant 5 : index
    %c0_335 = arith.constant 0 : index
    %c0_336 = arith.constant 0 : index
    %987 = vector.load %arg9[%c5_334, %c0_335, %c0_336] : memref<6x128x32xf32, #tpu.memory_space<vmem>>, vector<1x128x32xf32>
    %988 = vector.shape_cast %987 : vector<1x128x32xf32> to vector<128x32xf32>
    %cst_337 = arith.constant dense<0.000000e+00> : vector<16x32xf32>
    %989 = tpu.matmul %986, %988, %cst_337 {dimension_numbers = #tpu.dot_dimension_numbers<[1], [0], [0], [1], [0, 0, 1, 1], [], []>} : vector<16x128xf32>, vector<128x32xf32>, vector<16x32xf32> -> vector<16x32xf32>
    %990 = vector.broadcast %850 : vector<1x32xf32> to vector<16x32xf32>
    %991 = arith.addf %989, %990 : vector<16x32xf32>
    %992 = arith.addf %977, %991 : vector<16x32xf32>
    %cst_338 = arith.constant dense<0.000000e+00> : vector<16xf32>
    %993 = vector.multi_reduction <add>, %992, %cst_338 [1] : vector<16x32xf32> to vector<16xf32>
    %994 = vector.shape_cast %993 : vector<16xf32> to vector<16x1xf32>
    %cst_339 = arith.constant 3.200000e+01 : f32
    %995 = vector.broadcast %cst_339 : f32 to vector<16x1xf32>
    %996 = arith.divf %994, %995 : vector<16x1xf32>
    %997 = arith.mulf %992, %992 : vector<16x32xf32>
    %cst_340 = arith.constant dense<0.000000e+00> : vector<16xf32>
    %998 = vector.multi_reduction <add>, %997, %cst_340 [1] : vector<16x32xf32> to vector<16xf32>
    %999 = vector.shape_cast %998 : vector<16xf32> to vector<16x1xf32>
    %cst_341 = arith.constant 3.200000e+01 : f32
    %1000 = vector.broadcast %cst_341 : f32 to vector<16x1xf32>
    %1001 = arith.divf %999, %1000 : vector<16x1xf32>
    %1002 = arith.mulf %996, %996 : vector<16x1xf32>
    %1003 = arith.subf %1001, %1002 : vector<16x1xf32>
    %1004 = vector.broadcast %996 : vector<16x1xf32> to vector<16x32xf32>
    %1005 = arith.subf %992, %1004 : vector<16x32xf32>
    %cst_342 = arith.constant 9.99999974E-6 : f32
    %1006 = vector.broadcast %cst_342 : f32 to vector<16x1xf32>
    %1007 = arith.addf %1003, %1006 : vector<16x1xf32>
    %1008 = math.rsqrt %1007 : vector<16x1xf32>
    %1009 = vector.broadcast %1008 : vector<16x1xf32> to vector<16x32xf32>
    %1010 = arith.mulf %1005, %1009 : vector<16x32xf32>
    %1011 = vector.broadcast %853 : vector<1x32xf32> to vector<16x32xf32>
    %1012 = arith.mulf %1010, %1011 : vector<16x32xf32>
    %1013 = vector.broadcast %854 : vector<1x32xf32> to vector<16x32xf32>
    %1014 = arith.addf %1012, %1013 : vector<16x32xf32>
    %1015 = vector.shape_cast %1014 : vector<16x32xf32> to vector<1x16x32xf32>
    %c0_343 = arith.constant 0 : index
    %c0_344 = arith.constant 0 : index
    %c0_345 = arith.constant 0 : index
    %1016 = vector.load %arg11[%c0_343, %c0_344, %c0_345] : memref<1x16x32xf32, #tpu.memory_space<vmem>>, vector<1x16x32xf32>
    tpu.vector_store %arg11[%c0_343, %c0_344, %c0_345], %1015 {strides = array<i32>} : memref<1x16x32xf32, #tpu.memory_space<vmem>>, vector<1x16x32xf32>,
    return
  }
  func.func @transform_0(%arg0: i32) -> (i32, i32, i32) {
    %c0_i32 = arith.constant 0 : i32
    %c0_i32_0 = arith.constant 0 : i32
    %c0_i32_1 = arith.constant 0 : i32
    return %arg0, %c0_i32, %c0_i32_0 : i32, i32, i32
  }
  func.func @transform_1(%arg0: i32) -> (i32, i32) {
    %c0_i32 = arith.constant 0 : i32
    %c0_i32_0 = arith.constant 0 : i32
    %c0_i32_1 = arith.constant 0 : i32
    return %c0_i32, %c0_i32_0 : i32, i32
  }
  func.func @transform_2(%arg0: i32) -> (i32, i32) {
    %c0_i32 = arith.constant 0 : i32
    %c0_i32_0 = arith.constant 0 : i32
    %c0_i32_1 = arith.constant 0 : i32
    return %c0_i32, %c0_i32_0 : i32, i32
  }
  func.func @transform_3(%arg0: i32) -> (i32, i32, i32) {
    %c0_i32 = arith.constant 0 : i32
    %c0_i32_0 = arith.constant 0 : i32
    %c0_i32_1 = arith.constant 0 : i32
    %c0_i32_2 = arith.constant 0 : i32
    return %c0_i32, %c0_i32_0, %c0_i32_1 : i32, i32, i32
  }
  func.func @transform_4(%arg0: i32) -> (i32, i32, i32) {
    %c0_i32 = arith.constant 0 : i32
    %c0_i32_0 = arith.constant 0 : i32
    %c0_i32_1 = arith.constant 0 : i32
    %c0_i32_2 = arith.constant 0 : i32
    return %c0_i32, %c0_i32_0, %c0_i32_1 : i32, i32, i32
  }
  func.func @transform_5(%arg0: i32) -> (i32, i32, i32) {
    %c0_i32 = arith.constant 0 : i32
    %c0_i32_0 = arith.constant 0 : i32
    %c0_i32_1 = arith.constant 0 : i32
    %c0_i32_2 = arith.constant 0 : i32
    return %c0_i32, %c0_i32_0, %c0_i32_1 : i32, i32, i32
  }
  func.func @transform_6(%arg0: i32) -> (i32, i32, i32) {
    %c0_i32 = arith.constant 0 : i32
    %c0_i32_0 = arith.constant 0 : i32
    %c0_i32_1 = arith.constant 0 : i32
    %c0_i32_2 = arith.constant 0 : i32
    return %c0_i32, %c0_i32_0, %c0_i32_1 : i32, i32, i32
  }
  func.func @transform_7(%arg0: i32) -> (i32, i32, i32) {
    %c0_i32 = arith.constant 0 : i32
    %c0_i32_0 = arith.constant 0 : i32
    %c0_i32_1 = arith.constant 0 : i32
    %c0_i32_2 = arith.constant 0 : i32
    return %c0_i32, %c0_i32_0, %c0_i32_1 : i32, i32, i32
  }
  func.func @transform_8(%arg0: i32) -> (i32, i32, i32) {
    %c0_i32 = arith.constant 0 : i32
    %c0_i32_0 = arith.constant 0 : i32
    %c0_i32_1 = arith.constant 0 : i32
    %c0_i32_2 = arith.constant 0 : i32
    return %c0_i32, %c0_i32_0, %c0_i32_1 : i32, i32, i32
  }
  func.func @transform_9(%arg0: i32) -> (i32, i32, i32) {
    %c0_i32 = arith.constant 0 : i32
    %c0_i32_0 = arith.constant 0 : i32
    %c0_i32_1 = arith.constant 0 : i32
    %c0_i32_2 = arith.constant 0 : i32
    return %c0_i32, %c0_i32_0, %c0_i32_1 : i32, i32, i32
  }
  func.func @transform_10(%arg0: i32) -> (i32, i32, i32) {
    %c0_i32 = arith.constant 0 : i32
    %c0_i32_0 = arith.constant 0 : i32
    %c0_i32_1 = arith.constant 0 : i32
    return %arg0, %c0_i32, %c0_i32_0 : i32, i32, i32
  }
}

</mosaic_0001>

<llo_original>
// kernel: transformer_encoder_forward.1
$region0: #{transformer_encoder_forward.1}
  #allocation0 [shape = 'u32[]', space=smem, size = 0x4, offset = 0x4, fixed_abs, tag = 'smem constant byte address 0x4 - core index']
  #allocation1 [shape = 'u32[72,128]{1,0:T(1,128)}', space=vmem, size = 0x9000, scoped, tag = 'internal scratch']
  #allocation2 [shape = 'f32[16,32]{1,0:T(8,128)}', space=vmem, size = 0x2000, scoped, tag = 'scratch operand']
  %s0 = inlined_call_operand.vmem [shape: f32[2,16,16], index: 0, kind: input, shape index: {}]
  %s1 = inlined_call_operand.vmem [shape: f32[16,32], index: 1, kind: input, shape index: {}]
  %s2 = inlined_call_operand.vmem [shape: f32[1,32], index: 2, kind: input, shape index: {}]
  %s3 = inlined_call_operand.vmem [shape: f32[6,32,96], index: 3, kind: input, shape index: {}]
  %s4 = inlined_call_operand.vmem [shape: f32[6,1,96], index: 4, kind: input, shape index: {}]
  %s5 = inlined_call_operand.vmem [shape: f32[6,32,32], index: 5, kind: input, shape index: {}]
  %s6 = inlined_call_operand.vmem [shape: f32[6,32,128], index: 6, kind: input, shape index: {}]
  %s7 = inlined_call_operand.vmem [shape: f32[6,1,128], index: 7, kind: input, shape index: {}]
  %s8 = inlined_call_operand.vmem [shape: f32[6,128,32], index: 8, kind: input, shape index: {}]
  %s9 = inlined_call_operand.vmem [shape: f32[6,6,32], index: 9, kind: input, shape index: {}]
  %s10 = inlined_call_operand.vmem [shape: f32[2,16,32], index: 10, kind: output, shape index: {}]
  %s11 = sld [smem:[#allocation0]]
  $region73: #{transformer_encoder_forward.1} parent=0
    _
  %s13 = ssub.s32 1, %s11
  %s14 = scalar_select 0, %s13, %s11
  loop: start=0, step=1, limit=4
  $region2: #{transformer_encoder_forward.1} parent=0 // loop_pre_header
    _
  $region3: #{transformer_encoder_forward.1} parent=0 // loop_header
    %s16 = sphi 0, %s20
    %p17 = scmp.ge.s32.totalorder %s16, 4
    %s26 = sphi 0, %s28
    %s29 = sphi 0, %s26
    %s30 = sphi 0, %s29
    %s46 = sphi 0, %s30
    %s50 = sphi 0, %s50
    %s52 = sphi 0, %s50
    %s53 = sphi 0, %s52
    %s67 = sphi 0, %s53
    %s71 = sphi 0, %s71
    %s73 = sphi 0, %s71
    %s74 = sphi 0, %s73
    %s88 = sphi 0, %s74
    %s92 = sphi 0, %s92
    %s94 = sphi 0, %s92
    %s95 = sphi 0, %s94
    %s109 = sphi 0, %s95
    %s113 = sphi 0, %s113
    %s115 = sphi 0, %s113
    %s116 = sphi 0, %s115
    %s130 = sphi 0, %s116
    %s134 = sphi 0, %s134
    %s136 = sphi 0, %s134
    %s137 = sphi 0, %s136
    %s151 = sphi 0, %s137
    %s155 = sphi 0, %s155
    %s157 = sphi 0, %s155
    %s158 = sphi 0, %s157
    %s172 = sphi 0, %s158
    %s176 = sphi 0, %s176
    %s178 = sphi 0, %s176
    %s179 = sphi 0, %s178
    %s193 = sphi 0, %s179
    %s197 = sphi 0, %s197
    %s199 = sphi 0, %s197
    %s200 = sphi 0, %s199
    %s214 = sphi 0, %s200
    %s218 = sphi 0, %s218
    %s220 = sphi 0, %s218
    %s221 = sphi 0, %s220
    %s235 = sphi 0, %s221
    %s241 = sphi 0, %s243
    %s244 = sphi 0, %s241
    %s245 = sphi 0, %s244
    %s261 = sphi 0, %s245
  $region4: #{transformer_encoder_forward.1} parent=0 // loop_header_branch
    %19 = sbr.rel (%p17) target = $region8
  $region5: #{transformer_encoder_forward.1} parent=0 // loop_body
    %s21 = ssub.s32 %s16, 1
    %s22 = ssub.s32 %s16, 2
    %s23 = sadd.s32 %s16, 1
    %s24 = ssub.s32 %s16, %s23
    %p25 = scmp.eq.s32.totalorder %s24, 0
    %s27 = sadd.s32 %s26, 1
    %s28 = scalar_select %p25, %s26, %s27
    %p31 = pneg %p25
    %p32 = scmp.eq.s32.totalorder %s16, 1
    %p33 = por %p31, %p32
    %p34 = scmp.ne.s32.totalorder %s26, %s29
    %p35 = scmp.eq.s32.totalorder %s16, 0
    %p36 = por %p34, %p35
    %p37 = scmp.ne.s32.totalorder %s26, %s29
    %p38 = scmp.eq.s32.totalorder %s21, 1
    %p39 = por %p37, %p38
    %p40 = scmp.ne.s32.totalorder %s29, %s30
    %p41 = scmp.eq.s32.totalorder %s21, 0
    %p42 = por %p40, %p41
    %p43 = scmp.ne.s32.totalorder %s29, %s30
    %p44 = scmp.eq.s32.totalorder %s22, 1
    %p45 = por %p43, %p44
    %p47 = scmp.ne.s32.totalorder %s30, %s46
    %p48 = scmp.eq.s32.totalorder %s22, 0
    %p49 = por %p47, %p48
    %s51 = sadd.s32 %s50, 1
    %p54 = scmp.eq.s32.totalorder %s16, 1
    %p55 = scmp.ne.s32.totalorder %s50, %s52
    %p56 = scmp.eq.s32.totalorder %s16, 0
    %p57 = por %p55, %p56
    %p58 = scmp.ne.s32.totalorder %s50, %s52
    %p59 = scmp.eq.s32.totalorder %s21, 1
    %p60 = por %p58, %p59
    %p61 = scmp.ne.s32.totalorder %s52, %s53
    %p62 = scmp.eq.s32.totalorder %s21, 0
    %p63 = por %p61, %p62
    %p64 = scmp.ne.s32.totalorder %s52, %s53
    %p65 = scmp.eq.s32.totalorder %s22, 1
    %p66 = por %p64, %p65
    %p68 = scmp.ne.s32.totalorder %s53, %s67
    %p69 = scmp.eq.s32.totalorder %s22, 0
    %p70 = por %p68, %p69
    %s72 = sadd.s32 %s71, 1
    %p75 = scmp.eq.s32.totalorder %s16, 1
    %p76 = scmp.ne.s32.totalorder %s71, %s73
    %p77 = scmp.eq.s32.totalorder %s16, 0
    %p78 = por %p76, %p77
    %p79 = scmp.ne.s32.totalorder %s71, %s73
    %p80 = scmp.eq.s32.totalorder %s21, 1
    %p81 = por %p79, %p80
    %p82 = scmp.ne.s32.totalorder %s73, %s74
    %p83 = scmp.eq.s32.totalorder %s21, 0
    %p84 = por %p82, %p83
    %p85 = scmp.ne.s32.totalorder %s73, %s74
    %p86 = scmp.eq.s32.totalorder %s22, 1
    %p87 = por %p85, %p86
    %p89 = scmp.ne.s32.totalorder %s74, %s88
    %p90 = scmp.eq.s32.totalorder %s22, 0
    %p91 = por %p89, %p90
    %s93 = sadd.s32 %s92, 1
    %p96 = scmp.eq.s32.totalorder %s16, 1
    %p97 = scmp.ne.s32.totalorder %s92, %s94
    %p98 = scmp.eq.s32.totalorder %s16, 0
    %p99 = por %p97, %p98
    %p100 = scmp.ne.s32.totalorder %s92, %s94
    %p101 = scmp.eq.s32.totalorder %s21, 1
    %p102 = por %p100, %p101
    %p103 = scmp.ne.s32.totalorder %s94, %s95
    %p104 = scmp.eq.s32.totalorder %s21, 0
    %p105 = por %p103, %p104
    %p106 = scmp.ne.s32.totalorder %s94, %s95
    %p107 = scmp.eq.s32.totalorder %s22, 1
    %p108 = por %p106, %p107
    %p110 = scmp.ne.s32.totalorder %s95, %s109
    %p111 = scmp.eq.s32.totalorder %s22, 0
    %p112 = por %p110, %p111
    %s114 = sadd.s32 %s113, 1
    %p117 = scmp.eq.s32.totalorder %s16, 1
    %p118 = scmp.ne.s32.totalorder %s113, %s115
    %p119 = scmp.eq.s32.totalorder %s16, 0
    %p120 = por %p118, %p119
    %p121 = scmp.ne.s32.totalorder %s113, %s115
    %p122 = scmp.eq.s32.totalorder %s21, 1
    %p123 = por %p121, %p122
    %p124 = scmp.ne.s32.totalorder %s115, %s116
    %p125 = scmp.eq.s32.totalorder %s21, 0
    %p126 = por %p124, %p125
    %p127 = scmp.ne.s32.totalorder %s115, %s116
    %p128 = scmp.eq.s32.totalorder %s22, 1
    %p129 = por %p127, %p128
    %p131 = scmp.ne.s32.totalorder %s116, %s130
    %p132 = scmp.eq.s32.totalorder %s22, 0
    %p133 = por %p131, %p132
    %s135 = sadd.s32 %s134, 1
    %p138 = scmp.eq.s32.totalorder %s16, 1
    %p139 = scmp.ne.s32.totalorder %s134, %s136
    %p140 = scmp.eq.s32.totalorder %s16, 0
    %p141 = por %p139, %p140
    %p142 = scmp.ne.s32.totalorder %s134, %s136
    %p143 = scmp.eq.s32.totalorder %s21, 1
    %p144 = por %p142, %p143
    %p145 = scmp.ne.s32.totalorder %s136, %s137
    %p146 = scmp.eq.s32.totalorder %s21, 0
    %p147 = por %p145, %p146
    %p148 = scmp.ne.s32.totalorder %s136, %s137
    %p149 = scmp.eq.s32.totalorder %s22, 1
    %p150 = por %p148, %p149
    %p152 = scmp.ne.s32.totalorder %s137, %s151
    %p153 = scmp.eq.s32.totalorder %s22, 0
    %p154 = por %p152, %p153
    %s156 = sadd.s32 %s155, 1
    %p159 = scmp.eq.s32.totalorder %s16, 1
    %p160 = scmp.ne.s32.totalorder %s155, %s157
    %p161 = scmp.eq.s32.totalorder %s16, 0
    %p162 = por %p160, %p161
    %p163 = scmp.ne.s32.totalorder %s155, %s157
    %p164 = scmp.eq.s32.totalorder %s21, 1
    %p165 = por %p163, %p164
    %p166 = scmp.ne.s32.totalorder %s157, %s158
    %p167 = scmp.eq.s32.totalorder %s21, 0
    %p168 = por %p166, %p167
    %p169 = scmp.ne.s32.totalorder %s157, %s158
    %p170 = scmp.eq.s32.totalorder %s22, 1
    %p171 = por %p169, %p170
    %p173 = scmp.ne.s32.totalorder %s158, %s172
    %p174 = scmp.eq.s32.totalorder %s22, 0
    %p175 = por %p173, %p174
    %s177 = sadd.s32 %s176, 1
    %p180 = scmp.eq.s32.totalorder %s16, 1
    %p181 = scmp.ne.s32.totalorder %s176, %s178
    %p182 = scmp.eq.s32.totalorder %s16, 0
    %p183 = por %p181, %p182
    %p184 = scmp.ne.s32.totalorder %s176, %s178
    %p185 = scmp.eq.s32.totalorder %s21, 1
    %p186 = por %p184, %p185
    %p187 = scmp.ne.s32.totalorder %s178, %s179
    %p188 = scmp.eq.s32.totalorder %s21, 0
    %p189 = por %p187, %p188
    %p190 = scmp.ne.s32.totalorder %s178, %s179
    %p191 = scmp.eq.s32.totalorder %s22, 1
    %p192 = por %p190, %p191
    %p194 = scmp.ne.s32.totalorder %s179, %s193
    %p195 = scmp.eq.s32.totalorder %s22, 0
    %p196 = por %p194, %p195
    %s198 = sadd.s32 %s197, 1
    %p201 = scmp.eq.s32.totalorder %s16, 1
    %p202 = scmp.ne.s32.totalorder %s197, %s199
    %p203 = scmp.eq.s32.totalorder %s16, 0
    %p204 = por %p202, %p203
    %p205 = scmp.ne.s32.totalorder %s197, %s199
    %p206 = scmp.eq.s32.totalorder %s21, 1
    %p207 = por %p205, %p206
    %p208 = scmp.ne.s32.totalorder %s199, %s200
    %p209 = scmp.eq.s32.totalorder %s21, 0
    %p210 = por %p208, %p209
    %p211 = scmp.ne.s32.totalorder %s199, %s200
    %p212 = scmp.eq.s32.totalorder %s22, 1
    %p213 = por %p211, %p212
    %p215 = scmp.ne.s32.totalorder %s200, %s214
    %p216 = scmp.eq.s32.totalorder %s22, 0
    %p217 = por %p215, %p216
    %s219 = sadd.s32 %s218, 1
    %p222 = scmp.eq.s32.totalorder %s16, 1
    %p223 = scmp.ne.s32.totalorder %s218, %s220
    %p224 = scmp.eq.s32.totalorder %s16, 0
    %p225 = por %p223, %p224
    %p226 = scmp.ne.s32.totalorder %s218, %s220
    %p227 = scmp.eq.s32.totalorder %s21, 1
    %p228 = por %p226, %p227
    %p229 = scmp.ne.s32.totalorder %s220, %s221
    %p230 = scmp.eq.s32.totalorder %s21, 0
    %p231 = por %p229, %p230
    %p232 = scmp.ne.s32.totalorder %s220, %s221
    %p233 = scmp.eq.s32.totalorder %s22, 1
    %p234 = por %p232, %p233
    %p236 = scmp.ne.s32.totalorder %s221, %s235
    %p237 = scmp.eq.s32.totalorder %s22, 0
    %p238 = por %p236, %p237
    %s239 = ssub.s32 %s16, %s23
    %p240 = scmp.eq.s32.totalorder %s239, 0
    %s242 = sadd.s32 %s241, 1
    %s243 = scalar_select %p240, %s241, %s242
    %p246 = pneg %p240
    %p247 = scmp.eq.s32.totalorder %s16, 1
    %p248 = por %p246, %p247
    %p249 = scmp.ne.s32.totalorder %s241, %s244
    %p250 = scmp.eq.s32.totalorder %s16, 0
    %p251 = por %p249, %p250
    %p252 = scmp.ne.s32.totalorder %s241, %s244
    %p253 = scmp.eq.s32.totalorder %s21, 1
    %p254 = por %p252, %p253
    %p255 = scmp.ne.s32.totalorder %s244, %s245
    %p256 = scmp.eq.s32.totalorder %s21, 0
    %p257 = por %p255, %p256
    %p258 = scmp.ne.s32.totalorder %s244, %s245
    %p259 = scmp.eq.s32.totalorder %s22, 1
    %p260 = por %p258, %p259
    %p262 = scmp.ne.s32.totalorder %s245, %s261
    %p263 = scmp.eq.s32.totalorder %s22, 0
    %p264 = por %p262, %p263
    %p265 = scmp.le.s32.totalorder 1, %s16
    %p266 = scmp.lt.s32.totalorder %s16, 3
    %p267 = pnand %p265, %p266
    %p268 = pneg %p267
    // Predicated region
    $region9: #{transformer_encoder_forward.1} parent=5 // pred_check
      _
    $region10: #{transformer_encoder_forward.1} parent=5 // pred_check_branch
      %270 = sbr.rel (%p267) target = $region12
    $region11: #{transformer_encoder_forward.1} parent=5 // pred_region
      %s271 = ssub.s32 %s16, 1
      // Predicated region
      $region13: #{transformer_encoder_forward.1} parent=11 // pred_check
        %p272 = pneg %p63
      $region14: #{transformer_encoder_forward.1} parent=11 // pred_check_branch
        %274 = sbr.rel (%p272) target = $region16
      $region15: #{transformer_encoder_forward.1} parent=11 // pred_region
        _
      $region16: #{transformer_encoder_forward.1} parent=11 // pred_fallthru
        _
      // Predicated region
      $region17: #{transformer_encoder_forward.1} parent=11 // pred_check
        %p275 = pneg %p84
      $region18: #{transformer_encoder_forward.1} parent=11 // pred_check_branch
        %277 = sbr.rel (%p275) target = $region20
      $region19: #{transformer_encoder_forward.1} parent=11 // pred_region
        _
      $region20: #{transformer_encoder_forward.1} parent=11 // pred_fallthru
        _
      // Predicated region
      $region21: #{transformer_encoder_forward.1} parent=11 // pred_check
        %p278 = pneg %p105
      $region22: #{transformer_encoder_forward.1} parent=11 // pred_check_branch
        %280 = sbr.rel (%p278) target = $region24
      $region23: #{transformer_encoder_forward.1} parent=11 // pred_region
        _
      $region24: #{transformer_encoder_forward.1} parent=11 // pred_fallthru
        _
      // Predicated region
      $region25: #{transformer_encoder_forward.1} parent=11 // pred_check
        %p281 = pneg %p126
      $region26: #{transformer_encoder_forward.1} parent=11 // pred_check_branch
        %283 = sbr.rel (%p281) target = $region28
      $region27: #{transformer_encoder_forward.1} parent=11 // pred_region
        _
      $region28: #{transformer_encoder_forward.1} parent=11 // pred_fallthru
        _
      // Predicated region
      $region29: #{transformer_encoder_forward.1} parent=11 // pred_check
        %p284 = pneg %p147
      $region30: #{transformer_encoder_forward.1} parent=11 // pred_check_branch
        %286 = sbr.rel (%p284) target = $region32
      $region31: #{transformer_encoder_forward.1} parent=11 // pred_region
        _
      $region32: #{transformer_encoder_forward.1} parent=11 // pred_fallthru
        _
      // Predicated region
      $region33: #{transformer_encoder_forward.1} parent=11 // pred_check
        %p287 = pneg %p168
      $region34: #{transformer_encoder_forward.1} parent=11 // pred_check_branch
        %289 = sbr.rel (%p287) target = $region36
      $region35: #{transformer_encoder_forward.1} parent=11 // pred_region
        _
      $region36: #{transformer_encoder_forward.1} parent=11 // pred_fallthru
        _
      // Predicated region
      $region37: #{transformer_encoder_forward.1} parent=11 // pred_check
        %p290 = pneg %p189
      $region38: #{transformer_encoder_forward.1} parent=11 // pred_check_branch
        %292 = sbr.rel (%p290) target = $region40
      $region39: #{transformer_encoder_forward.1} parent=11 // pred_region
        _
      $region40: #{transformer_encoder_forward.1} parent=11 // pred_fallthru
        _
      // Predicated region
      $region41: #{transformer_encoder_forward.1} parent=11 // pred_check
        %p293 = pneg %p210
      $region42: #{transformer_encoder_forward.1} parent=11 // pred_check_branch
        %295 = sbr.rel (%p293) target = $region44
      $region43: #{transformer_encoder_forward.1} parent=11 // pred_region
        _
      $region44: #{transformer_encoder_forward.1} parent=11 // pred_fallthru
        _
      // Predicated region
      $region45: #{transformer_encoder_forward.1} parent=11 // pred_check
        %p296 = pneg %p231
      $region46: #{transformer_encoder_forward.1} parent=11 // pred_check_branch
        %298 = sbr.rel (%p296) target = $region48
      $region47: #{transformer_encoder_forward.1} parent=11 // pred_region
        _
      $region48: #{transformer_encoder_forward.1} parent=11 // pred_fallthru
        _
    $region12: #{transformer_encoder_forward.1} parent=5 // pred_fallthru
      _
    %p299 = scmp.lt.s32.totalorder %s16, 2
    // Predicated region
    $region49: #{transformer_encoder_forward.1} parent=5 // pred_check
      %p300 = pneg %p299
    $region50: #{transformer_encoder_forward.1} parent=5 // pred_check_branch
      %302 = sbr.rel (%p300) target = $region52
    $region51: #{transformer_encoder_forward.1} parent=5 // pred_region
      // Predicated region
      $region53: #{transformer_encoder_forward.1} parent=51 // pred_check
        %p303 = pneg %p36
      $region54: #{transformer_encoder_forward.1} parent=51 // pred_check_branch
        %305 = sbr.rel (%p303) target = $region56
      $region55: #{transformer_encoder_forward.1} parent=51 // pred_region
        %p306 = scmp.lt.s32.totalorder %s16, 1
        %s307 = scalar_select %p306, %s16, 1
        %s308 = smul.addr %s307, 2
        %s309 = smul.addr %s308, 8
        %s310 = scalar_lea.vmem %s0, %s309
      $region56: #{transformer_encoder_forward.1} parent=51 // pred_fallthru
        _
    $region52: #{transformer_encoder_forward.1} parent=5 // pred_fallthru
      _
    %p311 = scmp.le.s32.totalorder 1, %s16
    %p312 = scmp.lt.s32.totalorder %s16, 3
    %p313 = pnand %p311, %p312
    %p314 = pneg %p313
    // Predicated region
    $region57: #{transformer_encoder_forward.1} parent=5 // pred_check
      _
    $region58: #{transformer_encoder_forward.1} parent=5 // pred_check_branch
      %316 = sbr.rel (%p313) target = $region60
    $region59: #{transformer_encoder_forward.1} parent=5 // pred_region
      %s317 = ssub.s32 %s16, 1
      %p318 = scmp.lt.s32.totalorder %s21, 1
      %s319 = scalar_select %p318, %s21, 1
      %s320 = smul.addr %s319, 2
      %s321 = smul.addr %s320, 8
      %s322 = scalar_lea.vmem %s0, %s321
      %p323 = pneg %p42
      %p324 = pneg %p39
      %p325 = pneg %p63
      %p326 = pneg %p60
      %p327 = pneg %p84
      %p328 = pneg %p81
      %p329 = pneg %p105
      %p330 = pneg %p102
      %p331 = pneg %p126
      %p332 = pneg %p123
      %p333 = pneg %p147
      %p334 = pneg %p144
      %p335 = pneg %p168
      %p336 = pneg %p165
      %p337 = pneg %p189
      %p338 = pneg %p186
      %p339 = pneg %p210
      %p340 = pneg %p207
      %p341 = pneg %p231
      %p342 = pneg %p228
      %p343 = pneg %p257
      %p344 = pneg %p254
      %p345 = scmp.lt.s32.totalorder %s21, 1
      %s346 = scalar_select %p345, %s21, 1
      %s347 = smul.addr %s346, 2
      %s348 = smul.addr %s347, 8
      %s349 = scalar_lea.vmem %s10, %s348
      %p350 = scmp.lt.s32.totalorder %s21, 1
      %s351 = scalar_select %p350, %s21, 1
      %s352 = smul.addr %s351, 2
      %s353 = smul.addr %s352, 8
      %s354 = scalar_lea.vmem %s0, %s353
      %p355 = scmp.lt.s32.totalorder %s21, 1
      %s356 = scalar_select %p355, %s21, 1
      %s357 = smul.addr %s356, 2
      %s358 = smul.addr %s357, 8
      %s359 = scalar_lea.vmem %s10, %s358
      %v360 = vld [vmem:[%s354] sm:$0xff]
      %v361 = vld [vmem:[%s354 + $0x8] sm:$0xff]
      %v362 = vld [vmem:[%s1] sm:$0xff]
      %v363 = vld [vmem:[%s1 + $0x8] sm:$0xff]
      %v364 = vld [vmem:[%s2] sm:$0x1]
      %v366 = vperm.slane %v364, 0
      %vm368 = vcmask 130048
      %v370 = vsel %vm368, %v360, 0
      %v373 = vsel %vm368, %v361, 0
      %375 = vmatpush.msra.mxu0 0.0
      %376 = vmatpush.msra.mxu0 0.0
      %377 = vmatpush.msra.mxu0 0.0
      %378 = vmatpush.msra.mxu0 0.0
      %379 = vmatpush.msra.mxu0 0.0
      %380 = vmatpush.msra.mxu0 0.0
      %381 = vmatpush.msra.mxu0 0.0
      %382 = vmatpush.msra.mxu0 0.0
      %383 = vmatpush.msra.mxu0 0.0
      %384 = vmatpush.msra.mxu0 0.0
      %385 = vmatpush.msra.mxu0 0.0
      %386 = vmatpush.msra.mxu0 0.0
      %387 = vmatpush.msra.mxu0 0.0
      %388 = vmatpush.msra.mxu0 0.0
      %389 = vmatpush.msra.mxu0 %v363
      %390 = vmatpush.msra.mxu0 %v362
      %391 = vmatmul.f32.gmra.mxu0 %v370
      %v392 = vpop.f32.mrf.mxu0
      %v393 = vadd.f32 %v366, %v392
      %394 = vmatmul.f32.gmra.mxu0 %v373
      %v395 = vpop.f32.mrf.mxu0
      %v396 = vadd.f32 %v366, %v395
      %397 = vdwg.mxu0
      %v398 = vld [vmem:[%s9] sm:$0x3f]
      %v399 = vld [vmem:[%s3] sm:$0xff]
      %v400 = vld [vmem:[%s3 + $0x8] sm:$0xff]
      %v401 = vld [vmem:[%s3 + $0x10] sm:$0xff]
      %v402 = vld [vmem:[%s3 + $0x18] sm:$0xff]
      %v403 = vld [vmem:[%s4] sm:$0x1]
      %v405 = vperm.slane %v403, 0
      %vm407 = vcmask 261120
      %v409 = vsel %vm407, %v393, 0
      %v412 = vsel %vm407, %v396, 0
      %414 = vmatpush.msra.mxu0 0.0
      %415 = vmatpush.msra.mxu0 0.0
      %416 = vmatpush.msra.mxu0 0.0
      %417 = vmatpush.msra.mxu0 0.0
      %418 = vmatpush.msra.mxu0 0.0
      %419 = vmatpush.msra.mxu0 0.0
      %420 = vmatpush.msra.mxu0 0.0
      %421 = vmatpush.msra.mxu0 0.0
      %422 = vmatpush.msra.mxu0 0.0
      %423 = vmatpush.msra.mxu0 0.0
      %424 = vmatpush.msra.mxu0 0.0
      %425 = vmatpush.msra.mxu0 0.0
      %426 = vmatpush.msra.mxu0 %v402
      %427 = vmatpush.msra.mxu0 %v401
      %428 = vmatpush.msra.mxu0 %v400
      %429 = vmatpush.msra.mxu0 %v399
      %430 = vmatmul.f32.gmra.mxu0 %v409
      %v431 = vpop.f32.mrf.mxu0
      %v432 = vadd.f32 %v405, %v431
      %433 = vmatmul.f32.gmra.mxu0 %v412
      %v434 = vpop.f32.mrf.mxu0
      %v435 = vadd.f32 %v405, %v434
      %436 = vdwg.mxu0
      %439 = vrot.lane.b32.xlu0 %v432, 124
      %v440 = vpop.permute.xlu0 %439
      %441 = vrot.lane.b32.xlu0 %v435, 124
      %v442 = vpop.permute.xlu0 %441
      %443 = vrot.lane.b32.xlu0 %v432, 120
      %v444 = vpop.permute.xlu0 %443
      %445 = vrot.lane.b32.xlu0 %v435, 120
      %v446 = vpop.permute.xlu0 %445
      %447 = vrot.lane.b32.xlu0 %v432, 116
      %v448 = vpop.permute.xlu0 %447
      %449 = vrot.lane.b32.xlu0 %v435, 116
      %v450 = vpop.permute.xlu0 %449
      %451 = vrot.lane.b32.xlu0 %v432, 112
      %v452 = vpop.permute.xlu0 %451
      %453 = vrot.lane.b32.xlu0 %v435, 112
      %v454 = vpop.permute.xlu0 %453
      %455 = vrot.lane.b32.xlu0 %v432, 108
      %v456 = vpop.permute.xlu0 %455
      %457 = vrot.lane.b32.xlu0 %v435, 108
      %v458 = vpop.permute.xlu0 %457
      %459 = vrot.lane.b32.xlu0 %v432, 104
      %v460 = vpop.permute.xlu0 %459
      %461 = vrot.lane.b32.xlu0 %v435, 104
      %v462 = vpop.permute.xlu0 %461
      %463 = vrot.lane.b32.xlu0 %v432, 100
      %v464 = vpop.permute.xlu0 %463
      %465 = vrot.lane.b32.xlu0 %v435, 100
      %v466 = vpop.permute.xlu0 %465
      %467 = vrot.lane.b32.xlu0 %v432, 96
      %v468 = vpop.permute.xlu0 %467
      %469 = vrot.lane.b32.xlu0 %v435, 96
      %v470 = vpop.permute.xlu0 %469
      %vm471 = vcmask 31744
      %v472 = vsel %vm471, %v432, 0
      %v474 = vsel %vm471, %v435, 0
      %v476 = vsel %vm471, %v468, 0
      %v478 = vsel %vm471, %v470, 0
      %480 = vmatpush.xpose.msra.mxu0 0.0
      %481 = vmatpush.xpose.msra.mxu0 0.0
      %482 = vmatpush.xpose.msra.mxu0 0.0
      %483 = vmatpush.xpose.msra.mxu0 0.0
      %484 = vmatpush.xpose.msra.mxu0 0.0
      %485 = vmatpush.xpose.msra.mxu0 0.0
      %486 = vmatpush.xpose.msra.mxu0 0.0
      %487 = vmatpush.xpose.msra.mxu0 0.0
      %488 = vmatpush.xpose.msra.mxu0 0.0
      %489 = vmatpush.xpose.msra.mxu0 0.0
      %490 = vmatpush.xpose.msra.mxu0 0.0
      %491 = vmatpush.xpose.msra.mxu0 0.0
      %492 = vmatpush.xpose.msra.mxu0 0.0
      %493 = vmatpush.xpose.msra.mxu0 0.0
      %494 = vmatpush.xpose.msra.mxu0 %v478
      %495 = vmatpush.xpose.msra.mxu0 %v476
      %496 = vmatmul.f32.gmra.mxu0 %v472
      %v497 = vpop.f32.mrf.mxu0
      %v498 = vadd.f32 0.0, %v497
      %499 = vmatmul.f32.gmra.mxu0 %v474
      %v500 = vpop.f32.mrf.mxu0
      %v501 = vadd.f32 0.0, %v500
      %502 = vdwg.mxu0
      %503 = vrot.lane.b32.xlu0 %v440, 96
      %v504 = vpop.permute.xlu0 %503
      %505 = vrot.lane.b32.xlu0 %v442, 96
      %v506 = vpop.permute.xlu0 %505
      %v507 = vsel %vm471, %v440, 0
      %v509 = vsel %vm471, %v442, 0
      %v511 = vsel %vm471, %v504, 0
      %v513 = vsel %vm471, %v506, 0
      %515 = vmatpush.xpose.msra.mxu0 0.0
      %516 = vmatpush.xpose.msra.mxu0 0.0
      %517 = vmatpush.xpose.msra.mxu0 0.0
      %518 = vmatpush.xpose.msra.mxu0 0.0
      %519 = vmatpush.xpose.msra.mxu0 0.0
      %520 = vmatpush.xpose.msra.mxu0 0.0
      %521 = vmatpush.xpose.msra.mxu0 0.0
      %522 = vmatpush.xpose.msra.mxu0 0.0
      %523 = vmatpush.xpose.msra.mxu0 0.0
      %524 = vmatpush.xpose.msra.mxu0 0.0
      %525 = vmatpush.xpose.msra.mxu0 0.0
      %526 = vmatpush.xpose.msra.mxu0 0.0
      %527 = vmatpush.xpose.msra.mxu0 0.0
      %528 = vmatpush.xpose.msra.mxu0 0.0
      %529 = vmatpush.xpose.msra.mxu0 %v513
      %530 = vmatpush.xpose.msra.mxu0 %v511
      %531 = vmatmul.f32.gmra.mxu0 %v507
      %v532 = vpop.f32.mrf.mxu0
      %v533 = vadd.f32 0.0, %v532
      %534 = vmatmul.f32.gmra.mxu0 %v509
      %v535 = vpop.f32.mrf.mxu0
      %v536 = vadd.f32 0.0, %v535
      %537 = vdwg.mxu0
      %538 = vrot.lane.b32.xlu0 %v444, 96
      %v539 = vpop.permute.xlu0 %538
      %540 = vrot.lane.b32.xlu0 %v446, 96
      %v541 = vpop.permute.xlu0 %540
      %v542 = vsel %vm471, %v444, 0
      %v544 = vsel %vm471, %v446, 0
      %v546 = vsel %vm471, %v539, 0
      %v548 = vsel %vm471, %v541, 0
      %550 = vmatpush.xpose.msra.mxu0 0.0
      %551 = vmatpush.xpose.msra.mxu0 0.0
      %552 = vmatpush.xpose.msra.mxu0 0.0
      %553 = vmatpush.xpose.msra.mxu0 0.0
      %554 = vmatpush.xpose.msra.mxu0 0.0
      %555 = vmatpush.xpose.msra.mxu0 0.0
      %556 = vmatpush.xpose.msra.mxu0 0.0
      %557 = vmatpush.xpose.msra.mxu0 0.0
      %558 = vmatpush.xpose.msra.mxu0 0.0
      %559 = vmatpush.xpose.msra.mxu0 0.0
      %560 = vmatpush.xpose.msra.mxu0 0.0
      %561 = vmatpush.xpose.msra.mxu0 0.0
      %562 = vmatpush.xpose.msra.mxu0 0.0
      %563 = vmatpush.xpose.msra.mxu0 0.0
      %564 = vmatpush.xpose.msra.mxu0 %v548
      %565 = vmatpush.xpose.msra.mxu0 %v546
      %566 = vmatmul.f32.gmra.mxu0 %v542
      %v567 = vpop.f32.mrf.mxu0
      %v568 = vadd.f32 0.0, %v567
      %569 = vmatmul.f32.gmra.mxu0 %v544
      %v570 = vpop.f32.mrf.mxu0
      %v571 = vadd.f32 0.0, %v570
      %572 = vdwg.mxu0
      %573 = vrot.lane.b32.xlu0 %v448, 96
      %v574 = vpop.permute.xlu0 %573
      %575 = vrot.lane.b32.xlu0 %v450, 96
      %v576 = vpop.permute.xlu0 %575
      %v577 = vsel %vm471, %v448, 0
      %v579 = vsel %vm471, %v450, 0
      %v581 = vsel %vm471, %v574, 0
      %v583 = vsel %vm471, %v576, 0
      %585 = vmatpush.xpose.msra.mxu0 0.0
      %586 = vmatpush.xpose.msra.mxu0 0.0
      %587 = vmatpush.xpose.msra.mxu0 0.0
      %588 = vmatpush.xpose.msra.mxu0 0.0
      %589 = vmatpush.xpose.msra.mxu0 0.0
      %590 = vmatpush.xpose.msra.mxu0 0.0
      %591 = vmatpush.xpose.msra.mxu0 0.0
      %592 = vmatpush.xpose.msra.mxu0 0.0
      %593 = vmatpush.xpose.msra.mxu0 0.0
      %594 = vmatpush.xpose.msra.mxu0 0.0
      %595 = vmatpush.xpose.msra.mxu0 0.0
      %596 = vmatpush.xpose.msra.mxu0 0.0
      %597 = vmatpush.xpose.msra.mxu0 0.0
      %598 = vmatpush.xpose.msra.mxu0 0.0
      %599 = vmatpush.xpose.msra.mxu0 %v583
      %600 = vmatpush.xpose.msra.mxu0 %v581
      %601 = vmatmul.f32.gmra.mxu0 %v577
      %v602 = vpop.f32.mrf.mxu0
      %v603 = vadd.f32 0.0, %v602
      %604 = vmatmul.f32.gmra.mxu0 %v579
      %v605 = vpop.f32.mrf.mxu0
      %v606 = vadd.f32 0.0, %v605
      %607 = vdwg.mxu0
      %608 = vrot.lane.b32.xlu0 %v452, 96
      %v609 = vpop.permute.xlu0 %608
      %610 = vrot.lane.b32.xlu0 %v454, 96
      %v611 = vpop.permute.xlu0 %610
      %v612 = vsel %vm471, %v452, 0
      %v614 = vsel %vm471, %v454, 0
      %v616 = vsel %vm471, %v609, 0
      %v618 = vsel %vm471, %v611, 0
      %620 = vmatpush.xpose.msra.mxu0 0.0
      %621 = vmatpush.xpose.msra.mxu0 0.0
      %622 = vmatpush.xpose.msra.mxu0 0.0
      %623 = vmatpush.xpose.msra.mxu0 0.0
      %624 = vmatpush.xpose.msra.mxu0 0.0
      %625 = vmatpush.xpose.msra.mxu0 0.0
      %626 = vmatpush.xpose.msra.mxu0 0.0
      %627 = vmatpush.xpose.msra.mxu0 0.0
      %628 = vmatpush.xpose.msra.mxu0 0.0
      %629 = vmatpush.xpose.msra.mxu0 0.0
      %630 = vmatpush.xpose.msra.mxu0 0.0
      %631 = vmatpush.xpose.msra.mxu0 0.0
      %632 = vmatpush.xpose.msra.mxu0 0.0
      %633 = vmatpush.xpose.msra.mxu0 0.0
      %634 = vmatpush.xpose.msra.mxu0 %v618
      %635 = vmatpush.xpose.msra.mxu0 %v616
      %636 = vmatmul.f32.gmra.mxu0 %v612
      %v637 = vpop.f32.mrf.mxu0
      %v638 = vadd.f32 0.0, %v637
      %639 = vmatmul.f32.gmra.mxu0 %v614
      %v640 = vpop.f32.mrf.mxu0
      %v641 = vadd.f32 0.0, %v640
      %642 = vdwg.mxu0
      %643 = vrot.lane.b32.xlu0 %v456, 96
      %v644 = vpop.permute.xlu0 %643
      %645 = vrot.lane.b32.xlu0 %v458, 96
      %v646 = vpop.permute.xlu0 %645
      %v647 = vsel %vm471, %v456, 0
      %v649 = vsel %vm471, %v458, 0
      %v651 = vsel %vm471, %v644, 0
      %v653 = vsel %vm471, %v646, 0
      %655 = vmatpush.xpose.msra.mxu0 0.0
      %656 = vmatpush.xpose.msra.mxu0 0.0
      %657 = vmatpush.xpose.msra.mxu0 0.0
      %658 = vmatpush.xpose.msra.mxu0 0.0
      %659 = vmatpush.xpose.msra.mxu0 0.0
      %660 = vmatpush.xpose.msra.mxu0 0.0
      %661 = vmatpush.xpose.msra.mxu0 0.0
      %662 = vmatpush.xpose.msra.mxu0 0.0
      %663 = vmatpush.xpose.msra.mxu0 0.0
      %664 = vmatpush.xpose.msra.mxu0 0.0
      %665 = vmatpush.xpose.msra.mxu0 0.0
      %666 = vmatpush.xpose.msra.mxu0 0.0
      %667 = vmatpush.xpose.msra.mxu0 0.0
      %668 = vmatpush.xpose.msra.mxu0 0.0
      %669 = vmatpush.xpose.msra.mxu0 %v653
      %670 = vmatpush.xpose.msra.mxu0 %v651
      %671 = vmatmul.f32.gmra.mxu0 %v647
      %v672 = vpop.f32.mrf.mxu0
      %v673 = vadd.f32 0.0, %v672
      %674 = vmatmul.f32.gmra.mxu0 %v649
      %v675 = vpop.f32.mrf.mxu0
      %v676 = vadd.f32 0.0, %v675
      %677 = vdwg.mxu0
      %678 = vrot.lane.b32.xlu0 %v460, 96
      %v679 = vpop.permute.xlu0 %678
      %680 = vrot.lane.b32.xlu0 %v462, 96
      %v681 = vpop.permute.xlu0 %680
      %v682 = vsel %vm471, %v460, 0
      %v684 = vsel %vm471, %v462, 0
      %v686 = vsel %vm471, %v679, 0
      %v688 = vsel %vm471, %v681, 0
      %690 = vmatpush.xpose.msra.mxu0 0.0
      %691 = vmatpush.xpose.msra.mxu0 0.0
      %692 = vmatpush.xpose.msra.mxu0 0.0
      %693 = vmatpush.xpose.msra.mxu0 0.0
      %694 = vmatpush.xpose.msra.mxu0 0.0
      %695 = vmatpush.xpose.msra.mxu0 0.0
      %696 = vmatpush.xpose.msra.mxu0 0.0
      %697 = vmatpush.xpose.msra.mxu0 0.0
      %698 = vmatpush.xpose.msra.mxu0 0.0
      %699 = vmatpush.xpose.msra.mxu0 0.0
      %700 = vmatpush.xpose.msra.mxu0 0.0
      %701 = vmatpush.xpose.msra.mxu0 0.0
      %702 = vmatpush.xpose.msra.mxu0 0.0
      %703 = vmatpush.xpose.msra.mxu0 0.0
      %704 = vmatpush.xpose.msra.mxu0 %v688
      %705 = vmatpush.xpose.msra.mxu0 %v686
      %706 = vmatmul.f32.gmra.mxu0 %v682
      %v707 = vpop.f32.mrf.mxu0
      %v708 = vadd.f32 0.0, %v707
      %709 = vmatmul.f32.gmra.mxu0 %v684
      %v710 = vpop.f32.mrf.mxu0
      %v711 = vadd.f32 0.0, %v710
      %712 = vdwg.mxu0
      %713 = vrot.lane.b32.xlu0 %v464, 96
      %v714 = vpop.permute.xlu0 %713
      %715 = vrot.lane.b32.xlu0 %v466, 96
      %v716 = vpop.permute.xlu0 %715
      %v717 = vsel %vm471, %v464, 0
      %v719 = vsel %vm471, %v466, 0
      %v721 = vsel %vm471, %v714, 0
      %v723 = vsel %vm471, %v716, 0
      %725 = vmatpush.xpose.msra.mxu0 0.0
      %726 = vmatpush.xpose.msra.mxu0 0.0
      %727 = vmatpush.xpose.msra.mxu0 0.0
      %728 = vmatpush.xpose.msra.mxu0 0.0
      %729 = vmatpush.xpose.msra.mxu0 0.0
      %730 = vmatpush.xpose.msra.mxu0 0.0
      %731 = vmatpush.xpose.msra.mxu0 0.0
      %732 = vmatpush.xpose.msra.mxu0 0.0
      %733 = vmatpush.xpose.msra.mxu0 0.0
      %734 = vmatpush.xpose.msra.mxu0 0.0
      %735 = vmatpush.xpose.msra.mxu0 0.0
      %736 = vmatpush.xpose.msra.mxu0 0.0
      %737 = vmatpush.xpose.msra.mxu0 0.0
      %738 = vmatpush.xpose.msra.mxu0 0.0
      %739 = vmatpush.xpose.msra.mxu0 %v723
      %740 = vmatpush.xpose.msra.mxu0 %v721
      %741 = vmatmul.f32.gmra.mxu0 %v717
      %v742 = vpop.f32.mrf.mxu0
      %v743 = vadd.f32 0.0, %v742
      %744 = vmatmul.f32.gmra.mxu0 %v719
      %v745 = vpop.f32.mrf.mxu0
      %v746 = vadd.f32 0.0, %v745
      %747 = vdwg.mxu0
      %v748 = vsel %vm368, %v498, -inf
      %749 = vmax.xlane.f32.xlu0 %v748
      %v750 = vpop.xlane.xlu0 %749
      %v751 = vsel %vm368, %v501, -inf
      %752 = vmax.xlane.f32.xlu0 %v751
      %v753 = vpop.xlane.xlu0 %752
      %v754 = vsel %vm368, %v533, -inf
      %755 = vmax.xlane.f32.xlu0 %v754
      %v756 = vpop.xlane.xlu0 %755
      %v757 = vsel %vm368, %v536, -inf
      %758 = vmax.xlane.f32.xlu0 %v757
      %v759 = vpop.xlane.xlu0 %758
      %v760 = vsel %vm368, %v568, -inf
      %761 = vmax.xlane.f32.xlu0 %v760
      %v762 = vpop.xlane.xlu0 %761
      %v763 = vsel %vm368, %v571, -inf
      %764 = vmax.xlane.f32.xlu0 %v763
      %v765 = vpop.xlane.xlu0 %764
      %v766 = vsel %vm368, %v603, -inf
      %767 = vmax.xlane.f32.xlu0 %v766
      %v768 = vpop.xlane.xlu0 %767
      %v769 = vsel %vm368, %v606, -inf
      %770 = vmax.xlane.f32.xlu0 %v769
      %v771 = vpop.xlane.xlu0 %770
      %v772 = vsel %vm368, %v638, -inf
      %773 = vmax.xlane.f32.xlu0 %v772
      %v774 = vpop.xlane.xlu0 %773
      %v775 = vsel %vm368, %v641, -inf
      %776 = vmax.xlane.f32.xlu0 %v775
      %v777 = vpop.xlane.xlu0 %776
      %v778 = vsel %vm368, %v673, -inf
      %779 = vmax.xlane.f32.xlu0 %v778
      %v780 = vpop.xlane.xlu0 %779
      %v781 = vsel %vm368, %v676, -inf
      %782 = vmax.xlane.f32.xlu0 %v781
      %v783 = vpop.xlane.xlu0 %782
      %v784 = vsel %vm368, %v708, -inf
      %785 = vmax.xlane.f32.xlu0 %v784
      %v786 = vpop.xlane.xlu0 %785
      %v787 = vsel %vm368, %v711, -inf
      %788 = vmax.xlane.f32.xlu0 %v787
      %v789 = vpop.xlane.xlu0 %788
      %v790 = vsel %vm368, %v743, -inf
      %791 = vmax.xlane.f32.xlu0 %v790
      %v792 = vpop.xlane.xlu0 %791
      %v793 = vsel %vm368, %v746, -inf
      %794 = vmax.xlane.f32.xlu0 %v793
      %v795 = vpop.xlane.xlu0 %794
      %v796 = vsub.f32 %v498, %v750
      %v797 = vsub.f32 %v501, %v753
      %v798 = vsub.f32 %v533, %v756
      %v799 = vsub.f32 %v536, %v759
      %v800 = vsub.f32 %v568, %v762
      %v801 = vsub.f32 %v571, %v765
      %v802 = vsub.f32 %v603, %v768
      %v803 = vsub.f32 %v606, %v771
      %v804 = vsub.f32 %v638, %v774
      %v805 = vsub.f32 %v641, %v777
      %v806 = vsub.f32 %v673, %v780
      %v807 = vsub.f32 %v676, %v783
      %v808 = vsub.f32 %v708, %v786
      %v809 = vsub.f32 %v711, %v789
      %v810 = vsub.f32 %v743, %v792
      %v811 = vsub.f32 %v746, %v795
      %v812 = vmul.f32 %v796, 1.442695
      %v813 = vpow.pop %v812
      %v814 = vmul.f32 %v797, 1.442695
      %v815 = vpow.pop %v814
      %v816 = vmul.f32 %v798, 1.442695
      %v817 = vpow.pop %v816
      %v818 = vmul.f32 %v799, 1.442695
      %v819 = vpow.pop %v818
      %v820 = vmul.f32 %v800, 1.442695
      %v821 = vpow.pop %v820
      %v822 = vmul.f32 %v801, 1.442695
      %v823 = vpow.pop %v822
      %v824 = vmul.f32 %v802, 1.442695
      %v825 = vpow.pop %v824
      %v826 = vmul.f32 %v803, 1.442695
      %v827 = vpow.pop %v826
      %v828 = vmul.f32 %v804, 1.442695
      %v829 = vpow.pop %v828
      %v830 = vmul.f32 %v805, 1.442695
      %v831 = vpow.pop %v830
      %v832 = vmul.f32 %v806, 1.442695
      %v833 = vpow.pop %v832
      %v834 = vmul.f32 %v807, 1.442695
      %v835 = vpow.pop %v834
      %v836 = vmul.f32 %v808, 1.442695
      %v837 = vpow.pop %v836
      %v838 = vmul.f32 %v809, 1.442695
      %v839 = vpow.pop %v838
      %v840 = vmul.f32 %v810, 1.442695
      %v841 = vpow.pop %v840
      %v842 = vmul.f32 %v811, 1.442695
      %v843 = vpow.pop %v842
      %v844 = vsel %vm368, %v813, 0.0
      %845 = vadd.xlane.f32.xlu0 %v844
      %v846 = vpop.xlane.xlu0 %845
      %v847 = vsel %vm368, %v815, 0.0
      %848 = vadd.xlane.f32.xlu0 %v847
      %v849 = vpop.xlane.xlu0 %848
      %v850 = vsel %vm368, %v817, 0.0
      %851 = vadd.xlane.f32.xlu0 %v850
      %v852 = vpop.xlane.xlu0 %851
      %v853 = vsel %vm368, %v819, 0.0
      %854 = vadd.xlane.f32.xlu0 %v853
      %v855 = vpop.xlane.xlu0 %854
      %v856 = vsel %vm368, %v821, 0.0
      %857 = vadd.xlane.f32.xlu0 %v856
      %v858 = vpop.xlane.xlu0 %857
      %v859 = vsel %vm368, %v823, 0.0
      %860 = vadd.xlane.f32.xlu0 %v859
      %v861 = vpop.xlane.xlu0 %860
      %v862 = vsel %vm368, %v825, 0.0
      %863 = vadd.xlane.f32.xlu0 %v862
      %v864 = vpop.xlane.xlu0 %863
      %v865 = vsel %vm368, %v827, 0.0
      %866 = vadd.xlane.f32.xlu0 %v865
      %v867 = vpop.xlane.xlu0 %866
      %v868 = vsel %vm368, %v829, 0.0
      %869 = vadd.xlane.f32.xlu0 %v868
      %v870 = vpop.xlane.xlu0 %869
      %v871 = vsel %vm368, %v831, 0.0
      %872 = vadd.xlane.f32.xlu0 %v871
      %v873 = vpop.xlane.xlu0 %872
      %v874 = vsel %vm368, %v833, 0.0
      %875 = vadd.xlane.f32.xlu0 %v874
      %v876 = vpop.xlane.xlu0 %875
      %v877 = vsel %vm368, %v835, 0.0
      %878 = vadd.xlane.f32.xlu0 %v877
      %v879 = vpop.xlane.xlu0 %878
      %v880 = vsel %vm368, %v837, 0.0
      %881 = vadd.xlane.f32.xlu0 %v880
      %v882 = vpop.xlane.xlu0 %881
      %v883 = vsel %vm368, %v839, 0.0
      %884 = vadd.xlane.f32.xlu0 %v883
      %v885 = vpop.xlane.xlu0 %884
      %v886 = vsel %vm368, %v841, 0.0
      %887 = vadd.xlane.f32.xlu0 %v886
      %v888 = vpop.xlane.xlu0 %887
      %v889 = vsel %vm368, %v843, 0.0
      %890 = vadd.xlane.f32.xlu0 %v889
      %v891 = vpop.xlane.xlu0 %890
      %v892 = vrcp.pop %v846
      %v893 = vrcp.pop %v849
      %v894 = vrcp.pop %v852
      %v895 = vrcp.pop %v855
      %v896 = vrcp.pop %v858
      %v897 = vrcp.pop %v861
      %v898 = vrcp.pop %v864
      %v899 = vrcp.pop %v867
      %v900 = vrcp.pop %v870
      %v901 = vrcp.pop %v873
      %v902 = vrcp.pop %v876
      %v903 = vrcp.pop %v879
      %v904 = vrcp.pop %v882
      %v905 = vrcp.pop %v885
      %v906 = vrcp.pop %v888
      %v907 = vrcp.pop %v891
      %v908 = vmul.f32 %v813, %v892
      %v909 = vmul.f32 %v815, %v893
      %v910 = vmul.f32 %v817, %v894
      %v911 = vmul.f32 %v819, %v895
      %v912 = vmul.f32 %v821, %v896
      %v913 = vmul.f32 %v823, %v897
      %v914 = vmul.f32 %v825, %v898
      %v915 = vmul.f32 %v827, %v899
      %v916 = vmul.f32 %v829, %v900
      %v917 = vmul.f32 %v831, %v901
      %v918 = vmul.f32 %v833, %v902
      %v919 = vmul.f32 %v835, %v903
      %v920 = vmul.f32 %v837, %v904
      %v921 = vmul.f32 %v839, %v905
      %v922 = vmul.f32 %v841, %v906
      %v923 = vmul.f32 %v843, %v907
      %924 = vrot.lane.b32.xlu0 %v432, 64
      %v925 = vpop.permute.xlu0 %924
      %926 = vrot.lane.b32.xlu0 %v435, 64
      %v927 = vpop.permute.xlu0 %926
      %v931 = vsel %vm368, %v908, 0
      %v934 = vsel %vm368, %v909, 0
      %936 = vmatpush.msra.mxu0 0.0
      %937 = vmatpush.msra.mxu0 0.0
      %938 = vmatpush.msra.mxu0 0.0
      %939 = vmatpush.msra.mxu0 0.0
      %940 = vmatpush.msra.mxu0 0.0
      %941 = vmatpush.msra.mxu0 0.0
      %942 = vmatpush.msra.mxu0 0.0
      %943 = vmatpush.msra.mxu0 0.0
      %944 = vmatpush.msra.mxu0 0.0
      %945 = vmatpush.msra.mxu0 0.0
      %946 = vmatpush.msra.mxu0 0.0
      %947 = vmatpush.msra.mxu0 0.0
      %948 = vmatpush.msra.mxu0 0.0
      %949 = vmatpush.msra.mxu0 0.0
      %950 = vmatpush.msra.mxu0 %v927
      %951 = vmatpush.msra.mxu0 %v925
      %952 = vmatmul.f32.gmra.mxu0 %v931
      %v953 = vpop.f32.mrf.mxu0
      %v954 = vadd.f32 0.0, %v953
      %955 = vmatmul.f32.gmra.mxu0 %v934
      %v956 = vpop.f32.mrf.mxu0
      %v957 = vadd.f32 0.0, %v956
      %958 = vdwg.mxu0
      %959 = vrot.lane.b32.xlu0 %v440, 64
      %v960 = vpop.permute.xlu0 %959
      %961 = vrot.lane.b32.xlu0 %v442, 64
      %v962 = vpop.permute.xlu0 %961
      %v966 = vsel %vm368, %v910, 0
      %v969 = vsel %vm368, %v911, 0
      %971 = vmatpush.msra.mxu0 0.0
      %972 = vmatpush.msra.mxu0 0.0
      %973 = vmatpush.msra.mxu0 0.0
      %974 = vmatpush.msra.mxu0 0.0
      %975 = vmatpush.msra.mxu0 0.0
      %976 = vmatpush.msra.mxu0 0.0
      %977 = vmatpush.msra.mxu0 0.0
      %978 = vmatpush.msra.mxu0 0.0
      %979 = vmatpush.msra.mxu0 0.0
      %980 = vmatpush.msra.mxu0 0.0
      %981 = vmatpush.msra.mxu0 0.0
      %982 = vmatpush.msra.mxu0 0.0
      %983 = vmatpush.msra.mxu0 0.0
      %984 = vmatpush.msra.mxu0 0.0
      %985 = vmatpush.msra.mxu0 %v962
      %986 = vmatpush.msra.mxu0 %v960
      %987 = vmatmul.f32.gmra.mxu0 %v966
      %v988 = vpop.f32.mrf.mxu0
      %v989 = vadd.f32 0.0, %v988
      %990 = vmatmul.f32.gmra.mxu0 %v969
      %v991 = vpop.f32.mrf.mxu0
      %v992 = vadd.f32 0.0, %v991
      %993 = vdwg.mxu0
      %994 = vrot.lane.b32.xlu0 %v444, 64
      %v995 = vpop.permute.xlu0 %994
      %996 = vrot.lane.b32.xlu0 %v446, 64
      %v997 = vpop.permute.xlu0 %996
      %v1001 = vsel %vm368, %v912, 0
      %v1004 = vsel %vm368, %v913, 0
      %1006 = vmatpush.msra.mxu0 0.0
      %1007 = vmatpush.msra.mxu0 0.0
      %1008 = vmatpush.msra.mxu0 0.0
      %1009 = vmatpush.msra.mxu0 0.0
      %1010 = vmatpush.msra.mxu0 0.0
      %1011 = vmatpush.msra.mxu0 0.0
      %1012 = vmatpush.msra.mxu0 0.0
      %1013 = vmatpush.msra.mxu0 0.0
      %1014 = vmatpush.msra.mxu0 0.0
      %1015 = vmatpush.msra.mxu0 0.0
      %1016 = vmatpush.msra.mxu0 0.0
      %1017 = vmatpush.msra.mxu0 0.0
      %1018 = vmatpush.msra.mxu0 0.0
      %1019 = vmatpush.msra.mxu0 0.0
      %1020 = vmatpush.msra.mxu0 %v997
      %1021 = vmatpush.msra.mxu0 %v995
      %1022 = vmatmul.f32.gmra.mxu0 %v1001
      %v1023 = vpop.f32.mrf.mxu0
      %v1024 = vadd.f32 0.0, %v1023
      %1025 = vmatmul.f32.gmra.mxu0 %v1004
      %v1026 = vpop.f32.mrf.mxu0
      %v1027 = vadd.f32 0.0, %v1026
      %1028 = vdwg.mxu0
      %1029 = vrot.lane.b32.xlu0 %v448, 64
      %v1030 = vpop.permute.xlu0 %1029
      %1031 = vrot.lane.b32.xlu0 %v450, 64
      %v1032 = vpop.permute.xlu0 %1031
      %v1036 = vsel %vm368, %v914, 0
      %v1039 = vsel %vm368, %v915, 0
      %1041 = vmatpush.msra.mxu0 0.0
      %1042 = vmatpush.msra.mxu0 0.0
      %1043 = vmatpush.msra.mxu0 0.0
      %1044 = vmatpush.msra.mxu0 0.0
      %1045 = vmatpush.msra.mxu0 0.0
      %1046 = vmatpush.msra.mxu0 0.0
      %1047 = vmatpush.msra.mxu0 0.0
      %1048 = vmatpush.msra.mxu0 0.0
      %1049 = vmatpush.msra.mxu0 0.0
      %1050 = vmatpush.msra.mxu0 0.0
      %1051 = vmatpush.msra.mxu0 0.0
      %1052 = vmatpush.msra.mxu0 0.0
      %1053 = vmatpush.msra.mxu0 0.0
      %1054 = vmatpush.msra.mxu0 0.0
      %1055 = vmatpush.msra.mxu0 %v1032
      %1056 = vmatpush.msra.mxu0 %v1030
      %1057 = vmatmul.f32.gmra.mxu0 %v1036
      %v1058 = vpop.f32.mrf.mxu0
      %v1059 = vadd.f32 0.0, %v1058
      %1060 = vmatmul.f32.gmra.mxu0 %v1039
      %v1061 = vpop.f32.mrf.mxu0
      %v1062 = vadd.f32 0.0, %v1061
      %1063 = vdwg.mxu0
      %1064 = vrot.lane.b32.xlu0 %v452, 64
      %v1065 = vpop.permute.xlu0 %1064
      %1066 = vrot.lane.b32.xlu0 %v454, 64
      %v1067 = vpop.permute.xlu0 %1066
      %v1071 = vsel %vm368, %v916, 0
      %v1074 = vsel %vm368, %v917, 0
      %1076 = vmatpush.msra.mxu0 0.0
      %1077 = vmatpush.msra.mxu0 0.0
      %1078 = vmatpush.msra.mxu0 0.0
      %1079 = vmatpush.msra.mxu0 0.0
      %1080 = vmatpush.msra.mxu0 0.0
      %1081 = vmatpush.msra.mxu0 0.0
      %1082 = vmatpush.msra.mxu0 0.0
      %1083 = vmatpush.msra.mxu0 0.0
      %1084 = vmatpush.msra.mxu0 0.0
      %1085 = vmatpush.msra.mxu0 0.0
      %1086 = vmatpush.msra.mxu0 0.0
      %1087 = vmatpush.msra.mxu0 0.0
      %1088 = vmatpush.msra.mxu0 0.0
      %1089 = vmatpush.msra.mxu0 0.0
      %1090 = vmatpush.msra.mxu0 %v1067
      %1091 = vmatpush.msra.mxu0 %v1065
      %1092 = vmatmul.f32.gmra.mxu0 %v1071
      %v1093 = vpop.f32.mrf.mxu0
      %v1094 = vadd.f32 0.0, %v1093
      %1095 = vmatmul.f32.gmra.mxu0 %v1074
      %v1096 = vpop.f32.mrf.mxu0
      %v1097 = vadd.f32 0.0, %v1096
      %1098 = vdwg.mxu0
      %1099 = vrot.lane.b32.xlu0 %v456, 64
      %v1100 = vpop.permute.xlu0 %1099
      %1101 = vrot.lane.b32.xlu0 %v458, 64
      %v1102 = vpop.permute.xlu0 %1101
      %v1106 = vsel %vm368, %v918, 0
      %v1109 = vsel %vm368, %v919, 0
      %1111 = vmatpush.msra.mxu0 0.0
      %1112 = vmatpush.msra.mxu0 0.0
      %1113 = vmatpush.msra.mxu0 0.0
      %1114 = vmatpush.msra.mxu0 0.0
      %1115 = vmatpush.msra.mxu0 0.0
      %1116 = vmatpush.msra.mxu0 0.0
      %1117 = vmatpush.msra.mxu0 0.0
      %1118 = vmatpush.msra.mxu0 0.0
      %1119 = vmatpush.msra.mxu0 0.0
      %1120 = vmatpush.msra.mxu0 0.0
      %1121 = vmatpush.msra.mxu0 0.0
      %1122 = vmatpush.msra.mxu0 0.0
      %1123 = vmatpush.msra.mxu0 0.0
      %1124 = vmatpush.msra.mxu0 0.0
      %1125 = vmatpush.msra.mxu0 %v1102
      %1126 = vmatpush.msra.mxu0 %v1100
      %1127 = vmatmul.f32.gmra.mxu0 %v1106
      %v1128 = vpop.f32.mrf.mxu0
      %v1129 = vadd.f32 0.0, %v1128
      %1130 = vmatmul.f32.gmra.mxu0 %v1109
      %v1131 = vpop.f32.mrf.mxu0
      %v1132 = vadd.f32 0.0, %v1131
      %1133 = vdwg.mxu0
      %1134 = vrot.lane.b32.xlu0 %v460, 64
      %v1135 = vpop.permute.xlu0 %1134
      %1136 = vrot.lane.b32.xlu0 %v462, 64
      %v1137 = vpop.permute.xlu0 %1136
      %v1141 = vsel %vm368, %v920, 0
      %v1144 = vsel %vm368, %v921, 0
      %1146 = vmatpush.msra.mxu0 0.0
      %1147 = vmatpush.msra.mxu0 0.0
      %1148 = vmatpush.msra.mxu0 0.0
      %1149 = vmatpush.msra.mxu0 0.0
      %1150 = vmatpush.msra.mxu0 0.0
      %1151 = vmatpush.msra.mxu0 0.0
      %1152 = vmatpush.msra.mxu0 0.0
      %1153 = vmatpush.msra.mxu0 0.0
      %1154 = vmatpush.msra.mxu0 0.0
      %1155 = vmatpush.msra.mxu0 0.0
      %1156 = vmatpush.msra.mxu0 0.0
      %1157 = vmatpush.msra.mxu0 0.0
      %1158 = vmatpush.msra.mxu0 0.0
      %1159 = vmatpush.msra.mxu0 0.0
      %1160 = vmatpush.msra.mxu0 %v1137
      %1161 = vmatpush.msra.mxu0 %v1135
      %1162 = vmatmul.f32.gmra.mxu0 %v1141
      %v1163 = vpop.f32.mrf.mxu0
      %v1164 = vadd.f32 0.0, %v1163
      %1165 = vmatmul.f32.gmra.mxu0 %v1144
      %v1166 = vpop.f32.mrf.mxu0
      %v1167 = vadd.f32 0.0, %v1166
      %1168 = vdwg.mxu0
      %1169 = vrot.lane.b32.xlu0 %v464, 64
      %v1170 = vpop.permute.xlu0 %1169
      %1171 = vrot.lane.b32.xlu0 %v466, 64
      %v1172 = vpop.permute.xlu0 %1171
      %v1176 = vsel %vm368, %v922, 0
      %v1179 = vsel %vm368, %v923, 0
      %1181 = vmatpush.msra.mxu0 0.0
      %1182 = vmatpush.msra.mxu0 0.0
      %1183 = vmatpush.msra.mxu0 0.0
      %1184 = vmatpush.msra.mxu0 0.0
      %1185 = vmatpush.msra.mxu0 0.0
      %1186 = vmatpush.msra.mxu0 0.0
      %1187 = vmatpush.msra.mxu0 0.0
      %1188 = vmatpush.msra.mxu0 0.0
      %1189 = vmatpush.msra.mxu0 0.0
      %1190 = vmatpush.msra.mxu0 0.0
      %1191 = vmatpush.msra.mxu0 0.0
      %1192 = vmatpush.msra.mxu0 0.0
      %1193 = vmatpush.msra.mxu0 0.0
      %1194 = vmatpush.msra.mxu0 0.0
      %1195 = vmatpush.msra.mxu0 %v1172
      %1196 = vmatpush.msra.mxu0 %v1170
      %1197 = vmatmul.f32.gmra.mxu0 %v1176
      %v1198 = vpop.f32.mrf.mxu0
      %v1199 = vadd.f32 0.0, %v1198
      %1200 = vmatmul.f32.gmra.mxu0 %v1179
      %v1201 = vpop.f32.mrf.mxu0
      %v1202 = vadd.f32 0.0, %v1201
      %1203 = vdwg.mxu0
      %1204 = vst.msk [vmem:[#allocation2] sm:$0xff] %vm471, %v954
      %1205 = vst.msk [vmem:[#allocation2 + $0x8] sm:$0xff] %vm471, %v957
      %1208 = vrot.lane.b32.xlu0 %v989, 4
      %v1209 = vpop.permute.xlu0 %1208
      %1210 = vrot.lane.b32.xlu0 %v992, 4
      %v1211 = vpop.permute.xlu0 %1210
      %vm1214 = vcmask 64544
      %1215 = vst.msk [vmem:[#allocation2] sm:$0xff] %vm1214, %v1209
      %1216 = vst.msk [vmem:[#allocation2 + $0x8] sm:$0xff] %vm1214, %v1211
      %1219 = vrot.lane.b32.xlu0 %v1024, 8
      %v1220 = vpop.permute.xlu0 %1219
      %1221 = vrot.lane.b32.xlu0 %v1027, 8
      %v1222 = vpop.permute.xlu0 %1221
      %vm1225 = vcmask 97344
      %1226 = vst.msk [vmem:[#allocation2] sm:$0xff] %vm1225, %v1220
      %1227 = vst.msk [vmem:[#allocation2 + $0x8] sm:$0xff] %vm1225, %v1222
      %1230 = vrot.lane.b32.xlu0 %v1059, 12
      %v1231 = vpop.permute.xlu0 %1230
      %1232 = vrot.lane.b32.xlu0 %v1062, 12
      %v1233 = vpop.permute.xlu0 %1232
      %vm1236 = vcmask 130144
      %1237 = vst.msk [vmem:[#allocation2] sm:$0xff] %vm1236, %v1231
      %1238 = vst.msk [vmem:[#allocation2 + $0x8] sm:$0xff] %vm1236, %v1233
      %1241 = vrot.lane.b32.xlu0 %v1094, 16
      %v1242 = vpop.permute.xlu0 %1241
      %1243 = vrot.lane.b32.xlu0 %v1097, 16
      %v1244 = vpop.permute.xlu0 %1243
      %vm1247 = vcmask 162944
      %1248 = vst.msk [vmem:[#allocation2] sm:$0xff] %vm1247, %v1242
      %1249 = vst.msk [vmem:[#allocation2 + $0x8] sm:$0xff] %vm1247, %v1244
      %1252 = vrot.lane.b32.xlu0 %v1129, 20
      %v1253 = vpop.permute.xlu0 %1252
      %1254 = vrot.lane.b32.xlu0 %v1132, 20
      %v1255 = vpop.permute.xlu0 %1254
      %vm1258 = vcmask 195744
      %1259 = vst.msk [vmem:[#allocation2] sm:$0xff] %vm1258, %v1253
      %1260 = vst.msk [vmem:[#allocation2 + $0x8] sm:$0xff] %vm1258, %v1255
      %1263 = vrot.lane.b32.xlu0 %v1164, 24
      %v1264 = vpop.permute.xlu0 %1263
      %1265 = vrot.lane.b32.xlu0 %v1167, 24
      %v1266 = vpop.permute.xlu0 %1265
      %vm1269 = vcmask 228544
      %1270 = vst.msk [vmem:[#allocation2] sm:$0xff] %vm1269, %v1264
      %1271 = vst.msk [vmem:[#allocation2 + $0x8] sm:$0xff] %vm1269, %v1266
      %1274 = vrot.lane.b32.xlu0 %v1199, 28
      %v1275 = vpop.permute.xlu0 %1274
      %1276 = vrot.lane.b32.xlu0 %v1202, 28
      %v1277 = vpop.permute.xlu0 %1276
      %vm1280 = vcmask 261344
      %1281 = vst.msk [vmem:[#allocation2] sm:$0xff] %vm1280, %v1275
      %1282 = vst.msk [vmem:[#allocation2 + $0x8] sm:$0xff] %vm1280, %v1277
      %v1283 = vld [vmem:[#allocation2] sm:$0xff]
      %v1284 = vld [vmem:[#allocation2 + $0x8] sm:$0xff]
      %v1285 = vld [vmem:[%s5] sm:$0xff]
      %v1286 = vld [vmem:[%s5 + $0x8] sm:$0xff]
      %v1287 = vld [vmem:[%s5 + $0x10] sm:$0xff]
      %v1288 = vld [vmem:[%s5 + $0x18] sm:$0xff]
      %v1289 = vperm.slane %v398, 0
      %v1291 = vsel %vm407, %v1283, 0
      %v1294 = vsel %vm407, %v1284, 0
      %1296 = vmatpush.msra.mxu0 0.0
      %1297 = vmatpush.msra.mxu0 0.0
      %1298 = vmatpush.msra.mxu0 0.0
      %1299 = vmatpush.msra.mxu0 0.0
      %1300 = vmatpush.msra.mxu0 0.0
      %1301 = vmatpush.msra.mxu0 0.0
      %1302 = vmatpush.msra.mxu0 0.0
      %1303 = vmatpush.msra.mxu0 0.0
      %1304 = vmatpush.msra.mxu0 0.0
      %1305 = vmatpush.msra.mxu0 0.0
      %1306 = vmatpush.msra.mxu0 0.0
      %1307 = vmatpush.msra.mxu0 0.0
      %1308 = vmatpush.msra.mxu0 %v1288
      %1309 = vmatpush.msra.mxu0 %v1287
      %1310 = vmatpush.msra.mxu0 %v1286
      %1311 = vmatpush.msra.mxu0 %v1285
      %1312 = vmatmul.f32.gmra.mxu0 %v1291
      %v1313 = vpop.f32.mrf.mxu0
      %v1314 = vadd.f32 %v1289, %v1313
      %1315 = vmatmul.f32.gmra.mxu0 %v1294
      %v1316 = vpop.f32.mrf.mxu0
      %v1317 = vadd.f32 %v1289, %v1316
      %1318 = vdwg.mxu0
      %v1319 = vadd.f32 %v393, %v1314
      %v1320 = vadd.f32 %v396, %v1317
      %v1321 = vsel %vm407, %v1319, 0.0
      %1322 = vadd.xlane.f32.xlu0 %v1321
      %v1323 = vpop.xlane.xlu0 %1322
      %v1324 = vsel %vm407, %v1320, 0.0
      %1325 = vadd.xlane.f32.xlu0 %v1324
      %v1326 = vpop.xlane.xlu0 %1325
      %v1327 = vrcp.pop 32.0
      %v1328 = vmul.f32 32.0, %v1327
      %v1329 = vsub.f32 1.0, %v1328
      %v1330 = vmul.f32 %v1327, %v1329
      %v1331 = vadd.f32 %v1327, %v1330
      %vm1332 = vweird.f32 %v1327
      %v1333 = vsel %vm1332, %v1327, %v1331
      %v1334 = vmul.f32 %v1323, %v1333
      %v1335 = vmul.f32 %v1326, %v1333
      %v1336 = vmul.f32 %v1319, %v1319
      %v1337 = vmul.f32 %v1320, %v1320
      %v1338 = vsel %vm407, %v1336, 0.0
      %1339 = vadd.xlane.f32.xlu0 %v1338
      %v1340 = vpop.xlane.xlu0 %1339
      %v1341 = vsel %vm407, %v1337, 0.0
      %1342 = vadd.xlane.f32.xlu0 %v1341
      %v1343 = vpop.xlane.xlu0 %1342
      %v1344 = vmul.f32 %v1340, %v1333
      %v1345 = vmul.f32 %v1343, %v1333
      %v1346 = vmul.f32 %v1334, %v1334
      %v1347 = vmul.f32 %v1335, %v1335
      %v1348 = vsub.f32 %v1344, %v1346
      %v1349 = vsub.f32 %v1345, %v1347
      %v1350 = vsub.f32 %v1319, %v1334
      %v1351 = vsub.f32 %v1320, %v1335
      %v1352 = vadd.f32 %v1348, 1e-05
      %v1353 = vadd.f32 %v1349, 1e-05
      %v1354 = vrsqrt.pop %v1352
      %v1355 = vmul.f32 %v1354, %v1352
      %v1356 = vmul.f32 %v1355, %v1354
      %v1357 = vmul.f32 0.5, %v1356
      %v1358 = vsub.f32 1.5, %v1357
      %v1359 = vmul.f32 %v1354, %v1358
      %vm1360 = vweird.f32 %v1352
      %vm1361 = vweird.f32 %v1354
      %vm1362 = vmor %vm1360, %vm1361
      %v1363 = vsel %vm1362, %v1354, %v1359
      %v1364 = vrsqrt.pop %v1353
      %v1365 = vmul.f32 %v1364, %v1353
      %v1366 = vmul.f32 %v1365, %v1364
      %v1367 = vmul.f32 0.5, %v1366
      %v1368 = vsub.f32 1.5, %v1367
      %v1369 = vmul.f32 %v1364, %v1368
      %vm1370 = vweird.f32 %v1353
      %vm1371 = vweird.f32 %v1364
      %vm1372 = vmor %vm1370, %vm1371
      %v1373 = vsel %vm1372, %v1364, %v1369
      %v1374 = vmul.f32 %v1350, %v1363
      %v1375 = vmul.f32 %v1351, %v1373
      %v1376 = vperm.slane %v398, 2
      %v1377 = vmul.f32 %v1374, %v1376
      %v1378 = vmul.f32 %v1375, %v1376
      %v1379 = vperm.slane %v398, 3
      %v1380 = vadd.f32 %v1377, %v1379
      %v1381 = vadd.f32 %v1378, %v1379
      %v1382 = vld [vmem:[%s6] sm:$0xff]
      %v1383 = vld [vmem:[%s6 + $0x8] sm:$0xff]
      %v1384 = vld [vmem:[%s6 + $0x10] sm:$0xff]
      %v1385 = vld [vmem:[%s6 + $0x18] sm:$0xff]
      %v1386 = vld [vmem:[%s7] sm:$0x1]
      %v1388 = vperm.slane %v1386, 0
      %v1391 = vsel %vm407, %v1380, 0
      %v1394 = vsel %vm407, %v1381, 0
      %1396 = vmatpush.msra.mxu0 0.0
      %1397 = vmatpush.msra.mxu0 0.0
      %1398 = vmatpush.msra.mxu0 0.0
      %1399 = vmatpush.msra.mxu0 0.0
      %1400 = vmatpush.msra.mxu0 0.0
      %1401 = vmatpush.msra.mxu0 0.0
      %1402 = vmatpush.msra.mxu0 0.0
      %1403 = vmatpush.msra.mxu0 0.0
      %1404 = vmatpush.msra.mxu0 0.0
      %1405 = vmatpush.msra.mxu0 0.0
      %1406 = vmatpush.msra.mxu0 0.0
      %1407 = vmatpush.msra.mxu0 0.0
      %1408 = vmatpush.msra.mxu0 %v1385
      %1409 = vmatpush.msra.mxu0 %v1384
      %1410 = vmatpush.msra.mxu0 %v1383
      %1411 = vmatpush.msra.mxu0 %v1382
      %1412 = vmatmul.f32.gmra.mxu0 %v1391
      %v1413 = vpop.f32.mrf.mxu0
      %v1414 = vadd.f32 %v1388, %v1413
      %1415 = vmatmul.f32.gmra.mxu0 %v1394
      %v1416 = vpop.f32.mrf.mxu0
      %v1417 = vadd.f32 %v1388, %v1416
      %1418 = vdwg.mxu0
      %v1419 = vmax.f32 %v1414, 0.0
      %v1420 = vmax.f32 %v1417, 0.0
      %v1421 = vld [vmem:[%s8] sm:$0xff]
      %v1422 = vld [vmem:[%s8 + $0x8] sm:$0xff]
      %v1423 = vld [vmem:[%s8 + $0x10] sm:$0xff]
      %v1424 = vld [vmem:[%s8 + $0x18] sm:$0xff]
      %v1425 = vld [vmem:[%s8 + $0x20] sm:$0xff]
      %v1426 = vld [vmem:[%s8 + $0x28] sm:$0xff]
      %v1427 = vld [vmem:[%s8 + $0x30] sm:$0xff]
      %v1428 = vld [vmem:[%s8 + $0x38] sm:$0xff]
      %v1429 = vld [vmem:[%s8 + $0x40] sm:$0xff]
      %v1430 = vld [vmem:[%s8 + $0x48] sm:$0xff]
      %v1431 = vld [vmem:[%s8 + $0x50] sm:$0xff]
      %v1432 = vld [vmem:[%s8 + $0x58] sm:$0xff]
      %v1433 = vld [vmem:[%s8 + $0x60] sm:$0xff]
      %v1434 = vld [vmem:[%s8 + $0x68] sm:$0xff]
      %v1435 = vld [vmem:[%s8 + $0x70] sm:$0xff]
      %v1436 = vld [vmem:[%s8 + $0x78] sm:$0xff]
      %v1437 = vperm.slane %v398, 1
      %1438 = vmatpush.msra.mxu0 %v1436
      %1439 = vmatpush.msra.mxu0 %v1435
      %1440 = vmatpush.msra.mxu0 %v1434
      %1441 = vmatpush.msra.mxu0 %v1433
      %1442 = vmatpush.msra.mxu0 %v1432
      %1443 = vmatpush.msra.mxu0 %v1431
      %1444 = vmatpush.msra.mxu0 %v1430
      %1445 = vmatpush.msra.mxu0 %v1429
      %1446 = vmatpush.msra.mxu0 %v1428
      %1447 = vmatpush.msra.mxu0 %v1427
      %1448 = vmatpush.msra.mxu0 %v1426
      %1449 = vmatpush.msra.mxu0 %v1425
      %1450 = vmatpush.msra.mxu0 %v1424
      %1451 = vmatpush.msra.mxu0 %v1423
      %1452 = vmatpush.msra.mxu0 %v1422
      %1453 = vmatpush.msra.mxu0 %v1421
      %1454 = vmatmul.f32.gmra.mxu0 %v1419
      %v1455 = vpop.f32.mrf.mxu0
      %v1456 = vadd.f32 %v1437, %v1455
      %1457 = vmatmul.f32.gmra.mxu0 %v1420
      %v1458 = vpop.f32.mrf.mxu0
      %v1459 = vadd.f32 %v1437, %v1458
      %1460 = vdwg.mxu0
      %v1461 = vadd.f32 %v1380, %v1456
      %v1462 = vadd.f32 %v1381, %v1459
      %v1463 = vsel %vm407, %v1461, 0.0
      %1464 = vadd.xlane.f32.xlu0 %v1463
      %v1465 = vpop.xlane.xlu0 %1464
      %v1466 = vsel %vm407, %v1462, 0.0
      %1467 = vadd.xlane.f32.xlu0 %v1466
      %v1468 = vpop.xlane.xlu0 %1467
      %v1469 = vmul.f32 %v1465, %v1333
      %v1470 = vmul.f32 %v1468, %v1333
      %v1471 = vmul.f32 %v1461, %v1461
      %v1472 = vmul.f32 %v1462, %v1462
      %v1473 = vsel %vm407, %v1471, 0.0
      %1474 = vadd.xlane.f32.xlu0 %v1473
      %v1475 = vpop.xlane.xlu0 %1474
      %v1476 = vsel %vm407, %v1472, 0.0
      %1477 = vadd.xlane.f32.xlu0 %v1476
      %v1478 = vpop.xlane.xlu0 %1477
      %v1479 = vmul.f32 %v1475, %v1333
      %v1480 = vmul.f32 %v1478, %v1333
      %v1481 = vmul.f32 %v1469, %v1469
      %v1482 = vmul.f32 %v1470, %v1470
      %v1483 = vsub.f32 %v1479, %v1481
      %v1484 = vsub.f32 %v1480, %v1482
      %v1485 = vsub.f32 %v1461, %v1469
      %v1486 = vsub.f32 %v1462, %v1470
      %v1487 = vadd.f32 %v1483, 1e-05
      %v1488 = vadd.f32 %v1484, 1e-05
      %v1489 = vrsqrt.pop %v1487
      %v1490 = vmul.f32 %v1489, %v1487
      %v1491 = vmul.f32 %v1490, %v1489
      %v1492 = vmul.f32 0.5, %v1491
      %v1493 = vsub.f32 1.5, %v1492
      %v1494 = vmul.f32 %v1489, %v1493
      %vm1495 = vweird.f32 %v1487
      %vm1496 = vweird.f32 %v1489
      %vm1497 = vmor %vm1495, %vm1496
      %v1498 = vsel %vm1497, %v1489, %v1494
      %v1499 = vrsqrt.pop %v1488
      %v1500 = vmul.f32 %v1499, %v1488
      %v1501 = vmul.f32 %v1500, %v1499
      %v1502 = vmul.f32 0.5, %v1501
      %v1503 = vsub.f32 1.5, %v1502
      %v1504 = vmul.f32 %v1499, %v1503
      %vm1505 = vweird.f32 %v1488
      %vm1506 = vweird.f32 %v1499
      %vm1507 = vmor %vm1505, %vm1506
      %v1508 = vsel %vm1507, %v1499, %v1504
      %v1509 = vmul.f32 %v1485, %v1498
      %v1510 = vmul.f32 %v1486, %v1508
      %v1511 = vperm.slane %v398, 4
      %v1512 = vmul.f32 %v1509, %v1511
      %v1513 = vmul.f32 %v1510, %v1511
      %v1514 = vperm.slane %v398, 5
      %v1515 = vadd.f32 %v1512, %v1514
      %v1516 = vadd.f32 %v1513, %v1514
      %s1517 = scalar_lea.vmem %s9, 8
      %v1518 = vld [vmem:[%s1517] sm:$0x3f]
      %s1519 = scalar_lea.vmem %s3, 32
      %v1520 = vld [vmem:[%s1519] sm:$0xff]
      %v1521 = vld [vmem:[%s1519 + $0x8] sm:$0xff]
      %v1522 = vld [vmem:[%s1519 + $0x10] sm:$0xff]
      %v1523 = vld [vmem:[%s1519 + $0x18] sm:$0xff]
      %s1524 = scalar_lea.vmem %s4, 1
      %v1525 = vld [vmem:[%s1524] sm:$0x1]
      %v1527 = vperm.slane %v1525, 0
      %v1530 = vsel %vm407, %v1515, 0
      %v1533 = vsel %vm407, %v1516, 0
      %1535 = vmatpush.msra.mxu0 0.0
      %1536 = vmatpush.msra.mxu0 0.0
      %1537 = vmatpush.msra.mxu0 0.0
      %1538 = vmatpush.msra.mxu0 0.0
      %1539 = vmatpush.msra.mxu0 0.0
      %1540 = vmatpush.msra.mxu0 0.0
      %1541 = vmatpush.msra.mxu0 0.0
      %1542 = vmatpush.msra.mxu0 0.0
      %1543 = vmatpush.msra.mxu0 0.0
      %1544 = vmatpush.msra.mxu0 0.0
      %1545 = vmatpush.msra.mxu0 0.0
      %1546 = vmatpush.msra.mxu0 0.0
      %1547 = vmatpush.msra.mxu0 %v1523
      %1548 = vmatpush.msra.mxu0 %v1522
      %1549 = vmatpush.msra.mxu0 %v1521
      %1550 = vmatpush.msra.mxu0 %v1520
      %1551 = vmatmul.f32.gmra.mxu0 %v1530
      %v1552 = vpop.f32.mrf.mxu0
      %v1553 = vadd.f32 %v1527, %v1552
      %1554 = vmatmul.f32.gmra.mxu0 %v1533
      %v1555 = vpop.f32.mrf.mxu0
      %v1556 = vadd.f32 %v1527, %v1555
      %1557 = vdwg.mxu0
      %1560 = vrot.lane.b32.xlu0 %v1553, 124
      %v1561 = vpop.permute.xlu0 %1560
      %1562 = vrot.lane.b32.xlu0 %v1556, 124
      %v1563 = vpop.permute.xlu0 %1562
      %1564 = vrot.lane.b32.xlu0 %v1553, 120
      %v1565 = vpop.permute.xlu0 %1564
      %1566 = vrot.lane.b32.xlu0 %v1556, 120
      %v1567 = vpop.permute.xlu0 %1566
      %1568 = vrot.lane.b32.xlu0 %v1553, 116
      %v1569 = vpop.permute.xlu0 %1568
      %1570 = vrot.lane.b32.xlu0 %v1556, 116
      %v1571 = vpop.permute.xlu0 %1570
      %1572 = vrot.lane.b32.xlu0 %v1553, 112
      %v1573 = vpop.permute.xlu0 %1572
      %1574 = vrot.lane.b32.xlu0 %v1556, 112
      %v1575 = vpop.permute.xlu0 %1574
      %1576 = vrot.lane.b32.xlu0 %v1553, 108
      %v1577 = vpop.permute.xlu0 %1576
      %1578 = vrot.lane.b32.xlu0 %v1556, 108
      %v1579 = vpop.permute.xlu0 %1578
      %1580 = vrot.lane.b32.xlu0 %v1553, 104
      %v1581 = vpop.permute.xlu0 %1580
      %1582 = vrot.lane.b32.xlu0 %v1556, 104
      %v1583 = vpop.permute.xlu0 %1582
      %1584 = vrot.lane.b32.xlu0 %v1553, 100
      %v1585 = vpop.permute.xlu0 %1584
      %1586 = vrot.lane.b32.xlu0 %v1556, 100
      %v1587 = vpop.permute.xlu0 %1586
      %1588 = vrot.lane.b32.xlu0 %v1553, 96
      %v1589 = vpop.permute.xlu0 %1588
      %1590 = vrot.lane.b32.xlu0 %v1556, 96
      %v1591 = vpop.permute.xlu0 %1590
      %v1592 = vsel %vm471, %v1553, 0
      %v1594 = vsel %vm471, %v1556, 0
      %v1596 = vsel %vm471, %v1589, 0
      %v1598 = vsel %vm471, %v1591, 0
      %1600 = vmatpush.xpose.msra.mxu0 0.0
      %1601 = vmatpush.xpose.msra.mxu0 0.0
      %1602 = vmatpush.xpose.msra.mxu0 0.0
      %1603 = vmatpush.xpose.msra.mxu0 0.0
      %1604 = vmatpush.xpose.msra.mxu0 0.0
      %1605 = vmatpush.xpose.msra.mxu0 0.0
      %1606 = vmatpush.xpose.msra.mxu0 0.0
      %1607 = vmatpush.xpose.msra.mxu0 0.0
      %1608 = vmatpush.xpose.msra.mxu0 0.0
      %1609 = vmatpush.xpose.msra.mxu0 0.0
      %1610 = vmatpush.xpose.msra.mxu0 0.0
      %1611 = vmatpush.xpose.msra.mxu0 0.0
      %1612 = vmatpush.xpose.msra.mxu0 0.0
      %1613 = vmatpush.xpose.msra.mxu0 0.0
      %1614 = vmatpush.xpose.msra.mxu0 %v1598
      %1615 = vmatpush.xpose.msra.mxu0 %v1596
      %1616 = vmatmul.f32.gmra.mxu0 %v1592
      %v1617 = vpop.f32.mrf.mxu0
      %v1618 = vadd.f32 0.0, %v1617
      %1619 = vmatmul.f32.gmra.mxu0 %v1594
      %v1620 = vpop.f32.mrf.mxu0
      %v1621 = vadd.f32 0.0, %v1620
      %1622 = vdwg.mxu0
      %1623 = vrot.lane.b32.xlu0 %v1561, 96
      %v1624 = vpop.permute.xlu0 %1623
      %1625 = vrot.lane.b32.xlu0 %v1563, 96
      %v1626 = vpop.permute.xlu0 %1625
      %v1627 = vsel %vm471, %v1561, 0
      %v1629 = vsel %vm471, %v1563, 0
      %v1631 = vsel %vm471, %v1624, 0
      %v1633 = vsel %vm471, %v1626, 0
      %1635 = vmatpush.xpose.msra.mxu0 0.0
      %1636 = vmatpush.xpose.msra.mxu0 0.0
      %1637 = vmatpush.xpose.msra.mxu0 0.0
      %1638 = vmatpush.xpose.msra.mxu0 0.0
      %1639 = vmatpush.xpose.msra.mxu0 0.0
      %1640 = vmatpush.xpose.msra.mxu0 0.0
      %1641 = vmatpush.xpose.msra.mxu0 0.0
      %1642 = vmatpush.xpose.msra.mxu0 0.0
      %1643 = vmatpush.xpose.msra.mxu0 0.0
      %1644 = vmatpush.xpose.msra.mxu0 0.0
      %1645 = vmatpush.xpose.msra.mxu0 0.0
      %1646 = vmatpush.xpose.msra.mxu0 0.0
      %1647 = vmatpush.xpose.msra.mxu0 0.0
      %1648 = vmatpush.xpose.msra.mxu0 0.0
      %1649 = vmatpush.xpose.msra.mxu0 %v1633
      %1650 = vmatpush.xpose.msra.mxu0 %v1631
      %1651 = vmatmul.f32.gmra.mxu0 %v1627
      %v1652 = vpop.f32.mrf.mxu0
      %v1653 = vadd.f32 0.0, %v1652
      %1654 = vmatmul.f32.gmra.mxu0 %v1629
      %v1655 = vpop.f32.mrf.mxu0
      %v1656 = vadd.f32 0.0, %v1655
      %1657 = vdwg.mxu0
      %1658 = vrot.lane.b32.xlu0 %v1565, 96
      %v1659 = vpop.permute.xlu0 %1658
      %1660 = vrot.lane.b32.xlu0 %v1567, 96
      %v1661 = vpop.permute.xlu0 %1660
      %v1662 = vsel %vm471, %v1565, 0
      %v1664 = vsel %vm471, %v1567, 0
      %v1666 = vsel %vm471, %v1659, 0
      %v1668 = vsel %vm471, %v1661, 0
      %1670 = vmatpush.xpose.msra.mxu0 0.0
      %1671 = vmatpush.xpose.msra.mxu0 0.0
      %1672 = vmatpush.xpose.msra.mxu0 0.0
      %1673 = vmatpush.xpose.msra.mxu0 0.0
      %1674 = vmatpush.xpose.msra.mxu0 0.0
      %1675 = vmatpush.xpose.msra.mxu0 0.0
      %1676 = vmatpush.xpose.msra.mxu0 0.0
      %1677 = vmatpush.xpose.msra.mxu0 0.0
      %1678 = vmatpush.xpose.msra.mxu0 0.0
      %1679 = vmatpush.xpose.msra.mxu0 0.0
      %1680 = vmatpush.xpose.msra.mxu0 0.0
      %1681 = vmatpush.xpose.msra.mxu0 0.0
      %1682 = vmatpush.xpose.msra.mxu0 0.0
      %1683 = vmatpush.xpose.msra.mxu0 0.0
      %1684 = vmatpush.xpose.msra.mxu0 %v1668
      %1685 = vmatpush.xpose.msra.mxu0 %v1666
      %1686 = vmatmul.f32.gmra.mxu0 %v1662
      %v1687 = vpop.f32.mrf.mxu0
      %v1688 = vadd.f32 0.0, %v1687
      %1689 = vmatmul.f32.gmra.mxu0 %v1664
      %v1690 = vpop.f32.mrf.mxu0
      %v1691 = vadd.f32 0.0, %v1690
      %1692 = vdwg.mxu0
      %1693 = vrot.lane.b32.xlu0 %v1569, 96
      %v1694 = vpop.permute.xlu0 %1693
      %1695 = vrot.lane.b32.xlu0 %v1571, 96
      %v1696 = vpop.permute.xlu0 %1695
      %v1697 = vsel %vm471, %v1569, 0
      %v1699 = vsel %vm471, %v1571, 0
      %v1701 = vsel %vm471, %v1694, 0
      %v1703 = vsel %vm471, %v1696, 0
      %1705 = vmatpush.xpose.msra.mxu0 0.0
      %1706 = vmatpush.xpose.msra.mxu0 0.0
      %1707 = vmatpush.xpose.msra.mxu0 0.0
      %1708 = vmatpush.xpose.msra.mxu0 0.0
      %1709 = vmatpush.xpose.msra.mxu0 0.0
      %1710 = vmatpush.xpose.msra.mxu0 0.0
      %1711 = vmatpush.xpose.msra.mxu0 0.0
      %1712 = vmatpush.xpose.msra.mxu0 0.0
      %1713 = vmatpush.xpose.msra.mxu0 0.0
      %1714 = vmatpush.xpose.msra.mxu0 0.0
      %1715 = vmatpush.xpose.msra.mxu0 0.0
      %1716 = vmatpush.xpose.msra.mxu0 0.0
      %1717 = vmatpush.xpose.msra.mxu0 0.0
      %1718 = vmatpush.xpose.msra.mxu0 0.0
      %1719 = vmatpush.xpose.msra.mxu0 %v1703
      %1720 = vmatpush.xpose.msra.mxu0 %v1701
      %1721 = vmatmul.f32.gmra.mxu0 %v1697
      %v1722 = vpop.f32.mrf.mxu0
      %v1723 = vadd.f32 0.0, %v1722
      %1724 = vmatmul.f32.gmra.mxu0 %v1699
      %v1725 = vpop.f32.mrf.mxu0
      %v1726 = vadd.f32 0.0, %v1725
      %1727 = vdwg.mxu0
      %1728 = vrot.lane.b32.xlu0 %v1573, 96
      %v1729 = vpop.permute.xlu0 %1728
      %1730 = vrot.lane.b32.xlu0 %v1575, 96
      %v1731 = vpop.permute.xlu0 %1730
      %v1732 = vsel %vm471, %v1573, 0
      %v1734 = vsel %vm471, %v1575, 0
      %v1736 = vsel %vm471, %v1729, 0
      %v1738 = vsel %vm471, %v1731, 0
      %1740 = vmatpush.xpose.msra.mxu0 0.0
      %1741 = vmatpush.xpose.msra.mxu0 0.0
      %1742 = vmatpush.xpose.msra.mxu0 0.0
      %1743 = vmatpush.xpose.msra.mxu0 0.0
      %1744 = vmatpush.xpose.msra.mxu0 0.0
      %1745 = vmatpush.xpose.msra.mxu0 0.0
      %1746 = vmatpush.xpose.msra.mxu0 0.0
      %1747 = vmatpush.xpose.msra.mxu0 0.0
      %1748 = vmatpush.xpose.msra.mxu0 0.0
      %1749 = vmatpush.xpose.msra.mxu0 0.0
      %1750 = vmatpush.xpose.msra.mxu0 0.0
      %1751 = vmatpush.xpose.msra.mxu0 0.0
      %1752 = vmatpush.xpose.msra.mxu0 0.0
      %1753 = vmatpush.xpose.msra.mxu0 0.0
      %1754 = vmatpush.xpose.msra.mxu0 %v1738
      %1755 = vmatpush.xpose.msra.mxu0 %v1736
      %1756 = vmatmul.f32.gmra.mxu0 %v1732
      %v1757 = vpop.f32.mrf.mxu0
      %v1758 = vadd.f32 0.0, %v1757
      %1759 = vmatmul.f32.gmra.mxu0 %v1734
      %v1760 = vpop.f32.mrf.mxu0
      %v1761 = vadd.f32 0.0, %v1760
      %1762 = vdwg.mxu0
      %1763 = vrot.lane.b32.xlu0 %v1577, 96
      %v1764 = vpop.permute.xlu0 %1763
      %1765 = vrot.lane.b32.xlu0 %v1579, 96
      %v1766 = vpop.permute.xlu0 %1765
      %v1767 = vsel %vm471, %v1577, 0
      %v1769 = vsel %vm471, %v1579, 0
      %v1771 = vsel %vm471, %v1764, 0
      %v1773 = vsel %vm471, %v1766, 0
      %1775 = vmatpush.xpose.msra.mxu0 0.0
      %1776 = vmatpush.xpose.msra.mxu0 0.0
      %1777 = vmatpush.xpose.msra.mxu0 0.0
      %1778 = vmatpush.xpose.msra.mxu0 0.0
      %1779 = vmatpush.xpose.msra.mxu0 0.0
      %1780 = vmatpush.xpose.msra.mxu0 0.0
      %1781 = vmatpush.xpose.msra.mxu0 0.0
      %1782 = vmatpush.xpose.msra.mxu0 0.0
      %1783 = vmatpush.xpose.msra.mxu0 0.0
      %1784 = vmatpush.xpose.msra.mxu0 0.0
      %1785 = vmatpush.xpose.msra.mxu0 0.0
      %1786 = vmatpush.xpose.msra.mxu0 0.0
      %1787 = vmatpush.xpose.msra.mxu0 0.0
      %1788 = vmatpush.xpose.msra.mxu0 0.0
      %1789 = vmatpush.xpose.msra.mxu0 %v1773
      %1790 = vmatpush.xpose.msra.mxu0 %v1771
      %1791 = vmatmul.f32.gmra.mxu0 %v1767
      %v1792 = vpop.f32.mrf.mxu0
      %v1793 = vadd.f32 0.0, %v1792
      %1794 = vmatmul.f32.gmra.mxu0 %v1769
      %v1795 = vpop.f32.mrf.mxu0
      %v1796 = vadd.f32 0.0, %v1795
      %1797 = vdwg.mxu0
      %1798 = vrot.lane.b32.xlu0 %v1581, 96
      %v1799 = vpop.permute.xlu0 %1798
      %1800 = vrot.lane.b32.xlu0 %v1583, 96
      %v1801 = vpop.permute.xlu0 %1800
      %v1802 = vsel %vm471, %v1581, 0
      %v1804 = vsel %vm471, %v1583, 0
      %v1806 = vsel %vm471, %v1799, 0
      %v1808 = vsel %vm471, %v1801, 0
      %1810 = vmatpush.xpose.msra.mxu0 0.0
      %1811 = vmatpush.xpose.msra.mxu0 0.0
      %1812 = vmatpush.xpose.msra.mxu0 0.0
      %1813 = vmatpush.xpose.msra.mxu0 0.0
      %1814 = vmatpush.xpose.msra.mxu0 0.0
      %1815 = vmatpush.xpose.msra.mxu0 0.0
      %1816 = vmatpush.xpose.msra.mxu0 0.0
      %1817 = vmatpush.xpose.msra.mxu0 0.0
      %1818 = vmatpush.xpose.msra.mxu0 0.0
      %1819 = vmatpush.xpose.msra.mxu0 0.0
      %1820 = vmatpush.xpose.msra.mxu0 0.0
      %1821 = vmatpush.xpose.msra.mxu0 0.0
      %1822 = vmatpush.xpose.msra.mxu0 0.0
      %1823 = vmatpush.xpose.msra.mxu0 0.0
      %1824 = vmatpush.xpose.msra.mxu0 %v1808
      %1825 = vmatpush.xpose.msra.mxu0 %v1806
      %1826 = vmatmul.f32.gmra.mxu0 %v1802
      %v1827 = vpop.f32.mrf.mxu0
      %v1828 = vadd.f32 0.0, %v1827
      %1829 = vmatmul.f32.gmra.mxu0 %v1804
      %v1830 = vpop.f32.mrf.mxu0
      %v1831 = vadd.f32 0.0, %v1830
      %1832 = vdwg.mxu0
      %1833 = vrot.lane.b32.xlu0 %v1585, 96
      %v1834 = vpop.permute.xlu0 %1833
      %1835 = vrot.lane.b32.xlu0 %v1587, 96
      %v1836 = vpop.permute.xlu0 %1835
      %v1837 = vsel %vm471, %v1585, 0
      %v1839 = vsel %vm471, %v1587, 0
      %v1841 = vsel %vm471, %v1834, 0
      %v1843 = vsel %vm471, %v1836, 0
      %1845 = vmatpush.xpose.msra.mxu0 0.0
      %1846 = vmatpush.xpose.msra.mxu0 0.0
      %1847 = vmatpush.xpose.msra.mxu0 0.0
      %1848 = vmatpush.xpose.msra.mxu0 0.0
      %1849 = vmatpush.xpose.msra.mxu0 0.0
      %1850 = vmatpush.xpose.msra.mxu0 0.0
      %1851 = vmatpush.xpose.msra.mxu0 0.0
      %1852 = vmatpush.xpose.msra.mxu0 0.0
      %1853 = vmatpush.xpose.msra.mxu0 0.0
      %1854 = vmatpush.xpose.msra.mxu0 0.0
      %1855 = vmatpush.xpose.msra.mxu0 0.0
      %1856 = vmatpush.xpose.msra.mxu0 0.0
      %1857 = vmatpush.xpose.msra.mxu0 0.0
      %1858 = vmatpush.xpose.msra.mxu0 0.0
      %1859 = vmatpush.xpose.msra.mxu0 %v1843
      %1860 = vmatpush.xpose.msra.mxu0 %v1841
      %1861 = vmatmul.f32.gmra.mxu0 %v1837
      %v1862 = vpop.f32.mrf.mxu0
      %v1863 = vadd.f32 0.0, %v1862
      %1864 = vmatmul.f32.gmra.mxu0 %v1839
      %v1865 = vpop.f32.mrf.mxu0
      %v1866 = vadd.f32 0.0, %v1865
      %1867 = vdwg.mxu0
      %v1868 = vsel %vm368, %v1618, -inf
      %1869 = vmax.xlane.f32.xlu0 %v1868
      %v1870 = vpop.xlane.xlu0 %1869
      %v1871 = vsel %vm368, %v1621, -inf
      %1872 = vmax.xlane.f32.xlu0 %v1871
      %v1873 = vpop.xlane.xlu0 %1872
      %v1874 = vsel %vm368, %v1653, -inf
      %1875 = vmax.xlane.f32.xlu0 %v1874
      %v1876 = vpop.xlane.xlu0 %1875
      %v1877 = vsel %vm368, %v1656, -inf
      %1878 = vmax.xlane.f32.xlu0 %v1877
      %v1879 = vpop.xlane.xlu0 %1878
      %v1880 = vsel %vm368, %v1688, -inf
      %1881 = vmax.xlane.f32.xlu0 %v1880
      %v1882 = vpop.xlane.xlu0 %1881
      %v1883 = vsel %vm368, %v1691, -inf
      %1884 = vmax.xlane.f32.xlu0 %v1883
      %v1885 = vpop.xlane.xlu0 %1884
      %v1886 = vsel %vm368, %v1723, -inf
      %1887 = vmax.xlane.f32.xlu0 %v1886
      %v1888 = vpop.xlane.xlu0 %1887
      %v1889 = vsel %vm368, %v1726, -inf
      %1890 = vmax.xlane.f32.xlu0 %v1889
      %v1891 = vpop.xlane.xlu0 %1890
      %v1892 = vsel %vm368, %v1758, -inf
      %1893 = vmax.xlane.f32.xlu0 %v1892
      %v1894 = vpop.xlane.xlu0 %1893
      %v1895 = vsel %vm368, %v1761, -inf
      %1896 = vmax.xlane.f32.xlu0 %v1895
      %v1897 = vpop.xlane.xlu0 %1896
      %v1898 = vsel %vm368, %v1793, -inf
      %1899 = vmax.xlane.f32.xlu0 %v1898
      %v1900 = vpop.xlane.xlu0 %1899
      %v1901 = vsel %vm368, %v1796, -inf
      %1902 = vmax.xlane.f32.xlu0 %v1901
      %v1903 = vpop.xlane.xlu0 %1902
      %v1904 = vsel %vm368, %v1828, -inf
      %1905 = vmax.xlane.f32.xlu0 %v1904
      %v1906 = vpop.xlane.xlu0 %1905
      %v1907 = vsel %vm368, %v1831, -inf
      %1908 = vmax.xlane.f32.xlu0 %v1907
      %v1909 = vpop.xlane.xlu0 %1908
      %v1910 = vsel %vm368, %v1863, -inf
      %1911 = vmax.xlane.f32.xlu0 %v1910
      %v1912 = vpop.xlane.xlu0 %1911
      %v1913 = vsel %vm368, %v1866, -inf
      %1914 = vmax.xlane.f32.xlu0 %v1913
      %v1915 = vpop.xlane.xlu0 %1914
      %v1916 = vsub.f32 %v1618, %v1870
      %v1917 = vsub.f32 %v1621, %v1873
      %v1918 = vsub.f32 %v1653, %v1876
      %v1919 = vsub.f32 %v1656, %v1879
      %v1920 = vsub.f32 %v1688, %v1882
      %v1921 = vsub.f32 %v1691, %v1885
      %v1922 = vsub.f32 %v1723, %v1888
      %v1923 = vsub.f32 %v1726, %v1891
      %v1924 = vsub.f32 %v1758, %v1894
      %v1925 = vsub.f32 %v1761, %v1897
      %v1926 = vsub.f32 %v1793, %v1900
      %v1927 = vsub.f32 %v1796, %v1903
      %v1928 = vsub.f32 %v1828, %v1906
      %v1929 = vsub.f32 %v1831, %v1909
      %v1930 = vsub.f32 %v1863, %v1912
      %v1931 = vsub.f32 %v1866, %v1915
      %v1932 = vmul.f32 %v1916, 1.442695
      %v1933 = vpow.pop %v1932
      %v1934 = vmul.f32 %v1917, 1.442695
      %v1935 = vpow.pop %v1934
      %v1936 = vmul.f32 %v1918, 1.442695
      %v1937 = vpow.pop %v1936
      %v1938 = vmul.f32 %v1919, 1.442695
      %v1939 = vpow.pop %v1938
      %v1940 = vmul.f32 %v1920, 1.442695
      %v1941 = vpow.pop %v1940
      %v1942 = vmul.f32 %v1921, 1.442695
      %v1943 = vpow.pop %v1942
      %v1944 = vmul.f32 %v1922, 1.442695
      %v1945 = vpow.pop %v1944
      %v1946 = vmul.f32 %v1923, 1.442695
      %v1947 = vpow.pop %v1946
      %v1948 = vmul.f32 %v1924, 1.442695
      %v1949 = vpow.pop %v1948
      %v1950 = vmul.f32 %v1925, 1.442695
      %v1951 = vpow.pop %v1950
      %v1952 = vmul.f32 %v1926, 1.442695
      %v1953 = vpow.pop %v1952
      %v1954 = vmul.f32 %v1927, 1.442695
      %v1955 = vpow.pop %v1954
      %v1956 = vmul.f32 %v1928, 1.442695
      %v1957 = vpow.pop %v1956
      %v1958 = vmul.f32 %v1929, 1.442695
      %v1959 = vpow.pop %v1958
      %v1960 = vmul.f32 %v1930, 1.442695
      %v1961 = vpow.pop %v1960
      %v1962 = vmul.f32 %v1931, 1.442695
      %v1963 = vpow.pop %v1962
      %v1964 = vsel %vm368, %v1933, 0.0
      %1965 = vadd.xlane.f32.xlu0 %v1964
      %v1966 = vpop.xlane.xlu0 %1965
      %v1967 = vsel %vm368, %v1935, 0.0
      %1968 = vadd.xlane.f32.xlu0 %v1967
      %v1969 = vpop.xlane.xlu0 %1968
      %v1970 = vsel %vm368, %v1937, 0.0
      %1971 = vadd.xlane.f32.xlu0 %v1970
      %v1972 = vpop.xlane.xlu0 %1971
      %v1973 = vsel %vm368, %v1939, 0.0
      %1974 = vadd.xlane.f32.xlu0 %v1973
      %v1975 = vpop.xlane.xlu0 %1974
      %v1976 = vsel %vm368, %v1941, 0.0
      %1977 = vadd.xlane.f32.xlu0 %v1976
      %v1978 = vpop.xlane.xlu0 %1977
      %v1979 = vsel %vm368, %v1943, 0.0
      %1980 = vadd.xlane.f32.xlu0 %v1979
      %v1981 = vpop.xlane.xlu0 %1980
      %v1982 = vsel %vm368, %v1945, 0.0
      %1983 = vadd.xlane.f32.xlu0 %v1982
      %v1984 = vpop.xlane.xlu0 %1983
      %v1985 = vsel %vm368, %v1947, 0.0
      %1986 = vadd.xlane.f32.xlu0 %v1985
      %v1987 = vpop.xlane.xlu0 %1986
      %v1988 = vsel %vm368, %v1949, 0.0
      %1989 = vadd.xlane.f32.xlu0 %v1988
      %v1990 = vpop.xlane.xlu0 %1989
      %v1991 = vsel %vm368, %v1951, 0.0
      %1992 = vadd.xlane.f32.xlu0 %v1991
      %v1993 = vpop.xlane.xlu0 %1992
      %v1994 = vsel %vm368, %v1953, 0.0
      %1995 = vadd.xlane.f32.xlu0 %v1994
      %v1996 = vpop.xlane.xlu0 %1995
      %v1997 = vsel %vm368, %v1955, 0.0
      %1998 = vadd.xlane.f32.xlu0 %v1997
      %v1999 = vpop.xlane.xlu0 %1998
      %v2000 = vsel %vm368, %v1957, 0.0
      %2001 = vadd.xlane.f32.xlu0 %v2000
      %v2002 = vpop.xlane.xlu0 %2001
      %v2003 = vsel %vm368, %v1959, 0.0
      %2004 = vadd.xlane.f32.xlu0 %v2003
      %v2005 = vpop.xlane.xlu0 %2004
      %v2006 = vsel %vm368, %v1961, 0.0
      %2007 = vadd.xlane.f32.xlu0 %v2006
      %v2008 = vpop.xlane.xlu0 %2007
      %v2009 = vsel %vm368, %v1963, 0.0
      %2010 = vadd.xlane.f32.xlu0 %v2009
      %v2011 = vpop.xlane.xlu0 %2010
      %v2012 = vrcp.pop %v1966
      %v2013 = vrcp.pop %v1969
      %v2014 = vrcp.pop %v1972
      %v2015 = vrcp.pop %v1975
      %v2016 = vrcp.pop %v1978
      %v2017 = vrcp.pop %v1981
      %v2018 = vrcp.pop %v1984
      %v2019 = vrcp.pop %v1987
      %v2020 = vrcp.pop %v1990
      %v2021 = vrcp.pop %v1993
      %v2022 = vrcp.pop %v1996
      %v2023 = vrcp.pop %v1999
      %v2024 = vrcp.pop %v2002
      %v2025 = vrcp.pop %v2005
      %v2026 = vrcp.pop %v2008
      %v2027 = vrcp.pop %v2011
      %v2028 = vmul.f32 %v1933, %v2012
      %v2029 = vmul.f32 %v1935, %v2013
      %v2030 = vmul.f32 %v1937, %v2014
      %v2031 = vmul.f32 %v1939, %v2015
      %v2032 = vmul.f32 %v1941, %v2016
      %v2033 = vmul.f32 %v1943, %v2017
      %v2034 = vmul.f32 %v1945, %v2018
      %v2035 = vmul.f32 %v1947, %v2019
      %v2036 = vmul.f32 %v1949, %v2020
      %v2037 = vmul.f32 %v1951, %v2021
      %v2038 = vmul.f32 %v1953, %v2022
      %v2039 = vmul.f32 %v1955, %v2023
      %v2040 = vmul.f32 %v1957, %v2024
      %v2041 = vmul.f32 %v1959, %v2025
      %v2042 = vmul.f32 %v1961, %v2026
      %v2043 = vmul.f32 %v1963, %v2027
      %2044 = vrot.lane.b32.xlu0 %v1553, 64
      %v2045 = vpop.permute.xlu0 %2044
      %2046 = vrot.lane.b32.xlu0 %v1556, 64
      %v2047 = vpop.permute.xlu0 %2046
      %v2051 = vsel %vm368, %v2028, 0
      %v2054 = vsel %vm368, %v2029, 0
      %2056 = vmatpush.msra.mxu0 0.0
      %2057 = vmatpush.msra.mxu0 0.0
      %2058 = vmatpush.msra.mxu0 0.0
      %2059 = vmatpush.msra.mxu0 0.0
      %2060 = vmatpush.msra.mxu0 0.0
      %2061 = vmatpush.msra.mxu0 0.0
      %2062 = vmatpush.msra.mxu0 0.0
      %2063 = vmatpush.msra.mxu0 0.0
      %2064 = vmatpush.msra.mxu0 0.0
      %2065 = vmatpush.msra.mxu0 0.0
      %2066 = vmatpush.msra.mxu0 0.0
      %2067 = vmatpush.msra.mxu0 0.0
      %2068 = vmatpush.msra.mxu0 0.0
      %2069 = vmatpush.msra.mxu0 0.0
      %2070 = vmatpush.msra.mxu0 %v2047
      %2071 = vmatpush.msra.mxu0 %v2045
      %2072 = vmatmul.f32.gmra.mxu0 %v2051
      %v2073 = vpop.f32.mrf.mxu0
      %v2074 = vadd.f32 0.0, %v2073
      %2075 = vmatmul.f32.gmra.mxu0 %v2054
      %v2076 = vpop.f32.mrf.mxu0
      %v2077 = vadd.f32 0.0, %v2076
      %2078 = vdwg.mxu0
      %2079 = vrot.lane.b32.xlu0 %v1561, 64
      %v2080 = vpop.permute.xlu0 %2079
      %2081 = vrot.lane.b32.xlu0 %v1563, 64
      %v2082 = vpop.permute.xlu0 %2081
      %v2086 = vsel %vm368, %v2030, 0
      %v2089 = vsel %vm368, %v2031, 0
      %2091 = vmatpush.msra.mxu0 0.0
      %2092 = vmatpush.msra.mxu0 0.0
      %2093 = vmatpush.msra.mxu0 0.0
      %2094 = vmatpush.msra.mxu0 0.0
      %2095 = vmatpush.msra.mxu0 0.0
      %2096 = vmatpush.msra.mxu0 0.0
      %2097 = vmatpush.msra.mxu0 0.0
      %2098 = vmatpush.msra.mxu0 0.0
      %2099 = vmatpush.msra.mxu0 0.0
      %2100 = vmatpush.msra.mxu0 0.0
      %2101 = vmatpush.msra.mxu0 0.0
      %2102 = vmatpush.msra.mxu0 0.0
      %2103 = vmatpush.msra.mxu0 0.0
      %2104 = vmatpush.msra.mxu0 0.0
      %2105 = vmatpush.msra.mxu0 %v2082
      %2106 = vmatpush.msra.mxu0 %v2080
      %2107 = vmatmul.f32.gmra.mxu0 %v2086
      %v2108 = vpop.f32.mrf.mxu0
      %v2109 = vadd.f32 0.0, %v2108
      %2110 = vmatmul.f32.gmra.mxu0 %v2089
      %v2111 = vpop.f32.mrf.mxu0
      %v2112 = vadd.f32 0.0, %v2111
      %2113 = vdwg.mxu0
      %2114 = vrot.lane.b32.xlu0 %v1565, 64
      %v2115 = vpop.permute.xlu0 %2114
      %2116 = vrot.lane.b32.xlu0 %v1567, 64
      %v2117 = vpop.permute.xlu0 %2116
      %v2121 = vsel %vm368, %v2032, 0
      %v2124 = vsel %vm368, %v2033, 0
      %2126 = vmatpush.msra.mxu0 0.0
      %2127 = vmatpush.msra.mxu0 0.0
      %2128 = vmatpush.msra.mxu0 0.0
      %2129 = vmatpush.msra.mxu0 0.0
      %2130 = vmatpush.msra.mxu0 0.0
      %2131 = vmatpush.msra.mxu0 0.0
      %2132 = vmatpush.msra.mxu0 0.0
      %2133 = vmatpush.msra.mxu0 0.0
      %2134 = vmatpush.msra.mxu0 0.0
      %2135 = vmatpush.msra.mxu0 0.0
      %2136 = vmatpush.msra.mxu0 0.0
      %2137 = vmatpush.msra.mxu0 0.0
      %2138 = vmatpush.msra.mxu0 0.0
      %2139 = vmatpush.msra.mxu0 0.0
      %2140 = vmatpush.msra.mxu0 %v2117
      %2141 = vmatpush.msra.mxu0 %v2115
      %2142 = vmatmul.f32.gmra.mxu0 %v2121
      %v2143 = vpop.f32.mrf.mxu0
      %v2144 = vadd.f32 0.0, %v2143
      %2145 = vmatmul.f32.gmra.mxu0 %v2124
      %v2146 = vpop.f32.mrf.mxu0
      %v2147 = vadd.f32 0.0, %v2146
      %2148 = vdwg.mxu0
      %2149 = vrot.lane.b32.xlu0 %v1569, 64
      %v2150 = vpop.permute.xlu0 %2149
      %2151 = vrot.lane.b32.xlu0 %v1571, 64
      %v2152 = vpop.permute.xlu0 %2151
      %v2156 = vsel %vm368, %v2034, 0
      %v2159 = vsel %vm368, %v2035, 0
      %2161 = vmatpush.msra.mxu0 0.0
      %2162 = vmatpush.msra.mxu0 0.0
      %2163 = vmatpush.msra.mxu0 0.0
      %2164 = vmatpush.msra.mxu0 0.0
      %2165 = vmatpush.msra.mxu0 0.0
      %2166 = vmatpush.msra.mxu0 0.0
      %2167 = vmatpush.msra.mxu0 0.0
      %2168 = vmatpush.msra.mxu0 0.0
      %2169 = vmatpush.msra.mxu0 0.0
      %2170 = vmatpush.msra.mxu0 0.0
      %2171 = vmatpush.msra.mxu0 0.0
      %2172 = vmatpush.msra.mxu0 0.0
      %2173 = vmatpush.msra.mxu0 0.0
      %2174 = vmatpush.msra.mxu0 0.0
      %2175 = vmatpush.msra.mxu0 %v2152
      %2176 = vmatpush.msra.mxu0 %v2150
      %2177 = vmatmul.f32.gmra.mxu0 %v2156
      %v2178 = vpop.f32.mrf.mxu0
      %v2179 = vadd.f32 0.0, %v2178
      %2180 = vmatmul.f32.gmra.mxu0 %v2159
      %v2181 = vpop.f32.mrf.mxu0
      %v2182 = vadd.f32 0.0, %v2181
      %2183 = vdwg.mxu0
      %2184 = vrot.lane.b32.xlu0 %v1573, 64
      %v2185 = vpop.permute.xlu0 %2184
      %2186 = vrot.lane.b32.xlu0 %v1575, 64
      %v2187 = vpop.permute.xlu0 %2186
      %v2191 = vsel %vm368, %v2036, 0
      %v2194 = vsel %vm368, %v2037, 0
      %2196 = vmatpush.msra.mxu0 0.0
      %2197 = vmatpush.msra.mxu0 0.0
      %2198 = vmatpush.msra.mxu0 0.0
      %2199 = vmatpush.msra.mxu0 0.0
      %2200 = vmatpush.msra.mxu0 0.0
      %2201 = vmatpush.msra.mxu0 0.0
      %2202 = vmatpush.msra.mxu0 0.0
      %2203 = vmatpush.msra.mxu0 0.0
      %2204 = vmatpush.msra.mxu0 0.0
      %2205 = vmatpush.msra.mxu0 0.0
      %2206 = vmatpush.msra.mxu0 0.0
      %2207 = vmatpush.msra.mxu0 0.0
      %2208 = vmatpush.msra.mxu0 0.0
      %2209 = vmatpush.msra.mxu0 0.0
      %2210 = vmatpush.msra.mxu0 %v2187
      %2211 = vmatpush.msra.mxu0 %v2185
      %2212 = vmatmul.f32.gmra.mxu0 %v2191
      %v2213 = vpop.f32.mrf.mxu0
      %v2214 = vadd.f32 0.0, %v2213
      %2215 = vmatmul.f32.gmra.mxu0 %v2194
      %v2216 = vpop.f32.mrf.mxu0
      %v2217 = vadd.f32 0.0, %v2216
      %2218 = vdwg.mxu0
      %2219 = vrot.lane.b32.xlu0 %v1577, 64
      %v2220 = vpop.permute.xlu0 %2219
      %2221 = vrot.lane.b32.xlu0 %v1579, 64
      %v2222 = vpop.permute.xlu0 %2221
      %v2226 = vsel %vm368, %v2038, 0
      %v2229 = vsel %vm368, %v2039, 0
      %2231 = vmatpush.msra.mxu0 0.0
      %2232 = vmatpush.msra.mxu0 0.0
      %2233 = vmatpush.msra.mxu0 0.0
      %2234 = vmatpush.msra.mxu0 0.0
      %2235 = vmatpush.msra.mxu0 0.0
      %2236 = vmatpush.msra.mxu0 0.0
      %2237 = vmatpush.msra.mxu0 0.0
      %2238 = vmatpush.msra.mxu0 0.0
      %2239 = vmatpush.msra.mxu0 0.0
      %2240 = vmatpush.msra.mxu0 0.0
      %2241 = vmatpush.msra.mxu0 0.0
      %2242 = vmatpush.msra.mxu0 0.0
      %2243 = vmatpush.msra.mxu0 0.0
      %2244 = vmatpush.msra.mxu0 0.0
      %2245 = vmatpush.msra.mxu0 %v2222
      %2246 = vmatpush.msra.mxu0 %v2220
      %2247 = vmatmul.f32.gmra.mxu0 %v2226
      %v2248 = vpop.f32.mrf.mxu0
      %v2249 = vadd.f32 0.0, %v2248
      %2250 = vmatmul.f32.gmra.mxu0 %v2229
      %v2251 = vpop.f32.mrf.mxu0
      %v2252 = vadd.f32 0.0, %v2251
      %2253 = vdwg.mxu0
      %2254 = vrot.lane.b32.xlu0 %v1581, 64
      %v2255 = vpop.permute.xlu0 %2254
      %2256 = vrot.lane.b32.xlu0 %v1583, 64
      %v2257 = vpop.permute.xlu0 %2256
      %v2261 = vsel %vm368, %v2040, 0
      %v2264 = vsel %vm368, %v2041, 0
      %2266 = vmatpush.msra.mxu0 0.0
      %2267 = vmatpush.msra.mxu0 0.0
      %2268 = vmatpush.msra.mxu0 0.0
      %2269 = vmatpush.msra.mxu0 0.0
      %2270 = vmatpush.msra.mxu0 0.0
      %2271 = vmatpush.msra.mxu0 0.0
      %2272 = vmatpush.msra.mxu0 0.0
      %2273 = vmatpush.msra.mxu0 0.0
      %2274 = vmatpush.msra.mxu0 0.0
      %2275 = vmatpush.msra.mxu0 0.0
      %2276 = vmatpush.msra.mxu0 0.0
      %2277 = vmatpush.msra.mxu0 0.0
      %2278 = vmatpush.msra.mxu0 0.0
      %2279 = vmatpush.msra.mxu0 0.0
      %2280 = vmatpush.msra.mxu0 %v2257
      %2281 = vmatpush.msra.mxu0 %v2255
      %2282 = vmatmul.f32.gmra.mxu0 %v2261
      %v2283 = vpop.f32.mrf.mxu0
      %v2284 = vadd.f32 0.0, %v2283
      %2285 = vmatmul.f32.gmra.mxu0 %v2264
      %v2286 = vpop.f32.mrf.mxu0
      %v2287 = vadd.f32 0.0, %v2286
      %2288 = vdwg.mxu0
      %2289 = vrot.lane.b32.xlu0 %v1585, 64
      %v2290 = vpop.permute.xlu0 %2289
      %2291 = vrot.lane.b32.xlu0 %v1587, 64
      %v2292 = vpop.permute.xlu0 %2291
      %v2296 = vsel %vm368, %v2042, 0
      %v2299 = vsel %vm368, %v2043, 0
      %2301 = vmatpush.msra.mxu0 0.0
      %2302 = vmatpush.msra.mxu0 0.0
      %2303 = vmatpush.msra.mxu0 0.0
      %2304 = vmatpush.msra.mxu0 0.0
      %2305 = vmatpush.msra.mxu0 0.0
      %2306 = vmatpush.msra.mxu0 0.0
      %2307 = vmatpush.msra.mxu0 0.0
      %2308 = vmatpush.msra.mxu0 0.0
      %2309 = vmatpush.msra.mxu0 0.0
      %2310 = vmatpush.msra.mxu0 0.0
      %2311 = vmatpush.msra.mxu0 0.0
      %2312 = vmatpush.msra.mxu0 0.0
      %2313 = vmatpush.msra.mxu0 0.0
      %2314 = vmatpush.msra.mxu0 0.0
      %2315 = vmatpush.msra.mxu0 %v2292
      %2316 = vmatpush.msra.mxu0 %v2290
      %2317 = vmatmul.f32.gmra.mxu0 %v2296
      %v2318 = vpop.f32.mrf.mxu0
      %v2319 = vadd.f32 0.0, %v2318
      %2320 = vmatmul.f32.gmra.mxu0 %v2299
      %v2321 = vpop.f32.mrf.mxu0
      %v2322 = vadd.f32 0.0, %v2321
      %2323 = vdwg.mxu0
      %2324 = vst.msk [vmem:[#allocation2] sm:$0xff] %vm471, %v2074
      %2325 = vst.msk [vmem:[#allocation2 + $0x8] sm:$0xff] %vm471, %v2077
      %2328 = vrot.lane.b32.xlu0 %v2109, 4
      %v2329 = vpop.permute.xlu0 %2328
      %2330 = vrot.lane.b32.xlu0 %v2112, 4
      %v2331 = vpop.permute.xlu0 %2330
      %2334 = vst.msk [vmem:[#allocation2] sm:$0xff] %vm1214, %v2329
      %2335 = vst.msk [vmem:[#allocation2 + $0x8] sm:$0xff] %vm1214, %v2331
      %2338 = vrot.lane.b32.xlu0 %v2144, 8
      %v2339 = vpop.permute.xlu0 %2338
      %2340 = vrot.lane.b32.xlu0 %v2147, 8
      %v2341 = vpop.permute.xlu0 %2340
      %2344 = vst.msk [vmem:[#allocation2] sm:$0xff] %vm1225, %v2339
      %2345 = vst.msk [vmem:[#allocation2 + $0x8] sm:$0xff] %vm1225, %v2341
      %2348 = vrot.lane.b32.xlu0 %v2179, 12
      %v2349 = vpop.permute.xlu0 %2348
      %2350 = vrot.lane.b32.xlu0 %v2182, 12
      %v2351 = vpop.permute.xlu0 %2350
      %2354 = vst.msk [vmem:[#allocation2] sm:$0xff] %vm1236, %v2349
      %2355 = vst.msk [vmem:[#allocation2 + $0x8] sm:$0xff] %vm1236, %v2351
      %2358 = vrot.lane.b32.xlu0 %v2214, 16
      %v2359 = vpop.permute.xlu0 %2358
      %2360 = vrot.lane.b32.xlu0 %v2217, 16
      %v2361 = vpop.permute.xlu0 %2360
      %2364 = vst.msk [vmem:[#allocation2] sm:$0xff] %vm1247, %v2359
      %2365 = vst.msk [vmem:[#allocation2 + $0x8] sm:$0xff] %vm1247, %v2361
      %2368 = vrot.lane.b32.xlu0 %v2249, 20
      %v2369 = vpop.permute.xlu0 %2368
      %2370 = vrot.lane.b32.xlu0 %v2252, 20
      %v2371 = vpop.permute.xlu0 %2370
      %2374 = vst.msk [vmem:[#allocation2] sm:$0xff] %vm1258, %v2369
      %2375 = vst.msk [vmem:[#allocation2 + $0x8] sm:$0xff] %vm1258, %v2371
      %2378 = vrot.lane.b32.xlu0 %v2284, 24
      %v2379 = vpop.permute.xlu0 %2378
      %2380 = vrot.lane.b32.xlu0 %v2287, 24
      %v2381 = vpop.permute.xlu0 %2380
      %2384 = vst.msk [vmem:[#allocation2] sm:$0xff] %vm1269, %v2379
      %2385 = vst.msk [vmem:[#allocation2 + $0x8] sm:$0xff] %vm1269, %v2381
      %2388 = vrot.lane.b32.xlu0 %v2319, 28
      %v2389 = vpop.permute.xlu0 %2388
      %2390 = vrot.lane.b32.xlu0 %v2322, 28
      %v2391 = vpop.permute.xlu0 %2390
      %2394 = vst.msk [vmem:[#allocation2] sm:$0xff] %vm1280, %v2389
      %2395 = vst.msk [vmem:[#allocation2 + $0x8] sm:$0xff] %vm1280, %v2391
      %v2396 = vld [vmem:[#allocation2] sm:$0xff]
      %v2397 = vld [vmem:[#allocation2 + $0x8] sm:$0xff]
      %s2398 = scalar_lea.vmem %s5, 32
      %v2399 = vld [vmem:[%s2398] sm:$0xff]
      %v2400 = vld [vmem:[%s2398 + $0x8] sm:$0xff]
      %v2401 = vld [vmem:[%s2398 + $0x10] sm:$0xff]
      %v2402 = vld [vmem:[%s2398 + $0x18] sm:$0xff]
      %v2403 = vperm.slane %v1518, 0
      %v2405 = vsel %vm407, %v2396, 0
      %v2408 = vsel %vm407, %v2397, 0
      %2410 = vmatpush.msra.mxu0 0.0
      %2411 = vmatpush.msra.mxu0 0.0
      %2412 = vmatpush.msra.mxu0 0.0
      %2413 = vmatpush.msra.mxu0 0.0
      %2414 = vmatpush.msra.mxu0 0.0
      %2415 = vmatpush.msra.mxu0 0.0
      %2416 = vmatpush.msra.mxu0 0.0
      %2417 = vmatpush.msra.mxu0 0.0
      %2418 = vmatpush.msra.mxu0 0.0
      %2419 = vmatpush.msra.mxu0 0.0
      %2420 = vmatpush.msra.mxu0 0.0
      %2421 = vmatpush.msra.mxu0 0.0
      %2422 = vmatpush.msra.mxu0 %v2402
      %2423 = vmatpush.msra.mxu0 %v2401
      %2424 = vmatpush.msra.mxu0 %v2400
      %2425 = vmatpush.msra.mxu0 %v2399
      %2426 = vmatmul.f32.gmra.mxu0 %v2405
      %v2427 = vpop.f32.mrf.mxu0
      %v2428 = vadd.f32 %v2403, %v2427
      %2429 = vmatmul.f32.gmra.mxu0 %v2408
      %v2430 = vpop.f32.mrf.mxu0
      %v2431 = vadd.f32 %v2403, %v2430
      %2432 = vdwg.mxu0
      %v2433 = vadd.f32 %v1515, %v2428
      %v2434 = vadd.f32 %v1516, %v2431
      %v2435 = vsel %vm407, %v2433, 0.0
      %2436 = vadd.xlane.f32.xlu0 %v2435
      %v2437 = vpop.xlane.xlu0 %2436
      %v2438 = vsel %vm407, %v2434, 0.0
      %2439 = vadd.xlane.f32.xlu0 %v2438
      %v2440 = vpop.xlane.xlu0 %2439
      %v2441 = vmul.f32 %v2437, %v1333
      %v2442 = vmul.f32 %v2440, %v1333
      %v2443 = vmul.f32 %v2433, %v2433
      %v2444 = vmul.f32 %v2434, %v2434
      %v2445 = vsel %vm407, %v2443, 0.0
      %2446 = vadd.xlane.f32.xlu0 %v2445
      %v2447 = vpop.xlane.xlu0 %2446
      %v2448 = vsel %vm407, %v2444, 0.0
      %2449 = vadd.xlane.f32.xlu0 %v2448
      %v2450 = vpop.xlane.xlu0 %2449
      %v2451 = vmul.f32 %v2447, %v1333
      %v2452 = vmul.f32 %v2450, %v1333
      %v2453 = vmul.f32 %v2441, %v2441
      %v2454 = vmul.f32 %v2442, %v2442
      %v2455 = vsub.f32 %v2451, %v2453
      %v2456 = vsub.f32 %v2452, %v2454
      %v2457 = vsub.f32 %v2433, %v2441
      %v2458 = vsub.f32 %v2434, %v2442
      %v2459 = vadd.f32 %v2455, 1e-05
      %v2460 = vadd.f32 %v2456, 1e-05
      %v2461 = vrsqrt.pop %v2459
      %v2462 = vmul.f32 %v2461, %v2459
      %v2463 = vmul.f32 %v2462, %v2461
      %v2464 = vmul.f32 0.5, %v2463
      %v2465 = vsub.f32 1.5, %v2464
      %v2466 = vmul.f32 %v2461, %v2465
      %vm2467 = vweird.f32 %v2459
      %vm2468 = vweird.f32 %v2461
      %vm2469 = vmor %vm2467, %vm2468
      %v2470 = vsel %vm2469, %v2461, %v2466
      %v2471 = vrsqrt.pop %v2460
      %v2472 = vmul.f32 %v2471, %v2460
      %v2473 = vmul.f32 %v2472, %v2471
      %v2474 = vmul.f32 0.5, %v2473
      %v2475 = vsub.f32 1.5, %v2474
      %v2476 = vmul.f32 %v2471, %v2475
      %vm2477 = vweird.f32 %v2460
      %vm2478 = vweird.f32 %v2471
      %vm2479 = vmor %vm2477, %vm2478
      %v2480 = vsel %vm2479, %v2471, %v2476
      %v2481 = vmul.f32 %v2457, %v2470
      %v2482 = vmul.f32 %v2458, %v2480
      %v2483 = vperm.slane %v1518, 2
      %v2484 = vmul.f32 %v2481, %v2483
      %v2485 = vmul.f32 %v2482, %v2483
      %v2486 = vperm.slane %v1518, 3
      %v2487 = vadd.f32 %v2484, %v2486
      %v2488 = vadd.f32 %v2485, %v2486
      %s2489 = scalar_lea.vmem %s6, 32
      %v2490 = vld [vmem:[%s2489] sm:$0xff]
      %v2491 = vld [vmem:[%s2489 + $0x8] sm:$0xff]
      %v2492 = vld [vmem:[%s2489 + $0x10] sm:$0xff]
      %v2493 = vld [vmem:[%s2489 + $0x18] sm:$0xff]
      %s2494 = scalar_lea.vmem %s7, 1
      %v2495 = vld [vmem:[%s2494] sm:$0x1]
      %v2497 = vperm.slane %v2495, 0
      %v2500 = vsel %vm407, %v2487, 0
      %v2503 = vsel %vm407, %v2488, 0
      %2505 = vmatpush.msra.mxu0 0.0
      %2506 = vmatpush.msra.mxu0 0.0
      %2507 = vmatpush.msra.mxu0 0.0
      %2508 = vmatpush.msra.mxu0 0.0
      %2509 = vmatpush.msra.mxu0 0.0
      %2510 = vmatpush.msra.mxu0 0.0
      %2511 = vmatpush.msra.mxu0 0.0
      %2512 = vmatpush.msra.mxu0 0.0
      %2513 = vmatpush.msra.mxu0 0.0
      %2514 = vmatpush.msra.mxu0 0.0
      %2515 = vmatpush.msra.mxu0 0.0
      %2516 = vmatpush.msra.mxu0 0.0
      %2517 = vmatpush.msra.mxu0 %v2493
      %2518 = vmatpush.msra.mxu0 %v2492
      %2519 = vmatpush.msra.mxu0 %v2491
      %2520 = vmatpush.msra.mxu0 %v2490
      %2521 = vmatmul.f32.gmra.mxu0 %v2500
      %v2522 = vpop.f32.mrf.mxu0
      %v2523 = vadd.f32 %v2497, %v2522
      %2524 = vmatmul.f32.gmra.mxu0 %v2503
      %v2525 = vpop.f32.mrf.mxu0
      %v2526 = vadd.f32 %v2497, %v2525
      %2527 = vdwg.mxu0
      %v2528 = vmax.f32 %v2523, 0.0
      %v2529 = vmax.f32 %v2526, 0.0
      %s2530 = scalar_lea.vmem %s8, 128
      %v2531 = vld [vmem:[%s2530] sm:$0xff]
      %v2532 = vld [vmem:[%s2530 + $0x8] sm:$0xff]
      %v2533 = vld [vmem:[%s2530 + $0x10] sm:$0xff]
      %v2534 = vld [vmem:[%s2530 + $0x18] sm:$0xff]
      %v2535 = vld [vmem:[%s2530 + $0x20] sm:$0xff]
      %v2536 = vld [vmem:[%s2530 + $0x28] sm:$0xff]
      %v2537 = vld [vmem:[%s2530 + $0x30] sm:$0xff]
      %v2538 = vld [vmem:[%s2530 + $0x38] sm:$0xff]
      %v2539 = vld [vmem:[%s2530 + $0x40] sm:$0xff]
      %v2540 = vld [vmem:[%s2530 + $0x48] sm:$0xff]
      %v2541 = vld [vmem:[%s2530 + $0x50] sm:$0xff]
      %v2542 = vld [vmem:[%s2530 + $0x58] sm:$0xff]
      %v2543 = vld [vmem:[%s2530 + $0x60] sm:$0xff]
      %v2544 = vld [vmem:[%s2530 + $0x68] sm:$0xff]
      %v2545 = vld [vmem:[%s2530 + $0x70] sm:$0xff]
      %v2546 = vld [vmem:[%s2530 + $0x78] sm:$0xff]
      %v2547 = vperm.slane %v1518, 1
      %2548 = vmatpush.msra.mxu0 %v2546
      %2549 = vmatpush.msra.mxu0 %v2545
      %2550 = vmatpush.msra.mxu0 %v2544
      %2551 = vmatpush.msra.mxu0 %v2543
      %2552 = vmatpush.msra.mxu0 %v2542
      %2553 = vmatpush.msra.mxu0 %v2541
      %2554 = vmatpush.msra.mxu0 %v2540
      %2555 = vmatpush.msra.mxu0 %v2539
      %2556 = vmatpush.msra.mxu0 %v2538
      %2557 = vmatpush.msra.mxu0 %v2537
      %2558 = vmatpush.msra.mxu0 %v2536
      %2559 = vmatpush.msra.mxu0 %v2535
      %2560 = vmatpush.msra.mxu0 %v2534
      %2561 = vmatpush.msra.mxu0 %v2533
      %2562 = vmatpush.msra.mxu0 %v2532
      %2563 = vmatpush.msra.mxu0 %v2531
      %2564 = vmatmul.f32.gmra.mxu0 %v2528
      %v2565 = vpop.f32.mrf.mxu0
      %v2566 = vadd.f32 %v2547, %v2565
      %2567 = vmatmul.f32.gmra.mxu0 %v2529
      %v2568 = vpop.f32.mrf.mxu0
      %v2569 = vadd.f32 %v2547, %v2568
      %2570 = vdwg.mxu0
      %v2571 = vadd.f32 %v2487, %v2566
      %v2572 = vadd.f32 %v2488, %v2569
      %v2573 = vsel %vm407, %v2571, 0.0
      %2574 = vadd.xlane.f32.xlu0 %v2573
      %v2575 = vpop.xlane.xlu0 %2574
      %v2576 = vsel %vm407, %v2572, 0.0
      %2577 = vadd.xlane.f32.xlu0 %v2576
      %v2578 = vpop.xlane.xlu0 %2577
      %v2579 = vmul.f32 %v2575, %v1333
      %v2580 = vmul.f32 %v2578, %v1333
      %v2581 = vmul.f32 %v2571, %v2571
      %v2582 = vmul.f32 %v2572, %v2572
      %v2583 = vsel %vm407, %v2581, 0.0
      %2584 = vadd.xlane.f32.xlu0 %v2583
      %v2585 = vpop.xlane.xlu0 %2584
      %v2586 = vsel %vm407, %v2582, 0.0
      %2587 = vadd.xlane.f32.xlu0 %v2586
      %v2588 = vpop.xlane.xlu0 %2587
      %v2589 = vmul.f32 %v2585, %v1333
      %v2590 = vmul.f32 %v2588, %v1333
      %v2591 = vmul.f32 %v2579, %v2579
      %v2592 = vmul.f32 %v2580, %v2580
      %v2593 = vsub.f32 %v2589, %v2591
      %v2594 = vsub.f32 %v2590, %v2592
      %v2595 = vsub.f32 %v2571, %v2579
      %v2596 = vsub.f32 %v2572, %v2580
      %v2597 = vadd.f32 %v2593, 1e-05
      %v2598 = vadd.f32 %v2594, 1e-05
      %v2599 = vrsqrt.pop %v2597
      %v2600 = vmul.f32 %v2599, %v2597
      %v2601 = vmul.f32 %v2600, %v2599
      %v2602 = vmul.f32 0.5, %v2601
      %v2603 = vsub.f32 1.5, %v2602
      %v2604 = vmul.f32 %v2599, %v2603
      %vm2605 = vweird.f32 %v2597
      %vm2606 = vweird.f32 %v2599
      %vm2607 = vmor %vm2605, %vm2606
      %v2608 = vsel %vm2607, %v2599, %v2604
      %v2609 = vrsqrt.pop %v2598
      %v2610 = vmul.f32 %v2609, %v2598
      %v2611 = vmul.f32 %v2610, %v2609
      %v2612 = vmul.f32 0.5, %v2611
      %v2613 = vsub.f32 1.5, %v2612
      %v2614 = vmul.f32 %v2609, %v2613
      %vm2615 = vweird.f32 %v2598
      %vm2616 = vweird.f32 %v2609
      %vm2617 = vmor %vm2615, %vm2616
      %v2618 = vsel %vm2617, %v2609, %v2614
      %v2619 = vmul.f32 %v2595, %v2608
      %v2620 = vmul.f32 %v2596, %v2618
      %v2621 = vperm.slane %v1518, 4
      %v2622 = vmul.f32 %v2619, %v2621
      %v2623 = vmul.f32 %v2620, %v2621
      %v2624 = vperm.slane %v1518, 5
      %v2625 = vadd.f32 %v2622, %v2624
      %v2626 = vadd.f32 %v2623, %v2624
      %s2627 = scalar_lea.vmem %s9, 16
      %v2628 = vld [vmem:[%s2627] sm:$0x3f]
      %s2629 = scalar_lea.vmem %s3, 64
      %v2630 = vld [vmem:[%s2629] sm:$0xff]
      %v2631 = vld [vmem:[%s2629 + $0x8] sm:$0xff]
      %v2632 = vld [vmem:[%s2629 + $0x10] sm:$0xff]
      %v2633 = vld [vmem:[%s2629 + $0x18] sm:$0xff]
      %s2634 = scalar_lea.vmem %s4, 2
      %v2635 = vld [vmem:[%s2634] sm:$0x1]
      %v2637 = vperm.slane %v2635, 0
      %v2640 = vsel %vm407, %v2625, 0
      %v2643 = vsel %vm407, %v2626, 0
      %2645 = vmatpush.msra.mxu0 0.0
      %2646 = vmatpush.msra.mxu0 0.0
      %2647 = vmatpush.msra.mxu0 0.0
      %2648 = vmatpush.msra.mxu0 0.0
      %2649 = vmatpush.msra.mxu0 0.0
      %2650 = vmatpush.msra.mxu0 0.0
      %2651 = vmatpush.msra.mxu0 0.0
      %2652 = vmatpush.msra.mxu0 0.0
      %2653 = vmatpush.msra.mxu0 0.0
      %2654 = vmatpush.msra.mxu0 0.0
      %2655 = vmatpush.msra.mxu0 0.0
      %2656 = vmatpush.msra.mxu0 0.0
      %2657 = vmatpush.msra.mxu0 %v2633
      %2658 = vmatpush.msra.mxu0 %v2632
      %2659 = vmatpush.msra.mxu0 %v2631
      %2660 = vmatpush.msra.mxu0 %v2630
      %2661 = vmatmul.f32.gmra.mxu0 %v2640
      %v2662 = vpop.f32.mrf.mxu0
      %v2663 = vadd.f32 %v2637, %v2662
      %2664 = vmatmul.f32.gmra.mxu0 %v2643
      %v2665 = vpop.f32.mrf.mxu0
      %v2666 = vadd.f32 %v2637, %v2665
      %2667 = vdwg.mxu0
      %2670 = vrot.lane.b32.xlu0 %v2663, 124
      %v2671 = vpop.permute.xlu0 %2670
      %2672 = vrot.lane.b32.xlu0 %v2666, 124
      %v2673 = vpop.permute.xlu0 %2672
      %2674 = vrot.lane.b32.xlu0 %v2663, 120
      %v2675 = vpop.permute.xlu0 %2674
      %2676 = vrot.lane.b32.xlu0 %v2666, 120
      %v2677 = vpop.permute.xlu0 %2676
      %2678 = vrot.lane.b32.xlu0 %v2663, 116
      %v2679 = vpop.permute.xlu0 %2678
      %2680 = vrot.lane.b32.xlu0 %v2666, 116
      %v2681 = vpop.permute.xlu0 %2680
      %2682 = vrot.lane.b32.xlu0 %v2663, 112
      %v2683 = vpop.permute.xlu0 %2682
      %2684 = vrot.lane.b32.xlu0 %v2666, 112
      %v2685 = vpop.permute.xlu0 %2684
      %2686 = vrot.lane.b32.xlu0 %v2663, 108
      %v2687 = vpop.permute.xlu0 %2686
      %2688 = vrot.lane.b32.xlu0 %v2666, 108
      %v2689 = vpop.permute.xlu0 %2688
      %2690 = vrot.lane.b32.xlu0 %v2663, 104
      %v2691 = vpop.permute.xlu0 %2690
      %2692 = vrot.lane.b32.xlu0 %v2666, 104
      %v2693 = vpop.permute.xlu0 %2692
      %2694 = vrot.lane.b32.xlu0 %v2663, 100
      %v2695 = vpop.permute.xlu0 %2694
      %2696 = vrot.lane.b32.xlu0 %v2666, 100
      %v2697 = vpop.permute.xlu0 %2696
      %2698 = vrot.lane.b32.xlu0 %v2663, 96
      %v2699 = vpop.permute.xlu0 %2698
      %2700 = vrot.lane.b32.xlu0 %v2666, 96
      %v2701 = vpop.permute.xlu0 %2700
      %v2702 = vsel %vm471, %v2663, 0
      %v2704 = vsel %vm471, %v2666, 0
      %v2706 = vsel %vm471, %v2699, 0
      %v2708 = vsel %vm471, %v2701, 0
      %2710 = vmatpush.xpose.msra.mxu0 0.0
      %2711 = vmatpush.xpose.msra.mxu0 0.0
      %2712 = vmatpush.xpose.msra.mxu0 0.0
      %2713 = vmatpush.xpose.msra.mxu0 0.0
      %2714 = vmatpush.xpose.msra.mxu0 0.0
      %2715 = vmatpush.xpose.msra.mxu0 0.0
      %2716 = vmatpush.xpose.msra.mxu0 0.0
      %2717 = vmatpush.xpose.msra.mxu0 0.0
      %2718 = vmatpush.xpose.msra.mxu0 0.0
      %2719 = vmatpush.xpose.msra.mxu0 0.0
      %2720 = vmatpush.xpose.msra.mxu0 0.0
      %2721 = vmatpush.xpose.msra.mxu0 0.0
      %2722 = vmatpush.xpose.msra.mxu0 0.0
      %2723 = vmatpush.xpose.msra.mxu0 0.0
      %2724 = vmatpush.xpose.msra.mxu0 %v2708
      %2725 = vmatpush.xpose.msra.mxu0 %v2706
      %2726 = vmatmul.f32.gmra.mxu0 %v2702
      %v2727 = vpop.f32.mrf.mxu0
      %v2728 = vadd.f32 0.0, %v2727
      %2729 = vmatmul.f32.gmra.mxu0 %v2704
      %v2730 = vpop.f32.mrf.mxu0
      %v2731 = vadd.f32 0.0, %v2730
      %2732 = vdwg.mxu0
      %2733 = vrot.lane.b32.xlu0 %v2671, 96
      %v2734 = vpop.permute.xlu0 %2733
      %2735 = vrot.lane.b32.xlu0 %v2673, 96
      %v2736 = vpop.permute.xlu0 %2735
      %v2737 = vsel %vm471, %v2671, 0
      %v2739 = vsel %vm471, %v2673, 0
      %v2741 = vsel %vm471, %v2734, 0
      %v2743 = vsel %vm471, %v2736, 0
      %2745 = vmatpush.xpose.msra.mxu0 0.0
      %2746 = vmatpush.xpose.msra.mxu0 0.0
      %2747 = vmatpush.xpose.msra.mxu0 0.0
      %2748 = vmatpush.xpose.msra.mxu0 0.0
      %2749 = vmatpush.xpose.msra.mxu0 0.0
      %2750 = vmatpush.xpose.msra.mxu0 0.0
      %2751 = vmatpush.xpose.msra.mxu0 0.0
      %2752 = vmatpush.xpose.msra.mxu0 0.0
      %2753 = vmatpush.xpose.msra.mxu0 0.0
      %2754 = vmatpush.xpose.msra.mxu0 0.0
      %2755 = vmatpush.xpose.msra.mxu0 0.0
      %2756 = vmatpush.xpose.msra.mxu0 0.0
      %2757 = vmatpush.xpose.msra.mxu0 0.0
      %2758 = vmatpush.xpose.msra.mxu0 0.0
      %2759 = vmatpush.xpose.msra.mxu0 %v2743
      %2760 = vmatpush.xpose.msra.mxu0 %v2741
      %2761 = vmatmul.f32.gmra.mxu0 %v2737
      %v2762 = vpop.f32.mrf.mxu0
      %v2763 = vadd.f32 0.0, %v2762
      %2764 = vmatmul.f32.gmra.mxu0 %v2739
      %v2765 = vpop.f32.mrf.mxu0
      %v2766 = vadd.f32 0.0, %v2765
      %2767 = vdwg.mxu0
      %2768 = vrot.lane.b32.xlu0 %v2675, 96
      %v2769 = vpop.permute.xlu0 %2768
      %2770 = vrot.lane.b32.xlu0 %v2677, 96
      %v2771 = vpop.permute.xlu0 %2770
      %v2772 = vsel %vm471, %v2675, 0
      %v2774 = vsel %vm471, %v2677, 0
      %v2776 = vsel %vm471, %v2769, 0
      %v2778 = vsel %vm471, %v2771, 0
      %2780 = vmatpush.xpose.msra.mxu0 0.0
      %2781 = vmatpush.xpose.msra.mxu0 0.0
      %2782 = vmatpush.xpose.msra.mxu0 0.0
      %2783 = vmatpush.xpose.msra.mxu0 0.0
      %2784 = vmatpush.xpose.msra.mxu0 0.0
      %2785 = vmatpush.xpose.msra.mxu0 0.0
      %2786 = vmatpush.xpose.msra.mxu0 0.0
      %2787 = vmatpush.xpose.msra.mxu0 0.0
      %2788 = vmatpush.xpose.msra.mxu0 0.0
      %2789 = vmatpush.xpose.msra.mxu0 0.0
      %2790 = vmatpush.xpose.msra.mxu0 0.0
      %2791 = vmatpush.xpose.msra.mxu0 0.0
      %2792 = vmatpush.xpose.msra.mxu0 0.0
      %2793 = vmatpush.xpose.msra.mxu0 0.0
      %2794 = vmatpush.xpose.msra.mxu0 %v2778
      %2795 = vmatpush.xpose.msra.mxu0 %v2776
      %2796 = vmatmul.f32.gmra.mxu0 %v2772
      %v2797 = vpop.f32.mrf.mxu0
      %v2798 = vadd.f32 0.0, %v2797
      %2799 = vmatmul.f32.gmra.mxu0 %v2774
      %v2800 = vpop.f32.mrf.mxu0
      %v2801 = vadd.f32 0.0, %v2800
      %2802 = vdwg.mxu0
      %2803 = vrot.lane.b32.xlu0 %v2679, 96
      %v2804 = vpop.permute.xlu0 %2803
      %2805 = vrot.lane.b32.xlu0 %v2681, 96
      %v2806 = vpop.permute.xlu0 %2805
      %v2807 = vsel %vm471, %v2679, 0
      %v2809 = vsel %vm471, %v2681, 0
      %v2811 = vsel %vm471, %v2804, 0
      %v2813 = vsel %vm471, %v2806, 0
      %2815 = vmatpush.xpose.msra.mxu0 0.0
      %2816 = vmatpush.xpose.msra.mxu0 0.0
      %2817 = vmatpush.xpose.msra.mxu0 0.0
      %2818 = vmatpush.xpose.msra.mxu0 0.0
      %2819 = vmatpush.xpose.msra.mxu0 0.0
      %2820 = vmatpush.xpose.msra.mxu0 0.0
      %2821 = vmatpush.xpose.msra.mxu0 0.0
      %2822 = vmatpush.xpose.msra.mxu0 0.0
      %2823 = vmatpush.xpose.msra.mxu0 0.0
      %2824 = vmatpush.xpose.msra.mxu0 0.0
      %2825 = vmatpush.xpose.msra.mxu0 0.0
      %2826 = vmatpush.xpose.msra.mxu0 0.0
      %2827 = vmatpush.xpose.msra.mxu0 0.0
      %2828 = vmatpush.xpose.msra.mxu0 0.0
      %2829 = vmatpush.xpose.msra.mxu0 %v2813
      %2830 = vmatpush.xpose.msra.mxu0 %v2811
      %2831 = vmatmul.f32.gmra.mxu0 %v2807
      %v2832 = vpop.f32.mrf.mxu0
      %v2833 = vadd.f32 0.0, %v2832
      %2834 = vmatmul.f32.gmra.mxu0 %v2809
      %v2835 = vpop.f32.mrf.mxu0
      %v2836 = vadd.f32 0.0, %v2835
      %2837 = vdwg.mxu0
      %2838 = vrot.lane.b32.xlu0 %v2683, 96
      %v2839 = vpop.permute.xlu0 %2838
      %2840 = vrot.lane.b32.xlu0 %v2685, 96
      %v2841 = vpop.permute.xlu0 %2840
      %v2842 = vsel %vm471, %v2683, 0
      %v2844 = vsel %vm471, %v2685, 0
      %v2846 = vsel %vm471, %v2839, 0
      %v2848 = vsel %vm471, %v2841, 0
      %2850 = vmatpush.xpose.msra.mxu0 0.0
      %2851 = vmatpush.xpose.msra.mxu0 0.0
      %2852 = vmatpush.xpose.msra.mxu0 0.0
      %2853 = vmatpush.xpose.msra.mxu0 0.0
      %2854 = vmatpush.xpose.msra.mxu0 0.0
      %2855 = vmatpush.xpose.msra.mxu0 0.0
      %2856 = vmatpush.xpose.msra.mxu0 0.0
      %2857 = vmatpush.xpose.msra.mxu0 0.0
      %2858 = vmatpush.xpose.msra.mxu0 0.0
      %2859 = vmatpush.xpose.msra.mxu0 0.0
      %2860 = vmatpush.xpose.msra.mxu0 0.0
      %2861 = vmatpush.xpose.msra.mxu0 0.0
      %2862 = vmatpush.xpose.msra.mxu0 0.0
      %2863 = vmatpush.xpose.msra.mxu0 0.0
      %2864 = vmatpush.xpose.msra.mxu0 %v2848
      %2865 = vmatpush.xpose.msra.mxu0 %v2846
      %2866 = vmatmul.f32.gmra.mxu0 %v2842
      %v2867 = vpop.f32.mrf.mxu0
      %v2868 = vadd.f32 0.0, %v2867
      %2869 = vmatmul.f32.gmra.mxu0 %v2844
      %v2870 = vpop.f32.mrf.mxu0
      %v2871 = vadd.f32 0.0, %v2870
      %2872 = vdwg.mxu0
      %2873 = vrot.lane.b32.xlu0 %v2687, 96
      %v2874 = vpop.permute.xlu0 %2873
      %2875 = vrot.lane.b32.xlu0 %v2689, 96
      %v2876 = vpop.permute.xlu0 %2875
      %v2877 = vsel %vm471, %v2687, 0
      %v2879 = vsel %vm471, %v2689, 0
      %v2881 = vsel %vm471, %v2874, 0
      %v2883 = vsel %vm471, %v2876, 0
      %2885 = vmatpush.xpose.msra.mxu0 0.0
      %2886 = vmatpush.xpose.msra.mxu0 0.0
      %2887 = vmatpush.xpose.msra.mxu0 0.0
      %2888 = vmatpush.xpose.msra.mxu0 0.0
      %2889 = vmatpush.xpose.msra.mxu0 0.0
      %2890 = vmatpush.xpose.msra.mxu0 0.0
      %2891 = vmatpush.xpose.msra.mxu0 0.0
      %2892 = vmatpush.xpose.msra.mxu0 0.0
      %2893 = vmatpush.xpose.msra.mxu0 0.0
      %2894 = vmatpush.xpose.msra.mxu0 0.0
      %2895 = vmatpush.xpose.msra.mxu0 0.0
      %2896 = vmatpush.xpose.msra.mxu0 0.0
      %2897 = vmatpush.xpose.msra.mxu0 0.0
      %2898 = vmatpush.xpose.msra.mxu0 0.0
      %2899 = vmatpush.xpose.msra.mxu0 %v2883
      %2900 = vmatpush.xpose.msra.mxu0 %v2881
      %2901 = vmatmul.f32.gmra.mxu0 %v2877
      %v2902 = vpop.f32.mrf.mxu0
      %v2903 = vadd.f32 0.0, %v2902
      %2904 = vmatmul.f32.gmra.mxu0 %v2879
      %v2905 = vpop.f32.mrf.mxu0
      %v2906 = vadd.f32 0.0, %v2905
      %2907 = vdwg.mxu0
      %2908 = vrot.lane.b32.xlu0 %v2691, 96
      %v2909 = vpop.permute.xlu0 %2908
      %2910 = vrot.lane.b32.xlu0 %v2693, 96
      %v2911 = vpop.permute.xlu0 %2910
      %v2912 = vsel %vm471, %v2691, 0
      %v2914 = vsel %vm471, %v2693, 0
      %v2916 = vsel %vm471, %v2909, 0
      %v2918 = vsel %vm471, %v2911, 0
      %2920 = vmatpush.xpose.msra.mxu0 0.0
      %2921 = vmatpush.xpose.msra.mxu0 0.0
      %2922 = vmatpush.xpose.msra.mxu0 0.0
      %2923 = vmatpush.xpose.msra.mxu0 0.0
      %2924 = vmatpush.xpose.msra.mxu0 0.0
      %2925 = vmatpush.xpose.msra.mxu0 0.0
      %2926 = vmatpush.xpose.msra.mxu0 0.0
      %2927 = vmatpush.xpose.msra.mxu0 0.0
      %2928 = vmatpush.xpose.msra.mxu0 0.0
      %2929 = vmatpush.xpose.msra.mxu0 0.0
      %2930 = vmatpush.xpose.msra.mxu0 0.0
      %2931 = vmatpush.xpose.msra.mxu0 0.0
      %2932 = vmatpush.xpose.msra.mxu0 0.0
      %2933 = vmatpush.xpose.msra.mxu0 0.0
      %2934 = vmatpush.xpose.msra.mxu0 %v2918
      %2935 = vmatpush.xpose.msra.mxu0 %v2916
      %2936 = vmatmul.f32.gmra.mxu0 %v2912
      %v2937 = vpop.f32.mrf.mxu0
      %v2938 = vadd.f32 0.0, %v2937
      %2939 = vmatmul.f32.gmra.mxu0 %v2914
      %v2940 = vpop.f32.mrf.mxu0
      %v2941 = vadd.f32 0.0, %v2940
      %2942 = vdwg.mxu0
      %2943 = vrot.lane.b32.xlu0 %v2695, 96
      %v2944 = vpop.permute.xlu0 %2943
      %2945 = vrot.lane.b32.xlu0 %v2697, 96
      %v2946 = vpop.permute.xlu0 %2945
      %v2947 = vsel %vm471, %v2695, 0
      %v2949 = vsel %vm471, %v2697, 0
      %v2951 = vsel %vm471, %v2944, 0
      %v2953 = vsel %vm471, %v2946, 0
      %2955 = vmatpush.xpose.msra.mxu0 0.0
      %2956 = vmatpush.xpose.msra.mxu0 0.0
      %2957 = vmatpush.xpose.msra.mxu0 0.0
      %2958 = vmatpush.xpose.msra.mxu0 0.0
      %2959 = vmatpush.xpose.msra.mxu0 0.0
      %2960 = vmatpush.xpose.msra.mxu0 0.0
      %2961 = vmatpush.xpose.msra.mxu0 0.0
      %2962 = vmatpush.xpose.msra.mxu0 0.0
      %2963 = vmatpush.xpose.msra.mxu0 0.0
      %2964 = vmatpush.xpose.msra.mxu0 0.0
      %2965 = vmatpush.xpose.msra.mxu0 0.0
      %2966 = vmatpush.xpose.msra.mxu0 0.0
      %2967 = vmatpush.xpose.msra.mxu0 0.0
      %2968 = vmatpush.xpose.msra.mxu0 0.0
      %2969 = vmatpush.xpose.msra.mxu0 %v2953
      %2970 = vmatpush.xpose.msra.mxu0 %v2951
      %2971 = vmatmul.f32.gmra.mxu0 %v2947
      %v2972 = vpop.f32.mrf.mxu0
      %v2973 = vadd.f32 0.0, %v2972
      %2974 = vmatmul.f32.gmra.mxu0 %v2949
      %v2975 = vpop.f32.mrf.mxu0
      %v2976 = vadd.f32 0.0, %v2975
      %2977 = vdwg.mxu0
      %v2978 = vsel %vm368, %v2728, -inf
      %2979 = vmax.xlane.f32.xlu0 %v2978
      %v2980 = vpop.xlane.xlu0 %2979
      %v2981 = vsel %vm368, %v2731, -inf
      %2982 = vmax.xlane.f32.xlu0 %v2981
      %v2983 = vpop.xlane.xlu0 %2982
      %v2984 = vsel %vm368, %v2763, -inf
      %2985 = vmax.xlane.f32.xlu0 %v2984
      %v2986 = vpop.xlane.xlu0 %2985
      %v2987 = vsel %vm368, %v2766, -inf
      %2988 = vmax.xlane.f32.xlu0 %v2987
      %v2989 = vpop.xlane.xlu0 %2988
      %v2990 = vsel %vm368, %v2798, -inf
      %2991 = vmax.xlane.f32.xlu0 %v2990
      %v2992 = vpop.xlane.xlu0 %2991
      %v2993 = vsel %vm368, %v2801, -inf
      %2994 = vmax.xlane.f32.xlu0 %v2993
      %v2995 = vpop.xlane.xlu0 %2994
      %v2996 = vsel %vm368, %v2833, -inf
      %2997 = vmax.xlane.f32.xlu0 %v2996
      %v2998 = vpop.xlane.xlu0 %2997
      %v2999 = vsel %vm368, %v2836, -inf
      %3000 = vmax.xlane.f32.xlu0 %v2999
      %v3001 = vpop.xlane.xlu0 %3000
      %v3002 = vsel %vm368, %v2868, -inf
      %3003 = vmax.xlane.f32.xlu0 %v3002
      %v3004 = vpop.xlane.xlu0 %3003
      %v3005 = vsel %vm368, %v2871, -inf
      %3006 = vmax.xlane.f32.xlu0 %v3005
      %v3007 = vpop.xlane.xlu0 %3006
      %v3008 = vsel %vm368, %v2903, -inf
      %3009 = vmax.xlane.f32.xlu0 %v3008
      %v3010 = vpop.xlane.xlu0 %3009
      %v3011 = vsel %vm368, %v2906, -inf
      %3012 = vmax.xlane.f32.xlu0 %v3011
      %v3013 = vpop.xlane.xlu0 %3012
      %v3014 = vsel %vm368, %v2938, -inf
      %3015 = vmax.xlane.f32.xlu0 %v3014
      %v3016 = vpop.xlane.xlu0 %3015
      %v3017 = vsel %vm368, %v2941, -inf
      %3018 = vmax.xlane.f32.xlu0 %v3017
      %v3019 = vpop.xlane.xlu0 %3018
      %v3020 = vsel %vm368, %v2973, -inf
      %3021 = vmax.xlane.f32.xlu0 %v3020
      %v3022 = vpop.xlane.xlu0 %3021
      %v3023 = vsel %vm368, %v2976, -inf
      %3024 = vmax.xlane.f32.xlu0 %v3023
      %v3025 = vpop.xlane.xlu0 %3024
      %v3026 = vsub.f32 %v2728, %v2980
      %v3027 = vsub.f32 %v2731, %v2983
      %v3028 = vsub.f32 %v2763, %v2986
      %v3029 = vsub.f32 %v2766, %v2989
      %v3030 = vsub.f32 %v2798, %v2992
      %v3031 = vsub.f32 %v2801, %v2995
      %v3032 = vsub.f32 %v2833, %v2998
      %v3033 = vsub.f32 %v2836, %v3001
      %v3034 = vsub.f32 %v2868, %v3004
      %v3035 = vsub.f32 %v2871, %v3007
      %v3036 = vsub.f32 %v2903, %v3010
      %v3037 = vsub.f32 %v2906, %v3013
      %v3038 = vsub.f32 %v2938, %v3016
      %v3039 = vsub.f32 %v2941, %v3019
      %v3040 = vsub.f32 %v2973, %v3022
      %v3041 = vsub.f32 %v2976, %v3025
      %v3042 = vmul.f32 %v3026, 1.442695
      %v3043 = vpow.pop %v3042
      %v3044 = vmul.f32 %v3027, 1.442695
      %v3045 = vpow.pop %v3044
      %v3046 = vmul.f32 %v3028, 1.442695
      %v3047 = vpow.pop %v3046
      %v3048 = vmul.f32 %v3029, 1.442695
      %v3049 = vpow.pop %v3048
      %v3050 = vmul.f32 %v3030, 1.442695
      %v3051 = vpow.pop %v3050
      %v3052 = vmul.f32 %v3031, 1.442695
      %v3053 = vpow.pop %v3052
      %v3054 = vmul.f32 %v3032, 1.442695
      %v3055 = vpow.pop %v3054
      %v3056 = vmul.f32 %v3033, 1.442695
      %v3057 = vpow.pop %v3056
      %v3058 = vmul.f32 %v3034, 1.442695
      %v3059 = vpow.pop %v3058
      %v3060 = vmul.f32 %v3035, 1.442695
      %v3061 = vpow.pop %v3060
      %v3062 = vmul.f32 %v3036, 1.442695
      %v3063 = vpow.pop %v3062
      %v3064 = vmul.f32 %v3037, 1.442695
      %v3065 = vpow.pop %v3064
      %v3066 = vmul.f32 %v3038, 1.442695
      %v3067 = vpow.pop %v3066
      %v3068 = vmul.f32 %v3039, 1.442695
      %v3069 = vpow.pop %v3068
      %v3070 = vmul.f32 %v3040, 1.442695
      %v3071 = vpow.pop %v3070
      %v3072 = vmul.f32 %v3041, 1.442695
      %v3073 = vpow.pop %v3072
      %v3074 = vsel %vm368, %v3043, 0.0
      %3075 = vadd.xlane.f32.xlu0 %v3074
      %v3076 = vpop.xlane.xlu0 %3075
      %v3077 = vsel %vm368, %v3045, 0.0
      %3078 = vadd.xlane.f32.xlu0 %v3077
      %v3079 = vpop.xlane.xlu0 %3078
      %v3080 = vsel %vm368, %v3047, 0.0
      %3081 = vadd.xlane.f32.xlu0 %v3080
      %v3082 = vpop.xlane.xlu0 %3081
      %v3083 = vsel %vm368, %v3049, 0.0
      %3084 = vadd.xlane.f32.xlu0 %v3083
      %v3085 = vpop.xlane.xlu0 %3084
      %v3086 = vsel %vm368, %v3051, 0.0
      %3087 = vadd.xlane.f32.xlu0 %v3086
      %v3088 = vpop.xlane.xlu0 %3087
      %v3089 = vsel %vm368, %v3053, 0.0
      %3090 = vadd.xlane.f32.xlu0 %v3089
      %v3091 = vpop.xlane.xlu0 %3090
      %v3092 = vsel %vm368, %v3055, 0.0
      %3093 = vadd.xlane.f32.xlu0 %v3092
      %v3094 = vpop.xlane.xlu0 %3093
      %v3095 = vsel %vm368, %v3057, 0.0
      %3096 = vadd.xlane.f32.xlu0 %v3095
      %v3097 = vpop.xlane.xlu0 %3096
      %v3098 = vsel %vm368, %v3059, 0.0
      %3099 = vadd.xlane.f32.xlu0 %v3098
      %v3100 = vpop.xlane.xlu0 %3099
      %v3101 = vsel %vm368, %v3061, 0.0
      %3102 = vadd.xlane.f32.xlu0 %v3101
      %v3103 = vpop.xlane.xlu0 %3102
      %v3104 = vsel %vm368, %v3063, 0.0
      %3105 = vadd.xlane.f32.xlu0 %v3104
      %v3106 = vpop.xlane.xlu0 %3105
      %v3107 = vsel %vm368, %v3065, 0.0
      %3108 = vadd.xlane.f32.xlu0 %v3107
      %v3109 = vpop.xlane.xlu0 %3108
      %v3110 = vsel %vm368, %v3067, 0.0
      %3111 = vadd.xlane.f32.xlu0 %v3110
      %v3112 = vpop.xlane.xlu0 %3111
      %v3113 = vsel %vm368, %v3069, 0.0
      %3114 = vadd.xlane.f32.xlu0 %v3113
      %v3115 = vpop.xlane.xlu0 %3114
      %v3116 = vsel %vm368, %v3071, 0.0
      %3117 = vadd.xlane.f32.xlu0 %v3116
      %v3118 = vpop.xlane.xlu0 %3117
      %v3119 = vsel %vm368, %v3073, 0.0
      %3120 = vadd.xlane.f32.xlu0 %v3119
      %v3121 = vpop.xlane.xlu0 %3120
      %v3122 = vrcp.pop %v3076
      %v3123 = vrcp.pop %v3079
      %v3124 = vrcp.pop %v3082
      %v3125 = vrcp.pop %v3085
      %v3126 = vrcp.pop %v3088
      %v3127 = vrcp.pop %v3091
      %v3128 = vrcp.pop %v3094
      %v3129 = vrcp.pop %v3097
      %v3130 = vrcp.pop %v3100
      %v3131 = vrcp.pop %v3103
      %v3132 = vrcp.pop %v3106
      %v3133 = vrcp.pop %v3109
      %v3134 = vrcp.pop %v3112
      %v3135 = vrcp.pop %v3115
      %v3136 = vrcp.pop %v3118
      %v3137 = vrcp.pop %v3121
      %v3138 = vmul.f32 %v3043, %v3122
      %v3139 = vmul.f32 %v3045, %v3123
      %v3140 = vmul.f32 %v3047, %v3124
      %v3141 = vmul.f32 %v3049, %v3125
      %v3142 = vmul.f32 %v3051, %v3126
      %v3143 = vmul.f32 %v3053, %v3127
      %v3144 = vmul.f32 %v3055, %v3128
      %v3145 = vmul.f32 %v3057, %v3129
      %v3146 = vmul.f32 %v3059, %v3130
      %v3147 = vmul.f32 %v3061, %v3131
      %v3148 = vmul.f32 %v3063, %v3132
      %v3149 = vmul.f32 %v3065, %v3133
      %v3150 = vmul.f32 %v3067, %v3134
      %v3151 = vmul.f32 %v3069, %v3135
      %v3152 = vmul.f32 %v3071, %v3136
      %v3153 = vmul.f32 %v3073, %v3137
      %3154 = vrot.lane.b32.xlu0 %v2663, 64
      %v3155 = vpop.permute.xlu0 %3154
      %3156 = vrot.lane.b32.xlu0 %v2666, 64
      %v3157 = vpop.permute.xlu0 %3156
      %v3161 = vsel %vm368, %v3138, 0
      %v3164 = vsel %vm368, %v3139, 0
      %3166 = vmatpush.msra.mxu0 0.0
      %3167 = vmatpush.msra.mxu0 0.0
      %3168 = vmatpush.msra.mxu0 0.0
      %3169 = vmatpush.msra.mxu0 0.0
      %3170 = vmatpush.msra.mxu0 0.0
      %3171 = vmatpush.msra.mxu0 0.0
      %3172 = vmatpush.msra.mxu0 0.0
      %3173 = vmatpush.msra.mxu0 0.0
      %3174 = vmatpush.msra.mxu0 0.0
      %3175 = vmatpush.msra.mxu0 0.0
      %3176 = vmatpush.msra.mxu0 0.0
      %3177 = vmatpush.msra.mxu0 0.0
      %3178 = vmatpush.msra.mxu0 0.0
      %3179 = vmatpush.msra.mxu0 0.0
      %3180 = vmatpush.msra.mxu0 %v3157
      %3181 = vmatpush.msra.mxu0 %v3155
      %3182 = vmatmul.f32.gmra.mxu0 %v3161
      %v3183 = vpop.f32.mrf.mxu0
      %v3184 = vadd.f32 0.0, %v3183
      %3185 = vmatmul.f32.gmra.mxu0 %v3164
      %v3186 = vpop.f32.mrf.mxu0
      %v3187 = vadd.f32 0.0, %v3186
      %3188 = vdwg.mxu0
      %3189 = vrot.lane.b32.xlu0 %v2671, 64
      %v3190 = vpop.permute.xlu0 %3189
      %3191 = vrot.lane.b32.xlu0 %v2673, 64
      %v3192 = vpop.permute.xlu0 %3191
      %v3196 = vsel %vm368, %v3140, 0
      %v3199 = vsel %vm368, %v3141, 0
      %3201 = vmatpush.msra.mxu0 0.0
      %3202 = vmatpush.msra.mxu0 0.0
      %3203 = vmatpush.msra.mxu0 0.0
      %3204 = vmatpush.msra.mxu0 0.0
      %3205 = vmatpush.msra.mxu0 0.0
      %3206 = vmatpush.msra.mxu0 0.0
      %3207 = vmatpush.msra.mxu0 0.0
      %3208 = vmatpush.msra.mxu0 0.0
      %3209 = vmatpush.msra.mxu0 0.0
      %3210 = vmatpush.msra.mxu0 0.0
      %3211 = vmatpush.msra.mxu0 0.0
      %3212 = vmatpush.msra.mxu0 0.0
      %3213 = vmatpush.msra.mxu0 0.0
      %3214 = vmatpush.msra.mxu0 0.0
      %3215 = vmatpush.msra.mxu0 %v3192
      %3216 = vmatpush.msra.mxu0 %v3190
      %3217 = vmatmul.f32.gmra.mxu0 %v3196
      %v3218 = vpop.f32.mrf.mxu0
      %v3219 = vadd.f32 0.0, %v3218
      %3220 = vmatmul.f32.gmra.mxu0 %v3199
      %v3221 = vpop.f32.mrf.mxu0
      %v3222 = vadd.f32 0.0, %v3221
      %3223 = vdwg.mxu0
      %3224 = vrot.lane.b32.xlu0 %v2675, 64
      %v3225 = vpop.permute.xlu0 %3224
      %3226 = vrot.lane.b32.xlu0 %v2677, 64
      %v3227 = vpop.permute.xlu0 %3226
      %v3231 = vsel %vm368, %v3142, 0
      %v3234 = vsel %vm368, %v3143, 0
      %3236 = vmatpush.msra.mxu0 0.0
      %3237 = vmatpush.msra.mxu0 0.0
      %3238 = vmatpush.msra.mxu0 0.0
      %3239 = vmatpush.msra.mxu0 0.0
      %3240 = vmatpush.msra.mxu0 0.0
      %3241 = vmatpush.msra.mxu0 0.0
      %3242 = vmatpush.msra.mxu0 0.0
      %3243 = vmatpush.msra.mxu0 0.0
      %3244 = vmatpush.msra.mxu0 0.0
      %3245 = vmatpush.msra.mxu0 0.0
      %3246 = vmatpush.msra.mxu0 0.0
      %3247 = vmatpush.msra.mxu0 0.0
      %3248 = vmatpush.msra.mxu0 0.0
      %3249 = vmatpush.msra.mxu0 0.0
      %3250 = vmatpush.msra.mxu0 %v3227
      %3251 = vmatpush.msra.mxu0 %v3225
      %3252 = vmatmul.f32.gmra.mxu0 %v3231
      %v3253 = vpop.f32.mrf.mxu0
      %v3254 = vadd.f32 0.0, %v3253
      %3255 = vmatmul.f32.gmra.mxu0 %v3234
      %v3256 = vpop.f32.mrf.mxu0
      %v3257 = vadd.f32 0.0, %v3256
      %3258 = vdwg.mxu0
      %3259 = vrot.lane.b32.xlu0 %v2679, 64
      %v3260 = vpop.permute.xlu0 %3259
      %3261 = vrot.lane.b32.xlu0 %v2681, 64
      %v3262 = vpop.permute.xlu0 %3261
      %v3266 = vsel %vm368, %v3144, 0
      %v3269 = vsel %vm368, %v3145, 0
      %3271 = vmatpush.msra.mxu0 0.0
      %3272 = vmatpush.msra.mxu0 0.0
      %3273 = vmatpush.msra.mxu0 0.0
      %3274 = vmatpush.msra.mxu0 0.0
      %3275 = vmatpush.msra.mxu0 0.0
      %3276 = vmatpush.msra.mxu0 0.0
      %3277 = vmatpush.msra.mxu0 0.0
      %3278 = vmatpush.msra.mxu0 0.0
      %3279 = vmatpush.msra.mxu0 0.0
      %3280 = vmatpush.msra.mxu0 0.0
      %3281 = vmatpush.msra.mxu0 0.0
      %3282 = vmatpush.msra.mxu0 0.0
      %3283 = vmatpush.msra.mxu0 0.0
      %3284 = vmatpush.msra.mxu0 0.0
      %3285 = vmatpush.msra.mxu0 %v3262
      %3286 = vmatpush.msra.mxu0 %v3260
      %3287 = vmatmul.f32.gmra.mxu0 %v3266
      %v3288 = vpop.f32.mrf.mxu0
      %v3289 = vadd.f32 0.0, %v3288
      %3290 = vmatmul.f32.gmra.mxu0 %v3269
      %v3291 = vpop.f32.mrf.mxu0
      %v3292 = vadd.f32 0.0, %v3291
      %3293 = vdwg.mxu0
      %3294 = vrot.lane.b32.xlu0 %v2683, 64
      %v3295 = vpop.permute.xlu0 %3294
      %3296 = vrot.lane.b32.xlu0 %v2685, 64
      %v3297 = vpop.permute.xlu0 %3296
      %v3301 = vsel %vm368, %v3146, 0
      %v3304 = vsel %vm368, %v3147, 0
      %3306 = vmatpush.msra.mxu0 0.0
      %3307 = vmatpush.msra.mxu0 0.0
      %3308 = vmatpush.msra.mxu0 0.0
      %3309 = vmatpush.msra.mxu0 0.0
      %3310 = vmatpush.msra.mxu0 0.0
      %3311 = vmatpush.msra.mxu0 0.0
      %3312 = vmatpush.msra.mxu0 0.0
      %3313 = vmatpush.msra.mxu0 0.0
      %3314 = vmatpush.msra.mxu0 0.0
      %3315 = vmatpush.msra.mxu0 0.0
      %3316 = vmatpush.msra.mxu0 0.0
      %3317 = vmatpush.msra.mxu0 0.0
      %3318 = vmatpush.msra.mxu0 0.0
      %3319 = vmatpush.msra.mxu0 0.0
      %3320 = vmatpush.msra.mxu0 %v3297
      %3321 = vmatpush.msra.mxu0 %v3295
      %3322 = vmatmul.f32.gmra.mxu0 %v3301
      %v3323 = vpop.f32.mrf.mxu0
      %v3324 = vadd.f32 0.0, %v3323
      %3325 = vmatmul.f32.gmra.mxu0 %v3304
      %v3326 = vpop.f32.mrf.mxu0
      %v3327 = vadd.f32 0.0, %v3326
      %3328 = vdwg.mxu0
      %3329 = vrot.lane.b32.xlu0 %v2687, 64
      %v3330 = vpop.permute.xlu0 %3329
      %3331 = vrot.lane.b32.xlu0 %v2689, 64
      %v3332 = vpop.permute.xlu0 %3331
      %v3336 = vsel %vm368, %v3148, 0
      %v3339 = vsel %vm368, %v3149, 0
      %3341 = vmatpush.msra.mxu0 0.0
      %3342 = vmatpush.msra.mxu0 0.0
      %3343 = vmatpush.msra.mxu0 0.0
      %3344 = vmatpush.msra.mxu0 0.0
      %3345 = vmatpush.msra.mxu0 0.0
      %3346 = vmatpush.msra.mxu0 0.0
      %3347 = vmatpush.msra.mxu0 0.0
      %3348 = vmatpush.msra.mxu0 0.0
      %3349 = vmatpush.msra.mxu0 0.0
      %3350 = vmatpush.msra.mxu0 0.0
      %3351 = vmatpush.msra.mxu0 0.0
      %3352 = vmatpush.msra.mxu0 0.0
      %3353 = vmatpush.msra.mxu0 0.0
      %3354 = vmatpush.msra.mxu0 0.0
      %3355 = vmatpush.msra.mxu0 %v3332
      %3356 = vmatpush.msra.mxu0 %v3330
      %3357 = vmatmul.f32.gmra.mxu0 %v3336
      %v3358 = vpop.f32.mrf.mxu0
      %v3359 = vadd.f32 0.0, %v3358
      %3360 = vmatmul.f32.gmra.mxu0 %v3339
      %v3361 = vpop.f32.mrf.mxu0
      %v3362 = vadd.f32 0.0, %v3361
      %3363 = vdwg.mxu0
      %3364 = vrot.lane.b32.xlu0 %v2691, 64
      %v3365 = vpop.permute.xlu0 %3364
      %3366 = vrot.lane.b32.xlu0 %v2693, 64
      %v3367 = vpop.permute.xlu0 %3366
      %v3371 = vsel %vm368, %v3150, 0
      %v3374 = vsel %vm368, %v3151, 0
      %3376 = vmatpush.msra.mxu0 0.0
      %3377 = vmatpush.msra.mxu0 0.0
      %3378 = vmatpush.msra.mxu0 0.0
      %3379 = vmatpush.msra.mxu0 0.0
      %3380 = vmatpush.msra.mxu0 0.0
      %3381 = vmatpush.msra.mxu0 0.0
      %3382 = vmatpush.msra.mxu0 0.0
      %3383 = vmatpush.msra.mxu0 0.0
      %3384 = vmatpush.msra.mxu0 0.0
      %3385 = vmatpush.msra.mxu0 0.0
      %3386 = vmatpush.msra.mxu0 0.0
      %3387 = vmatpush.msra.mxu0 0.0
      %3388 = vmatpush.msra.mxu0 0.0
      %3389 = vmatpush.msra.mxu0 0.0
      %3390 = vmatpush.msra.mxu0 %v3367
      %3391 = vmatpush.msra.mxu0 %v3365
      %3392 = vmatmul.f32.gmra.mxu0 %v3371
      %v3393 = vpop.f32.mrf.mxu0
      %v3394 = vadd.f32 0.0, %v3393
      %3395 = vmatmul.f32.gmra.mxu0 %v3374
      %v3396 = vpop.f32.mrf.mxu0
      %v3397 = vadd.f32 0.0, %v3396
      %3398 = vdwg.mxu0
      %3399 = vrot.lane.b32.xlu0 %v2695, 64
      %v3400 = vpop.permute.xlu0 %3399
      %3401 = vrot.lane.b32.xlu0 %v2697, 64
      %v3402 = vpop.permute.xlu0 %3401
      %v3406 = vsel %vm368, %v3152, 0
      %v3409 = vsel %vm368, %v3153, 0
      %3411 = vmatpush.msra.mxu0 0.0
      %3412 = vmatpush.msra.mxu0 0.0
      %3413 = vmatpush.msra.mxu0 0.0
      %3414 = vmatpush.msra.mxu0 0.0
      %3415 = vmatpush.msra.mxu0 0.0
      %3416 = vmatpush.msra.mxu0 0.0
      %3417 = vmatpush.msra.mxu0 0.0
      %3418 = vmatpush.msra.mxu0 0.0
      %3419 = vmatpush.msra.mxu0 0.0
      %3420 = vmatpush.msra.mxu0 0.0
      %3421 = vmatpush.msra.mxu0 0.0
      %3422 = vmatpush.msra.mxu0 0.0
      %3423 = vmatpush.msra.mxu0 0.0
      %3424 = vmatpush.msra.mxu0 0.0
      %3425 = vmatpush.msra.mxu0 %v3402
      %3426 = vmatpush.msra.mxu0 %v3400
      %3427 = vmatmul.f32.gmra.mxu0 %v3406
      %v3428 = vpop.f32.mrf.mxu0
      %v3429 = vadd.f32 0.0, %v3428
      %3430 = vmatmul.f32.gmra.mxu0 %v3409
      %v3431 = vpop.f32.mrf.mxu0
      %v3432 = vadd.f32 0.0, %v3431
      %3433 = vdwg.mxu0
      %3434 = vst.msk [vmem:[#allocation2] sm:$0xff] %vm471, %v3184
      %3435 = vst.msk [vmem:[#allocation2 + $0x8] sm:$0xff] %vm471, %v3187
      %3438 = vrot.lane.b32.xlu0 %v3219, 4
      %v3439 = vpop.permute.xlu0 %3438
      %3440 = vrot.lane.b32.xlu0 %v3222, 4
      %v3441 = vpop.permute.xlu0 %3440
      %3444 = vst.msk [vmem:[#allocation2] sm:$0xff] %vm1214, %v3439
      %3445 = vst.msk [vmem:[#allocation2 + $0x8] sm:$0xff] %vm1214, %v3441
      %3448 = vrot.lane.b32.xlu0 %v3254, 8
      %v3449 = vpop.permute.xlu0 %3448
      %3450 = vrot.lane.b32.xlu0 %v3257, 8
      %v3451 = vpop.permute.xlu0 %3450
      %3454 = vst.msk [vmem:[#allocation2] sm:$0xff] %vm1225, %v3449
      %3455 = vst.msk [vmem:[#allocation2 + $0x8] sm:$0xff] %vm1225, %v3451
      %3458 = vrot.lane.b32.xlu0 %v3289, 12
      %v3459 = vpop.permute.xlu0 %3458
      %3460 = vrot.lane.b32.xlu0 %v3292, 12
      %v3461 = vpop.permute.xlu0 %3460
      %3464 = vst.msk [vmem:[#allocation2] sm:$0xff] %vm1236, %v3459
      %3465 = vst.msk [vmem:[#allocation2 + $0x8] sm:$0xff] %vm1236, %v3461
      %3468 = vrot.lane.b32.xlu0 %v3324, 16
      %v3469 = vpop.permute.xlu0 %3468
      %3470 = vrot.lane.b32.xlu0 %v3327, 16
      %v3471 = vpop.permute.xlu0 %3470
      %3474 = vst.msk [vmem:[#allocation2] sm:$0xff] %vm1247, %v3469
      %3475 = vst.msk [vmem:[#allocation2 + $0x8] sm:$0xff] %vm1247, %v3471
      %3478 = vrot.lane.b32.xlu0 %v3359, 20
      %v3479 = vpop.permute.xlu0 %3478
      %3480 = vrot.lane.b32.xlu0 %v3362, 20
      %v3481 = vpop.permute.xlu0 %3480
      %3484 = vst.msk [vmem:[#allocation2] sm:$0xff] %vm1258, %v3479
      %3485 = vst.msk [vmem:[#allocation2 + $0x8] sm:$0xff] %vm1258, %v3481
      %3488 = vrot.lane.b32.xlu0 %v3394, 24
      %v3489 = vpop.permute.xlu0 %3488
      %3490 = vrot.lane.b32.xlu0 %v3397, 24
      %v3491 = vpop.permute.xlu0 %3490
      %3494 = vst.msk [vmem:[#allocation2] sm:$0xff] %vm1269, %v3489
      %3495 = vst.msk [vmem:[#allocation2 + $0x8] sm:$0xff] %vm1269, %v3491
      %3498 = vrot.lane.b32.xlu0 %v3429, 28
      %v3499 = vpop.permute.xlu0 %3498
      %3500 = vrot.lane.b32.xlu0 %v3432, 28
      %v3501 = vpop.permute.xlu0 %3500
      %3504 = vst.msk [vmem:[#allocation2] sm:$0xff] %vm1280, %v3499
      %3505 = vst.msk [vmem:[#allocation2 + $0x8] sm:$0xff] %vm1280, %v3501
      %v3506 = vld [vmem:[#allocation2] sm:$0xff]
      %v3507 = vld [vmem:[#allocation2 + $0x8] sm:$0xff]
      %s3508 = scalar_lea.vmem %s5, 64
      %v3509 = vld [vmem:[%s3508] sm:$0xff]
      %v3510 = vld [vmem:[%s3508 + $0x8] sm:$0xff]
      %v3511 = vld [vmem:[%s3508 + $0x10] sm:$0xff]
      %v3512 = vld [vmem:[%s3508 + $0x18] sm:$0xff]
      %v3513 = vperm.slane %v2628, 0
      %v3515 = vsel %vm407, %v3506, 0
      %v3518 = vsel %vm407, %v3507, 0
      %3520 = vmatpush.msra.mxu0 0.0
      %3521 = vmatpush.msra.mxu0 0.0
      %3522 = vmatpush.msra.mxu0 0.0
      %3523 = vmatpush.msra.mxu0 0.0
      %3524 = vmatpush.msra.mxu0 0.0
      %3525 = vmatpush.msra.mxu0 0.0
      %3526 = vmatpush.msra.mxu0 0.0
      %3527 = vmatpush.msra.mxu0 0.0
      %3528 = vmatpush.msra.mxu0 0.0
      %3529 = vmatpush.msra.mxu0 0.0
      %3530 = vmatpush.msra.mxu0 0.0
      %3531 = vmatpush.msra.mxu0 0.0
      %3532 = vmatpush.msra.mxu0 %v3512
      %3533 = vmatpush.msra.mxu0 %v3511
      %3534 = vmatpush.msra.mxu0 %v3510
      %3535 = vmatpush.msra.mxu0 %v3509
      %3536 = vmatmul.f32.gmra.mxu0 %v3515
      %v3537 = vpop.f32.mrf.mxu0
      %v3538 = vadd.f32 %v3513, %v3537
      %3539 = vmatmul.f32.gmra.mxu0 %v3518
      %v3540 = vpop.f32.mrf.mxu0
      %v3541 = vadd.f32 %v3513, %v3540
      %3542 = vdwg.mxu0
      %v3543 = vadd.f32 %v2625, %v3538
      %v3544 = vadd.f32 %v2626, %v3541
      %v3545 = vsel %vm407, %v3543, 0.0
      %3546 = vadd.xlane.f32.xlu0 %v3545
      %v3547 = vpop.xlane.xlu0 %3546
      %v3548 = vsel %vm407, %v3544, 0.0
      %3549 = vadd.xlane.f32.xlu0 %v3548
      %v3550 = vpop.xlane.xlu0 %3549
      %v3551 = vmul.f32 %v3547, %v1333
      %v3552 = vmul.f32 %v3550, %v1333
      %v3553 = vmul.f32 %v3543, %v3543
      %v3554 = vmul.f32 %v3544, %v3544
      %v3555 = vsel %vm407, %v3553, 0.0
      %3556 = vadd.xlane.f32.xlu0 %v3555
      %v3557 = vpop.xlane.xlu0 %3556
      %v3558 = vsel %vm407, %v3554, 0.0
      %3559 = vadd.xlane.f32.xlu0 %v3558
      %v3560 = vpop.xlane.xlu0 %3559
      %v3561 = vmul.f32 %v3557, %v1333
      %v3562 = vmul.f32 %v3560, %v1333
      %v3563 = vmul.f32 %v3551, %v3551
      %v3564 = vmul.f32 %v3552, %v3552
      %v3565 = vsub.f32 %v3561, %v3563
      %v3566 = vsub.f32 %v3562, %v3564
      %v3567 = vsub.f32 %v3543, %v3551
      %v3568 = vsub.f32 %v3544, %v3552
      %v3569 = vadd.f32 %v3565, 1e-05
      %v3570 = vadd.f32 %v3566, 1e-05
      %v3571 = vrsqrt.pop %v3569
      %v3572 = vmul.f32 %v3571, %v3569
      %v3573 = vmul.f32 %v3572, %v3571
      %v3574 = vmul.f32 0.5, %v3573
      %v3575 = vsub.f32 1.5, %v3574
      %v3576 = vmul.f32 %v3571, %v3575
      %vm3577 = vweird.f32 %v3569
      %vm3578 = vweird.f32 %v3571
      %vm3579 = vmor %vm3577, %vm3578
      %v3580 = vsel %vm3579, %v3571, %v3576
      %v3581 = vrsqrt.pop %v3570
      %v3582 = vmul.f32 %v3581, %v3570
      %v3583 = vmul.f32 %v3582, %v3581
      %v3584 = vmul.f32 0.5, %v3583
      %v3585 = vsub.f32 1.5, %v3584
      %v3586 = vmul.f32 %v3581, %v3585
      %vm3587 = vweird.f32 %v3570
      %vm3588 = vweird.f32 %v3581
      %vm3589 = vmor %vm3587, %vm3588
      %v3590 = vsel %vm3589, %v3581, %v3586
      %v3591 = vmul.f32 %v3567, %v3580
      %v3592 = vmul.f32 %v3568, %v3590
      %v3593 = vperm.slane %v2628, 2
      %v3594 = vmul.f32 %v3591, %v3593
      %v3595 = vmul.f32 %v3592, %v3593
      %v3596 = vperm.slane %v2628, 3
      %v3597 = vadd.f32 %v3594, %v3596
      %v3598 = vadd.f32 %v3595, %v3596
      %s3599 = scalar_lea.vmem %s6, 64
      %v3600 = vld [vmem:[%s3599] sm:$0xff]
      %v3601 = vld [vmem:[%s3599 + $0x8] sm:$0xff]
      %v3602 = vld [vmem:[%s3599 + $0x10] sm:$0xff]
      %v3603 = vld [vmem:[%s3599 + $0x18] sm:$0xff]
      %s3604 = scalar_lea.vmem %s7, 2
      %v3605 = vld [vmem:[%s3604] sm:$0x1]
      %v3607 = vperm.slane %v3605, 0
      %v3610 = vsel %vm407, %v3597, 0
      %v3613 = vsel %vm407, %v3598, 0
      %3615 = vmatpush.msra.mxu0 0.0
      %3616 = vmatpush.msra.mxu0 0.0
      %3617 = vmatpush.msra.mxu0 0.0
      %3618 = vmatpush.msra.mxu0 0.0
      %3619 = vmatpush.msra.mxu0 0.0
      %3620 = vmatpush.msra.mxu0 0.0
      %3621 = vmatpush.msra.mxu0 0.0
      %3622 = vmatpush.msra.mxu0 0.0
      %3623 = vmatpush.msra.mxu0 0.0
      %3624 = vmatpush.msra.mxu0 0.0
      %3625 = vmatpush.msra.mxu0 0.0
      %3626 = vmatpush.msra.mxu0 0.0
      %3627 = vmatpush.msra.mxu0 %v3603
      %3628 = vmatpush.msra.mxu0 %v3602
      %3629 = vmatpush.msra.mxu0 %v3601
      %3630 = vmatpush.msra.mxu0 %v3600
      %3631 = vmatmul.f32.gmra.mxu0 %v3610
      %v3632 = vpop.f32.mrf.mxu0
      %v3633 = vadd.f32 %v3607, %v3632
      %3634 = vmatmul.f32.gmra.mxu0 %v3613
      %v3635 = vpop.f32.mrf.mxu0
      %v3636 = vadd.f32 %v3607, %v3635
      %3637 = vdwg.mxu0
      %v3638 = vmax.f32 %v3633, 0.0
      %v3639 = vmax.f32 %v3636, 0.0
      %s3640 = scalar_lea.vmem %s8, 256
      %v3641 = vld [vmem:[%s3640] sm:$0xff]
      %v3642 = vld [vmem:[%s3640 + $0x8] sm:$0xff]
      %v3643 = vld [vmem:[%s3640 + $0x10] sm:$0xff]
      %v3644 = vld [vmem:[%s3640 + $0x18] sm:$0xff]
      %v3645 = vld [vmem:[%s3640 + $0x20] sm:$0xff]
      %v3646 = vld [vmem:[%s3640 + $0x28] sm:$0xff]
      %v3647 = vld [vmem:[%s3640 + $0x30] sm:$0xff]
      %v3648 = vld [vmem:[%s3640 + $0x38] sm:$0xff]
      %v3649 = vld [vmem:[%s3640 + $0x40] sm:$0xff]
      %v3650 = vld [vmem:[%s3640 + $0x48] sm:$0xff]
      %v3651 = vld [vmem:[%s3640 + $0x50] sm:$0xff]
      %v3652 = vld [vmem:[%s3640 + $0x58] sm:$0xff]
      %v3653 = vld [vmem:[%s3640 + $0x60] sm:$0xff]
      %v3654 = vld [vmem:[%s3640 + $0x68] sm:$0xff]
      %v3655 = vld [vmem:[%s3640 + $0x70] sm:$0xff]
      %v3656 = vld [vmem:[%s3640 + $0x78] sm:$0xff]
      %v3657 = vperm.slane %v2628, 1
      %3658 = vmatpush.msra.mxu0 %v3656
      %3659 = vmatpush.msra.mxu0 %v3655
      %3660 = vmatpush.msra.mxu0 %v3654
      %3661 = vmatpush.msra.mxu0 %v3653
      %3662 = vmatpush.msra.mxu0 %v3652
      %3663 = vmatpush.msra.mxu0 %v3651
      %3664 = vmatpush.msra.mxu0 %v3650
      %3665 = vmatpush.msra.mxu0 %v3649
      %3666 = vmatpush.msra.mxu0 %v3648
      %3667 = vmatpush.msra.mxu0 %v3647
      %3668 = vmatpush.msra.mxu0 %v3646
      %3669 = vmatpush.msra.mxu0 %v3645
      %3670 = vmatpush.msra.mxu0 %v3644
      %3671 = vmatpush.msra.mxu0 %v3643
      %3672 = vmatpush.msra.mxu0 %v3642
      %3673 = vmatpush.msra.mxu0 %v3641
      %3674 = vmatmul.f32.gmra.mxu0 %v3638
      %v3675 = vpop.f32.mrf.mxu0
      %v3676 = vadd.f32 %v3657, %v3675
      %3677 = vmatmul.f32.gmra.mxu0 %v3639
      %v3678 = vpop.f32.mrf.mxu0
      %v3679 = vadd.f32 %v3657, %v3678
      %3680 = vdwg.mxu0
      %v3681 = vadd.f32 %v3597, %v3676
      %v3682 = vadd.f32 %v3598, %v3679
      %v3683 = vsel %vm407, %v3681, 0.0
      %3684 = vadd.xlane.f32.xlu0 %v3683
      %v3685 = vpop.xlane.xlu0 %3684
      %v3686 = vsel %vm407, %v3682, 0.0
      %3687 = vadd.xlane.f32.xlu0 %v3686
      %v3688 = vpop.xlane.xlu0 %3687
      %v3689 = vmul.f32 %v3685, %v1333
      %v3690 = vmul.f32 %v3688, %v1333
      %v3691 = vmul.f32 %v3681, %v3681
      %v3692 = vmul.f32 %v3682, %v3682
      %v3693 = vsel %vm407, %v3691, 0.0
      %3694 = vadd.xlane.f32.xlu0 %v3693
      %v3695 = vpop.xlane.xlu0 %3694
      %v3696 = vsel %vm407, %v3692, 0.0
      %3697 = vadd.xlane.f32.xlu0 %v3696
      %v3698 = vpop.xlane.xlu0 %3697
      %v3699 = vmul.f32 %v3695, %v1333
      %v3700 = vmul.f32 %v3698, %v1333
      %v3701 = vmul.f32 %v3689, %v3689
      %v3702 = vmul.f32 %v3690, %v3690
      %v3703 = vsub.f32 %v3699, %v3701
      %v3704 = vsub.f32 %v3700, %v3702
      %v3705 = vsub.f32 %v3681, %v3689
      %v3706 = vsub.f32 %v3682, %v3690
      %v3707 = vadd.f32 %v3703, 1e-05
      %v3708 = vadd.f32 %v3704, 1e-05
      %v3709 = vrsqrt.pop %v3707
      %v3710 = vmul.f32 %v3709, %v3707
      %v3711 = vmul.f32 %v3710, %v3709
      %v3712 = vmul.f32 0.5, %v3711
      %v3713 = vsub.f32 1.5, %v3712
      %v3714 = vmul.f32 %v3709, %v3713
      %vm3715 = vweird.f32 %v3707
      %vm3716 = vweird.f32 %v3709
      %vm3717 = vmor %vm3715, %vm3716
      %v3718 = vsel %vm3717, %v3709, %v3714
      %v3719 = vrsqrt.pop %v3708
      %v3720 = vmul.f32 %v3719, %v3708
      %v3721 = vmul.f32 %v3720, %v3719
      %v3722 = vmul.f32 0.5, %v3721
      %v3723 = vsub.f32 1.5, %v3722
      %v3724 = vmul.f32 %v3719, %v3723
      %vm3725 = vweird.f32 %v3708
      %vm3726 = vweird.f32 %v3719
      %vm3727 = vmor %vm3725, %vm3726
      %v3728 = vsel %vm3727, %v3719, %v3724
      %v3729 = vmul.f32 %v3705, %v3718
      %v3730 = vmul.f32 %v3706, %v3728
      %v3731 = vperm.slane %v2628, 4
      %v3732 = vmul.f32 %v3729, %v3731
      %v3733 = vmul.f32 %v3730, %v3731
      %v3734 = vperm.slane %v2628, 5
      %v3735 = vadd.f32 %v3732, %v3734
      %v3736 = vadd.f32 %v3733, %v3734
      %s3737 = scalar_lea.vmem %s9, 24
      %v3738 = vld [vmem:[%s3737] sm:$0x3f]
      %s3739 = scalar_lea.vmem %s3, 96
      %v3740 = vld [vmem:[%s3739] sm:$0xff]
      %v3741 = vld [vmem:[%s3739 + $0x8] sm:$0xff]
      %v3742 = vld [vmem:[%s3739 + $0x10] sm:$0xff]
      %v3743 = vld [vmem:[%s3739 + $0x18] sm:$0xff]
      %s3744 = scalar_lea.vmem %s4, 3
      %v3745 = vld [vmem:[%s3744] sm:$0x1]
      %v3747 = vperm.slane %v3745, 0
      %v3750 = vsel %vm407, %v3735, 0
      %v3753 = vsel %vm407, %v3736, 0
      %3755 = vmatpush.msra.mxu0 0.0
      %3756 = vmatpush.msra.mxu0 0.0
      %3757 = vmatpush.msra.mxu0 0.0
      %3758 = vmatpush.msra.mxu0 0.0
      %3759 = vmatpush.msra.mxu0 0.0
      %3760 = vmatpush.msra.mxu0 0.0
      %3761 = vmatpush.msra.mxu0 0.0
      %3762 = vmatpush.msra.mxu0 0.0
      %3763 = vmatpush.msra.mxu0 0.0
      %3764 = vmatpush.msra.mxu0 0.0
      %3765 = vmatpush.msra.mxu0 0.0
      %3766 = vmatpush.msra.mxu0 0.0
      %3767 = vmatpush.msra.mxu0 %v3743
      %3768 = vmatpush.msra.mxu0 %v3742
      %3769 = vmatpush.msra.mxu0 %v3741
      %3770 = vmatpush.msra.mxu0 %v3740
      %3771 = vmatmul.f32.gmra.mxu0 %v3750
      %v3772 = vpop.f32.mrf.mxu0
      %v3773 = vadd.f32 %v3747, %v3772
      %3774 = vmatmul.f32.gmra.mxu0 %v3753
      %v3775 = vpop.f32.mrf.mxu0
      %v3776 = vadd.f32 %v3747, %v3775
      %3777 = vdwg.mxu0
      %3780 = vrot.lane.b32.xlu0 %v3773, 124
      %v3781 = vpop.permute.xlu0 %3780
      %3782 = vrot.lane.b32.xlu0 %v3776, 124
      %v3783 = vpop.permute.xlu0 %3782
      %3784 = vrot.lane.b32.xlu0 %v3773, 120
      %v3785 = vpop.permute.xlu0 %3784
      %3786 = vrot.lane.b32.xlu0 %v3776, 120
      %v3787 = vpop.permute.xlu0 %3786
      %3788 = vrot.lane.b32.xlu0 %v3773, 116
      %v3789 = vpop.permute.xlu0 %3788
      %3790 = vrot.lane.b32.xlu0 %v3776, 116
      %v3791 = vpop.permute.xlu0 %3790
      %3792 = vrot.lane.b32.xlu0 %v3773, 112
      %v3793 = vpop.permute.xlu0 %3792
      %3794 = vrot.lane.b32.xlu0 %v3776, 112
      %v3795 = vpop.permute.xlu0 %3794
      %3796 = vrot.lane.b32.xlu0 %v3773, 108
      %v3797 = vpop.permute.xlu0 %3796
      %3798 = vrot.lane.b32.xlu0 %v3776, 108
      %v3799 = vpop.permute.xlu0 %3798
      %3800 = vrot.lane.b32.xlu0 %v3773, 104
      %v3801 = vpop.permute.xlu0 %3800
      %3802 = vrot.lane.b32.xlu0 %v3776, 104
      %v3803 = vpop.permute.xlu0 %3802
      %3804 = vrot.lane.b32.xlu0 %v3773, 100
      %v3805 = vpop.permute.xlu0 %3804
      %3806 = vrot.lane.b32.xlu0 %v3776, 100
      %v3807 = vpop.permute.xlu0 %3806
      %3808 = vrot.lane.b32.xlu0 %v3773, 96
      %v3809 = vpop.permute.xlu0 %3808
      %3810 = vrot.lane.b32.xlu0 %v3776, 96
      %v3811 = vpop.permute.xlu0 %3810
      %v3812 = vsel %vm471, %v3773, 0
      %v3814 = vsel %vm471, %v3776, 0
      %v3816 = vsel %vm471, %v3809, 0
      %v3818 = vsel %vm471, %v3811, 0
      %3820 = vmatpush.xpose.msra.mxu0 0.0
      %3821 = vmatpush.xpose.msra.mxu0 0.0
      %3822 = vmatpush.xpose.msra.mxu0 0.0
      %3823 = vmatpush.xpose.msra.mxu0 0.0
      %3824 = vmatpush.xpose.msra.mxu0 0.0
      %3825 = vmatpush.xpose.msra.mxu0 0.0
      %3826 = vmatpush.xpose.msra.mxu0 0.0
      %3827 = vmatpush.xpose.msra.mxu0 0.0
      %3828 = vmatpush.xpose.msra.mxu0 0.0
      %3829 = vmatpush.xpose.msra.mxu0 0.0
      %3830 = vmatpush.xpose.msra.mxu0 0.0
      %3831 = vmatpush.xpose.msra.mxu0 0.0
      %3832 = vmatpush.xpose.msra.mxu0 0.0
      %3833 = vmatpush.xpose.msra.mxu0 0.0
      %3834 = vmatpush.xpose.msra.mxu0 %v3818
      %3835 = vmatpush.xpose.msra.mxu0 %v3816
      %3836 = vmatmul.f32.gmra.mxu0 %v3812
      %v3837 = vpop.f32.mrf.mxu0
      %v3838 = vadd.f32 0.0, %v3837
      %3839 = vmatmul.f32.gmra.mxu0 %v3814
      %v3840 = vpop.f32.mrf.mxu0
      %v3841 = vadd.f32 0.0, %v3840
      %3842 = vdwg.mxu0
      %3843 = vrot.lane.b32.xlu0 %v3781, 96
      %v3844 = vpop.permute.xlu0 %3843
      %3845 = vrot.lane.b32.xlu0 %v3783, 96
      %v3846 = vpop.permute.xlu0 %3845
      %v3847 = vsel %vm471, %v3781, 0
      %v3849 = vsel %vm471, %v3783, 0
      %v3851 = vsel %vm471, %v3844, 0
      %v3853 = vsel %vm471, %v3846, 0
      %3855 = vmatpush.xpose.msra.mxu0 0.0
      %3856 = vmatpush.xpose.msra.mxu0 0.0
      %3857 = vmatpush.xpose.msra.mxu0 0.0
      %3858 = vmatpush.xpose.msra.mxu0 0.0
      %3859 = vmatpush.xpose.msra.mxu0 0.0
      %3860 = vmatpush.xpose.msra.mxu0 0.0
      %3861 = vmatpush.xpose.msra.mxu0 0.0
      %3862 = vmatpush.xpose.msra.mxu0 0.0
      %3863 = vmatpush.xpose.msra.mxu0 0.0
      %3864 = vmatpush.xpose.msra.mxu0 0.0
      %3865 = vmatpush.xpose.msra.mxu0 0.0
      %3866 = vmatpush.xpose.msra.mxu0 0.0
      %3867 = vmatpush.xpose.msra.mxu0 0.0
      %3868 = vmatpush.xpose.msra.mxu0 0.0
      %3869 = vmatpush.xpose.msra.mxu0 %v3853
      %3870 = vmatpush.xpose.msra.mxu0 %v3851
      %3871 = vmatmul.f32.gmra.mxu0 %v3847
      %v3872 = vpop.f32.mrf.mxu0
      %v3873 = vadd.f32 0.0, %v3872
      %3874 = vmatmul.f32.gmra.mxu0 %v3849
      %v3875 = vpop.f32.mrf.mxu0
      %v3876 = vadd.f32 0.0, %v3875
      %3877 = vdwg.mxu0
      %3878 = vrot.lane.b32.xlu0 %v3785, 96
      %v3879 = vpop.permute.xlu0 %3878
      %3880 = vrot.lane.b32.xlu0 %v3787, 96
      %v3881 = vpop.permute.xlu0 %3880
      %v3882 = vsel %vm471, %v3785, 0
      %v3884 = vsel %vm471, %v3787, 0
      %v3886 = vsel %vm471, %v3879, 0
      %v3888 = vsel %vm471, %v3881, 0
      %3890 = vmatpush.xpose.msra.mxu0 0.0
      %3891 = vmatpush.xpose.msra.mxu0 0.0
      %3892 = vmatpush.xpose.msra.mxu0 0.0
      %3893 = vmatpush.xpose.msra.mxu0 0.0
      %3894 = vmatpush.xpose.msra.mxu0 0.0
      %3895 = vmatpush.xpose.msra.mxu0 0.0
      %3896 = vmatpush.xpose.msra.mxu0 0.0
      %3897 = vmatpush.xpose.msra.mxu0 0.0
      %3898 = vmatpush.xpose.msra.mxu0 0.0
      %3899 = vmatpush.xpose.msra.mxu0 0.0
      %3900 = vmatpush.xpose.msra.mxu0 0.0
      %3901 = vmatpush.xpose.msra.mxu0 0.0
      %3902 = vmatpush.xpose.msra.mxu0 0.0
      %3903 = vmatpush.xpose.msra.mxu0 0.0
      %3904 = vmatpush.xpose.msra.mxu0 %v3888
      %3905 = vmatpush.xpose.msra.mxu0 %v3886
      %3906 = vmatmul.f32.gmra.mxu0 %v3882
      %v3907 = vpop.f32.mrf.mxu0
      %v3908 = vadd.f32 0.0, %v3907
      %3909 = vmatmul.f32.gmra.mxu0 %v3884
      %v3910 = vpop.f32.mrf.mxu0
      %v3911 = vadd.f32 0.0, %v3910
      %3912 = vdwg.mxu0
      %3913 = vrot.lane.b32.xlu0 %v3789, 96
      %v3914 = vpop.permute.xlu0 %3913
      %3915 = vrot.lane.b32.xlu0 %v3791, 96
      %v3916 = vpop.permute.xlu0 %3915
      %v3917 = vsel %vm471, %v3789, 0
      %v3919 = vsel %vm471, %v3791, 0
      %v3921 = vsel %vm471, %v3914, 0
      %v3923 = vsel %vm471, %v3916, 0
      %3925 = vmatpush.xpose.msra.mxu0 0.0
      %3926 = vmatpush.xpose.msra.mxu0 0.0
      %3927 = vmatpush.xpose.msra.mxu0 0.0
      %3928 = vmatpush.xpose.msra.mxu0 0.0
      %3929 = vmatpush.xpose.msra.mxu0 0.0
      %3930 = vmatpush.xpose.msra.mxu0 0.0
      %3931 = vmatpush.xpose.msra.mxu0 0.0
      %3932 = vmatpush.xpose.msra.mxu0 0.0
      %3933 = vmatpush.xpose.msra.mxu0 0.0
      %3934 = vmatpush.xpose.msra.mxu0 0.0
      %3935 = vmatpush.xpose.msra.mxu0 0.0
      %3936 = vmatpush.xpose.msra.mxu0 0.0
      %3937 = vmatpush.xpose.msra.mxu0 0.0
      %3938 = vmatpush.xpose.msra.mxu0 0.0
      %3939 = vmatpush.xpose.msra.mxu0 %v3923
      %3940 = vmatpush.xpose.msra.mxu0 %v3921
      %3941 = vmatmul.f32.gmra.mxu0 %v3917
      %v3942 = vpop.f32.mrf.mxu0
      %v3943 = vadd.f32 0.0, %v3942
      %3944 = vmatmul.f32.gmra.mxu0 %v3919
      %v3945 = vpop.f32.mrf.mxu0
      %v3946 = vadd.f32 0.0, %v3945
      %3947 = vdwg.mxu0
      %3948 = vrot.lane.b32.xlu0 %v3793, 96
      %v3949 = vpop.permute.xlu0 %3948
      %3950 = vrot.lane.b32.xlu0 %v3795, 96
      %v3951 = vpop.permute.xlu0 %3950
      %v3952 = vsel %vm471, %v3793, 0
      %v3954 = vsel %vm471, %v3795, 0
      %v3956 = vsel %vm471, %v3949, 0
      %v3958 = vsel %vm471, %v3951, 0
      %3960 = vmatpush.xpose.msra.mxu0 0.0
      %3961 = vmatpush.xpose.msra.mxu0 0.0
      %3962 = vmatpush.xpose.msra.mxu0 0.0
      %3963 = vmatpush.xpose.msra.mxu0 0.0
      %3964 = vmatpush.xpose.msra.mxu0 0.0
      %3965 = vmatpush.xpose.msra.mxu0 0.0
      %3966 = vmatpush.xpose.msra.mxu0 0.0
      %3967 = vmatpush.xpose.msra.mxu0 0.0
      %3968 = vmatpush.xpose.msra.mxu0 0.0
      %3969 = vmatpush.xpose.msra.mxu0 0.0
      %3970 = vmatpush.xpose.msra.mxu0 0.0
      %3971 = vmatpush.xpose.msra.mxu0 0.0
      %3972 = vmatpush.xpose.msra.mxu0 0.0
      %3973 = vmatpush.xpose.msra.mxu0 0.0
      %3974 = vmatpush.xpose.msra.mxu0 %v3958
      %3975 = vmatpush.xpose.msra.mxu0 %v3956
      %3976 = vmatmul.f32.gmra.mxu0 %v3952
      %v3977 = vpop.f32.mrf.mxu0
      %v3978 = vadd.f32 0.0, %v3977
      %3979 = vmatmul.f32.gmra.mxu0 %v3954
      %v3980 = vpop.f32.mrf.mxu0
      %v3981 = vadd.f32 0.0, %v3980
      %3982 = vdwg.mxu0
      %3983 = vrot.lane.b32.xlu0 %v3797, 96
      %v3984 = vpop.permute.xlu0 %3983
      %3985 = vrot.lane.b32.xlu0 %v3799, 96
      %v3986 = vpop.permute.xlu0 %3985
      %v3987 = vsel %vm471, %v3797, 0
      %v3989 = vsel %vm471, %v3799, 0
      %v3991 = vsel %vm471, %v3984, 0
      %v3993 = vsel %vm471, %v3986, 0
      %3995 = vmatpush.xpose.msra.mxu0 0.0
      %3996 = vmatpush.xpose.msra.mxu0 0.0
      %3997 = vmatpush.xpose.msra.mxu0 0.0
      %3998 = vmatpush.xpose.msra.mxu0 0.0
      %3999 = vmatpush.xpose.msra.mxu0 0.0
      %4000 = vmatpush.xpose.msra.mxu0 0.0
      %4001 = vmatpush.xpose.msra.mxu0 0.0
      %4002 = vmatpush.xpose.msra.mxu0 0.0
      %4003 = vmatpush.xpose.msra.mxu0 0.0
      %4004 = vmatpush.xpose.msra.mxu0 0.0
      %4005 = vmatpush.xpose.msra.mxu0 0.0
      %4006 = vmatpush.xpose.msra.mxu0 0.0
      %4007 = vmatpush.xpose.msra.mxu0 0.0
      %4008 = vmatpush.xpose.msra.mxu0 0.0
      %4009 = vmatpush.xpose.msra.mxu0 %v3993
      %4010 = vmatpush.xpose.msra.mxu0 %v3991
      %4011 = vmatmul.f32.gmra.mxu0 %v3987
      %v4012 = vpop.f32.mrf.mxu0
      %v4013 = vadd.f32 0.0, %v4012
      %4014 = vmatmul.f32.gmra.mxu0 %v3989
      %v4015 = vpop.f32.mrf.mxu0
      %v4016 = vadd.f32 0.0, %v4015
      %4017 = vdwg.mxu0
      %4018 = vrot.lane.b32.xlu0 %v3801, 96
      %v4019 = vpop.permute.xlu0 %4018
      %4020 = vrot.lane.b32.xlu0 %v3803, 96
      %v4021 = vpop.permute.xlu0 %4020
      %v4022 = vsel %vm471, %v3801, 0
      %v4024 = vsel %vm471, %v3803, 0
      %v4026 = vsel %vm471, %v4019, 0
      %v4028 = vsel %vm471, %v4021, 0
      %4030 = vmatpush.xpose.msra.mxu0 0.0
      %4031 = vmatpush.xpose.msra.mxu0 0.0
      %4032 = vmatpush.xpose.msra.mxu0 0.0
      %4033 = vmatpush.xpose.msra.mxu0 0.0
      %4034 = vmatpush.xpose.msra.mxu0 0.0
      %4035 = vmatpush.xpose.msra.mxu0 0.0
      %4036 = vmatpush.xpose.msra.mxu0 0.0
      %4037 = vmatpush.xpose.msra.mxu0 0.0
      %4038 = vmatpush.xpose.msra.mxu0 0.0
      %4039 = vmatpush.xpose.msra.mxu0 0.0
      %4040 = vmatpush.xpose.msra.mxu0 0.0
      %4041 = vmatpush.xpose.msra.mxu0 0.0
      %4042 = vmatpush.xpose.msra.mxu0 0.0
      %4043 = vmatpush.xpose.msra.mxu0 0.0
      %4044 = vmatpush.xpose.msra.mxu0 %v4028
      %4045 = vmatpush.xpose.msra.mxu0 %v4026
      %4046 = vmatmul.f32.gmra.mxu0 %v4022
      %v4047 = vpop.f32.mrf.mxu0
      %v4048 = vadd.f32 0.0, %v4047
      %4049 = vmatmul.f32.gmra.mxu0 %v4024
      %v4050 = vpop.f32.mrf.mxu0
      %v4051 = vadd.f32 0.0, %v4050
      %4052 = vdwg.mxu0
      %4053 = vrot.lane.b32.xlu0 %v3805, 96
      %v4054 = vpop.permute.xlu0 %4053
      %4055 = vrot.lane.b32.xlu0 %v3807, 96
      %v4056 = vpop.permute.xlu0 %4055
      %v4057 = vsel %vm471, %v3805, 0
      %v4059 = vsel %vm471, %v3807, 0
      %v4061 = vsel %vm471, %v4054, 0
      %v4063 = vsel %vm471, %v4056, 0
      %4065 = vmatpush.xpose.msra.mxu0 0.0
      %4066 = vmatpush.xpose.msra.mxu0 0.0
      %4067 = vmatpush.xpose.msra.mxu0 0.0
      %4068 = vmatpush.xpose.msra.mxu0 0.0
      %4069 = vmatpush.xpose.msra.mxu0 0.0
      %4070 = vmatpush.xpose.msra.mxu0 0.0
      %4071 = vmatpush.xpose.msra.mxu0 0.0
      %4072 = vmatpush.xpose.msra.mxu0 0.0
      %4073 = vmatpush.xpose.msra.mxu0 0.0
      %4074 = vmatpush.xpose.msra.mxu0 0.0
      %4075 = vmatpush.xpose.msra.mxu0 0.0
      %4076 = vmatpush.xpose.msra.mxu0 0.0
      %4077 = vmatpush.xpose.msra.mxu0 0.0
      %4078 = vmatpush.xpose.msra.mxu0 0.0
      %4079 = vmatpush.xpose.msra.mxu0 %v4063
      %4080 = vmatpush.xpose.msra.mxu0 %v4061
      %4081 = vmatmul.f32.gmra.mxu0 %v4057
      %v4082 = vpop.f32.mrf.mxu0
      %v4083 = vadd.f32 0.0, %v4082
      %4084 = vmatmul.f32.gmra.mxu0 %v4059
      %v4085 = vpop.f32.mrf.mxu0
      %v4086 = vadd.f32 0.0, %v4085
      %4087 = vdwg.mxu0
      %v4088 = vsel %vm368, %v3838, -inf
      %4089 = vmax.xlane.f32.xlu0 %v4088
      %v4090 = vpop.xlane.xlu0 %4089
      %v4091 = vsel %vm368, %v3841, -inf
      %4092 = vmax.xlane.f32.xlu0 %v4091
      %v4093 = vpop.xlane.xlu0 %4092
      %v4094 = vsel %vm368, %v3873, -inf
      %4095 = vmax.xlane.f32.xlu0 %v4094
      %v4096 = vpop.xlane.xlu0 %4095
      %v4097 = vsel %vm368, %v3876, -inf
      %4098 = vmax.xlane.f32.xlu0 %v4097
      %v4099 = vpop.xlane.xlu0 %4098
      %v4100 = vsel %vm368, %v3908, -inf
      %4101 = vmax.xlane.f32.xlu0 %v4100
      %v4102 = vpop.xlane.xlu0 %4101
      %v4103 = vsel %vm368, %v3911, -inf
      %4104 = vmax.xlane.f32.xlu0 %v4103
      %v4105 = vpop.xlane.xlu0 %4104
      %v4106 = vsel %vm368, %v3943, -inf
      %4107 = vmax.xlane.f32.xlu0 %v4106
      %v4108 = vpop.xlane.xlu0 %4107
      %v4109 = vsel %vm368, %v3946, -inf
      %4110 = vmax.xlane.f32.xlu0 %v4109
      %v4111 = vpop.xlane.xlu0 %4110
      %v4112 = vsel %vm368, %v3978, -inf
      %4113 = vmax.xlane.f32.xlu0 %v4112
      %v4114 = vpop.xlane.xlu0 %4113
      %v4115 = vsel %vm368, %v3981, -inf
      %4116 = vmax.xlane.f32.xlu0 %v4115
      %v4117 = vpop.xlane.xlu0 %4116
      %v4118 = vsel %vm368, %v4013, -inf
      %4119 = vmax.xlane.f32.xlu0 %v4118
      %v4120 = vpop.xlane.xlu0 %4119
      %v4121 = vsel %vm368, %v4016, -inf
      %4122 = vmax.xlane.f32.xlu0 %v4121
      %v4123 = vpop.xlane.xlu0 %4122
      %v4124 = vsel %vm368, %v4048, -inf
      %4125 = vmax.xlane.f32.xlu0 %v4124
      %v4126 = vpop.xlane.xlu0 %4125
      %v4127 = vsel %vm368, %v4051, -inf
      %4128 = vmax.xlane.f32.xlu0 %v4127
      %v4129 = vpop.xlane.xlu0 %4128
      %v4130 = vsel %vm368, %v4083, -inf
      %4131 = vmax.xlane.f32.xlu0 %v4130
      %v4132 = vpop.xlane.xlu0 %4131
      %v4133 = vsel %vm368, %v4086, -inf
      %4134 = vmax.xlane.f32.xlu0 %v4133
      %v4135 = vpop.xlane.xlu0 %4134
      %v4136 = vsub.f32 %v3838, %v4090
      %v4137 = vsub.f32 %v3841, %v4093
      %v4138 = vsub.f32 %v3873, %v4096
      %v4139 = vsub.f32 %v3876, %v4099
      %v4140 = vsub.f32 %v3908, %v4102
      %v4141 = vsub.f32 %v3911, %v4105
      %v4142 = vsub.f32 %v3943, %v4108
      %v4143 = vsub.f32 %v3946, %v4111
      %v4144 = vsub.f32 %v3978, %v4114
      %v4145 = vsub.f32 %v3981, %v4117
      %v4146 = vsub.f32 %v4013, %v4120
      %v4147 = vsub.f32 %v4016, %v4123
      %v4148 = vsub.f32 %v4048, %v4126
      %v4149 = vsub.f32 %v4051, %v4129
      %v4150 = vsub.f32 %v4083, %v4132
      %v4151 = vsub.f32 %v4086, %v4135
      %v4152 = vmul.f32 %v4136, 1.442695
      %v4153 = vpow.pop %v4152
      %v4154 = vmul.f32 %v4137, 1.442695
      %v4155 = vpow.pop %v4154
      %v4156 = vmul.f32 %v4138, 1.442695
      %v4157 = vpow.pop %v4156
      %v4158 = vmul.f32 %v4139, 1.442695
      %v4159 = vpow.pop %v4158
      %v4160 = vmul.f32 %v4140, 1.442695
      %v4161 = vpow.pop %v4160
      %v4162 = vmul.f32 %v4141, 1.442695
      %v4163 = vpow.pop %v4162
      %v4164 = vmul.f32 %v4142, 1.442695
      %v4165 = vpow.pop %v4164
      %v4166 = vmul.f32 %v4143, 1.442695
      %v4167 = vpow.pop %v4166
      %v4168 = vmul.f32 %v4144, 1.442695
      %v4169 = vpow.pop %v4168
      %v4170 = vmul.f32 %v4145, 1.442695
      %v4171 = vpow.pop %v4170
      %v4172 = vmul.f32 %v4146, 1.442695
      %v4173 = vpow.pop %v4172
      %v4174 = vmul.f32 %v4147, 1.442695
      %v4175 = vpow.pop %v4174
      %v4176 = vmul.f32 %v4148, 1.442695
      %v4177 = vpow.pop %v4176
      %v4178 = vmul.f32 %v4149, 1.442695
      %v4179 = vpow.pop %v4178
      %v4180 = vmul.f32 %v4150, 1.442695
      %v4181 = vpow.pop %v4180
      %v4182 = vmul.f32 %v4151, 1.442695
      %v4183 = vpow.pop %v4182
      %v4184 = vsel %vm368, %v4153, 0.0
      %4185 = vadd.xlane.f32.xlu0 %v4184
      %v4186 = vpop.xlane.xlu0 %4185
      %v4187 = vsel %vm368, %v4155, 0.0
      %4188 = vadd.xlane.f32.xlu0 %v4187
      %v4189 = vpop.xlane.xlu0 %4188
      %v4190 = vsel %vm368, %v4157, 0.0
      %4191 = vadd.xlane.f32.xlu0 %v4190
      %v4192 = vpop.xlane.xlu0 %4191
      %v4193 = vsel %vm368, %v4159, 0.0
      %4194 = vadd.xlane.f32.xlu0 %v4193
      %v4195 = vpop.xlane.xlu0 %4194
      %v4196 = vsel %vm368, %v4161, 0.0
      %4197 = vadd.xlane.f32.xlu0 %v4196
      %v4198 = vpop.xlane.xlu0 %4197
      %v4199 = vsel %vm368, %v4163, 0.0
      %4200 = vadd.xlane.f32.xlu0 %v4199
      %v4201 = vpop.xlane.xlu0 %4200
      %v4202 = vsel %vm368, %v4165, 0.0
      %4203 = vadd.xlane.f32.xlu0 %v4202
      %v4204 = vpop.xlane.xlu0 %4203
      %v4205 = vsel %vm368, %v4167, 0.0
      %4206 = vadd.xlane.f32.xlu0 %v4205
      %v4207 = vpop.xlane.xlu0 %4206
      %v4208 = vsel %vm368, %v4169, 0.0
      %4209 = vadd.xlane.f32.xlu0 %v4208
      %v4210 = vpop.xlane.xlu0 %4209
      %v4211 = vsel %vm368, %v4171, 0.0
      %4212 = vadd.xlane.f32.xlu0 %v4211
      %v4213 = vpop.xlane.xlu0 %4212
      %v4214 = vsel %vm368, %v4173, 0.0
      %4215 = vadd.xlane.f32.xlu0 %v4214
      %v4216 = vpop.xlane.xlu0 %4215
      %v4217 = vsel %vm368, %v4175, 0.0
      %4218 = vadd.xlane.f32.xlu0 %v4217
      %v4219 = vpop.xlane.xlu0 %4218
      %v4220 = vsel %vm368, %v4177, 0.0
      %4221 = vadd.xlane.f32.xlu0 %v4220
      %v4222 = vpop.xlane.xlu0 %4221
      %v4223 = vsel %vm368, %v4179, 0.0
      %4224 = vadd.xlane.f32.xlu0 %v4223
      %v4225 = vpop.xlane.xlu0 %4224
      %v4226 = vsel %vm368, %v4181, 0.0
      %4227 = vadd.xlane.f32.xlu0 %v4226
      %v4228 = vpop.xlane.xlu0 %4227
      %v4229 = vsel %vm368, %v4183, 0.0
      %4230 = vadd.xlane.f32.xlu0 %v4229
      %v4231 = vpop.xlane.xlu0 %4230
      %v4232 = vrcp.pop %v4186
      %v4233 = vrcp.pop %v4189
      %v4234 = vrcp.pop %v4192
      %v4235 = vrcp.pop %v4195
      %v4236 = vrcp.pop %v4198
      %v4237 = vrcp.pop %v4201
      %v4238 = vrcp.pop %v4204
      %v4239 = vrcp.pop %v4207
      %v4240 = vrcp.pop %v4210
      %v4241 = vrcp.pop %v4213
      %v4242 = vrcp.pop %v4216
      %v4243 = vrcp.pop %v4219
      %v4244 = vrcp.pop %v4222
      %v4245 = vrcp.pop %v4225
      %v4246 = vrcp.pop %v4228
      %v4247 = vrcp.pop %v4231
      %v4248 = vmul.f32 %v4153, %v4232
      %v4249 = vmul.f32 %v4155, %v4233
      %v4250 = vmul.f32 %v4157, %v4234
      %v4251 = vmul.f32 %v4159, %v4235
      %v4252 = vmul.f32 %v4161, %v4236
      %v4253 = vmul.f32 %v4163, %v4237
      %v4254 = vmul.f32 %v4165, %v4238
      %v4255 = vmul.f32 %v4167, %v4239
      %v4256 = vmul.f32 %v4169, %v4240
      %v4257 = vmul.f32 %v4171, %v4241
      %v4258 = vmul.f32 %v4173, %v4242
      %v4259 = vmul.f32 %v4175, %v4243
      %v4260 = vmul.f32 %v4177, %v4244
      %v4261 = vmul.f32 %v4179, %v4245
      %v4262 = vmul.f32 %v4181, %v4246
      %v4263 = vmul.f32 %v4183, %v4247
      %4264 = vrot.lane.b32.xlu0 %v3773, 64
      %v4265 = vpop.permute.xlu0 %4264
      %4266 = vrot.lane.b32.xlu0 %v3776, 64
      %v4267 = vpop.permute.xlu0 %4266
      %v4271 = vsel %vm368, %v4248, 0
      %v4274 = vsel %vm368, %v4249, 0
      %4276 = vmatpush.msra.mxu0 0.0
      %4277 = vmatpush.msra.mxu0 0.0
      %4278 = vmatpush.msra.mxu0 0.0
      %4279 = vmatpush.msra.mxu0 0.0
      %4280 = vmatpush.msra.mxu0 0.0
      %4281 = vmatpush.msra.mxu0 0.0
      %4282 = vmatpush.msra.mxu0 0.0
      %4283 = vmatpush.msra.mxu0 0.0
      %4284 = vmatpush.msra.mxu0 0.0
      %4285 = vmatpush.msra.mxu0 0.0
      %4286 = vmatpush.msra.mxu0 0.0
      %4287 = vmatpush.msra.mxu0 0.0
      %4288 = vmatpush.msra.mxu0 0.0
      %4289 = vmatpush.msra.mxu0 0.0
      %4290 = vmatpush.msra.mxu0 %v4267
      %4291 = vmatpush.msra.mxu0 %v4265
      %4292 = vmatmul.f32.gmra.mxu0 %v4271
      %v4293 = vpop.f32.mrf.mxu0
      %v4294 = vadd.f32 0.0, %v4293
      %4295 = vmatmul.f32.gmra.mxu0 %v4274
      %v4296 = vpop.f32.mrf.mxu0
      %v4297 = vadd.f32 0.0, %v4296
      %4298 = vdwg.mxu0
      %4299 = vrot.lane.b32.xlu0 %v3781, 64
      %v4300 = vpop.permute.xlu0 %4299
      %4301 = vrot.lane.b32.xlu0 %v3783, 64
      %v4302 = vpop.permute.xlu0 %4301
      %v4306 = vsel %vm368, %v4250, 0
      %v4309 = vsel %vm368, %v4251, 0
      %4311 = vmatpush.msra.mxu0 0.0
      %4312 = vmatpush.msra.mxu0 0.0
      %4313 = vmatpush.msra.mxu0 0.0
      %4314 = vmatpush.msra.mxu0 0.0
      %4315 = vmatpush.msra.mxu0 0.0
      %4316 = vmatpush.msra.mxu0 0.0
      %4317 = vmatpush.msra.mxu0 0.0
      %4318 = vmatpush.msra.mxu0 0.0
      %4319 = vmatpush.msra.mxu0 0.0
      %4320 = vmatpush.msra.mxu0 0.0
      %4321 = vmatpush.msra.mxu0 0.0
      %4322 = vmatpush.msra.mxu0 0.0
      %4323 = vmatpush.msra.mxu0 0.0
      %4324 = vmatpush.msra.mxu0 0.0
      %4325 = vmatpush.msra.mxu0 %v4302
      %4326 = vmatpush.msra.mxu0 %v4300
      %4327 = vmatmul.f32.gmra.mxu0 %v4306
      %v4328 = vpop.f32.mrf.mxu0
      %v4329 = vadd.f32 0.0, %v4328
      %4330 = vmatmul.f32.gmra.mxu0 %v4309
      %v4331 = vpop.f32.mrf.mxu0
      %v4332 = vadd.f32 0.0, %v4331
      %4333 = vdwg.mxu0
      %4334 = vrot.lane.b32.xlu0 %v3785, 64
      %v4335 = vpop.permute.xlu0 %4334
      %4336 = vrot.lane.b32.xlu0 %v3787, 64
      %v4337 = vpop.permute.xlu0 %4336
      %v4341 = vsel %vm368, %v4252, 0
      %v4344 = vsel %vm368, %v4253, 0
      %4346 = vmatpush.msra.mxu0 0.0
      %4347 = vmatpush.msra.mxu0 0.0
      %4348 = vmatpush.msra.mxu0 0.0
      %4349 = vmatpush.msra.mxu0 0.0
      %4350 = vmatpush.msra.mxu0 0.0
      %4351 = vmatpush.msra.mxu0 0.0
      %4352 = vmatpush.msra.mxu0 0.0
      %4353 = vmatpush.msra.mxu0 0.0
      %4354 = vmatpush.msra.mxu0 0.0
      %4355 = vmatpush.msra.mxu0 0.0
      %4356 = vmatpush.msra.mxu0 0.0
      %4357 = vmatpush.msra.mxu0 0.0
      %4358 = vmatpush.msra.mxu0 0.0
      %4359 = vmatpush.msra.mxu0 0.0
      %4360 = vmatpush.msra.mxu0 %v4337
      %4361 = vmatpush.msra.mxu0 %v4335
      %4362 = vmatmul.f32.gmra.mxu0 %v4341
      %v4363 = vpop.f32.mrf.mxu0
      %v4364 = vadd.f32 0.0, %v4363
      %4365 = vmatmul.f32.gmra.mxu0 %v4344
      %v4366 = vpop.f32.mrf.mxu0
      %v4367 = vadd.f32 0.0, %v4366
      %4368 = vdwg.mxu0
      %4369 = vrot.lane.b32.xlu0 %v3789, 64
      %v4370 = vpop.permute.xlu0 %4369
      %4371 = vrot.lane.b32.xlu0 %v3791, 64
      %v4372 = vpop.permute.xlu0 %4371
      %v4376 = vsel %vm368, %v4254, 0
      %v4379 = vsel %vm368, %v4255, 0
      %4381 = vmatpush.msra.mxu0 0.0
      %4382 = vmatpush.msra.mxu0 0.0
      %4383 = vmatpush.msra.mxu0 0.0
      %4384 = vmatpush.msra.mxu0 0.0
      %4385 = vmatpush.msra.mxu0 0.0
      %4386 = vmatpush.msra.mxu0 0.0
      %4387 = vmatpush.msra.mxu0 0.0
      %4388 = vmatpush.msra.mxu0 0.0
      %4389 = vmatpush.msra.mxu0 0.0
      %4390 = vmatpush.msra.mxu0 0.0
      %4391 = vmatpush.msra.mxu0 0.0
      %4392 = vmatpush.msra.mxu0 0.0
      %4393 = vmatpush.msra.mxu0 0.0
      %4394 = vmatpush.msra.mxu0 0.0
      %4395 = vmatpush.msra.mxu0 %v4372
      %4396 = vmatpush.msra.mxu0 %v4370
      %4397 = vmatmul.f32.gmra.mxu0 %v4376
      %v4398 = vpop.f32.mrf.mxu0
      %v4399 = vadd.f32 0.0, %v4398
      %4400 = vmatmul.f32.gmra.mxu0 %v4379
      %v4401 = vpop.f32.mrf.mxu0
      %v4402 = vadd.f32 0.0, %v4401
      %4403 = vdwg.mxu0
      %4404 = vrot.lane.b32.xlu0 %v3793, 64
      %v4405 = vpop.permute.xlu0 %4404
      %4406 = vrot.lane.b32.xlu0 %v3795, 64
      %v4407 = vpop.permute.xlu0 %4406
      %v4411 = vsel %vm368, %v4256, 0
      %v4414 = vsel %vm368, %v4257, 0
      %4416 = vmatpush.msra.mxu0 0.0
      %4417 = vmatpush.msra.mxu0 0.0
      %4418 = vmatpush.msra.mxu0 0.0
      %4419 = vmatpush.msra.mxu0 0.0
      %4420 = vmatpush.msra.mxu0 0.0
      %4421 = vmatpush.msra.mxu0 0.0
      %4422 = vmatpush.msra.mxu0 0.0
      %4423 = vmatpush.msra.mxu0 0.0
      %4424 = vmatpush.msra.mxu0 0.0
      %4425 = vmatpush.msra.mxu0 0.0
      %4426 = vmatpush.msra.mxu0 0.0
      %4427 = vmatpush.msra.mxu0 0.0
      %4428 = vmatpush.msra.mxu0 0.0
      %4429 = vmatpush.msra.mxu0 0.0
      %4430 = vmatpush.msra.mxu0 %v4407
      %4431 = vmatpush.msra.mxu0 %v4405
      %4432 = vmatmul.f32.gmra.mxu0 %v4411
      %v4433 = vpop.f32.mrf.mxu0
      %v4434 = vadd.f32 0.0, %v4433
      %4435 = vmatmul.f32.gmra.mxu0 %v4414
      %v4436 = vpop.f32.mrf.mxu0
      %v4437 = vadd.f32 0.0, %v4436
      %4438 = vdwg.mxu0
      %4439 = vrot.lane.b32.xlu0 %v3797, 64
      %v4440 = vpop.permute.xlu0 %4439
      %4441 = vrot.lane.b32.xlu0 %v3799, 64
      %v4442 = vpop.permute.xlu0 %4441
      %v4446 = vsel %vm368, %v4258, 0
      %v4449 = vsel %vm368, %v4259, 0
      %4451 = vmatpush.msra.mxu0 0.0
      %4452 = vmatpush.msra.mxu0 0.0
      %4453 = vmatpush.msra.mxu0 0.0
      %4454 = vmatpush.msra.mxu0 0.0
      %4455 = vmatpush.msra.mxu0 0.0
      %4456 = vmatpush.msra.mxu0 0.0
      %4457 = vmatpush.msra.mxu0 0.0
      %4458 = vmatpush.msra.mxu0 0.0
      %4459 = vmatpush.msra.mxu0 0.0
      %4460 = vmatpush.msra.mxu0 0.0
      %4461 = vmatpush.msra.mxu0 0.0
      %4462 = vmatpush.msra.mxu0 0.0
      %4463 = vmatpush.msra.mxu0 0.0
      %4464 = vmatpush.msra.mxu0 0.0
      %4465 = vmatpush.msra.mxu0 %v4442
      %4466 = vmatpush.msra.mxu0 %v4440
      %4467 = vmatmul.f32.gmra.mxu0 %v4446
      %v4468 = vpop.f32.mrf.mxu0
      %v4469 = vadd.f32 0.0, %v4468
      %4470 = vmatmul.f32.gmra.mxu0 %v4449
      %v4471 = vpop.f32.mrf.mxu0
      %v4472 = vadd.f32 0.0, %v4471
      %4473 = vdwg.mxu0
      %4474 = vrot.lane.b32.xlu0 %v3801, 64
      %v4475 = vpop.permute.xlu0 %4474
      %4476 = vrot.lane.b32.xlu0 %v3803, 64
      %v4477 = vpop.permute.xlu0 %4476
      %v4481 = vsel %vm368, %v4260, 0
      %v4484 = vsel %vm368, %v4261, 0
      %4486 = vmatpush.msra.mxu0 0.0
      %4487 = vmatpush.msra.mxu0 0.0
      %4488 = vmatpush.msra.mxu0 0.0
      %4489 = vmatpush.msra.mxu0 0.0
      %4490 = vmatpush.msra.mxu0 0.0
      %4491 = vmatpush.msra.mxu0 0.0
      %4492 = vmatpush.msra.mxu0 0.0
      %4493 = vmatpush.msra.mxu0 0.0
      %4494 = vmatpush.msra.mxu0 0.0
      %4495 = vmatpush.msra.mxu0 0.0
      %4496 = vmatpush.msra.mxu0 0.0
      %4497 = vmatpush.msra.mxu0 0.0
      %4498 = vmatpush.msra.mxu0 0.0
      %4499 = vmatpush.msra.mxu0 0.0
      %4500 = vmatpush.msra.mxu0 %v4477
      %4501 = vmatpush.msra.mxu0 %v4475
      %4502 = vmatmul.f32.gmra.mxu0 %v4481
      %v4503 = vpop.f32.mrf.mxu0
      %v4504 = vadd.f32 0.0, %v4503
      %4505 = vmatmul.f32.gmra.mxu0 %v4484
      %v4506 = vpop.f32.mrf.mxu0
      %v4507 = vadd.f32 0.0, %v4506
      %4508 = vdwg.mxu0
      %4509 = vrot.lane.b32.xlu0 %v3805, 64
      %v4510 = vpop.permute.xlu0 %4509
      %4511 = vrot.lane.b32.xlu0 %v3807, 64
      %v4512 = vpop.permute.xlu0 %4511
      %v4516 = vsel %vm368, %v4262, 0
      %v4519 = vsel %vm368, %v4263, 0
      %4521 = vmatpush.msra.mxu0 0.0
      %4522 = vmatpush.msra.mxu0 0.0
      %4523 = vmatpush.msra.mxu0 0.0
      %4524 = vmatpush.msra.mxu0 0.0
      %4525 = vmatpush.msra.mxu0 0.0
      %4526 = vmatpush.msra.mxu0 0.0
      %4527 = vmatpush.msra.mxu0 0.0
      %4528 = vmatpush.msra.mxu0 0.0
      %4529 = vmatpush.msra.mxu0 0.0
      %4530 = vmatpush.msra.mxu0 0.0
      %4531 = vmatpush.msra.mxu0 0.0
      %4532 = vmatpush.msra.mxu0 0.0
      %4533 = vmatpush.msra.mxu0 0.0
      %4534 = vmatpush.msra.mxu0 0.0
      %4535 = vmatpush.msra.mxu0 %v4512
      %4536 = vmatpush.msra.mxu0 %v4510
      %4537 = vmatmul.f32.gmra.mxu0 %v4516
      %v4538 = vpop.f32.mrf.mxu0
      %v4539 = vadd.f32 0.0, %v4538
      %4540 = vmatmul.f32.gmra.mxu0 %v4519
      %v4541 = vpop.f32.mrf.mxu0
      %v4542 = vadd.f32 0.0, %v4541
      %4543 = vdwg.mxu0
      %4544 = vst.msk [vmem:[#allocation2] sm:$0xff] %vm471, %v4294
      %4545 = vst.msk [vmem:[#allocation2 + $0x8] sm:$0xff] %vm471, %v4297
      %4548 = vrot.lane.b32.xlu0 %v4329, 4
      %v4549 = vpop.permute.xlu0 %4548
      %4550 = vrot.lane.b32.xlu0 %v4332, 4
      %v4551 = vpop.permute.xlu0 %4550
      %4554 = vst.msk [vmem:[#allocation2] sm:$0xff] %vm1214, %v4549
      %4555 = vst.msk [vmem:[#allocation2 + $0x8] sm:$0xff] %vm1214, %v4551
      %4558 = vrot.lane.b32.xlu0 %v4364, 8
      %v4559 = vpop.permute.xlu0 %4558
      %4560 = vrot.lane.b32.xlu0 %v4367, 8
      %v4561 = vpop.permute.xlu0 %4560
      %4564 = vst.msk [vmem:[#allocation2] sm:$0xff] %vm1225, %v4559
      %4565 = vst.msk [vmem:[#allocation2 + $0x8] sm:$0xff] %vm1225, %v4561
      %4568 = vrot.lane.b32.xlu0 %v4399, 12
      %v4569 = vpop.permute.xlu0 %4568
      %4570 = vrot.lane.b32.xlu0 %v4402, 12
      %v4571 = vpop.permute.xlu0 %4570
      %4574 = vst.msk [vmem:[#allocation2] sm:$0xff] %vm1236, %v4569
      %4575 = vst.msk [vmem:[#allocation2 + $0x8] sm:$0xff] %vm1236, %v4571
      %4578 = vrot.lane.b32.xlu0 %v4434, 16
      %v4579 = vpop.permute.xlu0 %4578
      %4580 = vrot.lane.b32.xlu0 %v4437, 16
      %v4581 = vpop.permute.xlu0 %4580
      %4584 = vst.msk [vmem:[#allocation2] sm:$0xff] %vm1247, %v4579
      %4585 = vst.msk [vmem:[#allocation2 + $0x8] sm:$0xff] %vm1247, %v4581
      %4588 = vrot.lane.b32.xlu0 %v4469, 20
      %v4589 = vpop.permute.xlu0 %4588
      %4590 = vrot.lane.b32.xlu0 %v4472, 20
      %v4591 = vpop.permute.xlu0 %4590
      %4594 = vst.msk [vmem:[#allocation2] sm:$0xff] %vm1258, %v4589
      %4595 = vst.msk [vmem:[#allocation2 + $0x8] sm:$0xff] %vm1258, %v4591
      %4598 = vrot.lane.b32.xlu0 %v4504, 24
      %v4599 = vpop.permute.xlu0 %4598
      %4600 = vrot.lane.b32.xlu0 %v4507, 24
      %v4601 = vpop.permute.xlu0 %4600
      %4604 = vst.msk [vmem:[#allocation2] sm:$0xff] %vm1269, %v4599
      %4605 = vst.msk [vmem:[#allocation2 + $0x8] sm:$0xff] %vm1269, %v4601
      %4608 = vrot.lane.b32.xlu0 %v4539, 28
      %v4609 = vpop.permute.xlu0 %4608
      %4610 = vrot.lane.b32.xlu0 %v4542, 28
      %v4611 = vpop.permute.xlu0 %4610
      %4614 = vst.msk [vmem:[#allocation2] sm:$0xff] %vm1280, %v4609
      %4615 = vst.msk [vmem:[#allocation2 + $0x8] sm:$0xff] %vm1280, %v4611
      %v4616 = vld [vmem:[#allocation2] sm:$0xff]
      %v4617 = vld [vmem:[#allocation2 + $0x8] sm:$0xff]
      %s4618 = scalar_lea.vmem %s5, 96
      %v4619 = vld [vmem:[%s4618] sm:$0xff]
      %v4620 = vld [vmem:[%s4618 + $0x8] sm:$0xff]
      %v4621 = vld [vmem:[%s4618 + $0x10] sm:$0xff]
      %v4622 = vld [vmem:[%s4618 + $0x18] sm:$0xff]
      %v4623 = vperm.slane %v3738, 0
      %v4625 = vsel %vm407, %v4616, 0
      %v4628 = vsel %vm407, %v4617, 0
      %4630 = vmatpush.msra.mxu0 0.0
      %4631 = vmatpush.msra.mxu0 0.0
      %4632 = vmatpush.msra.mxu0 0.0
      %4633 = vmatpush.msra.mxu0 0.0
      %4634 = vmatpush.msra.mxu0 0.0
      %4635 = vmatpush.msra.mxu0 0.0
      %4636 = vmatpush.msra.mxu0 0.0
      %4637 = vmatpush.msra.mxu0 0.0
      %4638 = vmatpush.msra.mxu0 0.0
      %4639 = vmatpush.msra.mxu0 0.0
      %4640 = vmatpush.msra.mxu0 0.0
      %4641 = vmatpush.msra.mxu0 0.0
      %4642 = vmatpush.msra.mxu0 %v4622
      %4643 = vmatpush.msra.mxu0 %v4621
      %4644 = vmatpush.msra.mxu0 %v4620
      %4645 = vmatpush.msra.mxu0 %v4619
      %4646 = vmatmul.f32.gmra.mxu0 %v4625
      %v4647 = vpop.f32.mrf.mxu0
      %v4648 = vadd.f32 %v4623, %v4647
      %4649 = vmatmul.f32.gmra.mxu0 %v4628
      %v4650 = vpop.f32.mrf.mxu0
      %v4651 = vadd.f32 %v4623, %v4650
      %4652 = vdwg.mxu0
      %v4653 = vadd.f32 %v3735, %v4648
      %v4654 = vadd.f32 %v3736, %v4651
      %v4655 = vsel %vm407, %v4653, 0.0
      %4656 = vadd.xlane.f32.xlu0 %v4655
      %v4657 = vpop.xlane.xlu0 %4656
      %v4658 = vsel %vm407, %v4654, 0.0
      %4659 = vadd.xlane.f32.xlu0 %v4658
      %v4660 = vpop.xlane.xlu0 %4659
      %v4661 = vmul.f32 %v4657, %v1333
      %v4662 = vmul.f32 %v4660, %v1333
      %v4663 = vmul.f32 %v4653, %v4653
      %v4664 = vmul.f32 %v4654, %v4654
      %v4665 = vsel %vm407, %v4663, 0.0
      %4666 = vadd.xlane.f32.xlu0 %v4665
      %v4667 = vpop.xlane.xlu0 %4666
      %v4668 = vsel %vm407, %v4664, 0.0
      %4669 = vadd.xlane.f32.xlu0 %v4668
      %v4670 = vpop.xlane.xlu0 %4669
      %v4671 = vmul.f32 %v4667, %v1333
      %v4672 = vmul.f32 %v4670, %v1333
      %v4673 = vmul.f32 %v4661, %v4661
      %v4674 = vmul.f32 %v4662, %v4662
      %v4675 = vsub.f32 %v4671, %v4673
      %v4676 = vsub.f32 %v4672, %v4674
      %v4677 = vsub.f32 %v4653, %v4661
      %v4678 = vsub.f32 %v4654, %v4662
      %v4679 = vadd.f32 %v4675, 1e-05
      %v4680 = vadd.f32 %v4676, 1e-05
      %v4681 = vrsqrt.pop %v4679
      %v4682 = vmul.f32 %v4681, %v4679
      %v4683 = vmul.f32 %v4682, %v4681
      %v4684 = vmul.f32 0.5, %v4683
      %v4685 = vsub.f32 1.5, %v4684
      %v4686 = vmul.f32 %v4681, %v4685
      %vm4687 = vweird.f32 %v4679
      %vm4688 = vweird.f32 %v4681
      %vm4689 = vmor %vm4687, %vm4688
      %v4690 = vsel %vm4689, %v4681, %v4686
      %v4691 = vrsqrt.pop %v4680
      %v4692 = vmul.f32 %v4691, %v4680
      %v4693 = vmul.f32 %v4692, %v4691
      %v4694 = vmul.f32 0.5, %v4693
      %v4695 = vsub.f32 1.5, %v4694
      %v4696 = vmul.f32 %v4691, %v4695
      %vm4697 = vweird.f32 %v4680
      %vm4698 = vweird.f32 %v4691
      %vm4699 = vmor %vm4697, %vm4698
      %v4700 = vsel %vm4699, %v4691, %v4696
      %v4701 = vmul.f32 %v4677, %v4690
      %v4702 = vmul.f32 %v4678, %v4700
      %v4703 = vperm.slane %v3738, 2
      %v4704 = vmul.f32 %v4701, %v4703
      %v4705 = vmul.f32 %v4702, %v4703
      %v4706 = vperm.slane %v3738, 3
      %v4707 = vadd.f32 %v4704, %v4706
      %v4708 = vadd.f32 %v4705, %v4706
      %s4709 = scalar_lea.vmem %s6, 96
      %v4710 = vld [vmem:[%s4709] sm:$0xff]
      %v4711 = vld [vmem:[%s4709 + $0x8] sm:$0xff]
      %v4712 = vld [vmem:[%s4709 + $0x10] sm:$0xff]
      %v4713 = vld [vmem:[%s4709 + $0x18] sm:$0xff]
      %s4714 = scalar_lea.vmem %s7, 3
      %v4715 = vld [vmem:[%s4714] sm:$0x1]
      %v4717 = vperm.slane %v4715, 0
      %v4720 = vsel %vm407, %v4707, 0
      %v4723 = vsel %vm407, %v4708, 0
      %4725 = vmatpush.msra.mxu0 0.0
      %4726 = vmatpush.msra.mxu0 0.0
      %4727 = vmatpush.msra.mxu0 0.0
      %4728 = vmatpush.msra.mxu0 0.0
      %4729 = vmatpush.msra.mxu0 0.0
      %4730 = vmatpush.msra.mxu0 0.0
      %4731 = vmatpush.msra.mxu0 0.0
      %4732 = vmatpush.msra.mxu0 0.0
      %4733 = vmatpush.msra.mxu0 0.0
      %4734 = vmatpush.msra.mxu0 0.0
      %4735 = vmatpush.msra.mxu0 0.0
      %4736 = vmatpush.msra.mxu0 0.0
      %4737 = vmatpush.msra.mxu0 %v4713
      %4738 = vmatpush.msra.mxu0 %v4712
      %4739 = vmatpush.msra.mxu0 %v4711
      %4740 = vmatpush.msra.mxu0 %v4710
      %4741 = vmatmul.f32.gmra.mxu0 %v4720
      %v4742 = vpop.f32.mrf.mxu0
      %v4743 = vadd.f32 %v4717, %v4742
      %4744 = vmatmul.f32.gmra.mxu0 %v4723
      %v4745 = vpop.f32.mrf.mxu0
      %v4746 = vadd.f32 %v4717, %v4745
      %4747 = vdwg.mxu0
      %v4748 = vmax.f32 %v4743, 0.0
      %v4749 = vmax.f32 %v4746, 0.0
      %s4750 = scalar_lea.vmem %s8, 384
      %v4751 = vld [vmem:[%s4750] sm:$0xff]
      %v4752 = vld [vmem:[%s4750 + $0x8] sm:$0xff]
      %v4753 = vld [vmem:[%s4750 + $0x10] sm:$0xff]
      %v4754 = vld [vmem:[%s4750 + $0x18] sm:$0xff]
      %v4755 = vld [vmem:[%s4750 + $0x20] sm:$0xff]
      %v4756 = vld [vmem:[%s4750 + $0x28] sm:$0xff]
      %v4757 = vld [vmem:[%s4750 + $0x30] sm:$0xff]
      %v4758 = vld [vmem:[%s4750 + $0x38] sm:$0xff]
      %v4759 = vld [vmem:[%s4750 + $0x40] sm:$0xff]
      %v4760 = vld [vmem:[%s4750 + $0x48] sm:$0xff]
      %v4761 = vld [vmem:[%s4750 + $0x50] sm:$0xff]
      %v4762 = vld [vmem:[%s4750 + $0x58] sm:$0xff]
      %v4763 = vld [vmem:[%s4750 + $0x60] sm:$0xff]
      %v4764 = vld [vmem:[%s4750 + $0x68] sm:$0xff]
      %v4765 = vld [vmem:[%s4750 + $0x70] sm:$0xff]
      %v4766 = vld [vmem:[%s4750 + $0x78] sm:$0xff]
      %v4767 = vperm.slane %v3738, 1
      %4768 = vmatpush.msra.mxu0 %v4766
      %4769 = vmatpush.msra.mxu0 %v4765
      %4770 = vmatpush.msra.mxu0 %v4764
      %4771 = vmatpush.msra.mxu0 %v4763
      %4772 = vmatpush.msra.mxu0 %v4762
      %4773 = vmatpush.msra.mxu0 %v4761
      %4774 = vmatpush.msra.mxu0 %v4760
      %4775 = vmatpush.msra.mxu0 %v4759
      %4776 = vmatpush.msra.mxu0 %v4758
      %4777 = vmatpush.msra.mxu0 %v4757
      %4778 = vmatpush.msra.mxu0 %v4756
      %4779 = vmatpush.msra.mxu0 %v4755
      %4780 = vmatpush.msra.mxu0 %v4754
      %4781 = vmatpush.msra.mxu0 %v4753
      %4782 = vmatpush.msra.mxu0 %v4752
      %4783 = vmatpush.msra.mxu0 %v4751
      %4784 = vmatmul.f32.gmra.mxu0 %v4748
      %v4785 = vpop.f32.mrf.mxu0
      %v4786 = vadd.f32 %v4767, %v4785
      %4787 = vmatmul.f32.gmra.mxu0 %v4749
      %v4788 = vpop.f32.mrf.mxu0
      %v4789 = vadd.f32 %v4767, %v4788
      %4790 = vdwg.mxu0
      %v4791 = vadd.f32 %v4707, %v4786
      %v4792 = vadd.f32 %v4708, %v4789
      %v4793 = vsel %vm407, %v4791, 0.0
      %4794 = vadd.xlane.f32.xlu0 %v4793
      %v4795 = vpop.xlane.xlu0 %4794
      %v4796 = vsel %vm407, %v4792, 0.0
      %4797 = vadd.xlane.f32.xlu0 %v4796
      %v4798 = vpop.xlane.xlu0 %4797
      %v4799 = vmul.f32 %v4795, %v1333
      %v4800 = vmul.f32 %v4798, %v1333
      %v4801 = vmul.f32 %v4791, %v4791
      %v4802 = vmul.f32 %v4792, %v4792
      %v4803 = vsel %vm407, %v4801, 0.0
      %4804 = vadd.xlane.f32.xlu0 %v4803
      %v4805 = vpop.xlane.xlu0 %4804
      %v4806 = vsel %vm407, %v4802, 0.0
      %4807 = vadd.xlane.f32.xlu0 %v4806
      %v4808 = vpop.xlane.xlu0 %4807
      %v4809 = vmul.f32 %v4805, %v1333
      %v4810 = vmul.f32 %v4808, %v1333
      %v4811 = vmul.f32 %v4799, %v4799
      %v4812 = vmul.f32 %v4800, %v4800
      %v4813 = vsub.f32 %v4809, %v4811
      %v4814 = vsub.f32 %v4810, %v4812
      %v4815 = vsub.f32 %v4791, %v4799
      %v4816 = vsub.f32 %v4792, %v4800
      %v4817 = vadd.f32 %v4813, 1e-05
      %v4818 = vadd.f32 %v4814, 1e-05
      %v4819 = vrsqrt.pop %v4817
      %v4820 = vmul.f32 %v4819, %v4817
      %v4821 = vmul.f32 %v4820, %v4819
      %v4822 = vmul.f32 0.5, %v4821
      %v4823 = vsub.f32 1.5, %v4822
      %v4824 = vmul.f32 %v4819, %v4823
      %vm4825 = vweird.f32 %v4817
      %vm4826 = vweird.f32 %v4819
      %vm4827 = vmor %vm4825, %vm4826
      %v4828 = vsel %vm4827, %v4819, %v4824
      %v4829 = vrsqrt.pop %v4818
      %v4830 = vmul.f32 %v4829, %v4818
      %v4831 = vmul.f32 %v4830, %v4829
      %v4832 = vmul.f32 0.5, %v4831
      %v4833 = vsub.f32 1.5, %v4832
      %v4834 = vmul.f32 %v4829, %v4833
      %vm4835 = vweird.f32 %v4818
      %vm4836 = vweird.f32 %v4829
      %vm4837 = vmor %vm4835, %vm4836
      %v4838 = vsel %vm4837, %v4829, %v4834
      %v4839 = vmul.f32 %v4815, %v4828
      %v4840 = vmul.f32 %v4816, %v4838
      %v4841 = vperm.slane %v3738, 4
      %v4842 = vmul.f32 %v4839, %v4841
      %v4843 = vmul.f32 %v4840, %v4841
      %v4844 = vperm.slane %v3738, 5
      %v4845 = vadd.f32 %v4842, %v4844
      %v4846 = vadd.f32 %v4843, %v4844
      %s4847 = scalar_lea.vmem %s9, 32
      %v4848 = vld [vmem:[%s4847] sm:$0x3f]
      %s4849 = scalar_lea.vmem %s3, 128
      %v4850 = vld [vmem:[%s4849] sm:$0xff]
      %v4851 = vld [vmem:[%s4849 + $0x8] sm:$0xff]
      %v4852 = vld [vmem:[%s4849 + $0x10] sm:$0xff]
      %v4853 = vld [vmem:[%s4849 + $0x18] sm:$0xff]
      %s4854 = scalar_lea.vmem %s4, 4
      %v4855 = vld [vmem:[%s4854] sm:$0x1]
      %v4857 = vperm.slane %v4855, 0
      %v4860 = vsel %vm407, %v4845, 0
      %v4863 = vsel %vm407, %v4846, 0
      %4865 = vmatpush.msra.mxu0 0.0
      %4866 = vmatpush.msra.mxu0 0.0
      %4867 = vmatpush.msra.mxu0 0.0
      %4868 = vmatpush.msra.mxu0 0.0
      %4869 = vmatpush.msra.mxu0 0.0
      %4870 = vmatpush.msra.mxu0 0.0
      %4871 = vmatpush.msra.mxu0 0.0
      %4872 = vmatpush.msra.mxu0 0.0
      %4873 = vmatpush.msra.mxu0 0.0
      %4874 = vmatpush.msra.mxu0 0.0
      %4875 = vmatpush.msra.mxu0 0.0
      %4876 = vmatpush.msra.mxu0 0.0
      %4877 = vmatpush.msra.mxu0 %v4853
      %4878 = vmatpush.msra.mxu0 %v4852
      %4879 = vmatpush.msra.mxu0 %v4851
      %4880 = vmatpush.msra.mxu0 %v4850
      %4881 = vmatmul.f32.gmra.mxu0 %v4860
      %v4882 = vpop.f32.mrf.mxu0
      %v4883 = vadd.f32 %v4857, %v4882
      %4884 = vmatmul.f32.gmra.mxu0 %v4863
      %v4885 = vpop.f32.mrf.mxu0
      %v4886 = vadd.f32 %v4857, %v4885
      %4887 = vdwg.mxu0
      %4890 = vrot.lane.b32.xlu0 %v4883, 124
      %v4891 = vpop.permute.xlu0 %4890
      %4892 = vrot.lane.b32.xlu0 %v4886, 124
      %v4893 = vpop.permute.xlu0 %4892
      %4894 = vrot.lane.b32.xlu0 %v4883, 120
      %v4895 = vpop.permute.xlu0 %4894
      %4896 = vrot.lane.b32.xlu0 %v4886, 120
      %v4897 = vpop.permute.xlu0 %4896
      %4898 = vrot.lane.b32.xlu0 %v4883, 116
      %v4899 = vpop.permute.xlu0 %4898
      %4900 = vrot.lane.b32.xlu0 %v4886, 116
      %v4901 = vpop.permute.xlu0 %4900
      %4902 = vrot.lane.b32.xlu0 %v4883, 112
      %v4903 = vpop.permute.xlu0 %4902
      %4904 = vrot.lane.b32.xlu0 %v4886, 112
      %v4905 = vpop.permute.xlu0 %4904
      %4906 = vrot.lane.b32.xlu0 %v4883, 108
      %v4907 = vpop.permute.xlu0 %4906
      %4908 = vrot.lane.b32.xlu0 %v4886, 108
      %v4909 = vpop.permute.xlu0 %4908
      %4910 = vrot.lane.b32.xlu0 %v4883, 104
      %v4911 = vpop.permute.xlu0 %4910
      %4912 = vrot.lane.b32.xlu0 %v4886, 104
      %v4913 = vpop.permute.xlu0 %4912
      %4914 = vrot.lane.b32.xlu0 %v4883, 100
      %v4915 = vpop.permute.xlu0 %4914
      %4916 = vrot.lane.b32.xlu0 %v4886, 100
      %v4917 = vpop.permute.xlu0 %4916
      %4918 = vrot.lane.b32.xlu0 %v4883, 96
      %v4919 = vpop.permute.xlu0 %4918
      %4920 = vrot.lane.b32.xlu0 %v4886, 96
      %v4921 = vpop.permute.xlu0 %4920
      %v4922 = vsel %vm471, %v4883, 0
      %v4924 = vsel %vm471, %v4886, 0
      %v4926 = vsel %vm471, %v4919, 0
      %v4928 = vsel %vm471, %v4921, 0
      %4930 = vmatpush.xpose.msra.mxu0 0.0
      %4931 = vmatpush.xpose.msra.mxu0 0.0
      %4932 = vmatpush.xpose.msra.mxu0 0.0
      %4933 = vmatpush.xpose.msra.mxu0 0.0
      %4934 = vmatpush.xpose.msra.mxu0 0.0
      %4935 = vmatpush.xpose.msra.mxu0 0.0
      %4936 = vmatpush.xpose.msra.mxu0 0.0
      %4937 = vmatpush.xpose.msra.mxu0 0.0
      %4938 = vmatpush.xpose.msra.mxu0 0.0
      %4939 = vmatpush.xpose.msra.mxu0 0.0
      %4940 = vmatpush.xpose.msra.mxu0 0.0
      %4941 = vmatpush.xpose.msra.mxu0 0.0
      %4942 = vmatpush.xpose.msra.mxu0 0.0
      %4943 = vmatpush.xpose.msra.mxu0 0.0
      %4944 = vmatpush.xpose.msra.mxu0 %v4928
      %4945 = vmatpush.xpose.msra.mxu0 %v4926
      %4946 = vmatmul.f32.gmra.mxu0 %v4922
      %v4947 = vpop.f32.mrf.mxu0
      %v4948 = vadd.f32 0.0, %v4947
      %4949 = vmatmul.f32.gmra.mxu0 %v4924
      %v4950 = vpop.f32.mrf.mxu0
      %v4951 = vadd.f32 0.0, %v4950
      %4952 = vdwg.mxu0
      %4953 = vrot.lane.b32.xlu0 %v4891, 96
      %v4954 = vpop.permute.xlu0 %4953
      %4955 = vrot.lane.b32.xlu0 %v4893, 96
      %v4956 = vpop.permute.xlu0 %4955
      %v4957 = vsel %vm471, %v4891, 0
      %v4959 = vsel %vm471, %v4893, 0
      %v4961 = vsel %vm471, %v4954, 0
      %v4963 = vsel %vm471, %v4956, 0
      %4965 = vmatpush.xpose.msra.mxu0 0.0
      %4966 = vmatpush.xpose.msra.mxu0 0.0
      %4967 = vmatpush.xpose.msra.mxu0 0.0
      %4968 = vmatpush.xpose.msra.mxu0 0.0
      %4969 = vmatpush.xpose.msra.mxu0 0.0
      %4970 = vmatpush.xpose.msra.mxu0 0.0
      %4971 = vmatpush.xpose.msra.mxu0 0.0
      %4972 = vmatpush.xpose.msra.mxu0 0.0
      %4973 = vmatpush.xpose.msra.mxu0 0.0
      %4974 = vmatpush.xpose.msra.mxu0 0.0
      %4975 = vmatpush.xpose.msra.mxu0 0.0
      %4976 = vmatpush.xpose.msra.mxu0 0.0
      %4977 = vmatpush.xpose.msra.mxu0 0.0
      %4978 = vmatpush.xpose.msra.mxu0 0.0
      %4979 = vmatpush.xpose.msra.mxu0 %v4963
      %4980 = vmatpush.xpose.msra.mxu0 %v4961
      %4981 = vmatmul.f32.gmra.mxu0 %v4957
      %v4982 = vpop.f32.mrf.mxu0
      %v4983 = vadd.f32 0.0, %v4982
      %4984 = vmatmul.f32.gmra.mxu0 %v4959
      %v4985 = vpop.f32.mrf.mxu0
      %v4986 = vadd.f32 0.0, %v4985
      %4987 = vdwg.mxu0
      %4988 = vrot.lane.b32.xlu0 %v4895, 96
      %v4989 = vpop.permute.xlu0 %4988
      %4990 = vrot.lane.b32.xlu0 %v4897, 96
      %v4991 = vpop.permute.xlu0 %4990
      %v4992 = vsel %vm471, %v4895, 0
      %v4994 = vsel %vm471, %v4897, 0
      %v4996 = vsel %vm471, %v4989, 0
      %v4998 = vsel %vm471, %v4991, 0
      %5000 = vmatpush.xpose.msra.mxu0 0.0
      %5001 = vmatpush.xpose.msra.mxu0 0.0
      %5002 = vmatpush.xpose.msra.mxu0 0.0
      %5003 = vmatpush.xpose.msra.mxu0 0.0
      %5004 = vmatpush.xpose.msra.mxu0 0.0
      %5005 = vmatpush.xpose.msra.mxu0 0.0
      %5006 = vmatpush.xpose.msra.mxu0 0.0
      %5007 = vmatpush.xpose.msra.mxu0 0.0
      %5008 = vmatpush.xpose.msra.mxu0 0.0
      %5009 = vmatpush.xpose.msra.mxu0 0.0
      %5010 = vmatpush.xpose.msra.mxu0 0.0
      %5011 = vmatpush.xpose.msra.mxu0 0.0
      %5012 = vmatpush.xpose.msra.mxu0 0.0
      %5013 = vmatpush.xpose.msra.mxu0 0.0
      %5014 = vmatpush.xpose.msra.mxu0 %v4998
      %5015 = vmatpush.xpose.msra.mxu0 %v4996
      %5016 = vmatmul.f32.gmra.mxu0 %v4992
      %v5017 = vpop.f32.mrf.mxu0
      %v5018 = vadd.f32 0.0, %v5017
      %5019 = vmatmul.f32.gmra.mxu0 %v4994
      %v5020 = vpop.f32.mrf.mxu0
      %v5021 = vadd.f32 0.0, %v5020
      %5022 = vdwg.mxu0
      %5023 = vrot.lane.b32.xlu0 %v4899, 96
      %v5024 = vpop.permute.xlu0 %5023
      %5025 = vrot.lane.b32.xlu0 %v4901, 96
      %v5026 = vpop.permute.xlu0 %5025
      %v5027 = vsel %vm471, %v4899, 0
      %v5029 = vsel %vm471, %v4901, 0
      %v5031 = vsel %vm471, %v5024, 0
      %v5033 = vsel %vm471, %v5026, 0
      %5035 = vmatpush.xpose.msra.mxu0 0.0
      %5036 = vmatpush.xpose.msra.mxu0 0.0
      %5037 = vmatpush.xpose.msra.mxu0 0.0
      %5038 = vmatpush.xpose.msra.mxu0 0.0
      %5039 = vmatpush.xpose.msra.mxu0 0.0
      %5040 = vmatpush.xpose.msra.mxu0 0.0
      %5041 = vmatpush.xpose.msra.mxu0 0.0
      %5042 = vmatpush.xpose.msra.mxu0 0.0
      %5043 = vmatpush.xpose.msra.mxu0 0.0
      %5044 = vmatpush.xpose.msra.mxu0 0.0
      %5045 = vmatpush.xpose.msra.mxu0 0.0
      %5046 = vmatpush.xpose.msra.mxu0 0.0
      %5047 = vmatpush.xpose.msra.mxu0 0.0
      %5048 = vmatpush.xpose.msra.mxu0 0.0
      %5049 = vmatpush.xpose.msra.mxu0 %v5033
      %5050 = vmatpush.xpose.msra.mxu0 %v5031
      %5051 = vmatmul.f32.gmra.mxu0 %v5027
      %v5052 = vpop.f32.mrf.mxu0
      %v5053 = vadd.f32 0.0, %v5052
      %5054 = vmatmul.f32.gmra.mxu0 %v5029
      %v5055 = vpop.f32.mrf.mxu0
      %v5056 = vadd.f32 0.0, %v5055
      %5057 = vdwg.mxu0
      %5058 = vrot.lane.b32.xlu0 %v4903, 96
      %v5059 = vpop.permute.xlu0 %5058
      %5060 = vrot.lane.b32.xlu0 %v4905, 96
      %v5061 = vpop.permute.xlu0 %5060
      %v5062 = vsel %vm471, %v4903, 0
      %v5064 = vsel %vm471, %v4905, 0
      %v5066 = vsel %vm471, %v5059, 0
      %v5068 = vsel %vm471, %v5061, 0
      %5070 = vmatpush.xpose.msra.mxu0 0.0
      %5071 = vmatpush.xpose.msra.mxu0 0.0
      %5072 = vmatpush.xpose.msra.mxu0 0.0
      %5073 = vmatpush.xpose.msra.mxu0 0.0
      %5074 = vmatpush.xpose.msra.mxu0 0.0
      %5075 = vmatpush.xpose.msra.mxu0 0.0
      %5076 = vmatpush.xpose.msra.mxu0 0.0
      %5077 = vmatpush.xpose.msra.mxu0 0.0
      %5078 = vmatpush.xpose.msra.mxu0 0.0
      %5079 = vmatpush.xpose.msra.mxu0 0.0
      %5080 = vmatpush.xpose.msra.mxu0 0.0
      %5081 = vmatpush.xpose.msra.mxu0 0.0
      %5082 = vmatpush.xpose.msra.mxu0 0.0
      %5083 = vmatpush.xpose.msra.mxu0 0.0
      %5084 = vmatpush.xpose.msra.mxu0 %v5068
      %5085 = vmatpush.xpose.msra.mxu0 %v5066
      %5086 = vmatmul.f32.gmra.mxu0 %v5062
      %v5087 = vpop.f32.mrf.mxu0
      %v5088 = vadd.f32 0.0, %v5087
      %5089 = vmatmul.f32.gmra.mxu0 %v5064
      %v5090 = vpop.f32.mrf.mxu0
      %v5091 = vadd.f32 0.0, %v5090
      %5092 = vdwg.mxu0
      %5093 = vrot.lane.b32.xlu0 %v4907, 96
      %v5094 = vpop.permute.xlu0 %5093
      %5095 = vrot.lane.b32.xlu0 %v4909, 96
      %v5096 = vpop.permute.xlu0 %5095
      %v5097 = vsel %vm471, %v4907, 0
      %v5099 = vsel %vm471, %v4909, 0
      %v5101 = vsel %vm471, %v5094, 0
      %v5103 = vsel %vm471, %v5096, 0
      %5105 = vmatpush.xpose.msra.mxu0 0.0
      %5106 = vmatpush.xpose.msra.mxu0 0.0
      %5107 = vmatpush.xpose.msra.mxu0 0.0
      %5108 = vmatpush.xpose.msra.mxu0 0.0
      %5109 = vmatpush.xpose.msra.mxu0 0.0
      %5110 = vmatpush.xpose.msra.mxu0 0.0
      %5111 = vmatpush.xpose.msra.mxu0 0.0
      %5112 = vmatpush.xpose.msra.mxu0 0.0
      %5113 = vmatpush.xpose.msra.mxu0 0.0
      %5114 = vmatpush.xpose.msra.mxu0 0.0
      %5115 = vmatpush.xpose.msra.mxu0 0.0
      %5116 = vmatpush.xpose.msra.mxu0 0.0
      %5117 = vmatpush.xpose.msra.mxu0 0.0
      %5118 = vmatpush.xpose.msra.mxu0 0.0
      %5119 = vmatpush.xpose.msra.mxu0 %v5103
      %5120 = vmatpush.xpose.msra.mxu0 %v5101
      %5121 = vmatmul.f32.gmra.mxu0 %v5097
      %v5122 = vpop.f32.mrf.mxu0
      %v5123 = vadd.f32 0.0, %v5122
      %5124 = vmatmul.f32.gmra.mxu0 %v5099
      %v5125 = vpop.f32.mrf.mxu0
      %v5126 = vadd.f32 0.0, %v5125
      %5127 = vdwg.mxu0
      %5128 = vrot.lane.b32.xlu0 %v4911, 96
      %v5129 = vpop.permute.xlu0 %5128
      %5130 = vrot.lane.b32.xlu0 %v4913, 96
      %v5131 = vpop.permute.xlu0 %5130
      %v5132 = vsel %vm471, %v4911, 0
      %v5134 = vsel %vm471, %v4913, 0
      %v5136 = vsel %vm471, %v5129, 0
      %v5138 = vsel %vm471, %v5131, 0
      %5140 = vmatpush.xpose.msra.mxu0 0.0
      %5141 = vmatpush.xpose.msra.mxu0 0.0
      %5142 = vmatpush.xpose.msra.mxu0 0.0
      %5143 = vmatpush.xpose.msra.mxu0 0.0
      %5144 = vmatpush.xpose.msra.mxu0 0.0
      %5145 = vmatpush.xpose.msra.mxu0 0.0
      %5146 = vmatpush.xpose.msra.mxu0 0.0
      %5147 = vmatpush.xpose.msra.mxu0 0.0
      %5148 = vmatpush.xpose.msra.mxu0 0.0
      %5149 = vmatpush.xpose.msra.mxu0 0.0
      %5150 = vmatpush.xpose.msra.mxu0 0.0
      %5151 = vmatpush.xpose.msra.mxu0 0.0
      %5152 = vmatpush.xpose.msra.mxu0 0.0
      %5153 = vmatpush.xpose.msra.mxu0 0.0
      %5154 = vmatpush.xpose.msra.mxu0 %v5138
      %5155 = vmatpush.xpose.msra.mxu0 %v5136
      %5156 = vmatmul.f32.gmra.mxu0 %v5132
      %v5157 = vpop.f32.mrf.mxu0
      %v5158 = vadd.f32 0.0, %v5157
      %5159 = vmatmul.f32.gmra.mxu0 %v5134
      %v5160 = vpop.f32.mrf.mxu0
      %v5161 = vadd.f32 0.0, %v5160
      %5162 = vdwg.mxu0
      %5163 = vrot.lane.b32.xlu0 %v4915, 96
      %v5164 = vpop.permute.xlu0 %5163
      %5165 = vrot.lane.b32.xlu0 %v4917, 96
      %v5166 = vpop.permute.xlu0 %5165
      %v5167 = vsel %vm471, %v4915, 0
      %v5169 = vsel %vm471, %v4917, 0
      %v5171 = vsel %vm471, %v5164, 0
      %v5173 = vsel %vm471, %v5166, 0
      %5175 = vmatpush.xpose.msra.mxu0 0.0
      %5176 = vmatpush.xpose.msra.mxu0 0.0
      %5177 = vmatpush.xpose.msra.mxu0 0.0
      %5178 = vmatpush.xpose.msra.mxu0 0.0
      %5179 = vmatpush.xpose.msra.mxu0 0.0
      %5180 = vmatpush.xpose.msra.mxu0 0.0
      %5181 = vmatpush.xpose.msra.mxu0 0.0
      %5182 = vmatpush.xpose.msra.mxu0 0.0
      %5183 = vmatpush.xpose.msra.mxu0 0.0
      %5184 = vmatpush.xpose.msra.mxu0 0.0
      %5185 = vmatpush.xpose.msra.mxu0 0.0
      %5186 = vmatpush.xpose.msra.mxu0 0.0
      %5187 = vmatpush.xpose.msra.mxu0 0.0
      %5188 = vmatpush.xpose.msra.mxu0 0.0
      %5189 = vmatpush.xpose.msra.mxu0 %v5173
      %5190 = vmatpush.xpose.msra.mxu0 %v5171
      %5191 = vmatmul.f32.gmra.mxu0 %v5167
      %v5192 = vpop.f32.mrf.mxu0
      %v5193 = vadd.f32 0.0, %v5192
      %5194 = vmatmul.f32.gmra.mxu0 %v5169
      %v5195 = vpop.f32.mrf.mxu0
      %v5196 = vadd.f32 0.0, %v5195
      %5197 = vdwg.mxu0
      %v5198 = vsel %vm368, %v4948, -inf
      %5199 = vmax.xlane.f32.xlu0 %v5198
      %v5200 = vpop.xlane.xlu0 %5199
      %v5201 = vsel %vm368, %v4951, -inf
      %5202 = vmax.xlane.f32.xlu0 %v5201
      %v5203 = vpop.xlane.xlu0 %5202
      %v5204 = vsel %vm368, %v4983, -inf
      %5205 = vmax.xlane.f32.xlu0 %v5204
      %v5206 = vpop.xlane.xlu0 %5205
      %v5207 = vsel %vm368, %v4986, -inf
      %5208 = vmax.xlane.f32.xlu0 %v5207
      %v5209 = vpop.xlane.xlu0 %5208
      %v5210 = vsel %vm368, %v5018, -inf
      %5211 = vmax.xlane.f32.xlu0 %v5210
      %v5212 = vpop.xlane.xlu0 %5211
      %v5213 = vsel %vm368, %v5021, -inf
      %5214 = vmax.xlane.f32.xlu0 %v5213
      %v5215 = vpop.xlane.xlu0 %5214
      %v5216 = vsel %vm368, %v5053, -inf
      %5217 = vmax.xlane.f32.xlu0 %v5216
      %v5218 = vpop.xlane.xlu0 %5217
      %v5219 = vsel %vm368, %v5056, -inf
      %5220 = vmax.xlane.f32.xlu0 %v5219
      %v5221 = vpop.xlane.xlu0 %5220
      %v5222 = vsel %vm368, %v5088, -inf
      %5223 = vmax.xlane.f32.xlu0 %v5222
      %v5224 = vpop.xlane.xlu0 %5223
      %v5225 = vsel %vm368, %v5091, -inf
      %5226 = vmax.xlane.f32.xlu0 %v5225
      %v5227 = vpop.xlane.xlu0 %5226
      %v5228 = vsel %vm368, %v5123, -inf
      %5229 = vmax.xlane.f32.xlu0 %v5228
      %v5230 = vpop.xlane.xlu0 %5229
      %v5231 = vsel %vm368, %v5126, -inf
      %5232 = vmax.xlane.f32.xlu0 %v5231
      %v5233 = vpop.xlane.xlu0 %5232
      %v5234 = vsel %vm368, %v5158, -inf
      %5235 = vmax.xlane.f32.xlu0 %v5234
      %v5236 = vpop.xlane.xlu0 %5235
      %v5237 = vsel %vm368, %v5161, -inf
      %5238 = vmax.xlane.f32.xlu0 %v5237
      %v5239 = vpop.xlane.xlu0 %5238
      %v5240 = vsel %vm368, %v5193, -inf
      %5241 = vmax.xlane.f32.xlu0 %v5240
      %v5242 = vpop.xlane.xlu0 %5241
      %v5243 = vsel %vm368, %v5196, -inf
      %5244 = vmax.xlane.f32.xlu0 %v5243
      %v5245 = vpop.xlane.xlu0 %5244
      %v5246 = vsub.f32 %v4948, %v5200
      %v5247 = vsub.f32 %v4951, %v5203
      %v5248 = vsub.f32 %v4983, %v5206
      %v5249 = vsub.f32 %v4986, %v5209
      %v5250 = vsub.f32 %v5018, %v5212
      %v5251 = vsub.f32 %v5021, %v5215
      %v5252 = vsub.f32 %v5053, %v5218
      %v5253 = vsub.f32 %v5056, %v5221
      %v5254 = vsub.f32 %v5088, %v5224
      %v5255 = vsub.f32 %v5091, %v5227
      %v5256 = vsub.f32 %v5123, %v5230
      %v5257 = vsub.f32 %v5126, %v5233
      %v5258 = vsub.f32 %v5158, %v5236
      %v5259 = vsub.f32 %v5161, %v5239
      %v5260 = vsub.f32 %v5193, %v5242
      %v5261 = vsub.f32 %v5196, %v5245
      %v5262 = vmul.f32 %v5246, 1.442695
      %v5263 = vpow.pop %v5262
      %v5264 = vmul.f32 %v5247, 1.442695
      %v5265 = vpow.pop %v5264
      %v5266 = vmul.f32 %v5248, 1.442695
      %v5267 = vpow.pop %v5266
      %v5268 = vmul.f32 %v5249, 1.442695
      %v5269 = vpow.pop %v5268
      %v5270 = vmul.f32 %v5250, 1.442695
      %v5271 = vpow.pop %v5270
      %v5272 = vmul.f32 %v5251, 1.442695
      %v5273 = vpow.pop %v5272
      %v5274 = vmul.f32 %v5252, 1.442695
      %v5275 = vpow.pop %v5274
      %v5276 = vmul.f32 %v5253, 1.442695
      %v5277 = vpow.pop %v5276
      %v5278 = vmul.f32 %v5254, 1.442695
      %v5279 = vpow.pop %v5278
      %v5280 = vmul.f32 %v5255, 1.442695
      %v5281 = vpow.pop %v5280
      %v5282 = vmul.f32 %v5256, 1.442695
      %v5283 = vpow.pop %v5282
      %v5284 = vmul.f32 %v5257, 1.442695
      %v5285 = vpow.pop %v5284
      %v5286 = vmul.f32 %v5258, 1.442695
      %v5287 = vpow.pop %v5286
      %v5288 = vmul.f32 %v5259, 1.442695
      %v5289 = vpow.pop %v5288
      %v5290 = vmul.f32 %v5260, 1.442695
      %v5291 = vpow.pop %v5290
      %v5292 = vmul.f32 %v5261, 1.442695
      %v5293 = vpow.pop %v5292
      %v5294 = vsel %vm368, %v5263, 0.0
      %5295 = vadd.xlane.f32.xlu0 %v5294
      %v5296 = vpop.xlane.xlu0 %5295
      %v5297 = vsel %vm368, %v5265, 0.0
      %5298 = vadd.xlane.f32.xlu0 %v5297
      %v5299 = vpop.xlane.xlu0 %5298
      %v5300 = vsel %vm368, %v5267, 0.0
      %5301 = vadd.xlane.f32.xlu0 %v5300
      %v5302 = vpop.xlane.xlu0 %5301
      %v5303 = vsel %vm368, %v5269, 0.0
      %5304 = vadd.xlane.f32.xlu0 %v5303
      %v5305 = vpop.xlane.xlu0 %5304
      %v5306 = vsel %vm368, %v5271, 0.0
      %5307 = vadd.xlane.f32.xlu0 %v5306
      %v5308 = vpop.xlane.xlu0 %5307
      %v5309 = vsel %vm368, %v5273, 0.0
      %5310 = vadd.xlane.f32.xlu0 %v5309
      %v5311 = vpop.xlane.xlu0 %5310
      %v5312 = vsel %vm368, %v5275, 0.0
      %5313 = vadd.xlane.f32.xlu0 %v5312
      %v5314 = vpop.xlane.xlu0 %5313
      %v5315 = vsel %vm368, %v5277, 0.0
      %5316 = vadd.xlane.f32.xlu0 %v5315
      %v5317 = vpop.xlane.xlu0 %5316
      %v5318 = vsel %vm368, %v5279, 0.0
      %5319 = vadd.xlane.f32.xlu0 %v5318
      %v5320 = vpop.xlane.xlu0 %5319
      %v5321 = vsel %vm368, %v5281, 0.0
      %5322 = vadd.xlane.f32.xlu0 %v5321
      %v5323 = vpop.xlane.xlu0 %5322
      %v5324 = vsel %vm368, %v5283, 0.0
      %5325 = vadd.xlane.f32.xlu0 %v5324
      %v5326 = vpop.xlane.xlu0 %5325
      %v5327 = vsel %vm368, %v5285, 0.0
      %5328 = vadd.xlane.f32.xlu0 %v5327
      %v5329 = vpop.xlane.xlu0 %5328
      %v5330 = vsel %vm368, %v5287, 0.0
      %5331 = vadd.xlane.f32.xlu0 %v5330
      %v5332 = vpop.xlane.xlu0 %5331
      %v5333 = vsel %vm368, %v5289, 0.0
      %5334 = vadd.xlane.f32.xlu0 %v5333
      %v5335 = vpop.xlane.xlu0 %5334
      %v5336 = vsel %vm368, %v5291, 0.0
      %5337 = vadd.xlane.f32.xlu0 %v5336
      %v5338 = vpop.xlane.xlu0 %5337
      %v5339 = vsel %vm368, %v5293, 0.0
      %5340 = vadd.xlane.f32.xlu0 %v5339
      %v5341 = vpop.xlane.xlu0 %5340
      %v5342 = vrcp.pop %v5296
      %v5343 = vrcp.pop %v5299
      %v5344 = vrcp.pop %v5302
      %v5345 = vrcp.pop %v5305
      %v5346 = vrcp.pop %v5308
      %v5347 = vrcp.pop %v5311
      %v5348 = vrcp.pop %v5314
      %v5349 = vrcp.pop %v5317
      %v5350 = vrcp.pop %v5320
      %v5351 = vrcp.pop %v5323
      %v5352 = vrcp.pop %v5326
      %v5353 = vrcp.pop %v5329
      %v5354 = vrcp.pop %v5332
      %v5355 = vrcp.pop %v5335
      %v5356 = vrcp.pop %v5338
      %v5357 = vrcp.pop %v5341
      %v5358 = vmul.f32 %v5263, %v5342
      %v5359 = vmul.f32 %v5265, %v5343
      %v5360 = vmul.f32 %v5267, %v5344
      %v5361 = vmul.f32 %v5269, %v5345
      %v5362 = vmul.f32 %v5271, %v5346
      %v5363 = vmul.f32 %v5273, %v5347
      %v5364 = vmul.f32 %v5275, %v5348
      %v5365 = vmul.f32 %v5277, %v5349
      %v5366 = vmul.f32 %v5279, %v5350
      %v5367 = vmul.f32 %v5281, %v5351
      %v5368 = vmul.f32 %v5283, %v5352
      %v5369 = vmul.f32 %v5285, %v5353
      %v5370 = vmul.f32 %v5287, %v5354
      %v5371 = vmul.f32 %v5289, %v5355
      %v5372 = vmul.f32 %v5291, %v5356
      %v5373 = vmul.f32 %v5293, %v5357
      %5374 = vrot.lane.b32.xlu0 %v4883, 64
      %v5375 = vpop.permute.xlu0 %5374
      %5376 = vrot.lane.b32.xlu0 %v4886, 64
      %v5377 = vpop.permute.xlu0 %5376
      %v5381 = vsel %vm368, %v5358, 0
      %v5384 = vsel %vm368, %v5359, 0
      %5386 = vmatpush.msra.mxu0 0.0
      %5387 = vmatpush.msra.mxu0 0.0
      %5388 = vmatpush.msra.mxu0 0.0
      %5389 = vmatpush.msra.mxu0 0.0
      %5390 = vmatpush.msra.mxu0 0.0
      %5391 = vmatpush.msra.mxu0 0.0
      %5392 = vmatpush.msra.mxu0 0.0
      %5393 = vmatpush.msra.mxu0 0.0
      %5394 = vmatpush.msra.mxu0 0.0
      %5395 = vmatpush.msra.mxu0 0.0
      %5396 = vmatpush.msra.mxu0 0.0
      %5397 = vmatpush.msra.mxu0 0.0
      %5398 = vmatpush.msra.mxu0 0.0
      %5399 = vmatpush.msra.mxu0 0.0
      %5400 = vmatpush.msra.mxu0 %v5377
      %5401 = vmatpush.msra.mxu0 %v5375
      %5402 = vmatmul.f32.gmra.mxu0 %v5381
      %v5403 = vpop.f32.mrf.mxu0
      %v5404 = vadd.f32 0.0, %v5403
      %5405 = vmatmul.f32.gmra.mxu0 %v5384
      %v5406 = vpop.f32.mrf.mxu0
      %v5407 = vadd.f32 0.0, %v5406
      %5408 = vdwg.mxu0
      %5409 = vrot.lane.b32.xlu0 %v4891, 64
      %v5410 = vpop.permute.xlu0 %5409
      %5411 = vrot.lane.b32.xlu0 %v4893, 64
      %v5412 = vpop.permute.xlu0 %5411
      %v5416 = vsel %vm368, %v5360, 0
      %v5419 = vsel %vm368, %v5361, 0
      %5421 = vmatpush.msra.mxu0 0.0
      %5422 = vmatpush.msra.mxu0 0.0
      %5423 = vmatpush.msra.mxu0 0.0
      %5424 = vmatpush.msra.mxu0 0.0
      %5425 = vmatpush.msra.mxu0 0.0
      %5426 = vmatpush.msra.mxu0 0.0
      %5427 = vmatpush.msra.mxu0 0.0
      %5428 = vmatpush.msra.mxu0 0.0
      %5429 = vmatpush.msra.mxu0 0.0
      %5430 = vmatpush.msra.mxu0 0.0
      %5431 = vmatpush.msra.mxu0 0.0
      %5432 = vmatpush.msra.mxu0 0.0
      %5433 = vmatpush.msra.mxu0 0.0
      %5434 = vmatpush.msra.mxu0 0.0
      %5435 = vmatpush.msra.mxu0 %v5412
      %5436 = vmatpush.msra.mxu0 %v5410
      %5437 = vmatmul.f32.gmra.mxu0 %v5416
      %v5438 = vpop.f32.mrf.mxu0
      %v5439 = vadd.f32 0.0, %v5438
      %5440 = vmatmul.f32.gmra.mxu0 %v5419
      %v5441 = vpop.f32.mrf.mxu0
      %v5442 = vadd.f32 0.0, %v5441
      %5443 = vdwg.mxu0
      %5444 = vrot.lane.b32.xlu0 %v4895, 64
      %v5445 = vpop.permute.xlu0 %5444
      %5446 = vrot.lane.b32.xlu0 %v4897, 64
      %v5447 = vpop.permute.xlu0 %5446
      %v5451 = vsel %vm368, %v5362, 0
      %v5454 = vsel %vm368, %v5363, 0
      %5456 = vmatpush.msra.mxu0 0.0
      %5457 = vmatpush.msra.mxu0 0.0
      %5458 = vmatpush.msra.mxu0 0.0
      %5459 = vmatpush.msra.mxu0 0.0
      %5460 = vmatpush.msra.mxu0 0.0
      %5461 = vmatpush.msra.mxu0 0.0
      %5462 = vmatpush.msra.mxu0 0.0
      %5463 = vmatpush.msra.mxu0 0.0
      %5464 = vmatpush.msra.mxu0 0.0
      %5465 = vmatpush.msra.mxu0 0.0
      %5466 = vmatpush.msra.mxu0 0.0
      %5467 = vmatpush.msra.mxu0 0.0
      %5468 = vmatpush.msra.mxu0 0.0
      %5469 = vmatpush.msra.mxu0 0.0
      %5470 = vmatpush.msra.mxu0 %v5447
      %5471 = vmatpush.msra.mxu0 %v5445
      %5472 = vmatmul.f32.gmra.mxu0 %v5451
      %v5473 = vpop.f32.mrf.mxu0
      %v5474 = vadd.f32 0.0, %v5473
      %5475 = vmatmul.f32.gmra.mxu0 %v5454
      %v5476 = vpop.f32.mrf.mxu0
      %v5477 = vadd.f32 0.0, %v5476
      %5478 = vdwg.mxu0
      %5479 = vrot.lane.b32.xlu0 %v4899, 64
      %v5480 = vpop.permute.xlu0 %5479
      %5481 = vrot.lane.b32.xlu0 %v4901, 64
      %v5482 = vpop.permute.xlu0 %5481
      %v5486 = vsel %vm368, %v5364, 0
      %v5489 = vsel %vm368, %v5365, 0
      %5491 = vmatpush.msra.mxu0 0.0
      %5492 = vmatpush.msra.mxu0 0.0
      %5493 = vmatpush.msra.mxu0 0.0
      %5494 = vmatpush.msra.mxu0 0.0
      %5495 = vmatpush.msra.mxu0 0.0
      %5496 = vmatpush.msra.mxu0 0.0
      %5497 = vmatpush.msra.mxu0 0.0
      %5498 = vmatpush.msra.mxu0 0.0
      %5499 = vmatpush.msra.mxu0 0.0
      %5500 = vmatpush.msra.mxu0 0.0
      %5501 = vmatpush.msra.mxu0 0.0
      %5502 = vmatpush.msra.mxu0 0.0
      %5503 = vmatpush.msra.mxu0 0.0
      %5504 = vmatpush.msra.mxu0 0.0
      %5505 = vmatpush.msra.mxu0 %v5482
      %5506 = vmatpush.msra.mxu0 %v5480
      %5507 = vmatmul.f32.gmra.mxu0 %v5486
      %v5508 = vpop.f32.mrf.mxu0
      %v5509 = vadd.f32 0.0, %v5508
      %5510 = vmatmul.f32.gmra.mxu0 %v5489
      %v5511 = vpop.f32.mrf.mxu0
      %v5512 = vadd.f32 0.0, %v5511
      %5513 = vdwg.mxu0
      %5514 = vrot.lane.b32.xlu0 %v4903, 64
      %v5515 = vpop.permute.xlu0 %5514
      %5516 = vrot.lane.b32.xlu0 %v4905, 64
      %v5517 = vpop.permute.xlu0 %5516
      %v5521 = vsel %vm368, %v5366, 0
      %v5524 = vsel %vm368, %v5367, 0
      %5526 = vmatpush.msra.mxu0 0.0
      %5527 = vmatpush.msra.mxu0 0.0
      %5528 = vmatpush.msra.mxu0 0.0
      %5529 = vmatpush.msra.mxu0 0.0
      %5530 = vmatpush.msra.mxu0 0.0
      %5531 = vmatpush.msra.mxu0 0.0
      %5532 = vmatpush.msra.mxu0 0.0
      %5533 = vmatpush.msra.mxu0 0.0
      %5534 = vmatpush.msra.mxu0 0.0
      %5535 = vmatpush.msra.mxu0 0.0
      %5536 = vmatpush.msra.mxu0 0.0
      %5537 = vmatpush.msra.mxu0 0.0
      %5538 = vmatpush.msra.mxu0 0.0
      %5539 = vmatpush.msra.mxu0 0.0
      %5540 = vmatpush.msra.mxu0 %v5517
      %5541 = vmatpush.msra.mxu0 %v5515
      %5542 = vmatmul.f32.gmra.mxu0 %v5521
      %v5543 = vpop.f32.mrf.mxu0
      %v5544 = vadd.f32 0.0, %v5543
      %5545 = vmatmul.f32.gmra.mxu0 %v5524
      %v5546 = vpop.f32.mrf.mxu0
      %v5547 = vadd.f32 0.0, %v5546
      %5548 = vdwg.mxu0
      %5549 = vrot.lane.b32.xlu0 %v4907, 64
      %v5550 = vpop.permute.xlu0 %5549
      %5551 = vrot.lane.b32.xlu0 %v4909, 64
      %v5552 = vpop.permute.xlu0 %5551
      %v5556 = vsel %vm368, %v5368, 0
      %v5559 = vsel %vm368, %v5369, 0
      %5561 = vmatpush.msra.mxu0 0.0
      %5562 = vmatpush.msra.mxu0 0.0
      %5563 = vmatpush.msra.mxu0 0.0
      %5564 = vmatpush.msra.mxu0 0.0
      %5565 = vmatpush.msra.mxu0 0.0
      %5566 = vmatpush.msra.mxu0 0.0
      %5567 = vmatpush.msra.mxu0 0.0
      %5568 = vmatpush.msra.mxu0 0.0
      %5569 = vmatpush.msra.mxu0 0.0
      %5570 = vmatpush.msra.mxu0 0.0
      %5571 = vmatpush.msra.mxu0 0.0
      %5572 = vmatpush.msra.mxu0 0.0
      %5573 = vmatpush.msra.mxu0 0.0
      %5574 = vmatpush.msra.mxu0 0.0
      %5575 = vmatpush.msra.mxu0 %v5552
      %5576 = vmatpush.msra.mxu0 %v5550
      %5577 = vmatmul.f32.gmra.mxu0 %v5556
      %v5578 = vpop.f32.mrf.mxu0
      %v5579 = vadd.f32 0.0, %v5578
      %5580 = vmatmul.f32.gmra.mxu0 %v5559
      %v5581 = vpop.f32.mrf.mxu0
      %v5582 = vadd.f32 0.0, %v5581
      %5583 = vdwg.mxu0
      %5584 = vrot.lane.b32.xlu0 %v4911, 64
      %v5585 = vpop.permute.xlu0 %5584
      %5586 = vrot.lane.b32.xlu0 %v4913, 64
      %v5587 = vpop.permute.xlu0 %5586
      %v5591 = vsel %vm368, %v5370, 0
      %v5594 = vsel %vm368, %v5371, 0
      %5596 = vmatpush.msra.mxu0 0.0
      %5597 = vmatpush.msra.mxu0 0.0
      %5598 = vmatpush.msra.mxu0 0.0
      %5599 = vmatpush.msra.mxu0 0.0
      %5600 = vmatpush.msra.mxu0 0.0
      %5601 = vmatpush.msra.mxu0 0.0
      %5602 = vmatpush.msra.mxu0 0.0
      %5603 = vmatpush.msra.mxu0 0.0
      %5604 = vmatpush.msra.mxu0 0.0
      %5605 = vmatpush.msra.mxu0 0.0
      %5606 = vmatpush.msra.mxu0 0.0
      %5607 = vmatpush.msra.mxu0 0.0
      %5608 = vmatpush.msra.mxu0 0.0
      %5609 = vmatpush.msra.mxu0 0.0
      %5610 = vmatpush.msra.mxu0 %v5587
      %5611 = vmatpush.msra.mxu0 %v5585
      %5612 = vmatmul.f32.gmra.mxu0 %v5591
      %v5613 = vpop.f32.mrf.mxu0
      %v5614 = vadd.f32 0.0, %v5613
      %5615 = vmatmul.f32.gmra.mxu0 %v5594
      %v5616 = vpop.f32.mrf.mxu0
      %v5617 = vadd.f32 0.0, %v5616
      %5618 = vdwg.mxu0
      %5619 = vrot.lane.b32.xlu0 %v4915, 64
      %v5620 = vpop.permute.xlu0 %5619
      %5621 = vrot.lane.b32.xlu0 %v4917, 64
      %v5622 = vpop.permute.xlu0 %5621
      %v5626 = vsel %vm368, %v5372, 0
      %v5629 = vsel %vm368, %v5373, 0
      %5631 = vmatpush.msra.mxu0 0.0
      %5632 = vmatpush.msra.mxu0 0.0
      %5633 = vmatpush.msra.mxu0 0.0
      %5634 = vmatpush.msra.mxu0 0.0
      %5635 = vmatpush.msra.mxu0 0.0
      %5636 = vmatpush.msra.mxu0 0.0
      %5637 = vmatpush.msra.mxu0 0.0
      %5638 = vmatpush.msra.mxu0 0.0
      %5639 = vmatpush.msra.mxu0 0.0
      %5640 = vmatpush.msra.mxu0 0.0
      %5641 = vmatpush.msra.mxu0 0.0
      %5642 = vmatpush.msra.mxu0 0.0
      %5643 = vmatpush.msra.mxu0 0.0
      %5644 = vmatpush.msra.mxu0 0.0
      %5645 = vmatpush.msra.mxu0 %v5622
      %5646 = vmatpush.msra.mxu0 %v5620
      %5647 = vmatmul.f32.gmra.mxu0 %v5626
      %v5648 = vpop.f32.mrf.mxu0
      %v5649 = vadd.f32 0.0, %v5648
      %5650 = vmatmul.f32.gmra.mxu0 %v5629
      %v5651 = vpop.f32.mrf.mxu0
      %v5652 = vadd.f32 0.0, %v5651
      %5653 = vdwg.mxu0
      %5654 = vst.msk [vmem:[#allocation2] sm:$0xff] %vm471, %v5404
      %5655 = vst.msk [vmem:[#allocation2 + $0x8] sm:$0xff] %vm471, %v5407
      %5658 = vrot.lane.b32.xlu0 %v5439, 4
      %v5659 = vpop.permute.xlu0 %5658
      %5660 = vrot.lane.b32.xlu0 %v5442, 4
      %v5661 = vpop.permute.xlu0 %5660
      %5664 = vst.msk [vmem:[#allocation2] sm:$0xff] %vm1214, %v5659
      %5665 = vst.msk [vmem:[#allocation2 + $0x8] sm:$0xff] %vm1214, %v5661
      %5668 = vrot.lane.b32.xlu0 %v5474, 8
      %v5669 = vpop.permute.xlu0 %5668
      %5670 = vrot.lane.b32.xlu0 %v5477, 8
      %v5671 = vpop.permute.xlu0 %5670
      %5674 = vst.msk [vmem:[#allocation2] sm:$0xff] %vm1225, %v5669
      %5675 = vst.msk [vmem:[#allocation2 + $0x8] sm:$0xff] %vm1225, %v5671
      %5678 = vrot.lane.b32.xlu0 %v5509, 12
      %v5679 = vpop.permute.xlu0 %5678
      %5680 = vrot.lane.b32.xlu0 %v5512, 12
      %v5681 = vpop.permute.xlu0 %5680
      %5684 = vst.msk [vmem:[#allocation2] sm:$0xff] %vm1236, %v5679
      %5685 = vst.msk [vmem:[#allocation2 + $0x8] sm:$0xff] %vm1236, %v5681
      %5688 = vrot.lane.b32.xlu0 %v5544, 16
      %v5689 = vpop.permute.xlu0 %5688
      %5690 = vrot.lane.b32.xlu0 %v5547, 16
      %v5691 = vpop.permute.xlu0 %5690
      %5694 = vst.msk [vmem:[#allocation2] sm:$0xff] %vm1247, %v5689
      %5695 = vst.msk [vmem:[#allocation2 + $0x8] sm:$0xff] %vm1247, %v5691
      %5698 = vrot.lane.b32.xlu0 %v5579, 20
      %v5699 = vpop.permute.xlu0 %5698
      %5700 = vrot.lane.b32.xlu0 %v5582, 20
      %v5701 = vpop.permute.xlu0 %5700
      %5704 = vst.msk [vmem:[#allocation2] sm:$0xff] %vm1258, %v5699
      %5705 = vst.msk [vmem:[#allocation2 + $0x8] sm:$0xff] %vm1258, %v5701
      %5708 = vrot.lane.b32.xlu0 %v5614, 24
      %v5709 = vpop.permute.xlu0 %5708
      %5710 = vrot.lane.b32.xlu0 %v5617, 24
      %v5711 = vpop.permute.xlu0 %5710
      %5714 = vst.msk [vmem:[#allocation2] sm:$0xff] %vm1269, %v5709
      %5715 = vst.msk [vmem:[#allocation2 + $0x8] sm:$0xff] %vm1269, %v5711
      %5718 = vrot.lane.b32.xlu0 %v5649, 28
      %v5719 = vpop.permute.xlu0 %5718
      %5720 = vrot.lane.b32.xlu0 %v5652, 28
      %v5721 = vpop.permute.xlu0 %5720
      %5724 = vst.msk [vmem:[#allocation2] sm:$0xff] %vm1280, %v5719
      %5725 = vst.msk [vmem:[#allocation2 + $0x8] sm:$0xff] %vm1280, %v5721
      %v5726 = vld [vmem:[#allocation2] sm:$0xff]
      %v5727 = vld [vmem:[#allocation2 + $0x8] sm:$0xff]
      %s5728 = scalar_lea.vmem %s5, 128
      %v5729 = vld [vmem:[%s5728] sm:$0xff]
      %v5730 = vld [vmem:[%s5728 + $0x8] sm:$0xff]
      %v5731 = vld [vmem:[%s5728 + $0x10] sm:$0xff]
      %v5732 = vld [vmem:[%s5728 + $0x18] sm:$0xff]
      %v5733 = vperm.slane %v4848, 0
      %v5735 = vsel %vm407, %v5726, 0
      %v5738 = vsel %vm407, %v5727, 0
      %5740 = vmatpush.msra.mxu0 0.0
      %5741 = vmatpush.msra.mxu0 0.0
      %5742 = vmatpush.msra.mxu0 0.0
      %5743 = vmatpush.msra.mxu0 0.0
      %5744 = vmatpush.msra.mxu0 0.0
      %5745 = vmatpush.msra.mxu0 0.0
      %5746 = vmatpush.msra.mxu0 0.0
      %5747 = vmatpush.msra.mxu0 0.0
      %5748 = vmatpush.msra.mxu0 0.0
      %5749 = vmatpush.msra.mxu0 0.0
      %5750 = vmatpush.msra.mxu0 0.0
      %5751 = vmatpush.msra.mxu0 0.0
      %5752 = vmatpush.msra.mxu0 %v5732
      %5753 = vmatpush.msra.mxu0 %v5731
      %5754 = vmatpush.msra.mxu0 %v5730
      %5755 = vmatpush.msra.mxu0 %v5729
      %5756 = vmatmul.f32.gmra.mxu0 %v5735
      %v5757 = vpop.f32.mrf.mxu0
      %v5758 = vadd.f32 %v5733, %v5757
      %5759 = vmatmul.f32.gmra.mxu0 %v5738
      %v5760 = vpop.f32.mrf.mxu0
      %v5761 = vadd.f32 %v5733, %v5760
      %5762 = vdwg.mxu0
      %v5763 = vadd.f32 %v4845, %v5758
      %v5764 = vadd.f32 %v4846, %v5761
      %v5765 = vsel %vm407, %v5763, 0.0
      %5766 = vadd.xlane.f32.xlu0 %v5765
      %v5767 = vpop.xlane.xlu0 %5766
      %v5768 = vsel %vm407, %v5764, 0.0
      %5769 = vadd.xlane.f32.xlu0 %v5768
      %v5770 = vpop.xlane.xlu0 %5769
      %v5771 = vmul.f32 %v5767, %v1333
      %v5772 = vmul.f32 %v5770, %v1333
      %v5773 = vmul.f32 %v5763, %v5763
      %v5774 = vmul.f32 %v5764, %v5764
      %v5775 = vsel %vm407, %v5773, 0.0
      %5776 = vadd.xlane.f32.xlu0 %v5775
      %v5777 = vpop.xlane.xlu0 %5776
      %v5778 = vsel %vm407, %v5774, 0.0
      %5779 = vadd.xlane.f32.xlu0 %v5778
      %v5780 = vpop.xlane.xlu0 %5779
      %v5781 = vmul.f32 %v5777, %v1333
      %v5782 = vmul.f32 %v5780, %v1333
      %v5783 = vmul.f32 %v5771, %v5771
      %v5784 = vmul.f32 %v5772, %v5772
      %v5785 = vsub.f32 %v5781, %v5783
      %v5786 = vsub.f32 %v5782, %v5784
      %v5787 = vsub.f32 %v5763, %v5771
      %v5788 = vsub.f32 %v5764, %v5772
      %v5789 = vadd.f32 %v5785, 1e-05
      %v5790 = vadd.f32 %v5786, 1e-05
      %v5791 = vrsqrt.pop %v5789
      %v5792 = vmul.f32 %v5791, %v5789
      %v5793 = vmul.f32 %v5792, %v5791
      %v5794 = vmul.f32 0.5, %v5793
      %v5795 = vsub.f32 1.5, %v5794
      %v5796 = vmul.f32 %v5791, %v5795
      %vm5797 = vweird.f32 %v5789
      %vm5798 = vweird.f32 %v5791
      %vm5799 = vmor %vm5797, %vm5798
      %v5800 = vsel %vm5799, %v5791, %v5796
      %v5801 = vrsqrt.pop %v5790
      %v5802 = vmul.f32 %v5801, %v5790
      %v5803 = vmul.f32 %v5802, %v5801
      %v5804 = vmul.f32 0.5, %v5803
      %v5805 = vsub.f32 1.5, %v5804
      %v5806 = vmul.f32 %v5801, %v5805
      %vm5807 = vweird.f32 %v5790
      %vm5808 = vweird.f32 %v5801
      %vm5809 = vmor %vm5807, %vm5808
      %v5810 = vsel %vm5809, %v5801, %v5806
      %v5811 = vmul.f32 %v5787, %v5800
      %v5812 = vmul.f32 %v5788, %v5810
      %v5813 = vperm.slane %v4848, 2
      %v5814 = vmul.f32 %v5811, %v5813
      %v5815 = vmul.f32 %v5812, %v5813
      %v5816 = vperm.slane %v4848, 3
      %v5817 = vadd.f32 %v5814, %v5816
      %v5818 = vadd.f32 %v5815, %v5816
      %s5819 = scalar_lea.vmem %s6, 128
      %v5820 = vld [vmem:[%s5819] sm:$0xff]
      %v5821 = vld [vmem:[%s5819 + $0x8] sm:$0xff]
      %v5822 = vld [vmem:[%s5819 + $0x10] sm:$0xff]
      %v5823 = vld [vmem:[%s5819 + $0x18] sm:$0xff]
      %s5824 = scalar_lea.vmem %s7, 4
      %v5825 = vld [vmem:[%s5824] sm:$0x1]
      %v5827 = vperm.slane %v5825, 0
      %v5830 = vsel %vm407, %v5817, 0
      %v5833 = vsel %vm407, %v5818, 0
      %5835 = vmatpush.msra.mxu0 0.0
      %5836 = vmatpush.msra.mxu0 0.0
      %5837 = vmatpush.msra.mxu0 0.0
      %5838 = vmatpush.msra.mxu0 0.0
      %5839 = vmatpush.msra.mxu0 0.0
      %5840 = vmatpush.msra.mxu0 0.0
      %5841 = vmatpush.msra.mxu0 0.0
      %5842 = vmatpush.msra.mxu0 0.0
      %5843 = vmatpush.msra.mxu0 0.0
      %5844 = vmatpush.msra.mxu0 0.0
      %5845 = vmatpush.msra.mxu0 0.0
      %5846 = vmatpush.msra.mxu0 0.0
      %5847 = vmatpush.msra.mxu0 %v5823
      %5848 = vmatpush.msra.mxu0 %v5822
      %5849 = vmatpush.msra.mxu0 %v5821
      %5850 = vmatpush.msra.mxu0 %v5820
      %5851 = vmatmul.f32.gmra.mxu0 %v5830
      %v5852 = vpop.f32.mrf.mxu0
      %v5853 = vadd.f32 %v5827, %v5852
      %5854 = vmatmul.f32.gmra.mxu0 %v5833
      %v5855 = vpop.f32.mrf.mxu0
      %v5856 = vadd.f32 %v5827, %v5855
      %5857 = vdwg.mxu0
      %v5858 = vmax.f32 %v5853, 0.0
      %v5859 = vmax.f32 %v5856, 0.0
      %s5860 = scalar_lea.vmem %s8, 512
      %v5861 = vld [vmem:[%s5860] sm:$0xff]
      %v5862 = vld [vmem:[%s5860 + $0x8] sm:$0xff]
      %v5863 = vld [vmem:[%s5860 + $0x10] sm:$0xff]
      %v5864 = vld [vmem:[%s5860 + $0x18] sm:$0xff]
      %v5865 = vld [vmem:[%s5860 + $0x20] sm:$0xff]
      %v5866 = vld [vmem:[%s5860 + $0x28] sm:$0xff]
      %v5867 = vld [vmem:[%s5860 + $0x30] sm:$0xff]
      %v5868 = vld [vmem:[%s5860 + $0x38] sm:$0xff]
      %v5869 = vld [vmem:[%s5860 + $0x40] sm:$0xff]
      %v5870 = vld [vmem:[%s5860 + $0x48] sm:$0xff]
      %v5871 = vld [vmem:[%s5860 + $0x50] sm:$0xff]
      %v5872 = vld [vmem:[%s5860 + $0x58] sm:$0xff]
      %v5873 = vld [vmem:[%s5860 + $0x60] sm:$0xff]
      %v5874 = vld [vmem:[%s5860 + $0x68] sm:$0xff]
      %v5875 = vld [vmem:[%s5860 + $0x70] sm:$0xff]
      %v5876 = vld [vmem:[%s5860 + $0x78] sm:$0xff]
      %v5877 = vperm.slane %v4848, 1
      %5878 = vmatpush.msra.mxu0 %v5876
      %5879 = vmatpush.msra.mxu0 %v5875
      %5880 = vmatpush.msra.mxu0 %v5874
      %5881 = vmatpush.msra.mxu0 %v5873
      %5882 = vmatpush.msra.mxu0 %v5872
      %5883 = vmatpush.msra.mxu0 %v5871
      %5884 = vmatpush.msra.mxu0 %v5870
      %5885 = vmatpush.msra.mxu0 %v5869
      %5886 = vmatpush.msra.mxu0 %v5868
      %5887 = vmatpush.msra.mxu0 %v5867
      %5888 = vmatpush.msra.mxu0 %v5866
      %5889 = vmatpush.msra.mxu0 %v5865
      %5890 = vmatpush.msra.mxu0 %v5864
      %5891 = vmatpush.msra.mxu0 %v5863
      %5892 = vmatpush.msra.mxu0 %v5862
      %5893 = vmatpush.msra.mxu0 %v5861
      %5894 = vmatmul.f32.gmra.mxu0 %v5858
      %v5895 = vpop.f32.mrf.mxu0
      %v5896 = vadd.f32 %v5877, %v5895
      %5897 = vmatmul.f32.gmra.mxu0 %v5859
      %v5898 = vpop.f32.mrf.mxu0
      %v5899 = vadd.f32 %v5877, %v5898
      %5900 = vdwg.mxu0
      %v5901 = vadd.f32 %v5817, %v5896
      %v5902 = vadd.f32 %v5818, %v5899
      %v5903 = vsel %vm407, %v5901, 0.0
      %5904 = vadd.xlane.f32.xlu0 %v5903
      %v5905 = vpop.xlane.xlu0 %5904
      %v5906 = vsel %vm407, %v5902, 0.0
      %5907 = vadd.xlane.f32.xlu0 %v5906
      %v5908 = vpop.xlane.xlu0 %5907
      %v5909 = vmul.f32 %v5905, %v1333
      %v5910 = vmul.f32 %v5908, %v1333
      %v5911 = vmul.f32 %v5901, %v5901
      %v5912 = vmul.f32 %v5902, %v5902
      %v5913 = vsel %vm407, %v5911, 0.0
      %5914 = vadd.xlane.f32.xlu0 %v5913
      %v5915 = vpop.xlane.xlu0 %5914
      %v5916 = vsel %vm407, %v5912, 0.0
      %5917 = vadd.xlane.f32.xlu0 %v5916
      %v5918 = vpop.xlane.xlu0 %5917
      %v5919 = vmul.f32 %v5915, %v1333
      %v5920 = vmul.f32 %v5918, %v1333
      %v5921 = vmul.f32 %v5909, %v5909
      %v5922 = vmul.f32 %v5910, %v5910
      %v5923 = vsub.f32 %v5919, %v5921
      %v5924 = vsub.f32 %v5920, %v5922
      %v5925 = vsub.f32 %v5901, %v5909
      %v5926 = vsub.f32 %v5902, %v5910
      %v5927 = vadd.f32 %v5923, 1e-05
      %v5928 = vadd.f32 %v5924, 1e-05
      %v5929 = vrsqrt.pop %v5927
      %v5930 = vmul.f32 %v5929, %v5927
      %v5931 = vmul.f32 %v5930, %v5929
      %v5932 = vmul.f32 0.5, %v5931
      %v5933 = vsub.f32 1.5, %v5932
      %v5934 = vmul.f32 %v5929, %v5933
      %vm5935 = vweird.f32 %v5927
      %vm5936 = vweird.f32 %v5929
      %vm5937 = vmor %vm5935, %vm5936
      %v5938 = vsel %vm5937, %v5929, %v5934
      %v5939 = vrsqrt.pop %v5928
      %v5940 = vmul.f32 %v5939, %v5928
      %v5941 = vmul.f32 %v5940, %v5939
      %v5942 = vmul.f32 0.5, %v5941
      %v5943 = vsub.f32 1.5, %v5942
      %v5944 = vmul.f32 %v5939, %v5943
      %vm5945 = vweird.f32 %v5928
      %vm5946 = vweird.f32 %v5939
      %vm5947 = vmor %vm5945, %vm5946
      %v5948 = vsel %vm5947, %v5939, %v5944
      %v5949 = vmul.f32 %v5925, %v5938
      %v5950 = vmul.f32 %v5926, %v5948
      %v5951 = vperm.slane %v4848, 4
      %v5952 = vmul.f32 %v5949, %v5951
      %v5953 = vmul.f32 %v5950, %v5951
      %v5954 = vperm.slane %v4848, 5
      %v5955 = vadd.f32 %v5952, %v5954
      %v5956 = vadd.f32 %v5953, %v5954
      %s5957 = scalar_lea.vmem %s9, 40
      %v5958 = vld [vmem:[%s5957] sm:$0x3f]
      %s5959 = scalar_lea.vmem %s3, 160
      %v5960 = vld [vmem:[%s5959] sm:$0xff]
      %v5961 = vld [vmem:[%s5959 + $0x8] sm:$0xff]
      %v5962 = vld [vmem:[%s5959 + $0x10] sm:$0xff]
      %v5963 = vld [vmem:[%s5959 + $0x18] sm:$0xff]
      %s5964 = scalar_lea.vmem %s4, 5
      %v5965 = vld [vmem:[%s5964] sm:$0x1]
      %v5967 = vperm.slane %v5965, 0
      %v5970 = vsel %vm407, %v5955, 0
      %v5973 = vsel %vm407, %v5956, 0
      %5975 = vmatpush.msra.mxu0 0.0
      %5976 = vmatpush.msra.mxu0 0.0
      %5977 = vmatpush.msra.mxu0 0.0
      %5978 = vmatpush.msra.mxu0 0.0
      %5979 = vmatpush.msra.mxu0 0.0
      %5980 = vmatpush.msra.mxu0 0.0
      %5981 = vmatpush.msra.mxu0 0.0
      %5982 = vmatpush.msra.mxu0 0.0
      %5983 = vmatpush.msra.mxu0 0.0
      %5984 = vmatpush.msra.mxu0 0.0
      %5985 = vmatpush.msra.mxu0 0.0
      %5986 = vmatpush.msra.mxu0 0.0
      %5987 = vmatpush.msra.mxu0 %v5963
      %5988 = vmatpush.msra.mxu0 %v5962
      %5989 = vmatpush.msra.mxu0 %v5961
      %5990 = vmatpush.msra.mxu0 %v5960
      %5991 = vmatmul.f32.gmra.mxu0 %v5970
      %v5992 = vpop.f32.mrf.mxu0
      %v5993 = vadd.f32 %v5967, %v5992
      %5994 = vmatmul.f32.gmra.mxu0 %v5973
      %v5995 = vpop.f32.mrf.mxu0
      %v5996 = vadd.f32 %v5967, %v5995
      %5997 = vdwg.mxu0
      %6000 = vrot.lane.b32.xlu0 %v5993, 124
      %v6001 = vpop.permute.xlu0 %6000
      %6002 = vrot.lane.b32.xlu0 %v5996, 124
      %v6003 = vpop.permute.xlu0 %6002
      %6004 = vrot.lane.b32.xlu0 %v5993, 120
      %v6005 = vpop.permute.xlu0 %6004
      %6006 = vrot.lane.b32.xlu0 %v5996, 120
      %v6007 = vpop.permute.xlu0 %6006
      %6008 = vrot.lane.b32.xlu0 %v5993, 116
      %v6009 = vpop.permute.xlu0 %6008
      %6010 = vrot.lane.b32.xlu0 %v5996, 116
      %v6011 = vpop.permute.xlu0 %6010
      %6012 = vrot.lane.b32.xlu0 %v5993, 112
      %v6013 = vpop.permute.xlu0 %6012
      %6014 = vrot.lane.b32.xlu0 %v5996, 112
      %v6015 = vpop.permute.xlu0 %6014
      %6016 = vrot.lane.b32.xlu0 %v5993, 108
      %v6017 = vpop.permute.xlu0 %6016
      %6018 = vrot.lane.b32.xlu0 %v5996, 108
      %v6019 = vpop.permute.xlu0 %6018
      %6020 = vrot.lane.b32.xlu0 %v5993, 104
      %v6021 = vpop.permute.xlu0 %6020
      %6022 = vrot.lane.b32.xlu0 %v5996, 104
      %v6023 = vpop.permute.xlu0 %6022
      %6024 = vrot.lane.b32.xlu0 %v5993, 100
      %v6025 = vpop.permute.xlu0 %6024
      %6026 = vrot.lane.b32.xlu0 %v5996, 100
      %v6027 = vpop.permute.xlu0 %6026
      %6028 = vrot.lane.b32.xlu0 %v5993, 96
      %v6029 = vpop.permute.xlu0 %6028
      %6030 = vrot.lane.b32.xlu0 %v5996, 96
      %v6031 = vpop.permute.xlu0 %6030
      %v6032 = vsel %vm471, %v5993, 0
      %v6034 = vsel %vm471, %v5996, 0
      %v6036 = vsel %vm471, %v6029, 0
      %v6038 = vsel %vm471, %v6031, 0
      %6040 = vmatpush.xpose.msra.mxu0 0.0
      %6041 = vmatpush.xpose.msra.mxu0 0.0
      %6042 = vmatpush.xpose.msra.mxu0 0.0
      %6043 = vmatpush.xpose.msra.mxu0 0.0
      %6044 = vmatpush.xpose.msra.mxu0 0.0
      %6045 = vmatpush.xpose.msra.mxu0 0.0
      %6046 = vmatpush.xpose.msra.mxu0 0.0
      %6047 = vmatpush.xpose.msra.mxu0 0.0
      %6048 = vmatpush.xpose.msra.mxu0 0.0
      %6049 = vmatpush.xpose.msra.mxu0 0.0
      %6050 = vmatpush.xpose.msra.mxu0 0.0
      %6051 = vmatpush.xpose.msra.mxu0 0.0
      %6052 = vmatpush.xpose.msra.mxu0 0.0
      %6053 = vmatpush.xpose.msra.mxu0 0.0
      %6054 = vmatpush.xpose.msra.mxu0 %v6038
      %6055 = vmatpush.xpose.msra.mxu0 %v6036
      %6056 = vmatmul.f32.gmra.mxu0 %v6032
      %v6057 = vpop.f32.mrf.mxu0
      %v6058 = vadd.f32 0.0, %v6057
      %6059 = vmatmul.f32.gmra.mxu0 %v6034
      %v6060 = vpop.f32.mrf.mxu0
      %v6061 = vadd.f32 0.0, %v6060
      %6062 = vdwg.mxu0
      %6063 = vrot.lane.b32.xlu0 %v6001, 96
      %v6064 = vpop.permute.xlu0 %6063
      %6065 = vrot.lane.b32.xlu0 %v6003, 96
      %v6066 = vpop.permute.xlu0 %6065
      %v6067 = vsel %vm471, %v6001, 0
      %v6069 = vsel %vm471, %v6003, 0
      %v6071 = vsel %vm471, %v6064, 0
      %v6073 = vsel %vm471, %v6066, 0
      %6075 = vmatpush.xpose.msra.mxu0 0.0
      %6076 = vmatpush.xpose.msra.mxu0 0.0
      %6077 = vmatpush.xpose.msra.mxu0 0.0
      %6078 = vmatpush.xpose.msra.mxu0 0.0
      %6079 = vmatpush.xpose.msra.mxu0 0.0
      %6080 = vmatpush.xpose.msra.mxu0 0.0
      %6081 = vmatpush.xpose.msra.mxu0 0.0
      %6082 = vmatpush.xpose.msra.mxu0 0.0
      %6083 = vmatpush.xpose.msra.mxu0 0.0
      %6084 = vmatpush.xpose.msra.mxu0 0.0
      %6085 = vmatpush.xpose.msra.mxu0 0.0
      %6086 = vmatpush.xpose.msra.mxu0 0.0
      %6087 = vmatpush.xpose.msra.mxu0 0.0
      %6088 = vmatpush.xpose.msra.mxu0 0.0
      %6089 = vmatpush.xpose.msra.mxu0 %v6073
      %6090 = vmatpush.xpose.msra.mxu0 %v6071
      %6091 = vmatmul.f32.gmra.mxu0 %v6067
      %v6092 = vpop.f32.mrf.mxu0
      %v6093 = vadd.f32 0.0, %v6092
      %6094 = vmatmul.f32.gmra.mxu0 %v6069
      %v6095 = vpop.f32.mrf.mxu0
      %v6096 = vadd.f32 0.0, %v6095
      %6097 = vdwg.mxu0
      %6098 = vrot.lane.b32.xlu0 %v6005, 96
      %v6099 = vpop.permute.xlu0 %6098
      %6100 = vrot.lane.b32.xlu0 %v6007, 96
      %v6101 = vpop.permute.xlu0 %6100
      %v6102 = vsel %vm471, %v6005, 0
      %v6104 = vsel %vm471, %v6007, 0
      %v6106 = vsel %vm471, %v6099, 0
      %v6108 = vsel %vm471, %v6101, 0
      %6110 = vmatpush.xpose.msra.mxu0 0.0
      %6111 = vmatpush.xpose.msra.mxu0 0.0
      %6112 = vmatpush.xpose.msra.mxu0 0.0
      %6113 = vmatpush.xpose.msra.mxu0 0.0
      %6114 = vmatpush.xpose.msra.mxu0 0.0
      %6115 = vmatpush.xpose.msra.mxu0 0.0
      %6116 = vmatpush.xpose.msra.mxu0 0.0
      %6117 = vmatpush.xpose.msra.mxu0 0.0
      %6118 = vmatpush.xpose.msra.mxu0 0.0
      %6119 = vmatpush.xpose.msra.mxu0 0.0
      %6120 = vmatpush.xpose.msra.mxu0 0.0
      %6121 = vmatpush.xpose.msra.mxu0 0.0
      %6122 = vmatpush.xpose.msra.mxu0 0.0
      %6123 = vmatpush.xpose.msra.mxu0 0.0
      %6124 = vmatpush.xpose.msra.mxu0 %v6108
      %6125 = vmatpush.xpose.msra.mxu0 %v6106
      %6126 = vmatmul.f32.gmra.mxu0 %v6102
      %v6127 = vpop.f32.mrf.mxu0
      %v6128 = vadd.f32 0.0, %v6127
      %6129 = vmatmul.f32.gmra.mxu0 %v6104
      %v6130 = vpop.f32.mrf.mxu0
      %v6131 = vadd.f32 0.0, %v6130
      %6132 = vdwg.mxu0
      %6133 = vrot.lane.b32.xlu0 %v6009, 96
      %v6134 = vpop.permute.xlu0 %6133
      %6135 = vrot.lane.b32.xlu0 %v6011, 96
      %v6136 = vpop.permute.xlu0 %6135
      %v6137 = vsel %vm471, %v6009, 0
      %v6139 = vsel %vm471, %v6011, 0
      %v6141 = vsel %vm471, %v6134, 0
      %v6143 = vsel %vm471, %v6136, 0
      %6145 = vmatpush.xpose.msra.mxu0 0.0
      %6146 = vmatpush.xpose.msra.mxu0 0.0
      %6147 = vmatpush.xpose.msra.mxu0 0.0
      %6148 = vmatpush.xpose.msra.mxu0 0.0
      %6149 = vmatpush.xpose.msra.mxu0 0.0
      %6150 = vmatpush.xpose.msra.mxu0 0.0
      %6151 = vmatpush.xpose.msra.mxu0 0.0
      %6152 = vmatpush.xpose.msra.mxu0 0.0
      %6153 = vmatpush.xpose.msra.mxu0 0.0
      %6154 = vmatpush.xpose.msra.mxu0 0.0
      %6155 = vmatpush.xpose.msra.mxu0 0.0
      %6156 = vmatpush.xpose.msra.mxu0 0.0
      %6157 = vmatpush.xpose.msra.mxu0 0.0
      %6158 = vmatpush.xpose.msra.mxu0 0.0
      %6159 = vmatpush.xpose.msra.mxu0 %v6143
      %6160 = vmatpush.xpose.msra.mxu0 %v6141
      %6161 = vmatmul.f32.gmra.mxu0 %v6137
      %v6162 = vpop.f32.mrf.mxu0
      %v6163 = vadd.f32 0.0, %v6162
      %6164 = vmatmul.f32.gmra.mxu0 %v6139
      %v6165 = vpop.f32.mrf.mxu0
      %v6166 = vadd.f32 0.0, %v6165
      %6167 = vdwg.mxu0
      %6168 = vrot.lane.b32.xlu0 %v6013, 96
      %v6169 = vpop.permute.xlu0 %6168
      %6170 = vrot.lane.b32.xlu0 %v6015, 96
      %v6171 = vpop.permute.xlu0 %6170
      %v6172 = vsel %vm471, %v6013, 0
      %v6174 = vsel %vm471, %v6015, 0
      %v6176 = vsel %vm471, %v6169, 0
      %v6178 = vsel %vm471, %v6171, 0
      %6180 = vmatpush.xpose.msra.mxu0 0.0
      %6181 = vmatpush.xpose.msra.mxu0 0.0
      %6182 = vmatpush.xpose.msra.mxu0 0.0
      %6183 = vmatpush.xpose.msra.mxu0 0.0
      %6184 = vmatpush.xpose.msra.mxu0 0.0
      %6185 = vmatpush.xpose.msra.mxu0 0.0
      %6186 = vmatpush.xpose.msra.mxu0 0.0
      %6187 = vmatpush.xpose.msra.mxu0 0.0
      %6188 = vmatpush.xpose.msra.mxu0 0.0
      %6189 = vmatpush.xpose.msra.mxu0 0.0
      %6190 = vmatpush.xpose.msra.mxu0 0.0
      %6191 = vmatpush.xpose.msra.mxu0 0.0
      %6192 = vmatpush.xpose.msra.mxu0 0.0
      %6193 = vmatpush.xpose.msra.mxu0 0.0
      %6194 = vmatpush.xpose.msra.mxu0 %v6178
      %6195 = vmatpush.xpose.msra.mxu0 %v6176
      %6196 = vmatmul.f32.gmra.mxu0 %v6172
      %v6197 = vpop.f32.mrf.mxu0
      %v6198 = vadd.f32 0.0, %v6197
      %6199 = vmatmul.f32.gmra.mxu0 %v6174
      %v6200 = vpop.f32.mrf.mxu0
      %v6201 = vadd.f32 0.0, %v6200
      %6202 = vdwg.mxu0
      %6203 = vrot.lane.b32.xlu0 %v6017, 96
      %v6204 = vpop.permute.xlu0 %6203
      %6205 = vrot.lane.b32.xlu0 %v6019, 96
      %v6206 = vpop.permute.xlu0 %6205
      %v6207 = vsel %vm471, %v6017, 0
      %v6209 = vsel %vm471, %v6019, 0
      %v6211 = vsel %vm471, %v6204, 0
      %v6213 = vsel %vm471, %v6206, 0
      %6215 = vmatpush.xpose.msra.mxu0 0.0
      %6216 = vmatpush.xpose.msra.mxu0 0.0
      %6217 = vmatpush.xpose.msra.mxu0 0.0
      %6218 = vmatpush.xpose.msra.mxu0 0.0
      %6219 = vmatpush.xpose.msra.mxu0 0.0
      %6220 = vmatpush.xpose.msra.mxu0 0.0
      %6221 = vmatpush.xpose.msra.mxu0 0.0
      %6222 = vmatpush.xpose.msra.mxu0 0.0
      %6223 = vmatpush.xpose.msra.mxu0 0.0
      %6224 = vmatpush.xpose.msra.mxu0 0.0
      %6225 = vmatpush.xpose.msra.mxu0 0.0
      %6226 = vmatpush.xpose.msra.mxu0 0.0
      %6227 = vmatpush.xpose.msra.mxu0 0.0
      %6228 = vmatpush.xpose.msra.mxu0 0.0
      %6229 = vmatpush.xpose.msra.mxu0 %v6213
      %6230 = vmatpush.xpose.msra.mxu0 %v6211
      %6231 = vmatmul.f32.gmra.mxu0 %v6207
      %v6232 = vpop.f32.mrf.mxu0
      %v6233 = vadd.f32 0.0, %v6232
      %6234 = vmatmul.f32.gmra.mxu0 %v6209
      %v6235 = vpop.f32.mrf.mxu0
      %v6236 = vadd.f32 0.0, %v6235
      %6237 = vdwg.mxu0
      %6238 = vrot.lane.b32.xlu0 %v6021, 96
      %v6239 = vpop.permute.xlu0 %6238
      %6240 = vrot.lane.b32.xlu0 %v6023, 96
      %v6241 = vpop.permute.xlu0 %6240
      %v6242 = vsel %vm471, %v6021, 0
      %v6244 = vsel %vm471, %v6023, 0
      %v6246 = vsel %vm471, %v6239, 0
      %v6248 = vsel %vm471, %v6241, 0
      %6250 = vmatpush.xpose.msra.mxu0 0.0
      %6251 = vmatpush.xpose.msra.mxu0 0.0
      %6252 = vmatpush.xpose.msra.mxu0 0.0
      %6253 = vmatpush.xpose.msra.mxu0 0.0
      %6254 = vmatpush.xpose.msra.mxu0 0.0
      %6255 = vmatpush.xpose.msra.mxu0 0.0
      %6256 = vmatpush.xpose.msra.mxu0 0.0
      %6257 = vmatpush.xpose.msra.mxu0 0.0
      %6258 = vmatpush.xpose.msra.mxu0 0.0
      %6259 = vmatpush.xpose.msra.mxu0 0.0
      %6260 = vmatpush.xpose.msra.mxu0 0.0
      %6261 = vmatpush.xpose.msra.mxu0 0.0
      %6262 = vmatpush.xpose.msra.mxu0 0.0
      %6263 = vmatpush.xpose.msra.mxu0 0.0
      %6264 = vmatpush.xpose.msra.mxu0 %v6248
      %6265 = vmatpush.xpose.msra.mxu0 %v6246
      %6266 = vmatmul.f32.gmra.mxu0 %v6242
      %v6267 = vpop.f32.mrf.mxu0
      %v6268 = vadd.f32 0.0, %v6267
      %6269 = vmatmul.f32.gmra.mxu0 %v6244
      %v6270 = vpop.f32.mrf.mxu0
      %v6271 = vadd.f32 0.0, %v6270
      %6272 = vdwg.mxu0
      %6273 = vrot.lane.b32.xlu0 %v6025, 96
      %v6274 = vpop.permute.xlu0 %6273
      %6275 = vrot.lane.b32.xlu0 %v6027, 96
      %v6276 = vpop.permute.xlu0 %6275
      %v6277 = vsel %vm471, %v6025, 0
      %v6279 = vsel %vm471, %v6027, 0
      %v6281 = vsel %vm471, %v6274, 0
      %v6283 = vsel %vm471, %v6276, 0
      %6285 = vmatpush.xpose.msra.mxu0 0.0
      %6286 = vmatpush.xpose.msra.mxu0 0.0
      %6287 = vmatpush.xpose.msra.mxu0 0.0
      %6288 = vmatpush.xpose.msra.mxu0 0.0
      %6289 = vmatpush.xpose.msra.mxu0 0.0
      %6290 = vmatpush.xpose.msra.mxu0 0.0
      %6291 = vmatpush.xpose.msra.mxu0 0.0
      %6292 = vmatpush.xpose.msra.mxu0 0.0
      %6293 = vmatpush.xpose.msra.mxu0 0.0
      %6294 = vmatpush.xpose.msra.mxu0 0.0
      %6295 = vmatpush.xpose.msra.mxu0 0.0
      %6296 = vmatpush.xpose.msra.mxu0 0.0
      %6297 = vmatpush.xpose.msra.mxu0 0.0
      %6298 = vmatpush.xpose.msra.mxu0 0.0
      %6299 = vmatpush.xpose.msra.mxu0 %v6283
      %6300 = vmatpush.xpose.msra.mxu0 %v6281
      %6301 = vmatmul.f32.gmra.mxu0 %v6277
      %v6302 = vpop.f32.mrf.mxu0
      %v6303 = vadd.f32 0.0, %v6302
      %6304 = vmatmul.f32.gmra.mxu0 %v6279
      %v6305 = vpop.f32.mrf.mxu0
      %v6306 = vadd.f32 0.0, %v6305
      %6307 = vdwg.mxu0
      %v6308 = vsel %vm368, %v6058, -inf
      %6309 = vmax.xlane.f32.xlu0 %v6308
      %v6310 = vpop.xlane.xlu0 %6309
      %v6311 = vsel %vm368, %v6061, -inf
      %6312 = vmax.xlane.f32.xlu0 %v6311
      %v6313 = vpop.xlane.xlu0 %6312
      %v6314 = vsel %vm368, %v6093, -inf
      %6315 = vmax.xlane.f32.xlu0 %v6314
      %v6316 = vpop.xlane.xlu0 %6315
      %v6317 = vsel %vm368, %v6096, -inf
      %6318 = vmax.xlane.f32.xlu0 %v6317
      %v6319 = vpop.xlane.xlu0 %6318
      %v6320 = vsel %vm368, %v6128, -inf
      %6321 = vmax.xlane.f32.xlu0 %v6320
      %v6322 = vpop.xlane.xlu0 %6321
      %v6323 = vsel %vm368, %v6131, -inf
      %6324 = vmax.xlane.f32.xlu0 %v6323
      %v6325 = vpop.xlane.xlu0 %6324
      %v6326 = vsel %vm368, %v6163, -inf
      %6327 = vmax.xlane.f32.xlu0 %v6326
      %v6328 = vpop.xlane.xlu0 %6327
      %v6329 = vsel %vm368, %v6166, -inf
      %6330 = vmax.xlane.f32.xlu0 %v6329
      %v6331 = vpop.xlane.xlu0 %6330
      %v6332 = vsel %vm368, %v6198, -inf
      %6333 = vmax.xlane.f32.xlu0 %v6332
      %v6334 = vpop.xlane.xlu0 %6333
      %v6335 = vsel %vm368, %v6201, -inf
      %6336 = vmax.xlane.f32.xlu0 %v6335
      %v6337 = vpop.xlane.xlu0 %6336
      %v6338 = vsel %vm368, %v6233, -inf
      %6339 = vmax.xlane.f32.xlu0 %v6338
      %v6340 = vpop.xlane.xlu0 %6339
      %v6341 = vsel %vm368, %v6236, -inf
      %6342 = vmax.xlane.f32.xlu0 %v6341
      %v6343 = vpop.xlane.xlu0 %6342
      %v6344 = vsel %vm368, %v6268, -inf
      %6345 = vmax.xlane.f32.xlu0 %v6344
      %v6346 = vpop.xlane.xlu0 %6345
      %v6347 = vsel %vm368, %v6271, -inf
      %6348 = vmax.xlane.f32.xlu0 %v6347
      %v6349 = vpop.xlane.xlu0 %6348
      %v6350 = vsel %vm368, %v6303, -inf
      %6351 = vmax.xlane.f32.xlu0 %v6350
      %v6352 = vpop.xlane.xlu0 %6351
      %v6353 = vsel %vm368, %v6306, -inf
      %6354 = vmax.xlane.f32.xlu0 %v6353
      %v6355 = vpop.xlane.xlu0 %6354
      %v6356 = vsub.f32 %v6058, %v6310
      %v6357 = vsub.f32 %v6061, %v6313
      %v6358 = vsub.f32 %v6093, %v6316
      %v6359 = vsub.f32 %v6096, %v6319
      %v6360 = vsub.f32 %v6128, %v6322
      %v6361 = vsub.f32 %v6131, %v6325
      %v6362 = vsub.f32 %v6163, %v6328
      %v6363 = vsub.f32 %v6166, %v6331
      %v6364 = vsub.f32 %v6198, %v6334
      %v6365 = vsub.f32 %v6201, %v6337
      %v6366 = vsub.f32 %v6233, %v6340
      %v6367 = vsub.f32 %v6236, %v6343
      %v6368 = vsub.f32 %v6268, %v6346
      %v6369 = vsub.f32 %v6271, %v6349
      %v6370 = vsub.f32 %v6303, %v6352
      %v6371 = vsub.f32 %v6306, %v6355
      %v6372 = vmul.f32 %v6356, 1.442695
      %v6373 = vpow.pop %v6372
      %v6374 = vmul.f32 %v6357, 1.442695
      %v6375 = vpow.pop %v6374
      %v6376 = vmul.f32 %v6358, 1.442695
      %v6377 = vpow.pop %v6376
      %v6378 = vmul.f32 %v6359, 1.442695
      %v6379 = vpow.pop %v6378
      %v6380 = vmul.f32 %v6360, 1.442695
      %v6381 = vpow.pop %v6380
      %v6382 = vmul.f32 %v6361, 1.442695
      %v6383 = vpow.pop %v6382
      %v6384 = vmul.f32 %v6362, 1.442695
      %v6385 = vpow.pop %v6384
      %v6386 = vmul.f32 %v6363, 1.442695
      %v6387 = vpow.pop %v6386
      %v6388 = vmul.f32 %v6364, 1.442695
      %v6389 = vpow.pop %v6388
      %v6390 = vmul.f32 %v6365, 1.442695
      %v6391 = vpow.pop %v6390
      %v6392 = vmul.f32 %v6366, 1.442695
      %v6393 = vpow.pop %v6392
      %v6394 = vmul.f32 %v6367, 1.442695
      %v6395 = vpow.pop %v6394
      %v6396 = vmul.f32 %v6368, 1.442695
      %v6397 = vpow.pop %v6396
      %v6398 = vmul.f32 %v6369, 1.442695
      %v6399 = vpow.pop %v6398
      %v6400 = vmul.f32 %v6370, 1.442695
      %v6401 = vpow.pop %v6400
      %v6402 = vmul.f32 %v6371, 1.442695
      %v6403 = vpow.pop %v6402
      %v6404 = vsel %vm368, %v6373, 0.0
      %6405 = vadd.xlane.f32.xlu0 %v6404
      %v6406 = vpop.xlane.xlu0 %6405
      %v6407 = vsel %vm368, %v6375, 0.0
      %6408 = vadd.xlane.f32.xlu0 %v6407
      %v6409 = vpop.xlane.xlu0 %6408
      %v6410 = vsel %vm368, %v6377, 0.0
      %6411 = vadd.xlane.f32.xlu0 %v6410
      %v6412 = vpop.xlane.xlu0 %6411
      %v6413 = vsel %vm368, %v6379, 0.0
      %6414 = vadd.xlane.f32.xlu0 %v6413
      %v6415 = vpop.xlane.xlu0 %6414
      %v6416 = vsel %vm368, %v6381, 0.0
      %6417 = vadd.xlane.f32.xlu0 %v6416
      %v6418 = vpop.xlane.xlu0 %6417
      %v6419 = vsel %vm368, %v6383, 0.0
      %6420 = vadd.xlane.f32.xlu0 %v6419
      %v6421 = vpop.xlane.xlu0 %6420
      %v6422 = vsel %vm368, %v6385, 0.0
      %6423 = vadd.xlane.f32.xlu0 %v6422
      %v6424 = vpop.xlane.xlu0 %6423
      %v6425 = vsel %vm368, %v6387, 0.0
      %6426 = vadd.xlane.f32.xlu0 %v6425
      %v6427 = vpop.xlane.xlu0 %6426
      %v6428 = vsel %vm368, %v6389, 0.0
      %6429 = vadd.xlane.f32.xlu0 %v6428
      %v6430 = vpop.xlane.xlu0 %6429
      %v6431 = vsel %vm368, %v6391, 0.0
      %6432 = vadd.xlane.f32.xlu0 %v6431
      %v6433 = vpop.xlane.xlu0 %6432
      %v6434 = vsel %vm368, %v6393, 0.0
      %6435 = vadd.xlane.f32.xlu0 %v6434
      %v6436 = vpop.xlane.xlu0 %6435
      %v6437 = vsel %vm368, %v6395, 0.0
      %6438 = vadd.xlane.f32.xlu0 %v6437
      %v6439 = vpop.xlane.xlu0 %6438
      %v6440 = vsel %vm368, %v6397, 0.0
      %6441 = vadd.xlane.f32.xlu0 %v6440
      %v6442 = vpop.xlane.xlu0 %6441
      %v6443 = vsel %vm368, %v6399, 0.0
      %6444 = vadd.xlane.f32.xlu0 %v6443
      %v6445 = vpop.xlane.xlu0 %6444
      %v6446 = vsel %vm368, %v6401, 0.0
      %6447 = vadd.xlane.f32.xlu0 %v6446
      %v6448 = vpop.xlane.xlu0 %6447
      %v6449 = vsel %vm368, %v6403, 0.0
      %6450 = vadd.xlane.f32.xlu0 %v6449
      %v6451 = vpop.xlane.xlu0 %6450
      %v6452 = vrcp.pop %v6406
      %v6453 = vrcp.pop %v6409
      %v6454 = vrcp.pop %v6412
      %v6455 = vrcp.pop %v6415
      %v6456 = vrcp.pop %v6418
      %v6457 = vrcp.pop %v6421
      %v6458 = vrcp.pop %v6424
      %v6459 = vrcp.pop %v6427
      %v6460 = vrcp.pop %v6430
      %v6461 = vrcp.pop %v6433
      %v6462 = vrcp.pop %v6436
      %v6463 = vrcp.pop %v6439
      %v6464 = vrcp.pop %v6442
      %v6465 = vrcp.pop %v6445
      %v6466 = vrcp.pop %v6448
      %v6467 = vrcp.pop %v6451
      %v6468 = vmul.f32 %v6373, %v6452
      %v6469 = vmul.f32 %v6375, %v6453
      %v6470 = vmul.f32 %v6377, %v6454
      %v6471 = vmul.f32 %v6379, %v6455
      %v6472 = vmul.f32 %v6381, %v6456
      %v6473 = vmul.f32 %v6383, %v6457
      %v6474 = vmul.f32 %v6385, %v6458
      %v6475 = vmul.f32 %v6387, %v6459
      %v6476 = vmul.f32 %v6389, %v6460
      %v6477 = vmul.f32 %v6391, %v6461
      %v6478 = vmul.f32 %v6393, %v6462
      %v6479 = vmul.f32 %v6395, %v6463
      %v6480 = vmul.f32 %v6397, %v6464
      %v6481 = vmul.f32 %v6399, %v6465
      %v6482 = vmul.f32 %v6401, %v6466
      %v6483 = vmul.f32 %v6403, %v6467
      %6484 = vrot.lane.b32.xlu0 %v5993, 64
      %v6485 = vpop.permute.xlu0 %6484
      %6486 = vrot.lane.b32.xlu0 %v5996, 64
      %v6487 = vpop.permute.xlu0 %6486
      %v6491 = vsel %vm368, %v6468, 0
      %v6494 = vsel %vm368, %v6469, 0
      %6496 = vmatpush.msra.mxu0 0.0
      %6497 = vmatpush.msra.mxu0 0.0
      %6498 = vmatpush.msra.mxu0 0.0
      %6499 = vmatpush.msra.mxu0 0.0
      %6500 = vmatpush.msra.mxu0 0.0
      %6501 = vmatpush.msra.mxu0 0.0
      %6502 = vmatpush.msra.mxu0 0.0
      %6503 = vmatpush.msra.mxu0 0.0
      %6504 = vmatpush.msra.mxu0 0.0
      %6505 = vmatpush.msra.mxu0 0.0
      %6506 = vmatpush.msra.mxu0 0.0
      %6507 = vmatpush.msra.mxu0 0.0
      %6508 = vmatpush.msra.mxu0 0.0
      %6509 = vmatpush.msra.mxu0 0.0
      %6510 = vmatpush.msra.mxu0 %v6487
      %6511 = vmatpush.msra.mxu0 %v6485
      %6512 = vmatmul.f32.gmra.mxu0 %v6491
      %v6513 = vpop.f32.mrf.mxu0
      %v6514 = vadd.f32 0.0, %v6513
      %6515 = vmatmul.f32.gmra.mxu0 %v6494
      %v6516 = vpop.f32.mrf.mxu0
      %v6517 = vadd.f32 0.0, %v6516
      %6518 = vdwg.mxu0
      %6519 = vrot.lane.b32.xlu0 %v6001, 64
      %v6520 = vpop.permute.xlu0 %6519
      %6521 = vrot.lane.b32.xlu0 %v6003, 64
      %v6522 = vpop.permute.xlu0 %6521
      %v6526 = vsel %vm368, %v6470, 0
      %v6529 = vsel %vm368, %v6471, 0
      %6531 = vmatpush.msra.mxu0 0.0
      %6532 = vmatpush.msra.mxu0 0.0
      %6533 = vmatpush.msra.mxu0 0.0
      %6534 = vmatpush.msra.mxu0 0.0
      %6535 = vmatpush.msra.mxu0 0.0
      %6536 = vmatpush.msra.mxu0 0.0
      %6537 = vmatpush.msra.mxu0 0.0
      %6538 = vmatpush.msra.mxu0 0.0
      %6539 = vmatpush.msra.mxu0 0.0
      %6540 = vmatpush.msra.mxu0 0.0
      %6541 = vmatpush.msra.mxu0 0.0
      %6542 = vmatpush.msra.mxu0 0.0
      %6543 = vmatpush.msra.mxu0 0.0
      %6544 = vmatpush.msra.mxu0 0.0
      %6545 = vmatpush.msra.mxu0 %v6522
      %6546 = vmatpush.msra.mxu0 %v6520
      %6547 = vmatmul.f32.gmra.mxu0 %v6526
      %v6548 = vpop.f32.mrf.mxu0
      %v6549 = vadd.f32 0.0, %v6548
      %6550 = vmatmul.f32.gmra.mxu0 %v6529
      %v6551 = vpop.f32.mrf.mxu0
      %v6552 = vadd.f32 0.0, %v6551
      %6553 = vdwg.mxu0
      %6554 = vrot.lane.b32.xlu0 %v6005, 64
      %v6555 = vpop.permute.xlu0 %6554
      %6556 = vrot.lane.b32.xlu0 %v6007, 64
      %v6557 = vpop.permute.xlu0 %6556
      %v6561 = vsel %vm368, %v6472, 0
      %v6564 = vsel %vm368, %v6473, 0
      %6566 = vmatpush.msra.mxu0 0.0
      %6567 = vmatpush.msra.mxu0 0.0
      %6568 = vmatpush.msra.mxu0 0.0
      %6569 = vmatpush.msra.mxu0 0.0
      %6570 = vmatpush.msra.mxu0 0.0
      %6571 = vmatpush.msra.mxu0 0.0
      %6572 = vmatpush.msra.mxu0 0.0
      %6573 = vmatpush.msra.mxu0 0.0
      %6574 = vmatpush.msra.mxu0 0.0
      %6575 = vmatpush.msra.mxu0 0.0
      %6576 = vmatpush.msra.mxu0 0.0
      %6577 = vmatpush.msra.mxu0 0.0
      %6578 = vmatpush.msra.mxu0 0.0
      %6579 = vmatpush.msra.mxu0 0.0
      %6580 = vmatpush.msra.mxu0 %v6557
      %6581 = vmatpush.msra.mxu0 %v6555
      %6582 = vmatmul.f32.gmra.mxu0 %v6561
      %v6583 = vpop.f32.mrf.mxu0
      %v6584 = vadd.f32 0.0, %v6583
      %6585 = vmatmul.f32.gmra.mxu0 %v6564
      %v6586 = vpop.f32.mrf.mxu0
      %v6587 = vadd.f32 0.0, %v6586
      %6588 = vdwg.mxu0
      %6589 = vrot.lane.b32.xlu0 %v6009, 64
      %v6590 = vpop.permute.xlu0 %6589
      %6591 = vrot.lane.b32.xlu0 %v6011, 64
      %v6592 = vpop.permute.xlu0 %6591
      %v6596 = vsel %vm368, %v6474, 0
      %v6599 = vsel %vm368, %v6475, 0
      %6601 = vmatpush.msra.mxu0 0.0
      %6602 = vmatpush.msra.mxu0 0.0
      %6603 = vmatpush.msra.mxu0 0.0
      %6604 = vmatpush.msra.mxu0 0.0
      %6605 = vmatpush.msra.mxu0 0.0
      %6606 = vmatpush.msra.mxu0 0.0
      %6607 = vmatpush.msra.mxu0 0.0
      %6608 = vmatpush.msra.mxu0 0.0
      %6609 = vmatpush.msra.mxu0 0.0
      %6610 = vmatpush.msra.mxu0 0.0
      %6611 = vmatpush.msra.mxu0 0.0
      %6612 = vmatpush.msra.mxu0 0.0
      %6613 = vmatpush.msra.mxu0 0.0
      %6614 = vmatpush.msra.mxu0 0.0
      %6615 = vmatpush.msra.mxu0 %v6592
      %6616 = vmatpush.msra.mxu0 %v6590
      %6617 = vmatmul.f32.gmra.mxu0 %v6596
      %v6618 = vpop.f32.mrf.mxu0
      %v6619 = vadd.f32 0.0, %v6618
      %6620 = vmatmul.f32.gmra.mxu0 %v6599
      %v6621 = vpop.f32.mrf.mxu0
      %v6622 = vadd.f32 0.0, %v6621
      %6623 = vdwg.mxu0
      %6624 = vrot.lane.b32.xlu0 %v6013, 64
      %v6625 = vpop.permute.xlu0 %6624
      %6626 = vrot.lane.b32.xlu0 %v6015, 64
      %v6627 = vpop.permute.xlu0 %6626
      %v6631 = vsel %vm368, %v6476, 0
      %v6634 = vsel %vm368, %v6477, 0
      %6636 = vmatpush.msra.mxu0 0.0
      %6637 = vmatpush.msra.mxu0 0.0
      %6638 = vmatpush.msra.mxu0 0.0
      %6639 = vmatpush.msra.mxu0 0.0
      %6640 = vmatpush.msra.mxu0 0.0
      %6641 = vmatpush.msra.mxu0 0.0
      %6642 = vmatpush.msra.mxu0 0.0
      %6643 = vmatpush.msra.mxu0 0.0
      %6644 = vmatpush.msra.mxu0 0.0
      %6645 = vmatpush.msra.mxu0 0.0
      %6646 = vmatpush.msra.mxu0 0.0
      %6647 = vmatpush.msra.mxu0 0.0
      %6648 = vmatpush.msra.mxu0 0.0
      %6649 = vmatpush.msra.mxu0 0.0
      %6650 = vmatpush.msra.mxu0 %v6627
      %6651 = vmatpush.msra.mxu0 %v6625
      %6652 = vmatmul.f32.gmra.mxu0 %v6631
      %v6653 = vpop.f32.mrf.mxu0
      %v6654 = vadd.f32 0.0, %v6653
      %6655 = vmatmul.f32.gmra.mxu0 %v6634
      %v6656 = vpop.f32.mrf.mxu0
      %v6657 = vadd.f32 0.0, %v6656
      %6658 = vdwg.mxu0
      %6659 = vrot.lane.b32.xlu0 %v6017, 64
      %v6660 = vpop.permute.xlu0 %6659
      %6661 = vrot.lane.b32.xlu0 %v6019, 64
      %v6662 = vpop.permute.xlu0 %6661
      %v6666 = vsel %vm368, %v6478, 0
      %v6669 = vsel %vm368, %v6479, 0
      %6671 = vmatpush.msra.mxu0 0.0
      %6672 = vmatpush.msra.mxu0 0.0
      %6673 = vmatpush.msra.mxu0 0.0
      %6674 = vmatpush.msra.mxu0 0.0
      %6675 = vmatpush.msra.mxu0 0.0
      %6676 = vmatpush.msra.mxu0 0.0
      %6677 = vmatpush.msra.mxu0 0.0
      %6678 = vmatpush.msra.mxu0 0.0
      %6679 = vmatpush.msra.mxu0 0.0
      %6680 = vmatpush.msra.mxu0 0.0
      %6681 = vmatpush.msra.mxu0 0.0
      %6682 = vmatpush.msra.mxu0 0.0
      %6683 = vmatpush.msra.mxu0 0.0
      %6684 = vmatpush.msra.mxu0 0.0
      %6685 = vmatpush.msra.mxu0 %v6662
      %6686 = vmatpush.msra.mxu0 %v6660
      %6687 = vmatmul.f32.gmra.mxu0 %v6666
      %v6688 = vpop.f32.mrf.mxu0
      %v6689 = vadd.f32 0.0, %v6688
      %6690 = vmatmul.f32.gmra.mxu0 %v6669
      %v6691 = vpop.f32.mrf.mxu0
      %v6692 = vadd.f32 0.0, %v6691
      %6693 = vdwg.mxu0
      %6694 = vrot.lane.b32.xlu0 %v6021, 64
      %v6695 = vpop.permute.xlu0 %6694
      %6696 = vrot.lane.b32.xlu0 %v6023, 64
      %v6697 = vpop.permute.xlu0 %6696
      %v6701 = vsel %vm368, %v6480, 0
      %v6704 = vsel %vm368, %v6481, 0
      %6706 = vmatpush.msra.mxu0 0.0
      %6707 = vmatpush.msra.mxu0 0.0
      %6708 = vmatpush.msra.mxu0 0.0
      %6709 = vmatpush.msra.mxu0 0.0
      %6710 = vmatpush.msra.mxu0 0.0
      %6711 = vmatpush.msra.mxu0 0.0
      %6712 = vmatpush.msra.mxu0 0.0
      %6713 = vmatpush.msra.mxu0 0.0
      %6714 = vmatpush.msra.mxu0 0.0
      %6715 = vmatpush.msra.mxu0 0.0
      %6716 = vmatpush.msra.mxu0 0.0
      %6717 = vmatpush.msra.mxu0 0.0
      %6718 = vmatpush.msra.mxu0 0.0
      %6719 = vmatpush.msra.mxu0 0.0
      %6720 = vmatpush.msra.mxu0 %v6697
      %6721 = vmatpush.msra.mxu0 %v6695
      %6722 = vmatmul.f32.gmra.mxu0 %v6701
      %v6723 = vpop.f32.mrf.mxu0
      %v6724 = vadd.f32 0.0, %v6723
      %6725 = vmatmul.f32.gmra.mxu0 %v6704
      %v6726 = vpop.f32.mrf.mxu0
      %v6727 = vadd.f32 0.0, %v6726
      %6728 = vdwg.mxu0
      %6729 = vrot.lane.b32.xlu0 %v6025, 64
      %v6730 = vpop.permute.xlu0 %6729
      %6731 = vrot.lane.b32.xlu0 %v6027, 64
      %v6732 = vpop.permute.xlu0 %6731
      %v6736 = vsel %vm368, %v6482, 0
      %v6739 = vsel %vm368, %v6483, 0
      %6741 = vmatpush.msra.mxu0 0.0
      %6742 = vmatpush.msra.mxu0 0.0
      %6743 = vmatpush.msra.mxu0 0.0
      %6744 = vmatpush.msra.mxu0 0.0
      %6745 = vmatpush.msra.mxu0 0.0
      %6746 = vmatpush.msra.mxu0 0.0
      %6747 = vmatpush.msra.mxu0 0.0
      %6748 = vmatpush.msra.mxu0 0.0
      %6749 = vmatpush.msra.mxu0 0.0
      %6750 = vmatpush.msra.mxu0 0.0
      %6751 = vmatpush.msra.mxu0 0.0
      %6752 = vmatpush.msra.mxu0 0.0
      %6753 = vmatpush.msra.mxu0 0.0
      %6754 = vmatpush.msra.mxu0 0.0
      %6755 = vmatpush.msra.mxu0 %v6732
      %6756 = vmatpush.msra.mxu0 %v6730
      %6757 = vmatmul.f32.gmra.mxu0 %v6736
      %v6758 = vpop.f32.mrf.mxu0
      %v6759 = vadd.f32 0.0, %v6758
      %6760 = vmatmul.f32.gmra.mxu0 %v6739
      %v6761 = vpop.f32.mrf.mxu0
      %v6762 = vadd.f32 0.0, %v6761
      %6763 = vdwg.mxu0
      %6764 = vst.msk [vmem:[#allocation2] sm:$0xff] %vm471, %v6514
      %6765 = vst.msk [vmem:[#allocation2 + $0x8] sm:$0xff] %vm471, %v6517
      %6768 = vrot.lane.b32.xlu0 %v6549, 4
      %v6769 = vpop.permute.xlu0 %6768
      %6770 = vrot.lane.b32.xlu0 %v6552, 4
      %v6771 = vpop.permute.xlu0 %6770
      %6774 = vst.msk [vmem:[#allocation2] sm:$0xff] %vm1214, %v6769
      %6775 = vst.msk [vmem:[#allocation2 + $0x8] sm:$0xff] %vm1214, %v6771
      %6778 = vrot.lane.b32.xlu0 %v6584, 8
      %v6779 = vpop.permute.xlu0 %6778
      %6780 = vrot.lane.b32.xlu0 %v6587, 8
      %v6781 = vpop.permute.xlu0 %6780
      %6784 = vst.msk [vmem:[#allocation2] sm:$0xff] %vm1225, %v6779
      %6785 = vst.msk [vmem:[#allocation2 + $0x8] sm:$0xff] %vm1225, %v6781
      %6788 = vrot.lane.b32.xlu0 %v6619, 12
      %v6789 = vpop.permute.xlu0 %6788
      %6790 = vrot.lane.b32.xlu0 %v6622, 12
      %v6791 = vpop.permute.xlu0 %6790
      %6794 = vst.msk [vmem:[#allocation2] sm:$0xff] %vm1236, %v6789
      %6795 = vst.msk [vmem:[#allocation2 + $0x8] sm:$0xff] %vm1236, %v6791
      %6798 = vrot.lane.b32.xlu0 %v6654, 16
      %v6799 = vpop.permute.xlu0 %6798
      %6800 = vrot.lane.b32.xlu0 %v6657, 16
      %v6801 = vpop.permute.xlu0 %6800
      %6804 = vst.msk [vmem:[#allocation2] sm:$0xff] %vm1247, %v6799
      %6805 = vst.msk [vmem:[#allocation2 + $0x8] sm:$0xff] %vm1247, %v6801
      %6808 = vrot.lane.b32.xlu0 %v6689, 20
      %v6809 = vpop.permute.xlu0 %6808
      %6810 = vrot.lane.b32.xlu0 %v6692, 20
      %v6811 = vpop.permute.xlu0 %6810
      %6814 = vst.msk [vmem:[#allocation2] sm:$0xff] %vm1258, %v6809
      %6815 = vst.msk [vmem:[#allocation2 + $0x8] sm:$0xff] %vm1258, %v6811
      %6818 = vrot.lane.b32.xlu0 %v6724, 24
      %v6819 = vpop.permute.xlu0 %6818
      %6820 = vrot.lane.b32.xlu0 %v6727, 24
      %v6821 = vpop.permute.xlu0 %6820
      %6824 = vst.msk [vmem:[#allocation2] sm:$0xff] %vm1269, %v6819
      %6825 = vst.msk [vmem:[#allocation2 + $0x8] sm:$0xff] %vm1269, %v6821
      %6828 = vrot.lane.b32.xlu0 %v6759, 28
      %v6829 = vpop.permute.xlu0 %6828
      %6830 = vrot.lane.b32.xlu0 %v6762, 28
      %v6831 = vpop.permute.xlu0 %6830
      %6834 = vst.msk [vmem:[#allocation2] sm:$0xff] %vm1280, %v6829
      %6835 = vst.msk [vmem:[#allocation2 + $0x8] sm:$0xff] %vm1280, %v6831
      %v6836 = vld [vmem:[#allocation2] sm:$0xff]
      %v6837 = vld [vmem:[#allocation2 + $0x8] sm:$0xff]
      %s6838 = scalar_lea.vmem %s5, 160
      %v6839 = vld [vmem:[%s6838] sm:$0xff]
      %v6840 = vld [vmem:[%s6838 + $0x8] sm:$0xff]
      %v6841 = vld [vmem:[%s6838 + $0x10] sm:$0xff]
      %v6842 = vld [vmem:[%s6838 + $0x18] sm:$0xff]
      %v6843 = vperm.slane %v5958, 0
      %v6845 = vsel %vm407, %v6836, 0
      %v6848 = vsel %vm407, %v6837, 0
      %6850 = vmatpush.msra.mxu0 0.0
      %6851 = vmatpush.msra.mxu0 0.0
      %6852 = vmatpush.msra.mxu0 0.0
      %6853 = vmatpush.msra.mxu0 0.0
      %6854 = vmatpush.msra.mxu0 0.0
      %6855 = vmatpush.msra.mxu0 0.0
      %6856 = vmatpush.msra.mxu0 0.0
      %6857 = vmatpush.msra.mxu0 0.0
      %6858 = vmatpush.msra.mxu0 0.0
      %6859 = vmatpush.msra.mxu0 0.0
      %6860 = vmatpush.msra.mxu0 0.0
      %6861 = vmatpush.msra.mxu0 0.0
      %6862 = vmatpush.msra.mxu0 %v6842
      %6863 = vmatpush.msra.mxu0 %v6841
      %6864 = vmatpush.msra.mxu0 %v6840
      %6865 = vmatpush.msra.mxu0 %v6839
      %6866 = vmatmul.f32.gmra.mxu0 %v6845
      %v6867 = vpop.f32.mrf.mxu0
      %v6868 = vadd.f32 %v6843, %v6867
      %6869 = vmatmul.f32.gmra.mxu0 %v6848
      %v6870 = vpop.f32.mrf.mxu0
      %v6871 = vadd.f32 %v6843, %v6870
      %6872 = vdwg.mxu0
      %v6873 = vadd.f32 %v5955, %v6868
      %v6874 = vadd.f32 %v5956, %v6871
      %v6875 = vsel %vm407, %v6873, 0.0
      %6876 = vadd.xlane.f32.xlu0 %v6875
      %v6877 = vpop.xlane.xlu0 %6876
      %v6878 = vsel %vm407, %v6874, 0.0
      %6879 = vadd.xlane.f32.xlu0 %v6878
      %v6880 = vpop.xlane.xlu0 %6879
      %v6881 = vmul.f32 %v6877, %v1333
      %v6882 = vmul.f32 %v6880, %v1333
      %v6883 = vmul.f32 %v6873, %v6873
      %v6884 = vmul.f32 %v6874, %v6874
      %v6885 = vsel %vm407, %v6883, 0.0
      %6886 = vadd.xlane.f32.xlu0 %v6885
      %v6887 = vpop.xlane.xlu0 %6886
      %v6888 = vsel %vm407, %v6884, 0.0
      %6889 = vadd.xlane.f32.xlu0 %v6888
      %v6890 = vpop.xlane.xlu0 %6889
      %v6891 = vmul.f32 %v6887, %v1333
      %v6892 = vmul.f32 %v6890, %v1333
      %v6893 = vmul.f32 %v6881, %v6881
      %v6894 = vmul.f32 %v6882, %v6882
      %v6895 = vsub.f32 %v6891, %v6893
      %v6896 = vsub.f32 %v6892, %v6894
      %v6897 = vsub.f32 %v6873, %v6881
      %v6898 = vsub.f32 %v6874, %v6882
      %v6899 = vadd.f32 %v6895, 1e-05
      %v6900 = vadd.f32 %v6896, 1e-05
      %v6901 = vrsqrt.pop %v6899
      %v6902 = vmul.f32 %v6901, %v6899
      %v6903 = vmul.f32 %v6902, %v6901
      %v6904 = vmul.f32 0.5, %v6903
      %v6905 = vsub.f32 1.5, %v6904
      %v6906 = vmul.f32 %v6901, %v6905
      %vm6907 = vweird.f32 %v6899
      %vm6908 = vweird.f32 %v6901
      %vm6909 = vmor %vm6907, %vm6908
      %v6910 = vsel %vm6909, %v6901, %v6906
      %v6911 = vrsqrt.pop %v6900
      %v6912 = vmul.f32 %v6911, %v6900
      %v6913 = vmul.f32 %v6912, %v6911
      %v6914 = vmul.f32 0.5, %v6913
      %v6915 = vsub.f32 1.5, %v6914
      %v6916 = vmul.f32 %v6911, %v6915
      %vm6917 = vweird.f32 %v6900
      %vm6918 = vweird.f32 %v6911
      %vm6919 = vmor %vm6917, %vm6918
      %v6920 = vsel %vm6919, %v6911, %v6916
      %v6921 = vmul.f32 %v6897, %v6910
      %v6922 = vmul.f32 %v6898, %v6920
      %v6923 = vperm.slane %v5958, 2
      %v6924 = vmul.f32 %v6921, %v6923
      %v6925 = vmul.f32 %v6922, %v6923
      %v6926 = vperm.slane %v5958, 3
      %v6927 = vadd.f32 %v6924, %v6926
      %v6928 = vadd.f32 %v6925, %v6926
      %s6929 = scalar_lea.vmem %s6, 160
      %v6930 = vld [vmem:[%s6929] sm:$0xff]
      %v6931 = vld [vmem:[%s6929 + $0x8] sm:$0xff]
      %v6932 = vld [vmem:[%s6929 + $0x10] sm:$0xff]
      %v6933 = vld [vmem:[%s6929 + $0x18] sm:$0xff]
      %s6934 = scalar_lea.vmem %s7, 5
      %v6935 = vld [vmem:[%s6934] sm:$0x1]
      %v6937 = vperm.slane %v6935, 0
      %v6940 = vsel %vm407, %v6927, 0
      %v6943 = vsel %vm407, %v6928, 0
      %6945 = vmatpush.msra.mxu0 0.0
      %6946 = vmatpush.msra.mxu0 0.0
      %6947 = vmatpush.msra.mxu0 0.0
      %6948 = vmatpush.msra.mxu0 0.0
      %6949 = vmatpush.msra.mxu0 0.0
      %6950 = vmatpush.msra.mxu0 0.0
      %6951 = vmatpush.msra.mxu0 0.0
      %6952 = vmatpush.msra.mxu0 0.0
      %6953 = vmatpush.msra.mxu0 0.0
      %6954 = vmatpush.msra.mxu0 0.0
      %6955 = vmatpush.msra.mxu0 0.0
      %6956 = vmatpush.msra.mxu0 0.0
      %6957 = vmatpush.msra.mxu0 %v6933
      %6958 = vmatpush.msra.mxu0 %v6932
      %6959 = vmatpush.msra.mxu0 %v6931
      %6960 = vmatpush.msra.mxu0 %v6930
      %6961 = vmatmul.f32.gmra.mxu0 %v6940
      %v6962 = vpop.f32.mrf.mxu0
      %v6963 = vadd.f32 %v6937, %v6962
      %6964 = vmatmul.f32.gmra.mxu0 %v6943
      %v6965 = vpop.f32.mrf.mxu0
      %v6966 = vadd.f32 %v6937, %v6965
      %6967 = vdwg.mxu0
      %v6968 = vmax.f32 %v6963, 0.0
      %v6969 = vmax.f32 %v6966, 0.0
      %s6970 = scalar_lea.vmem %s8, 640
      %v6971 = vld [vmem:[%s6970] sm:$0xff]
      %v6972 = vld [vmem:[%s6970 + $0x8] sm:$0xff]
      %v6973 = vld [vmem:[%s6970 + $0x10] sm:$0xff]
      %v6974 = vld [vmem:[%s6970 + $0x18] sm:$0xff]
      %v6975 = vld [vmem:[%s6970 + $0x20] sm:$0xff]
      %v6976 = vld [vmem:[%s6970 + $0x28] sm:$0xff]
      %v6977 = vld [vmem:[%s6970 + $0x30] sm:$0xff]
      %v6978 = vld [vmem:[%s6970 + $0x38] sm:$0xff]
      %v6979 = vld [vmem:[%s6970 + $0x40] sm:$0xff]
      %v6980 = vld [vmem:[%s6970 + $0x48] sm:$0xff]
      %v6981 = vld [vmem:[%s6970 + $0x50] sm:$0xff]
      %v6982 = vld [vmem:[%s6970 + $0x58] sm:$0xff]
      %v6983 = vld [vmem:[%s6970 + $0x60] sm:$0xff]
      %v6984 = vld [vmem:[%s6970 + $0x68] sm:$0xff]
      %v6985 = vld [vmem:[%s6970 + $0x70] sm:$0xff]
      %v6986 = vld [vmem:[%s6970 + $0x78] sm:$0xff]
      %v6987 = vperm.slane %v5958, 1
      %6988 = vmatpush.msra.mxu0 %v6986
      %6989 = vmatpush.msra.mxu0 %v6985
      %6990 = vmatpush.msra.mxu0 %v6984
      %6991 = vmatpush.msra.mxu0 %v6983
      %6992 = vmatpush.msra.mxu0 %v6982
      %6993 = vmatpush.msra.mxu0 %v6981
      %6994 = vmatpush.msra.mxu0 %v6980
      %6995 = vmatpush.msra.mxu0 %v6979
      %6996 = vmatpush.msra.mxu0 %v6978
      %6997 = vmatpush.msra.mxu0 %v6977
      %6998 = vmatpush.msra.mxu0 %v6976
      %6999 = vmatpush.msra.mxu0 %v6975
      %7000 = vmatpush.msra.mxu0 %v6974
      %7001 = vmatpush.msra.mxu0 %v6973
      %7002 = vmatpush.msra.mxu0 %v6972
      %7003 = vmatpush.msra.mxu0 %v6971
      %7004 = vmatmul.f32.gmra.mxu0 %v6968
      %v7005 = vpop.f32.mrf.mxu0
      %v7006 = vadd.f32 %v6987, %v7005
      %7007 = vmatmul.f32.gmra.mxu0 %v6969
      %v7008 = vpop.f32.mrf.mxu0
      %v7009 = vadd.f32 %v6987, %v7008
      %7010 = vdwg.mxu0
      %v7011 = vadd.f32 %v6927, %v7006
      %v7012 = vadd.f32 %v6928, %v7009
      %v7013 = vsel %vm407, %v7011, 0.0
      %7014 = vadd.xlane.f32.xlu0 %v7013
      %v7015 = vpop.xlane.xlu0 %7014
      %v7016 = vsel %vm407, %v7012, 0.0
      %7017 = vadd.xlane.f32.xlu0 %v7016
      %v7018 = vpop.xlane.xlu0 %7017
      %v7019 = vmul.f32 %v7015, %v1333
      %v7020 = vmul.f32 %v7018, %v1333
      %v7021 = vmul.f32 %v7011, %v7011
      %v7022 = vmul.f32 %v7012, %v7012
      %v7023 = vsel %vm407, %v7021, 0.0
      %7024 = vadd.xlane.f32.xlu0 %v7023
      %v7025 = vpop.xlane.xlu0 %7024
      %v7026 = vsel %vm407, %v7022, 0.0
      %7027 = vadd.xlane.f32.xlu0 %v7026
      %v7028 = vpop.xlane.xlu0 %7027
      %v7029 = vmul.f32 %v7025, %v1333
      %v7030 = vmul.f32 %v7028, %v1333
      %v7031 = vmul.f32 %v7019, %v7019
      %v7032 = vmul.f32 %v7020, %v7020
      %v7033 = vsub.f32 %v7029, %v7031
      %v7034 = vsub.f32 %v7030, %v7032
      %v7035 = vsub.f32 %v7011, %v7019
      %v7036 = vsub.f32 %v7012, %v7020
      %v7037 = vadd.f32 %v7033, 1e-05
      %v7038 = vadd.f32 %v7034, 1e-05
      %v7039 = vrsqrt.pop %v7037
      %v7040 = vmul.f32 %v7039, %v7037
      %v7041 = vmul.f32 %v7040, %v7039
      %v7042 = vmul.f32 0.5, %v7041
      %v7043 = vsub.f32 1.5, %v7042
      %v7044 = vmul.f32 %v7039, %v7043
      %vm7045 = vweird.f32 %v7037
      %vm7046 = vweird.f32 %v7039
      %vm7047 = vmor %vm7045, %vm7046
      %v7048 = vsel %vm7047, %v7039, %v7044
      %v7049 = vrsqrt.pop %v7038
      %v7050 = vmul.f32 %v7049, %v7038
      %v7051 = vmul.f32 %v7050, %v7049
      %v7052 = vmul.f32 0.5, %v7051
      %v7053 = vsub.f32 1.5, %v7052
      %v7054 = vmul.f32 %v7049, %v7053
      %vm7055 = vweird.f32 %v7038
      %vm7056 = vweird.f32 %v7049
      %vm7057 = vmor %vm7055, %vm7056
      %v7058 = vsel %vm7057, %v7049, %v7054
      %v7059 = vmul.f32 %v7035, %v7048
      %v7060 = vmul.f32 %v7036, %v7058
      %v7061 = vperm.slane %v5958, 4
      %v7062 = vmul.f32 %v7059, %v7061
      %v7063 = vmul.f32 %v7060, %v7061
      %v7064 = vperm.slane %v5958, 5
      %v7065 = vadd.f32 %v7062, %v7064
      %v7066 = vadd.f32 %v7063, %v7064
      %7067 = vst.msk [vmem:[%s359] sm:$0xff] %vm407, %v7065
      %7068 = vst.msk [vmem:[%s359 + $0x8] sm:$0xff] %vm407, %v7066
      %p7069 = scmp.lt.s32.totalorder %s21, 1
      %s7070 = scalar_select %p7069, %s21, 1
      %s7071 = smul.addr %s7070, 2
      %s7072 = smul.addr %s7071, 8
      %s7073 = scalar_lea.vmem %s10, %s7072
      // Predicated region
      $region61: #{transformer_encoder_forward.1} parent=59 // pred_check
        %p7074 = pneg %p254
      $region62: #{transformer_encoder_forward.1} parent=59 // pred_check_branch
        %7076 = sbr.rel (%p7074) target = $region64
      $region63: #{transformer_encoder_forward.1} parent=59 // pred_region
        _
      $region64: #{transformer_encoder_forward.1} parent=59 // pred_fallthru
        _
    $region60: #{transformer_encoder_forward.1} parent=5 // pred_fallthru
      _
    %p7077 = scmp.le.s32.totalorder 2, %s16
    // Predicated region
    $region65: #{transformer_encoder_forward.1} parent=5 // pred_check
      %p7078 = pneg %p7077
    $region66: #{transformer_encoder_forward.1} parent=5 // pred_check_branch
      %7080 = sbr.rel (%p7078) target = $region68
    $region67: #{transformer_encoder_forward.1} parent=5 // pred_region
      %s7081 = ssub.s32 %s16, 2
      // Predicated region
      $region69: #{transformer_encoder_forward.1} parent=67 // pred_check
        %p7082 = pneg %p260
      $region70: #{transformer_encoder_forward.1} parent=67 // pred_check_branch
        %7084 = sbr.rel (%p7082) target = $region72
      $region71: #{transformer_encoder_forward.1} parent=67 // pred_region
        %p7085 = scmp.lt.s32.totalorder %s22, 1
        %s7086 = scalar_select %p7085, %s22, 1
        %s7087 = smul.addr %s7086, 2
        %s7088 = smul.addr %s7087, 8
        %s7089 = scalar_lea.vmem %s10, %s7088
      $region72: #{transformer_encoder_forward.1} parent=67 // pred_fallthru
        _
    $region68: #{transformer_encoder_forward.1} parent=5 // pred_fallthru
      _
  $region6: #{transformer_encoder_forward.1} parent=0 // loop_footer
    %s20 = sadd.s32 1, %s16
  $region7: #{transformer_encoder_forward.1} parent=0 // loop_footer_branch
    %15 = sbr.rel target = $region3
  $region8: #{transformer_encoder_forward.1} parent=0 // loop_exit
    _

</llo_original>
